<compile_context>
chip_gen: v5e
topology: v5e:2x2
jax: 0.10.0
libtpu: 0.0.40
codegen_flags: <defaults>
</compile_context>

<pallas_src>
import numpy as np

import jax
import jax.numpy as jnp
from jax import lax
from jax.experimental import pallas as pl
from jax.experimental.pallas import tpu as pltpu

EPS = 1e-5  # PyTorch BatchNorm default eps

# ----------------------------- static geometry ----------------------------- #
N = 4                # batch
H0, W0 = 16, 9       # input spatial (gives 16*4*10 = 640 flat features)

# stage A: conv1 / conv2 activations 16x9, zero-padded grid 18x11 per sample
WP_A = 11
SP_A = 18 * WP_A            # 198
LOUT_A = N * SP_A           # 792  (conv1/conv2 output columns, stride-11 coords)
LBUF_A = LOUT_A + 24        # 816  (max 3x3 tap offset = 2*11 + 2)

# stage B/C: conv3 / conv4 inputs 8x9, zero-padded grid 10x11 per sample
WP_B = 11
SP_B = 10 * WP_B            # 110
LOUT_B = N * SP_B           # 440
LBUF_B = LOUT_B + 24        # 464  (max 3x3 tap offset)
LOUT_C = N * SP_B           # 440  (conv4 output: 9x10 valid positions in 10x11 grid)
LBUF_C = LOUT_B + 12        # 452  (conv4 is 2x2: max tap offset = 11 + 1)

# ---------------- weight-slab column layout (sections disjoint) -------------- #
C_W1, C_T1 = 0, 9           # conv1 taps (8,9), bn1 shift (8,1)
C_W2, C_T2 = 16, 88         # conv2 taps (8,72), bn2 shift (8,1)
C_W3, C_T3 = 96, 168        # conv3 taps (8,72), bn3 shift (8,1)
C_W4, C_T4 = 176, 208       # conv4 taps (16,32), bn4 shift (16,1)
C_W2L, C_B2, C_T5 = 216, 232, 256   # linear2 W^T (16,NC), b2 (1,NC), bn5 shift (1,16)
W_COLS = 272


def _valid_mask(length, sp, wp, ho, wo):
    """1.0 on columns that are valid conv outputs of an (ho, wo) grid laid out
    with padded stride wp inside per-sample blocks of size sp; 0.0 on garbage."""
    p = np.arange(length) % sp
    m = ((p // wp) < ho) & ((p % wp) < wo)
    return m.astype(np.float32)[None, :]


MASK_A = _valid_mask(LOUT_A, SP_A, WP_A, 16, 9)   # conv1/conv2 valid outputs
MASK_B = _valid_mask(LOUT_B, SP_B, WP_B, 8, 9)    # conv3 valid outputs


# ------------------------------ fused kernel ------------------------------- #

def _cnn_fused_kernel(x_ref, w_ref, w1t_ref, out_ref,
                      bufA, outA, poolA, bufB, bufC, outC, poolC, pooled):
    f32 = jnp.float32
    nc = out_ref.shape[1]

    # ---------------- conv1 (Ci=1) + bn1 + relu : 9-tap broadcast FMA ----------
    acc = None
    for t in range(9):
        i, j = divmod(t, 3)
        off = i * WP_A + j
        c = w_ref[0:8, C_W1 + t:C_W1 + t + 1] * x_ref[0:1, off:off + LOUT_A]
        acc = c if acc is None else acc + c
    act1 = jnp.maximum(acc + w_ref[0:8, C_T1:C_T1 + 1], 0.0)

    # re-pad into conv2's zero-padded grid: halo-only zeroing, interior is fully
    # covered by the masked activation write (mask zeroes the per-row pad cols).
    bufA[:, 0:WP_A + 1] = jnp.zeros((8, WP_A + 1), f32)
    bufA[:, WP_A + 1 + LOUT_A:LBUF_A] = jnp.zeros(
        (8, LBUF_A - (WP_A + 1 + LOUT_A)), f32)
    bufA[:, WP_A + 1:WP_A + 1 + LOUT_A] = act1 * x_ref[1:2, 0:LOUT_A]

    # ---------------- conv2 + bn2 + relu : 9 lane-dense (8,8)@(8,792) matmuls --
    acc = None
    for t in range(9):
        i, j = divmod(t, 3)
        off = i * WP_A + j
        c = jnp.dot(w_ref[0:8, C_W2 + 8 * t:C_W2 + 8 * t + 8],
                    bufA[:, off:off + LOUT_A], preferred_element_type=f32)
        acc = c if acc is None else acc + c
    outA[...] = jnp.maximum(acc + w_ref[0:8, C_T2:C_T2 + 1], 0.0)

    # -------- max_pool2d((2,1)) #1: one hoisted full-width max, then the repack
    # loop is pure narrow copies into conv3's padded input grid.
    poolA[...] = jnp.maximum(outA[:, 0:LOUT_A - WP_A], outA[:, WP_A:LOUT_A])
    bufB[...] = jnp.zeros_like(bufB)     # interior pad cols need these zeros
    for n in range(N):
        for r in range(8):
            s0 = n * SP_A + (2 * r) * WP_A
            d = n * SP_B + (r + 1) * WP_B + 1
            bufB[:, d:d + 9] = poolA[:, s0:s0 + 9]

    # ---------------- conv3 + bn3 + relu --------------------------------------
    acc = None
    for t in range(9):
        i, j = divmod(t, 3)
        off = i * WP_B + j
        c = jnp.dot(w_ref[0:8, C_W3 + 8 * t:C_W3 + 8 * t + 8],
                    bufB[:, off:off + LOUT_B], preferred_element_type=f32)
        acc = c if acc is None else acc + c
    act3 = jnp.maximum(acc + w_ref[0:8, C_T3:C_T3 + 1], 0.0)

    # re-pad into conv4's grid (halo-only zeroing; conv4 taps read <= col 451)
    bufC[:, 0:WP_B + 1] = jnp.zeros((8, WP_B + 1), f32)
    bufC[:, WP_B + 1:WP_B + 1 + LOUT_B] = act3 * x_ref[2:3, 0:LOUT_B]

    # ---------------- conv4 (k=2, pad=1) + bn4 + relu : 4 (16,8)@(8,440) -------
    acc = None
    for t in range(4):
        i, j = divmod(t, 2)
        off = i * WP_B + j
        c = jnp.dot(w_ref[0:16, C_W4 + 8 * t:C_W4 + 8 * t + 8],
                    bufC[:, off:off + LOUT_C], preferred_element_type=f32)
        acc = c if acc is None else acc + c
    outC[...] = jnp.maximum(acc + w_ref[0:16, C_T4:C_T4 + 1], 0.0)

    # ------ max_pool2d((2,1)) #2 (hoisted max) + NCHW-flatten packing ----------
    poolC[...] = jnp.maximum(outC[:, 0:LOUT_C - WP_B], outC[:, WP_B:LOUT_C])
    for n in range(N):
        for r in range(4):
            s0 = n * SP_B + (2 * r) * WP_B
            pooled[:, n, r * 10:(r + 1) * 10] = poolC[:, s0:s0 + 10]

    # ------ head: linear1 (bn5 scale folded) -> +shift -> relu -> dropout(eval)
    #        -> linear2 -> log_softmax.  16 2-D (4,40)@(40,16) matmuls against
    #        sublane-aligned blocks of the pre-transposed linear1 weight.
    hT = None
    for ch in range(16):
        c = jnp.dot(pooled[ch], w1t_ref[ch * 40:(ch + 1) * 40, :],
                    preferred_element_type=f32)               # (N, 16)
        hT = c if hT is None else hT + c
    hT = jnp.maximum(hT + w_ref[0:1, C_T5:C_T5 + 16], 0.0)
    # TODO(synk): Dropout(0.2) uses eval-mode (identity) semantics here.
    logits = jnp.dot(hT, w_ref[0:16, C_W2L:C_W2L + nc],
                     preferred_element_type=f32) + w_ref[0:1, C_B2:C_B2 + nc]
    m = jnp.max(logits, axis=1, keepdims=True)
    z = logits - m
    lse = jnp.log(jnp.sum(jnp.exp(z), axis=1, keepdims=True))
    out_ref[...] = z - lse                                    # (N, num_classes)


# ------------------------------ JAX wrappers -------------------------------- #

def _fold_bn(bn):
    gamma, beta, mean, var = bn
    s = gamma / jnp.sqrt(var + EPS)
    return s, beta - mean * s


def _conv_tap_block(w_oihw, scale):
    """(Co,Ci,Kh,Kw) torch weight * per-Co BN scale -> (Co, Kh*Kw*Ci) block whose
    columns [t*Ci:(t+1)*Ci] hold tap t (t = i*Kw + j) as a (Co, Ci) MXU LHS."""
    co, ci, kh, kw = w_oihw.shape
    wf = w_oihw * scale[:, None, None, None]
    return jnp.transpose(wf, (0, 2, 3, 1)).reshape(co, kh * kw * ci)


def cnn_forward(x_nchw, params):
    assert x_nchw.shape == (N, 1, H0, W0), x_nchw.shape
    nc = params["w2"].shape[0]
    assert nc <= 16, nc

    # ---- data slab: row 0 = zero-padded flat input, rows 1/2 = validity masks -
    xp = jnp.pad(x_nchw[:, 0], ((0, 0), (1, 1), (1, 1)))           # (N, 18, 11)
    xrow = jnp.pad(xp.reshape(1, N * SP_A), ((0, 0), (0, LBUF_A - N * SP_A)))
    xslab = jnp.zeros((8, LBUF_A), jnp.float32)
    xslab = xslab.at[0:1, :].set(xrow)
    xslab = xslab.at[1:2, 0:LOUT_A].set(jnp.asarray(MASK_A))
    xslab = xslab.at[2:3, 0:LOUT_B].set(jnp.asarray(MASK_B))

    # ---- weight slab: eval-mode BN scales folded into the conv / linear weights
    s1, t1 = _fold_bn(params["bn1"])
    s2, t2 = _fold_bn(params["bn2"])
    s3, t3 = _fold_bn(params["bn3"])
    s4, t4 = _fold_bn(params["bn4"])
    g5, b5, m5, v5 = params["bn5"]
    s5 = g5 / jnp.sqrt(v5 + EPS)
    t5 = (params["b1"] - m5) * s5 + b5

    wslab = jnp.zeros((16, W_COLS), jnp.float32)
    wslab = wslab.at[0:8, C_W1:C_W1 + 9].set(_conv_tap_block(params["conv1"], s1))
    wslab = wslab.at[0:8, C_T1:C_T1 + 1].set(t1.reshape(8, 1))
    wslab = wslab.at[0:8, C_W2:C_W2 + 72].set(_conv_tap_block(params["conv2"], s2))
    wslab = wslab.at[0:8, C_T2:C_T2 + 1].set(t2.reshape(8, 1))
    wslab = wslab.at[0:8, C_W3:C_W3 + 72].set(_conv_tap_block(params["conv3"], s3))
    wslab = wslab.at[0:8, C_T3:C_T3 + 1].set(t3.reshape(8, 1))
    wslab = wslab.at[0:16, C_W4:C_W4 + 32].set(_conv_tap_block(params["conv4"], s4))
    wslab = wslab.at[0:16, C_T4:C_T4 + 1].set(t4.reshape(16, 1))
    wslab = wslab.at[0:16, C_W2L:C_W2L + nc].set(params["w2"].T)
    wslab = wslab.at[0:1, C_B2:C_B2 + nc].set(params["b2"].reshape(1, nc))
    wslab = wslab.at[0:1, C_T5:C_T5 + 16].set(t5.reshape(1, 16))

    # linear1 weight with bn5 scale folded, pre-transposed to (640, 16);
    # row f = c*40 + r*10 + w matches the NCHW flatten order.
    w1t = (params["w1"] * s5[:, None]).T

    out = pl.pallas_call(
        _cnn_fused_kernel,
        out_shape=jax.ShapeDtypeStruct((N, nc), jnp.float32),
        scratch_shapes=[
            pltpu.VMEM((8, LBUF_A), jnp.float32),           # bufA : padded conv2 input
            pltpu.VMEM((8, LOUT_A), jnp.float32),           # outA : conv2 output
            pltpu.VMEM((8, LOUT_A - WP_A), jnp.float32),    # poolA: hoisted pool1 max
            pltpu.VMEM((8, LBUF_B), jnp.float32),           # bufB : padded conv3 input
            pltpu.VMEM((8, LBUF_C), jnp.float32),           # bufC : padded conv4 input
            pltpu.VMEM((16, LOUT_C), jnp.float32),          # outC : conv4 output
            pltpu.VMEM((16, LOUT_C - WP_B), jnp.float32),   # poolC: hoisted pool2 max
            pltpu.VMEM((16, N, 40), jnp.float32),           # pooled[c, n, r*10+w]
        ],
    )(xslab, wslab, w1t)

    return out                                   # (N, num_classes) log-probs


# ------------------------- pure-JAX reference (check) ----------------------- #

def _reference_forward(x, params):
    def conv(x, w, pad):
        return lax.conv_general_dilated(
            x, w, window_strides=(1, 1), padding=[(pad, pad), (pad, pad)],
            dimension_numbers=("NCHW", "OIHW", "NCHW"))

    def bn(x, p):
        g, b, m, v = p
        s = g / jnp.sqrt(v + EPS)
        return x * s[None, :, None, None] + (b - m * s)[None, :, None, None]

    def pool_h2(x):
        h2 = x.shape[2] // 2
        return jnp.maximum(x[:, :, 0:2 * h2:2, :], x[:, :, 1:2 * h2:2, :])

    out = jax.nn.relu(bn(conv(x, params["conv1"], 1), params["bn1"]))
    out = pool_h2(jax.nn.relu(bn(conv(out, params["conv2"], 1), params["bn2"])))
    out = jax.nn.relu(bn(conv(out, params["conv3"], 1), params["bn3"]))
    out = pool_h2(jax.nn.relu(bn(conv(out, params["conv4"], 1), params["bn4"])))
    flat = out.reshape(out.shape[0], -1)
    h = flat @ params["w1"].T + params["b1"]
    g5, b5, m5, v5 = params["bn5"]
    s5 = g5 / jnp.sqrt(v5 + EPS)
    h = jax.nn.relu(h * s5 + (b5 - m5 * s5))
    logits = h @ params["w2"].T + params["b2"]
    return jax.nn.log_softmax(logits, axis=1)


# ------------------------------ parameter init ------------------------------ #

def init_params(key, num_classes=4):
    ks = iter(jax.random.split(key, 32))

    def conv_w(co, ci, kh, kw):
        return 0.1 * jax.random.normal(next(ks), (co, ci, kh, kw), jnp.float32)

    def bn_params(c):
        gamma = 1.0 + 0.1 * jax.random.normal(next(ks), (c,), jnp.float32)
        beta = 0.1 * jax.random.normal(next(ks), (c,), jnp.float32)
        running_mean = 0.1 * jax.random.normal(next(ks), (c,), jnp.float32)
        running_var = 0.5 + jax.random.uniform(next(ks), (c,), jnp.float32)
        return (gamma, beta, running_mean, running_var)

    return {
        "conv1": conv_w(8, 1, 3, 3),  "bn1": bn_params(8),
        "conv2": conv_w(8, 8, 3, 3),  "bn2": bn_params(8),
        "conv3": conv_w(8, 8, 3, 3),  "bn3": bn_params(8),
        "conv4": conv_w(16, 8, 2, 2), "bn4": bn_params(16),
        "w1": 0.05 * jax.random.normal(next(ks), (16, 640), jnp.float32),
        "b1": 0.05 * jax.random.normal(next(ks), (16,), jnp.float32),
        "bn5": bn_params(16),
        "w2": 0.1 * jax.random.normal(next(ks), (num_classes, 16), jnp.float32),
        "b2": 0.1 * jax.random.normal(next(ks), (num_classes,), jnp.float32),
    }


if __name__ == "__main__":
    key = jax.random.PRNGKey(0)
    pkey, xkey = jax.random.split(key)
    params = init_params(pkey, num_classes=4)

    # (N, C, H, W) = (4, 1, 16, 9): forward implies 16*4*10 = 640 flat features.
    x = jax.random.normal(xkey, (N, 1, H0, W0), jnp.float32)

    fwd = jax.jit(cnn_forward)
    out = jax.block_until_ready(fwd(x, params))
    assert out.shape == (N, 4), out.shape

    # log_softmax sanity: rows of exp(out) sum to 1.
    row_sums = np.asarray(jnp.sum(jnp.exp(out), axis=1))
    assert np.allclose(row_sums, 1.0, atol=1e-4), row_sums

    # Numerical check against a pure-JAX (XLA) reference of the same module.
    ref = np.asarray(jax.jit(_reference_forward)(x, params))
    err = np.max(np.abs(np.asarray(out) - ref))
    assert np.allclose(np.asarray(out), ref, atol=1e-4, rtol=1e-4), err

    print("KERNEL_OK")
</pallas_src>

<mosaic_0001>
module attributes {stable_mosaic.version = 11 : i64} {
  func.func @_cnn_fused_kernel(%arg0: memref<8x816xf32, #tpu.memory_space<vmem>>, %arg1: memref<16x272xf32, #tpu.memory_space<vmem>>, %arg2: memref<640x16xf32, #tpu.memory_space<vmem>>, %arg3: memref<4x4xf32, #tpu.memory_space<vmem>>, %arg4: memref<8x816xf32, #tpu.memory_space<vmem>>, %arg5: memref<8x792xf32, #tpu.memory_space<vmem>>, %arg6: memref<8x781xf32, #tpu.memory_space<vmem>>, %arg7: memref<8x464xf32, #tpu.memory_space<vmem>>, %arg8: memref<8x452xf32, #tpu.memory_space<vmem>>, %arg9: memref<16x440xf32, #tpu.memory_space<vmem>>, %arg10: memref<16x429xf32, #tpu.memory_space<vmem>>, %arg11: memref<16x4x40xf32, #tpu.memory_space<vmem>>) attributes {dimension_semantics = [], scalar_prefetch = 0 : i64, scratch_operands = 8 : i64, tpu.core_type = #tpu.core_type<tc>} {
    %c0 = arith.constant 0 : index
    %c0_0 = arith.constant 0 : index
    %0 = vector.load %arg1[%c0, %c0_0] : memref<16x272xf32, #tpu.memory_space<vmem>>, vector<8x1xf32>
    %c0_1 = arith.constant 0 : index
    %c0_2 = arith.constant 0 : index
    %1 = vector.load %arg0[%c0_1, %c0_2] : memref<8x816xf32, #tpu.memory_space<vmem>>, vector<1x792xf32>
    %2 = vector.broadcast %0 : vector<8x1xf32> to vector<8x792xf32>
    %3 = vector.broadcast %1 : vector<1x792xf32> to vector<8x792xf32>
    %4 = arith.mulf %2, %3 : vector<8x792xf32>
    %c0_3 = arith.constant 0 : index
    %c1 = arith.constant 1 : index
    %5 = vector.load %arg1[%c0_3, %c1] : memref<16x272xf32, #tpu.memory_space<vmem>>, vector<8x1xf32>
    %c0_4 = arith.constant 0 : index
    %c1_5 = arith.constant 1 : index
    %6 = vector.load %arg0[%c0_4, %c1_5] : memref<8x816xf32, #tpu.memory_space<vmem>>, vector<1x792xf32>
    %7 = vector.broadcast %5 : vector<8x1xf32> to vector<8x792xf32>
    %8 = vector.broadcast %6 : vector<1x792xf32> to vector<8x792xf32>
    %9 = arith.mulf %7, %8 : vector<8x792xf32>
    %10 = arith.addf %4, %9 : vector<8x792xf32>
    %c0_6 = arith.constant 0 : index
    %c2 = arith.constant 2 : index
    %11 = vector.load %arg1[%c0_6, %c2] : memref<16x272xf32, #tpu.memory_space<vmem>>, vector<8x1xf32>
    %c0_7 = arith.constant 0 : index
    %c2_8 = arith.constant 2 : index
    %12 = vector.load %arg0[%c0_7, %c2_8] : memref<8x816xf32, #tpu.memory_space<vmem>>, vector<1x792xf32>
    %13 = vector.broadcast %11 : vector<8x1xf32> to vector<8x792xf32>
    %14 = vector.broadcast %12 : vector<1x792xf32> to vector<8x792xf32>
    %15 = arith.mulf %13, %14 : vector<8x792xf32>
    %16 = arith.addf %10, %15 : vector<8x792xf32>
    %c0_9 = arith.constant 0 : index
    %c3 = arith.constant 3 : index
    %17 = vector.load %arg1[%c0_9, %c3] : memref<16x272xf32, #tpu.memory_space<vmem>>, vector<8x1xf32>
    %c0_10 = arith.constant 0 : index
    %c11 = arith.constant 11 : index
    %18 = vector.load %arg0[%c0_10, %c11] : memref<8x816xf32, #tpu.memory_space<vmem>>, vector<1x792xf32>
    %19 = vector.broadcast %17 : vector<8x1xf32> to vector<8x792xf32>
    %20 = vector.broadcast %18 : vector<1x792xf32> to vector<8x792xf32>
    %21 = arith.mulf %19, %20 : vector<8x792xf32>
    %22 = arith.addf %16, %21 : vector<8x792xf32>
    %c0_11 = arith.constant 0 : index
    %c4 = arith.constant 4 : index
    %23 = vector.load %arg1[%c0_11, %c4] : memref<16x272xf32, #tpu.memory_space<vmem>>, vector<8x1xf32>
    %c0_12 = arith.constant 0 : index
    %c12 = arith.constant 12 : index
    %24 = vector.load %arg0[%c0_12, %c12] : memref<8x816xf32, #tpu.memory_space<vmem>>, vector<1x792xf32>
    %25 = vector.broadcast %23 : vector<8x1xf32> to vector<8x792xf32>
    %26 = vector.broadcast %24 : vector<1x792xf32> to vector<8x792xf32>
    %27 = arith.mulf %25, %26 : vector<8x792xf32>
    %28 = arith.addf %22, %27 : vector<8x792xf32>
    %c0_13 = arith.constant 0 : index
    %c5 = arith.constant 5 : index
    %29 = vector.load %arg1[%c0_13, %c5] : memref<16x272xf32, #tpu.memory_space<vmem>>, vector<8x1xf32>
    %c0_14 = arith.constant 0 : index
    %c13 = arith.constant 13 : index
    %30 = vector.load %arg0[%c0_14, %c13] : memref<8x816xf32, #tpu.memory_space<vmem>>, vector<1x792xf32>
    %31 = vector.broadcast %29 : vector<8x1xf32> to vector<8x792xf32>
    %32 = vector.broadcast %30 : vector<1x792xf32> to vector<8x792xf32>
    %33 = arith.mulf %31, %32 : vector<8x792xf32>
    %34 = arith.addf %28, %33 : vector<8x792xf32>
    %c0_15 = arith.constant 0 : index
    %c6 = arith.constant 6 : index
    %35 = vector.load %arg1[%c0_15, %c6] : memref<16x272xf32, #tpu.memory_space<vmem>>, vector<8x1xf32>
    %c0_16 = arith.constant 0 : index
    %c22 = arith.constant 22 : index
    %36 = vector.load %arg0[%c0_16, %c22] : memref<8x816xf32, #tpu.memory_space<vmem>>, vector<1x792xf32>
    %37 = vector.broadcast %35 : vector<8x1xf32> to vector<8x792xf32>
    %38 = vector.broadcast %36 : vector<1x792xf32> to vector<8x792xf32>
    %39 = arith.mulf %37, %38 : vector<8x792xf32>
    %40 = arith.addf %34, %39 : vector<8x792xf32>
    %c0_17 = arith.constant 0 : index
    %c7 = arith.constant 7 : index
    %41 = vector.load %arg1[%c0_17, %c7] : memref<16x272xf32, #tpu.memory_space<vmem>>, vector<8x1xf32>
    %c0_18 = arith.constant 0 : index
    %c23 = arith.constant 23 : index
    %42 = vector.load %arg0[%c0_18, %c23] : memref<8x816xf32, #tpu.memory_space<vmem>>, vector<1x792xf32>
    %43 = vector.broadcast %41 : vector<8x1xf32> to vector<8x792xf32>
    %44 = vector.broadcast %42 : vector<1x792xf32> to vector<8x792xf32>
    %45 = arith.mulf %43, %44 : vector<8x792xf32>
    %46 = arith.addf %40, %45 : vector<8x792xf32>
    %c0_19 = arith.constant 0 : index
    %c8 = arith.constant 8 : index
    %47 = vector.load %arg1[%c0_19, %c8] : memref<16x272xf32, #tpu.memory_space<vmem>>, vector<8x1xf32>
    %c0_20 = arith.constant 0 : index
    %c24 = arith.constant 24 : index
    %48 = vector.load %arg0[%c0_20, %c24] : memref<8x816xf32, #tpu.memory_space<vmem>>, vector<1x792xf32>
    %49 = vector.broadcast %47 : vector<8x1xf32> to vector<8x792xf32>
    %50 = vector.broadcast %48 : vector<1x792xf32> to vector<8x792xf32>
    %51 = arith.mulf %49, %50 : vector<8x792xf32>
    %52 = arith.addf %46, %51 : vector<8x792xf32>
    %c0_21 = arith.constant 0 : index
    %c9 = arith.constant 9 : index
    %53 = vector.load %arg1[%c0_21, %c9] : memref<16x272xf32, #tpu.memory_space<vmem>>, vector<8x1xf32>
    %54 = vector.broadcast %53 : vector<8x1xf32> to vector<8x792xf32>
    %55 = arith.addf %52, %54 : vector<8x792xf32>
    %cst = arith.constant 0.000000e+00 : f32
    %56 = vector.broadcast %cst : f32 to vector<8x792xf32>
    %57 = arith.maximumf %55, %56 : vector<8x792xf32>
    %cst_22 = arith.constant 0.000000e+00 : f32
    %58 = vector.broadcast %cst_22 : f32 to vector<8x12xf32>
    %c0_23 = arith.constant 0 : index
    %c0_24 = arith.constant 0 : index
    %59 = vector.load %arg4[%c0_23, %c0_24] : memref<8x816xf32, #tpu.memory_space<vmem>>, vector<8x12xf32>
    tpu.vector_store %arg4[%c0_23, %c0_24], %58 {strides = array<i32>} : memref<8x816xf32, #tpu.memory_space<vmem>>, vector<8x12xf32>,
    %cst_25 = arith.constant 0.000000e+00 : f32
    %60 = vector.broadcast %cst_25 : f32 to vector<8x12xf32>
    %c0_26 = arith.constant 0 : index
    %c804 = arith.constant 804 : index
    %61 = vector.load %arg4[%c0_26, %c804] : memref<8x816xf32, #tpu.memory_space<vmem>>, vector<8x12xf32>
    tpu.vector_store %arg4[%c0_26, %c804], %60 {strides = array<i32>} : memref<8x816xf32, #tpu.memory_space<vmem>>, vector<8x12xf32>,
    %c1_27 = arith.constant 1 : index
    %c0_28 = arith.constant 0 : index
    %62 = vector.load %arg0[%c1_27, %c0_28] : memref<8x816xf32, #tpu.memory_space<vmem>>, vector<1x792xf32>
    %63 = vector.broadcast %62 : vector<1x792xf32> to vector<8x792xf32>
    %64 = arith.mulf %57, %63 : vector<8x792xf32>
    %c0_29 = arith.constant 0 : index
    %c12_30 = arith.constant 12 : index
    %65 = vector.load %arg4[%c0_29, %c12_30] : memref<8x816xf32, #tpu.memory_space<vmem>>, vector<8x792xf32>
    tpu.vector_store %arg4[%c0_29, %c12_30], %64 {strides = array<i32>} : memref<8x816xf32, #tpu.memory_space<vmem>>, vector<8x792xf32>,
    %c0_31 = arith.constant 0 : index
    %c16 = arith.constant 16 : index
    %66 = vector.load %arg1[%c0_31, %c16] : memref<16x272xf32, #tpu.memory_space<vmem>>, vector<8x8xf32>
    %c0_32 = arith.constant 0 : index
    %c0_33 = arith.constant 0 : index
    %67 = vector.load %arg4[%c0_32, %c0_33] : memref<8x816xf32, #tpu.memory_space<vmem>>, vector<8x792xf32>
    %cst_34 = arith.constant dense<0.000000e+00> : vector<8x792xf32>
    %68 = tpu.matmul %66, %67, %cst_34 {dimension_numbers = #tpu.dot_dimension_numbers<[1], [0], [0], [1], [0, 0, 1, 1], [], []>} : vector<8x8xf32>, vector<8x792xf32>, vector<8x792xf32> -> vector<8x792xf32>
    %c0_35 = arith.constant 0 : index
    %c24_36 = arith.constant 24 : index
    %69 = vector.load %arg1[%c0_35, %c24_36] : memref<16x272xf32, #tpu.memory_space<vmem>>, vector<8x8xf32>
    %c0_37 = arith.constant 0 : index
    %c1_38 = arith.constant 1 : index
    %70 = vector.load %arg4[%c0_37, %c1_38] : memref<8x816xf32, #tpu.memory_space<vmem>>, vector<8x792xf32>
    %cst_39 = arith.constant dense<0.000000e+00> : vector<8x792xf32>
    %71 = tpu.matmul %69, %70, %cst_39 {dimension_numbers = #tpu.dot_dimension_numbers<[1], [0], [0], [1], [0, 0, 1, 1], [], []>} : vector<8x8xf32>, vector<8x792xf32>, vector<8x792xf32> -> vector<8x792xf32>
    %72 = arith.addf %68, %71 : vector<8x792xf32>
    %c0_40 = arith.constant 0 : index
    %c32 = arith.constant 32 : index
    %73 = vector.load %arg1[%c0_40, %c32] : memref<16x272xf32, #tpu.memory_space<vmem>>, vector<8x8xf32>
    %c0_41 = arith.constant 0 : index
    %c2_42 = arith.constant 2 : index
    %74 = vector.load %arg4[%c0_41, %c2_42] : memref<8x816xf32, #tpu.memory_space<vmem>>, vector<8x792xf32>
    %cst_43 = arith.constant dense<0.000000e+00> : vector<8x792xf32>
    %75 = tpu.matmul %73, %74, %cst_43 {dimension_numbers = #tpu.dot_dimension_numbers<[1], [0], [0], [1], [0, 0, 1, 1], [], []>} : vector<8x8xf32>, vector<8x792xf32>, vector<8x792xf32> -> vector<8x792xf32>
    %76 = arith.addf %72, %75 : vector<8x792xf32>
    %c0_44 = arith.constant 0 : index
    %c40 = arith.constant 40 : index
    %77 = vector.load %arg1[%c0_44, %c40] : memref<16x272xf32, #tpu.memory_space<vmem>>, vector<8x8xf32>
    %c0_45 = arith.constant 0 : index
    %c11_46 = arith.constant 11 : index
    %78 = vector.load %arg4[%c0_45, %c11_46] : memref<8x816xf32, #tpu.memory_space<vmem>>, vector<8x792xf32>
    %cst_47 = arith.constant dense<0.000000e+00> : vector<8x792xf32>
    %79 = tpu.matmul %77, %78, %cst_47 {dimension_numbers = #tpu.dot_dimension_numbers<[1], [0], [0], [1], [0, 0, 1, 1], [], []>} : vector<8x8xf32>, vector<8x792xf32>, vector<8x792xf32> -> vector<8x792xf32>
    %80 = arith.addf %76, %79 : vector<8x792xf32>
    %c0_48 = arith.constant 0 : index
    %c48 = arith.constant 48 : index
    %81 = vector.load %arg1[%c0_48, %c48] : memref<16x272xf32, #tpu.memory_space<vmem>>, vector<8x8xf32>
    %c0_49 = arith.constant 0 : index
    %c12_50 = arith.constant 12 : index
    %82 = vector.load %arg4[%c0_49, %c12_50] : memref<8x816xf32, #tpu.memory_space<vmem>>, vector<8x792xf32>
    %cst_51 = arith.constant dense<0.000000e+00> : vector<8x792xf32>
    %83 = tpu.matmul %81, %82, %cst_51 {dimension_numbers = #tpu.dot_dimension_numbers<[1], [0], [0], [1], [0, 0, 1, 1], [], []>} : vector<8x8xf32>, vector<8x792xf32>, vector<8x792xf32> -> vector<8x792xf32>
    %84 = arith.addf %80, %83 : vector<8x792xf32>
    %c0_52 = arith.constant 0 : index
    %c56 = arith.constant 56 : index
    %85 = vector.load %arg1[%c0_52, %c56] : memref<16x272xf32, #tpu.memory_space<vmem>>, vector<8x8xf32>
    %c0_53 = arith.constant 0 : index
    %c13_54 = arith.constant 13 : index
    %86 = vector.load %arg4[%c0_53, %c13_54] : memref<8x816xf32, #tpu.memory_space<vmem>>, vector<8x792xf32>
    %cst_55 = arith.constant dense<0.000000e+00> : vector<8x792xf32>
    %87 = tpu.matmul %85, %86, %cst_55 {dimension_numbers = #tpu.dot_dimension_numbers<[1], [0], [0], [1], [0, 0, 1, 1], [], []>} : vector<8x8xf32>, vector<8x792xf32>, vector<8x792xf32> -> vector<8x792xf32>
    %88 = arith.addf %84, %87 : vector<8x792xf32>
    %c0_56 = arith.constant 0 : index
    %c64 = arith.constant 64 : index
    %89 = vector.load %arg1[%c0_56, %c64] : memref<16x272xf32, #tpu.memory_space<vmem>>, vector<8x8xf32>
    %c0_57 = arith.constant 0 : index
    %c22_58 = arith.constant 22 : index
    %90 = vector.load %arg4[%c0_57, %c22_58] : memref<8x816xf32, #tpu.memory_space<vmem>>, vector<8x792xf32>
    %cst_59 = arith.constant dense<0.000000e+00> : vector<8x792xf32>
    %91 = tpu.matmul %89, %90, %cst_59 {dimension_numbers = #tpu.dot_dimension_numbers<[1], [0], [0], [1], [0, 0, 1, 1], [], []>} : vector<8x8xf32>, vector<8x792xf32>, vector<8x792xf32> -> vector<8x792xf32>
    %92 = arith.addf %88, %91 : vector<8x792xf32>
    %c0_60 = arith.constant 0 : index
    %c72 = arith.constant 72 : index
    %93 = vector.load %arg1[%c0_60, %c72] : memref<16x272xf32, #tpu.memory_space<vmem>>, vector<8x8xf32>
    %c0_61 = arith.constant 0 : index
    %c23_62 = arith.constant 23 : index
    %94 = vector.load %arg4[%c0_61, %c23_62] : memref<8x816xf32, #tpu.memory_space<vmem>>, vector<8x792xf32>
    %cst_63 = arith.constant dense<0.000000e+00> : vector<8x792xf32>
    %95 = tpu.matmul %93, %94, %cst_63 {dimension_numbers = #tpu.dot_dimension_numbers<[1], [0], [0], [1], [0, 0, 1, 1], [], []>} : vector<8x8xf32>, vector<8x792xf32>, vector<8x792xf32> -> vector<8x792xf32>
    %96 = arith.addf %92, %95 : vector<8x792xf32>
    %c0_64 = arith.constant 0 : index
    %c80 = arith.constant 80 : index
    %97 = vector.load %arg1[%c0_64, %c80] : memref<16x272xf32, #tpu.memory_space<vmem>>, vector<8x8xf32>
    %c0_65 = arith.constant 0 : index
    %c24_66 = arith.constant 24 : index
    %98 = vector.load %arg4[%c0_65, %c24_66] : memref<8x816xf32, #tpu.memory_space<vmem>>, vector<8x792xf32>
    %cst_67 = arith.constant dense<0.000000e+00> : vector<8x792xf32>
    %99 = tpu.matmul %97, %98, %cst_67 {dimension_numbers = #tpu.dot_dimension_numbers<[1], [0], [0], [1], [0, 0, 1, 1], [], []>} : vector<8x8xf32>, vector<8x792xf32>, vector<8x792xf32> -> vector<8x792xf32>
    %100 = arith.addf %96, %99 : vector<8x792xf32>
    %c0_68 = arith.constant 0 : index
    %c88 = arith.constant 88 : index
    %101 = vector.load %arg1[%c0_68, %c88] : memref<16x272xf32, #tpu.memory_space<vmem>>, vector<8x1xf32>
    %102 = vector.broadcast %101 : vector<8x1xf32> to vector<8x792xf32>
    %103 = arith.addf %100, %102 : vector<8x792xf32>
    %cst_69 = arith.constant 0.000000e+00 : f32
    %104 = vector.broadcast %cst_69 : f32 to vector<8x792xf32>
    %105 = arith.maximumf %103, %104 : vector<8x792xf32>
    %c0_70 = arith.constant 0 : index
    %c0_71 = arith.constant 0 : index
    %106 = vector.load %arg5[%c0_70, %c0_71] : memref<8x792xf32, #tpu.memory_space<vmem>>, vector<8x792xf32>
    tpu.vector_store %arg5[%c0_70, %c0_71], %105 {strides = array<i32>} : memref<8x792xf32, #tpu.memory_space<vmem>>, vector<8x792xf32>,
    %c0_72 = arith.constant 0 : index
    %c0_73 = arith.constant 0 : index
    %107 = vector.load %arg5[%c0_72, %c0_73] : memref<8x792xf32, #tpu.memory_space<vmem>>, vector<8x781xf32>
    %c0_74 = arith.constant 0 : index
    %c11_75 = arith.constant 11 : index
    %108 = vector.load %arg5[%c0_74, %c11_75] : memref<8x792xf32, #tpu.memory_space<vmem>>, vector<8x781xf32>
    %109 = arith.maximumf %107, %108 : vector<8x781xf32>
    %c0_76 = arith.constant 0 : index
    %c0_77 = arith.constant 0 : index
    %110 = vector.load %arg6[%c0_76, %c0_77] : memref<8x781xf32, #tpu.memory_space<vmem>>, vector<8x781xf32>
    tpu.vector_store %arg6[%c0_76, %c0_77], %109 {strides = array<i32>} : memref<8x781xf32, #tpu.memory_space<vmem>>, vector<8x781xf32>,
    %cst_78 = arith.constant 0.000000e+00 : f32
    %111 = vector.broadcast %cst_78 : f32 to vector<8x464xf32>
    %c0_79 = arith.constant 0 : index
    %c0_80 = arith.constant 0 : index
    %112 = vector.load %arg7[%c0_79, %c0_80] : memref<8x464xf32, #tpu.memory_space<vmem>>, vector<8x464xf32>
    tpu.vector_store %arg7[%c0_79, %c0_80], %111 {strides = array<i32>} : memref<8x464xf32, #tpu.memory_space<vmem>>, vector<8x464xf32>,
    %c0_81 = arith.constant 0 : index
    %c0_82 = arith.constant 0 : index
    %113 = vector.load %arg6[%c0_81, %c0_82] : memref<8x781xf32, #tpu.memory_space<vmem>>, vector<8x9xf32>
    %c0_83 = arith.constant 0 : index
    %c12_84 = arith.constant 12 : index
    %114 = vector.load %arg7[%c0_83, %c12_84] : memref<8x464xf32, #tpu.memory_space<vmem>>, vector<8x9xf32>
    tpu.vector_store %arg7[%c0_83, %c12_84], %113 {strides = array<i32>} : memref<8x464xf32, #tpu.memory_space<vmem>>, vector<8x9xf32>,
    %c0_85 = arith.constant 0 : index
    %c22_86 = arith.constant 22 : index
    %115 = vector.load %arg6[%c0_85, %c22_86] : memref<8x781xf32, #tpu.memory_space<vmem>>, vector<8x9xf32>
    %c0_87 = arith.constant 0 : index
    %c23_88 = arith.constant 23 : index
    %116 = vector.load %arg7[%c0_87, %c23_88] : memref<8x464xf32, #tpu.memory_space<vmem>>, vector<8x9xf32>
    tpu.vector_store %arg7[%c0_87, %c23_88], %115 {strides = array<i32>} : memref<8x464xf32, #tpu.memory_space<vmem>>, vector<8x9xf32>,
    %c0_89 = arith.constant 0 : index
    %c44 = arith.constant 44 : index
    %117 = vector.load %arg6[%c0_89, %c44] : memref<8x781xf32, #tpu.memory_space<vmem>>, vector<8x9xf32>
    %c0_90 = arith.constant 0 : index
    %c34 = arith.constant 34 : index
    %118 = vector.load %arg7[%c0_90, %c34] : memref<8x464xf32, #tpu.memory_space<vmem>>, vector<8x9xf32>
    tpu.vector_store %arg7[%c0_90, %c34], %117 {strides = array<i32>} : memref<8x464xf32, #tpu.memory_space<vmem>>, vector<8x9xf32>,
    %c0_91 = arith.constant 0 : index
    %c66 = arith.constant 66 : index
    %119 = vector.load %arg6[%c0_91, %c66] : memref<8x781xf32, #tpu.memory_space<vmem>>, vector<8x9xf32>
    %c0_92 = arith.constant 0 : index
    %c45 = arith.constant 45 : index
    %120 = vector.load %arg7[%c0_92, %c45] : memref<8x464xf32, #tpu.memory_space<vmem>>, vector<8x9xf32>
    tpu.vector_store %arg7[%c0_92, %c45], %119 {strides = array<i32>} : memref<8x464xf32, #tpu.memory_space<vmem>>, vector<8x9xf32>,
    %c0_93 = arith.constant 0 : index
    %c88_94 = arith.constant 88 : index
    %121 = vector.load %arg6[%c0_93, %c88_94] : memref<8x781xf32, #tpu.memory_space<vmem>>, vector<8x9xf32>
    %c0_95 = arith.constant 0 : index
    %c56_96 = arith.constant 56 : index
    %122 = vector.load %arg7[%c0_95, %c56_96] : memref<8x464xf32, #tpu.memory_space<vmem>>, vector<8x9xf32>
    tpu.vector_store %arg7[%c0_95, %c56_96], %121 {strides = array<i32>} : memref<8x464xf32, #tpu.memory_space<vmem>>, vector<8x9xf32>,
    %c0_97 = arith.constant 0 : index
    %c110 = arith.constant 110 : index
    %123 = vector.load %arg6[%c0_97, %c110] : memref<8x781xf32, #tpu.memory_space<vmem>>, vector<8x9xf32>
    %c0_98 = arith.constant 0 : index
    %c67 = arith.constant 67 : index
    %124 = vector.load %arg7[%c0_98, %c67] : memref<8x464xf32, #tpu.memory_space<vmem>>, vector<8x9xf32>
    tpu.vector_store %arg7[%c0_98, %c67], %123 {strides = array<i32>} : memref<8x464xf32, #tpu.memory_space<vmem>>, vector<8x9xf32>,
    %c0_99 = arith.constant 0 : index
    %c132 = arith.constant 132 : index
    %125 = vector.load %arg6[%c0_99, %c132] : memref<8x781xf32, #tpu.memory_space<vmem>>, vector<8x9xf32>
    %c0_100 = arith.constant 0 : index
    %c78 = arith.constant 78 : index
    %126 = vector.load %arg7[%c0_100, %c78] : memref<8x464xf32, #tpu.memory_space<vmem>>, vector<8x9xf32>
    tpu.vector_store %arg7[%c0_100, %c78], %125 {strides = array<i32>} : memref<8x464xf32, #tpu.memory_space<vmem>>, vector<8x9xf32>,
    %c0_101 = arith.constant 0 : index
    %c154 = arith.constant 154 : index
    %127 = vector.load %arg6[%c0_101, %c154] : memref<8x781xf32, #tpu.memory_space<vmem>>, vector<8x9xf32>
    %c0_102 = arith.constant 0 : index
    %c89 = arith.constant 89 : index
    %128 = vector.load %arg7[%c0_102, %c89] : memref<8x464xf32, #tpu.memory_space<vmem>>, vector<8x9xf32>
    tpu.vector_store %arg7[%c0_102, %c89], %127 {strides = array<i32>} : memref<8x464xf32, #tpu.memory_space<vmem>>, vector<8x9xf32>,
    %c0_103 = arith.constant 0 : index
    %c198 = arith.constant 198 : index
    %129 = vector.load %arg6[%c0_103, %c198] : memref<8x781xf32, #tpu.memory_space<vmem>>, vector<8x9xf32>
    %c0_104 = arith.constant 0 : index
    %c122 = arith.constant 122 : index
    %130 = vector.load %arg7[%c0_104, %c122] : memref<8x464xf32, #tpu.memory_space<vmem>>, vector<8x9xf32>
    tpu.vector_store %arg7[%c0_104, %c122], %129 {strides = array<i32>} : memref<8x464xf32, #tpu.memory_space<vmem>>, vector<8x9xf32>,
    %c0_105 = arith.constant 0 : index
    %c220 = arith.constant 220 : index
    %131 = vector.load %arg6[%c0_105, %c220] : memref<8x781xf32, #tpu.memory_space<vmem>>, vector<8x9xf32>
    %c0_106 = arith.constant 0 : index
    %c133 = arith.constant 133 : index
    %132 = vector.load %arg7[%c0_106, %c133] : memref<8x464xf32, #tpu.memory_space<vmem>>, vector<8x9xf32>
    tpu.vector_store %arg7[%c0_106, %c133], %131 {strides = array<i32>} : memref<8x464xf32, #tpu.memory_space<vmem>>, vector<8x9xf32>,
    %c0_107 = arith.constant 0 : index
    %c242 = arith.constant 242 : index
    %133 = vector.load %arg6[%c0_107, %c242] : memref<8x781xf32, #tpu.memory_space<vmem>>, vector<8x9xf32>
    %c0_108 = arith.constant 0 : index
    %c144 = arith.constant 144 : index
    %134 = vector.load %arg7[%c0_108, %c144] : memref<8x464xf32, #tpu.memory_space<vmem>>, vector<8x9xf32>
    tpu.vector_store %arg7[%c0_108, %c144], %133 {strides = array<i32>} : memref<8x464xf32, #tpu.memory_space<vmem>>, vector<8x9xf32>,
    %c0_109 = arith.constant 0 : index
    %c264 = arith.constant 264 : index
    %135 = vector.load %arg6[%c0_109, %c264] : memref<8x781xf32, #tpu.memory_space<vmem>>, vector<8x9xf32>
    %c0_110 = arith.constant 0 : index
    %c155 = arith.constant 155 : index
    %136 = vector.load %arg7[%c0_110, %c155] : memref<8x464xf32, #tpu.memory_space<vmem>>, vector<8x9xf32>
    tpu.vector_store %arg7[%c0_110, %c155], %135 {strides = array<i32>} : memref<8x464xf32, #tpu.memory_space<vmem>>, vector<8x9xf32>,
    %c0_111 = arith.constant 0 : index
    %c286 = arith.constant 286 : index
    %137 = vector.load %arg6[%c0_111, %c286] : memref<8x781xf32, #tpu.memory_space<vmem>>, vector<8x9xf32>
    %c0_112 = arith.constant 0 : index
    %c166 = arith.constant 166 : index
    %138 = vector.load %arg7[%c0_112, %c166] : memref<8x464xf32, #tpu.memory_space<vmem>>, vector<8x9xf32>
    tpu.vector_store %arg7[%c0_112, %c166], %137 {strides = array<i32>} : memref<8x464xf32, #tpu.memory_space<vmem>>, vector<8x9xf32>,
    %c0_113 = arith.constant 0 : index
    %c308 = arith.constant 308 : index
    %139 = vector.load %arg6[%c0_113, %c308] : memref<8x781xf32, #tpu.memory_space<vmem>>, vector<8x9xf32>
    %c0_114 = arith.constant 0 : index
    %c177 = arith.constant 177 : index
    %140 = vector.load %arg7[%c0_114, %c177] : memref<8x464xf32, #tpu.memory_space<vmem>>, vector<8x9xf32>
    tpu.vector_store %arg7[%c0_114, %c177], %139 {strides = array<i32>} : memref<8x464xf32, #tpu.memory_space<vmem>>, vector<8x9xf32>,
    %c0_115 = arith.constant 0 : index
    %c330 = arith.constant 330 : index
    %141 = vector.load %arg6[%c0_115, %c330] : memref<8x781xf32, #tpu.memory_space<vmem>>, vector<8x9xf32>
    %c0_116 = arith.constant 0 : index
    %c188 = arith.constant 188 : index
    %142 = vector.load %arg7[%c0_116, %c188] : memref<8x464xf32, #tpu.memory_space<vmem>>, vector<8x9xf32>
    tpu.vector_store %arg7[%c0_116, %c188], %141 {strides = array<i32>} : memref<8x464xf32, #tpu.memory_space<vmem>>, vector<8x9xf32>,
    %c0_117 = arith.constant 0 : index
    %c352 = arith.constant 352 : index
    %143 = vector.load %arg6[%c0_117, %c352] : memref<8x781xf32, #tpu.memory_space<vmem>>, vector<8x9xf32>
    %c0_118 = arith.constant 0 : index
    %c199 = arith.constant 199 : index
    %144 = vector.load %arg7[%c0_118, %c199] : memref<8x464xf32, #tpu.memory_space<vmem>>, vector<8x9xf32>
    tpu.vector_store %arg7[%c0_118, %c199], %143 {strides = array<i32>} : memref<8x464xf32, #tpu.memory_space<vmem>>, vector<8x9xf32>,
    %c0_119 = arith.constant 0 : index
    %c396 = arith.constant 396 : index
    %145 = vector.load %arg6[%c0_119, %c396] : memref<8x781xf32, #tpu.memory_space<vmem>>, vector<8x9xf32>
    %c0_120 = arith.constant 0 : index
    %c232 = arith.constant 232 : index
    %146 = vector.load %arg7[%c0_120, %c232] : memref<8x464xf32, #tpu.memory_space<vmem>>, vector<8x9xf32>
    tpu.vector_store %arg7[%c0_120, %c232], %145 {strides = array<i32>} : memref<8x464xf32, #tpu.memory_space<vmem>>, vector<8x9xf32>,
    %c0_121 = arith.constant 0 : index
    %c418 = arith.constant 418 : index
    %147 = vector.load %arg6[%c0_121, %c418] : memref<8x781xf32, #tpu.memory_space<vmem>>, vector<8x9xf32>
    %c0_122 = arith.constant 0 : index
    %c243 = arith.constant 243 : index
    %148 = vector.load %arg7[%c0_122, %c243] : memref<8x464xf32, #tpu.memory_space<vmem>>, vector<8x9xf32>
    tpu.vector_store %arg7[%c0_122, %c243], %147 {strides = array<i32>} : memref<8x464xf32, #tpu.memory_space<vmem>>, vector<8x9xf32>,
    %c0_123 = arith.constant 0 : index
    %c440 = arith.constant 440 : index
    %149 = vector.load %arg6[%c0_123, %c440] : memref<8x781xf32, #tpu.memory_space<vmem>>, vector<8x9xf32>
    %c0_124 = arith.constant 0 : index
    %c254 = arith.constant 254 : index
    %150 = vector.load %arg7[%c0_124, %c254] : memref<8x464xf32, #tpu.memory_space<vmem>>, vector<8x9xf32>
    tpu.vector_store %arg7[%c0_124, %c254], %149 {strides = array<i32>} : memref<8x464xf32, #tpu.memory_space<vmem>>, vector<8x9xf32>,
    %c0_125 = arith.constant 0 : index
    %c462 = arith.constant 462 : index
    %151 = vector.load %arg6[%c0_125, %c462] : memref<8x781xf32, #tpu.memory_space<vmem>>, vector<8x9xf32>
    %c0_126 = arith.constant 0 : index
    %c265 = arith.constant 265 : index
    %152 = vector.load %arg7[%c0_126, %c265] : memref<8x464xf32, #tpu.memory_space<vmem>>, vector<8x9xf32>
    tpu.vector_store %arg7[%c0_126, %c265], %151 {strides = array<i32>} : memref<8x464xf32, #tpu.memory_space<vmem>>, vector<8x9xf32>,
    %c0_127 = arith.constant 0 : index
    %c484 = arith.constant 484 : index
    %153 = vector.load %arg6[%c0_127, %c484] : memref<8x781xf32, #tpu.memory_space<vmem>>, vector<8x9xf32>
    %c0_128 = arith.constant 0 : index
    %c276 = arith.constant 276 : index
    %154 = vector.load %arg7[%c0_128, %c276] : memref<8x464xf32, #tpu.memory_space<vmem>>, vector<8x9xf32>
    tpu.vector_store %arg7[%c0_128, %c276], %153 {strides = array<i32>} : memref<8x464xf32, #tpu.memory_space<vmem>>, vector<8x9xf32>,
    %c0_129 = arith.constant 0 : index
    %c506 = arith.constant 506 : index
    %155 = vector.load %arg6[%c0_129, %c506] : memref<8x781xf32, #tpu.memory_space<vmem>>, vector<8x9xf32>
    %c0_130 = arith.constant 0 : index
    %c287 = arith.constant 287 : index
    %156 = vector.load %arg7[%c0_130, %c287] : memref<8x464xf32, #tpu.memory_space<vmem>>, vector<8x9xf32>
    tpu.vector_store %arg7[%c0_130, %c287], %155 {strides = array<i32>} : memref<8x464xf32, #tpu.memory_space<vmem>>, vector<8x9xf32>,
    %c0_131 = arith.constant 0 : index
    %c528 = arith.constant 528 : index
    %157 = vector.load %arg6[%c0_131, %c528] : memref<8x781xf32, #tpu.memory_space<vmem>>, vector<8x9xf32>
    %c0_132 = arith.constant 0 : index
    %c298 = arith.constant 298 : index
    %158 = vector.load %arg7[%c0_132, %c298] : memref<8x464xf32, #tpu.memory_space<vmem>>, vector<8x9xf32>
    tpu.vector_store %arg7[%c0_132, %c298], %157 {strides = array<i32>} : memref<8x464xf32, #tpu.memory_space<vmem>>, vector<8x9xf32>,
    %c0_133 = arith.constant 0 : index
    %c550 = arith.constant 550 : index
    %159 = vector.load %arg6[%c0_133, %c550] : memref<8x781xf32, #tpu.memory_space<vmem>>, vector<8x9xf32>
    %c0_134 = arith.constant 0 : index
    %c309 = arith.constant 309 : index
    %160 = vector.load %arg7[%c0_134, %c309] : memref<8x464xf32, #tpu.memory_space<vmem>>, vector<8x9xf32>
    tpu.vector_store %arg7[%c0_134, %c309], %159 {strides = array<i32>} : memref<8x464xf32, #tpu.memory_space<vmem>>, vector<8x9xf32>,
    %c0_135 = arith.constant 0 : index
    %c594 = arith.constant 594 : index
    %161 = vector.load %arg6[%c0_135, %c594] : memref<8x781xf32, #tpu.memory_space<vmem>>, vector<8x9xf32>
    %c0_136 = arith.constant 0 : index
    %c342 = arith.constant 342 : index
    %162 = vector.load %arg7[%c0_136, %c342] : memref<8x464xf32, #tpu.memory_space<vmem>>, vector<8x9xf32>
    tpu.vector_store %arg7[%c0_136, %c342], %161 {strides = array<i32>} : memref<8x464xf32, #tpu.memory_space<vmem>>, vector<8x9xf32>,
    %c0_137 = arith.constant 0 : index
    %c616 = arith.constant 616 : index
    %163 = vector.load %arg6[%c0_137, %c616] : memref<8x781xf32, #tpu.memory_space<vmem>>, vector<8x9xf32>
    %c0_138 = arith.constant 0 : index
    %c353 = arith.constant 353 : index
    %164 = vector.load %arg7[%c0_138, %c353] : memref<8x464xf32, #tpu.memory_space<vmem>>, vector<8x9xf32>
    tpu.vector_store %arg7[%c0_138, %c353], %163 {strides = array<i32>} : memref<8x464xf32, #tpu.memory_space<vmem>>, vector<8x9xf32>,
    %c0_139 = arith.constant 0 : index
    %c638 = arith.constant 638 : index
    %165 = vector.load %arg6[%c0_139, %c638] : memref<8x781xf32, #tpu.memory_space<vmem>>, vector<8x9xf32>
    %c0_140 = arith.constant 0 : index
    %c364 = arith.constant 364 : index
    %166 = vector.load %arg7[%c0_140, %c364] : memref<8x464xf32, #tpu.memory_space<vmem>>, vector<8x9xf32>
    tpu.vector_store %arg7[%c0_140, %c364], %165 {strides = array<i32>} : memref<8x464xf32, #tpu.memory_space<vmem>>, vector<8x9xf32>,
    %c0_141 = arith.constant 0 : index
    %c660 = arith.constant 660 : index
    %167 = vector.load %arg6[%c0_141, %c660] : memref<8x781xf32, #tpu.memory_space<vmem>>, vector<8x9xf32>
    %c0_142 = arith.constant 0 : index
    %c375 = arith.constant 375 : index
    %168 = vector.load %arg7[%c0_142, %c375] : memref<8x464xf32, #tpu.memory_space<vmem>>, vector<8x9xf32>
    tpu.vector_store %arg7[%c0_142, %c375], %167 {strides = array<i32>} : memref<8x464xf32, #tpu.memory_space<vmem>>, vector<8x9xf32>,
    %c0_143 = arith.constant 0 : index
    %c682 = arith.constant 682 : index
    %169 = vector.load %arg6[%c0_143, %c682] : memref<8x781xf32, #tpu.memory_space<vmem>>, vector<8x9xf32>
    %c0_144 = arith.constant 0 : index
    %c386 = arith.constant 386 : index
    %170 = vector.load %arg7[%c0_144, %c386] : memref<8x464xf32, #tpu.memory_space<vmem>>, vector<8x9xf32>
    tpu.vector_store %arg7[%c0_144, %c386], %169 {strides = array<i32>} : memref<8x464xf32, #tpu.memory_space<vmem>>, vector<8x9xf32>,
    %c0_145 = arith.constant 0 : index
    %c704 = arith.constant 704 : index
    %171 = vector.load %arg6[%c0_145, %c704] : memref<8x781xf32, #tpu.memory_space<vmem>>, vector<8x9xf32>
    %c0_146 = arith.constant 0 : index
    %c397 = arith.constant 397 : index
    %172 = vector.load %arg7[%c0_146, %c397] : memref<8x464xf32, #tpu.memory_space<vmem>>, vector<8x9xf32>
    tpu.vector_store %arg7[%c0_146, %c397], %171 {strides = array<i32>} : memref<8x464xf32, #tpu.memory_space<vmem>>, vector<8x9xf32>,
    %c0_147 = arith.constant 0 : index
    %c726 = arith.constant 726 : index
    %173 = vector.load %arg6[%c0_147, %c726] : memref<8x781xf32, #tpu.memory_space<vmem>>, vector<8x9xf32>
    %c0_148 = arith.constant 0 : index
    %c408 = arith.constant 408 : index
    %174 = vector.load %arg7[%c0_148, %c408] : memref<8x464xf32, #tpu.memory_space<vmem>>, vector<8x9xf32>
    tpu.vector_store %arg7[%c0_148, %c408], %173 {strides = array<i32>} : memref<8x464xf32, #tpu.memory_space<vmem>>, vector<8x9xf32>,
    %c0_149 = arith.constant 0 : index
    %c748 = arith.constant 748 : index
    %175 = vector.load %arg6[%c0_149, %c748] : memref<8x781xf32, #tpu.memory_space<vmem>>, vector<8x9xf32>
    %c0_150 = arith.constant 0 : index
    %c419 = arith.constant 419 : index
    %176 = vector.load %arg7[%c0_150, %c419] : memref<8x464xf32, #tpu.memory_space<vmem>>, vector<8x9xf32>
    tpu.vector_store %arg7[%c0_150, %c419], %175 {strides = array<i32>} : memref<8x464xf32, #tpu.memory_space<vmem>>, vector<8x9xf32>,
    %c0_151 = arith.constant 0 : index
    %c96 = arith.constant 96 : index
    %177 = vector.load %arg1[%c0_151, %c96] : memref<16x272xf32, #tpu.memory_space<vmem>>, vector<8x8xf32>
    %c0_152 = arith.constant 0 : index
    %c0_153 = arith.constant 0 : index
    %178 = vector.load %arg7[%c0_152, %c0_153] : memref<8x464xf32, #tpu.memory_space<vmem>>, vector<8x440xf32>
    %cst_154 = arith.constant dense<0.000000e+00> : vector<8x440xf32>
    %179 = tpu.matmul %177, %178, %cst_154 {dimension_numbers = #tpu.dot_dimension_numbers<[1], [0], [0], [1], [0, 0, 1, 1], [], []>} : vector<8x8xf32>, vector<8x440xf32>, vector<8x440xf32> -> vector<8x440xf32>
    %c0_155 = arith.constant 0 : index
    %c104 = arith.constant 104 : index
    %180 = vector.load %arg1[%c0_155, %c104] : memref<16x272xf32, #tpu.memory_space<vmem>>, vector<8x8xf32>
    %c0_156 = arith.constant 0 : index
    %c1_157 = arith.constant 1 : index
    %181 = vector.load %arg7[%c0_156, %c1_157] : memref<8x464xf32, #tpu.memory_space<vmem>>, vector<8x440xf32>
    %cst_158 = arith.constant dense<0.000000e+00> : vector<8x440xf32>
    %182 = tpu.matmul %180, %181, %cst_158 {dimension_numbers = #tpu.dot_dimension_numbers<[1], [0], [0], [1], [0, 0, 1, 1], [], []>} : vector<8x8xf32>, vector<8x440xf32>, vector<8x440xf32> -> vector<8x440xf32>
    %183 = arith.addf %179, %182 : vector<8x440xf32>
    %c0_159 = arith.constant 0 : index
    %c112 = arith.constant 112 : index
    %184 = vector.load %arg1[%c0_159, %c112] : memref<16x272xf32, #tpu.memory_space<vmem>>, vector<8x8xf32>
    %c0_160 = arith.constant 0 : index
    %c2_161 = arith.constant 2 : index
    %185 = vector.load %arg7[%c0_160, %c2_161] : memref<8x464xf32, #tpu.memory_space<vmem>>, vector<8x440xf32>
    %cst_162 = arith.constant dense<0.000000e+00> : vector<8x440xf32>
    %186 = tpu.matmul %184, %185, %cst_162 {dimension_numbers = #tpu.dot_dimension_numbers<[1], [0], [0], [1], [0, 0, 1, 1], [], []>} : vector<8x8xf32>, vector<8x440xf32>, vector<8x440xf32> -> vector<8x440xf32>
    %187 = arith.addf %183, %186 : vector<8x440xf32>
    %c0_163 = arith.constant 0 : index
    %c120 = arith.constant 120 : index
    %188 = vector.load %arg1[%c0_163, %c120] : memref<16x272xf32, #tpu.memory_space<vmem>>, vector<8x8xf32>
    %c0_164 = arith.constant 0 : index
    %c11_165 = arith.constant 11 : index
    %189 = vector.load %arg7[%c0_164, %c11_165] : memref<8x464xf32, #tpu.memory_space<vmem>>, vector<8x440xf32>
    %cst_166 = arith.constant dense<0.000000e+00> : vector<8x440xf32>
    %190 = tpu.matmul %188, %189, %cst_166 {dimension_numbers = #tpu.dot_dimension_numbers<[1], [0], [0], [1], [0, 0, 1, 1], [], []>} : vector<8x8xf32>, vector<8x440xf32>, vector<8x440xf32> -> vector<8x440xf32>
    %191 = arith.addf %187, %190 : vector<8x440xf32>
    %c0_167 = arith.constant 0 : index
    %c128 = arith.constant 128 : index
    %192 = vector.load %arg1[%c0_167, %c128] : memref<16x272xf32, #tpu.memory_space<vmem>>, vector<8x8xf32>
    %c0_168 = arith.constant 0 : index
    %c12_169 = arith.constant 12 : index
    %193 = vector.load %arg7[%c0_168, %c12_169] : memref<8x464xf32, #tpu.memory_space<vmem>>, vector<8x440xf32>
    %cst_170 = arith.constant dense<0.000000e+00> : vector<8x440xf32>
    %194 = tpu.matmul %192, %193, %cst_170 {dimension_numbers = #tpu.dot_dimension_numbers<[1], [0], [0], [1], [0, 0, 1, 1], [], []>} : vector<8x8xf32>, vector<8x440xf32>, vector<8x440xf32> -> vector<8x440xf32>
    %195 = arith.addf %191, %194 : vector<8x440xf32>
    %c0_171 = arith.constant 0 : index
    %c136 = arith.constant 136 : index
    %196 = vector.load %arg1[%c0_171, %c136] : memref<16x272xf32, #tpu.memory_space<vmem>>, vector<8x8xf32>
    %c0_172 = arith.constant 0 : index
    %c13_173 = arith.constant 13 : index
    %197 = vector.load %arg7[%c0_172, %c13_173] : memref<8x464xf32, #tpu.memory_space<vmem>>, vector<8x440xf32>
    %cst_174 = arith.constant dense<0.000000e+00> : vector<8x440xf32>
    %198 = tpu.matmul %196, %197, %cst_174 {dimension_numbers = #tpu.dot_dimension_numbers<[1], [0], [0], [1], [0, 0, 1, 1], [], []>} : vector<8x8xf32>, vector<8x440xf32>, vector<8x440xf32> -> vector<8x440xf32>
    %199 = arith.addf %195, %198 : vector<8x440xf32>
    %c0_175 = arith.constant 0 : index
    %c144_176 = arith.constant 144 : index
    %200 = vector.load %arg1[%c0_175, %c144_176] : memref<16x272xf32, #tpu.memory_space<vmem>>, vector<8x8xf32>
    %c0_177 = arith.constant 0 : index
    %c22_178 = arith.constant 22 : index
    %201 = vector.load %arg7[%c0_177, %c22_178] : memref<8x464xf32, #tpu.memory_space<vmem>>, vector<8x440xf32>
    %cst_179 = arith.constant dense<0.000000e+00> : vector<8x440xf32>
    %202 = tpu.matmul %200, %201, %cst_179 {dimension_numbers = #tpu.dot_dimension_numbers<[1], [0], [0], [1], [0, 0, 1, 1], [], []>} : vector<8x8xf32>, vector<8x440xf32>, vector<8x440xf32> -> vector<8x440xf32>
    %203 = arith.addf %199, %202 : vector<8x440xf32>
    %c0_180 = arith.constant 0 : index
    %c152 = arith.constant 152 : index
    %204 = vector.load %arg1[%c0_180, %c152] : memref<16x272xf32, #tpu.memory_space<vmem>>, vector<8x8xf32>
    %c0_181 = arith.constant 0 : index
    %c23_182 = arith.constant 23 : index
    %205 = vector.load %arg7[%c0_181, %c23_182] : memref<8x464xf32, #tpu.memory_space<vmem>>, vector<8x440xf32>
    %cst_183 = arith.constant dense<0.000000e+00> : vector<8x440xf32>
    %206 = tpu.matmul %204, %205, %cst_183 {dimension_numbers = #tpu.dot_dimension_numbers<[1], [0], [0], [1], [0, 0, 1, 1], [], []>} : vector<8x8xf32>, vector<8x440xf32>, vector<8x440xf32> -> vector<8x440xf32>
    %207 = arith.addf %203, %206 : vector<8x440xf32>
    %c0_184 = arith.constant 0 : index
    %c160 = arith.constant 160 : index
    %208 = vector.load %arg1[%c0_184, %c160] : memref<16x272xf32, #tpu.memory_space<vmem>>, vector<8x8xf32>
    %c0_185 = arith.constant 0 : index
    %c24_186 = arith.constant 24 : index
    %209 = vector.load %arg7[%c0_185, %c24_186] : memref<8x464xf32, #tpu.memory_space<vmem>>, vector<8x440xf32>
    %cst_187 = arith.constant dense<0.000000e+00> : vector<8x440xf32>
    %210 = tpu.matmul %208, %209, %cst_187 {dimension_numbers = #tpu.dot_dimension_numbers<[1], [0], [0], [1], [0, 0, 1, 1], [], []>} : vector<8x8xf32>, vector<8x440xf32>, vector<8x440xf32> -> vector<8x440xf32>
    %211 = arith.addf %207, %210 : vector<8x440xf32>
    %c0_188 = arith.constant 0 : index
    %c168 = arith.constant 168 : index
    %212 = vector.load %arg1[%c0_188, %c168] : memref<16x272xf32, #tpu.memory_space<vmem>>, vector<8x1xf32>
    %213 = vector.broadcast %212 : vector<8x1xf32> to vector<8x440xf32>
    %214 = arith.addf %211, %213 : vector<8x440xf32>
    %cst_189 = arith.constant 0.000000e+00 : f32
    %215 = vector.broadcast %cst_189 : f32 to vector<8x440xf32>
    %216 = arith.maximumf %214, %215 : vector<8x440xf32>
    %cst_190 = arith.constant 0.000000e+00 : f32
    %217 = vector.broadcast %cst_190 : f32 to vector<8x12xf32>
    %c0_191 = arith.constant 0 : index
    %c0_192 = arith.constant 0 : index
    %218 = vector.load %arg8[%c0_191, %c0_192] : memref<8x452xf32, #tpu.memory_space<vmem>>, vector<8x12xf32>
    tpu.vector_store %arg8[%c0_191, %c0_192], %217 {strides = array<i32>} : memref<8x452xf32, #tpu.memory_space<vmem>>, vector<8x12xf32>,
    %c2_193 = arith.constant 2 : index
    %c0_194 = arith.constant 0 : index
    %219 = vector.load %arg0[%c2_193, %c0_194] : memref<8x816xf32, #tpu.memory_space<vmem>>, vector<1x440xf32>
    %220 = vector.broadcast %219 : vector<1x440xf32> to vector<8x440xf32>
    %221 = arith.mulf %216, %220 : vector<8x440xf32>
    %c0_195 = arith.constant 0 : index
    %c12_196 = arith.constant 12 : index
    %222 = vector.load %arg8[%c0_195, %c12_196] : memref<8x452xf32, #tpu.memory_space<vmem>>, vector<8x440xf32>
    tpu.vector_store %arg8[%c0_195, %c12_196], %221 {strides = array<i32>} : memref<8x452xf32, #tpu.memory_space<vmem>>, vector<8x440xf32>,
    %c0_197 = arith.constant 0 : index
    %c176 = arith.constant 176 : index
    %223 = vector.load %arg1[%c0_197, %c176] : memref<16x272xf32, #tpu.memory_space<vmem>>, vector<16x8xf32>
    %c0_198 = arith.constant 0 : index
    %c0_199 = arith.constant 0 : index
    %224 = vector.load %arg8[%c0_198, %c0_199] : memref<8x452xf32, #tpu.memory_space<vmem>>, vector<8x440xf32>
    %cst_200 = arith.constant dense<0.000000e+00> : vector<16x440xf32>
    %225 = tpu.matmul %223, %224, %cst_200 {dimension_numbers = #tpu.dot_dimension_numbers<[1], [0], [0], [1], [0, 0, 1, 1], [], []>} : vector<16x8xf32>, vector<8x440xf32>, vector<16x440xf32> -> vector<16x440xf32>
    %c0_201 = arith.constant 0 : index
    %c184 = arith.constant 184 : index
    %226 = vector.load %arg1[%c0_201, %c184] : memref<16x272xf32, #tpu.memory_space<vmem>>, vector<16x8xf32>
    %c0_202 = arith.constant 0 : index
    %c1_203 = arith.constant 1 : index
    %227 = vector.load %arg8[%c0_202, %c1_203] : memref<8x452xf32, #tpu.memory_space<vmem>>, vector<8x440xf32>
    %cst_204 = arith.constant dense<0.000000e+00> : vector<16x440xf32>
    %228 = tpu.matmul %226, %227, %cst_204 {dimension_numbers = #tpu.dot_dimension_numbers<[1], [0], [0], [1], [0, 0, 1, 1], [], []>} : vector<16x8xf32>, vector<8x440xf32>, vector<16x440xf32> -> vector<16x440xf32>
    %229 = arith.addf %225, %228 : vector<16x440xf32>
    %c0_205 = arith.constant 0 : index
    %c192 = arith.constant 192 : index
    %230 = vector.load %arg1[%c0_205, %c192] : memref<16x272xf32, #tpu.memory_space<vmem>>, vector<16x8xf32>
    %c0_206 = arith.constant 0 : index
    %c11_207 = arith.constant 11 : index
    %231 = vector.load %arg8[%c0_206, %c11_207] : memref<8x452xf32, #tpu.memory_space<vmem>>, vector<8x440xf32>
    %cst_208 = arith.constant dense<0.000000e+00> : vector<16x440xf32>
    %232 = tpu.matmul %230, %231, %cst_208 {dimension_numbers = #tpu.dot_dimension_numbers<[1], [0], [0], [1], [0, 0, 1, 1], [], []>} : vector<16x8xf32>, vector<8x440xf32>, vector<16x440xf32> -> vector<16x440xf32>
    %233 = arith.addf %229, %232 : vector<16x440xf32>
    %c0_209 = arith.constant 0 : index
    %c200 = arith.constant 200 : index
    %234 = vector.load %arg1[%c0_209, %c200] : memref<16x272xf32, #tpu.memory_space<vmem>>, vector<16x8xf32>
    %c0_210 = arith.constant 0 : index
    %c12_211 = arith.constant 12 : index
    %235 = vector.load %arg8[%c0_210, %c12_211] : memref<8x452xf32, #tpu.memory_space<vmem>>, vector<8x440xf32>
    %cst_212 = arith.constant dense<0.000000e+00> : vector<16x440xf32>
    %236 = tpu.matmul %234, %235, %cst_212 {dimension_numbers = #tpu.dot_dimension_numbers<[1], [0], [0], [1], [0, 0, 1, 1], [], []>} : vector<16x8xf32>, vector<8x440xf32>, vector<16x440xf32> -> vector<16x440xf32>
    %237 = arith.addf %233, %236 : vector<16x440xf32>
    %c0_213 = arith.constant 0 : index
    %c208 = arith.constant 208 : index
    %238 = vector.load %arg1[%c0_213, %c208] : memref<16x272xf32, #tpu.memory_space<vmem>>, vector<16x1xf32>
    %239 = vector.broadcast %238 : vector<16x1xf32> to vector<16x440xf32>
    %240 = arith.addf %237, %239 : vector<16x440xf32>
    %cst_214 = arith.constant 0.000000e+00 : f32
    %241 = vector.broadcast %cst_214 : f32 to vector<16x440xf32>
    %242 = arith.maximumf %240, %241 : vector<16x440xf32>
    %c0_215 = arith.constant 0 : index
    %c0_216 = arith.constant 0 : index
    %243 = vector.load %arg9[%c0_215, %c0_216] : memref<16x440xf32, #tpu.memory_space<vmem>>, vector<16x440xf32>
    tpu.vector_store %arg9[%c0_215, %c0_216], %242 {strides = array<i32>} : memref<16x440xf32, #tpu.memory_space<vmem>>, vector<16x440xf32>,
    %c0_217 = arith.constant 0 : index
    %c0_218 = arith.constant 0 : index
    %244 = vector.load %arg9[%c0_217, %c0_218] : memref<16x440xf32, #tpu.memory_space<vmem>>, vector<16x429xf32>
    %c0_219 = arith.constant 0 : index
    %c11_220 = arith.constant 11 : index
    %245 = vector.load %arg9[%c0_219, %c11_220] : memref<16x440xf32, #tpu.memory_space<vmem>>, vector<16x429xf32>
    %246 = arith.maximumf %244, %245 : vector<16x429xf32>
    %c0_221 = arith.constant 0 : index
    %c0_222 = arith.constant 0 : index
    %247 = vector.load %arg10[%c0_221, %c0_222] : memref<16x429xf32, #tpu.memory_space<vmem>>, vector<16x429xf32>
    tpu.vector_store %arg10[%c0_221, %c0_222], %246 {strides = array<i32>} : memref<16x429xf32, #tpu.memory_space<vmem>>, vector<16x429xf32>,
    %c0_223 = arith.constant 0 : index
    %c0_224 = arith.constant 0 : index
    %248 = vector.load %arg10[%c0_223, %c0_224] : memref<16x429xf32, #tpu.memory_space<vmem>>, vector<16x10xf32>
    %c0_225 = arith.constant 0 : index
    %c0_226 = arith.constant 0 : index
    %c0_227 = arith.constant 0 : index
    %249 = vector.load %arg11[%c0_225, %c0_226, %c0_227] : memref<16x4x40xf32, #tpu.memory_space<vmem>>, vector<16x1x10xf32>
    %250 = vector.shape_cast %249 : vector<16x1x10xf32> to vector<16x10xf32>
    %251 = vector.shape_cast %248 : vector<16x10xf32> to vector<16x1x10xf32>
    tpu.vector_store %arg11[%c0_225, %c0_226, %c0_227], %251 {strides = array<i32>} : memref<16x4x40xf32, #tpu.memory_space<vmem>>, vector<16x1x10xf32>,
    %c0_228 = arith.constant 0 : index
    %c22_229 = arith.constant 22 : index
    %252 = vector.load %arg10[%c0_228, %c22_229] : memref<16x429xf32, #tpu.memory_space<vmem>>, vector<16x10xf32>
    %c0_230 = arith.constant 0 : index
    %c0_231 = arith.constant 0 : index
    %c10 = arith.constant 10 : index
    %253 = vector.load %arg11[%c0_230, %c0_231, %c10] : memref<16x4x40xf32, #tpu.memory_space<vmem>>, vector<16x1x10xf32>
    %254 = vector.shape_cast %253 : vector<16x1x10xf32> to vector<16x10xf32>
    %255 = vector.shape_cast %252 : vector<16x10xf32> to vector<16x1x10xf32>
    tpu.vector_store %arg11[%c0_230, %c0_231, %c10], %255 {strides = array<i32>} : memref<16x4x40xf32, #tpu.memory_space<vmem>>, vector<16x1x10xf32>,
    %c0_232 = arith.constant 0 : index
    %c44_233 = arith.constant 44 : index
    %256 = vector.load %arg10[%c0_232, %c44_233] : memref<16x429xf32, #tpu.memory_space<vmem>>, vector<16x10xf32>
    %c0_234 = arith.constant 0 : index
    %c0_235 = arith.constant 0 : index
    %c20 = arith.constant 20 : index
    %257 = vector.load %arg11[%c0_234, %c0_235, %c20] : memref<16x4x40xf32, #tpu.memory_space<vmem>>, vector<16x1x10xf32>
    %258 = vector.shape_cast %257 : vector<16x1x10xf32> to vector<16x10xf32>
    %259 = vector.shape_cast %256 : vector<16x10xf32> to vector<16x1x10xf32>
    tpu.vector_store %arg11[%c0_234, %c0_235, %c20], %259 {strides = array<i32>} : memref<16x4x40xf32, #tpu.memory_space<vmem>>, vector<16x1x10xf32>,
    %c0_236 = arith.constant 0 : index
    %c66_237 = arith.constant 66 : index
    %260 = vector.load %arg10[%c0_236, %c66_237] : memref<16x429xf32, #tpu.memory_space<vmem>>, vector<16x10xf32>
    %c0_238 = arith.constant 0 : index
    %c0_239 = arith.constant 0 : index
    %c30 = arith.constant 30 : index
    %261 = vector.load %arg11[%c0_238, %c0_239, %c30] : memref<16x4x40xf32, #tpu.memory_space<vmem>>, vector<16x1x10xf32>
    %262 = vector.shape_cast %261 : vector<16x1x10xf32> to vector<16x10xf32>
    %263 = vector.shape_cast %260 : vector<16x10xf32> to vector<16x1x10xf32>
    tpu.vector_store %arg11[%c0_238, %c0_239, %c30], %263 {strides = array<i32>} : memref<16x4x40xf32, #tpu.memory_space<vmem>>, vector<16x1x10xf32>,
    %c0_240 = arith.constant 0 : index
    %c110_241 = arith.constant 110 : index
    %264 = vector.load %arg10[%c0_240, %c110_241] : memref<16x429xf32, #tpu.memory_space<vmem>>, vector<16x10xf32>
    %c0_242 = arith.constant 0 : index
    %c1_243 = arith.constant 1 : index
    %c0_244 = arith.constant 0 : index
    %265 = vector.load %arg11[%c0_242, %c1_243, %c0_244] : memref<16x4x40xf32, #tpu.memory_space<vmem>>, vector<16x1x10xf32>
    %266 = vector.shape_cast %265 : vector<16x1x10xf32> to vector<16x10xf32>
    %267 = vector.shape_cast %264 : vector<16x10xf32> to vector<16x1x10xf32>
    tpu.vector_store %arg11[%c0_242, %c1_243, %c0_244], %267 {strides = array<i32>} : memref<16x4x40xf32, #tpu.memory_space<vmem>>, vector<16x1x10xf32>,
    %c0_245 = arith.constant 0 : index
    %c132_246 = arith.constant 132 : index
    %268 = vector.load %arg10[%c0_245, %c132_246] : memref<16x429xf32, #tpu.memory_space<vmem>>, vector<16x10xf32>
    %c0_247 = arith.constant 0 : index
    %c1_248 = arith.constant 1 : index
    %c10_249 = arith.constant 10 : index
    %269 = vector.load %arg11[%c0_247, %c1_248, %c10_249] : memref<16x4x40xf32, #tpu.memory_space<vmem>>, vector<16x1x10xf32>
    %270 = vector.shape_cast %269 : vector<16x1x10xf32> to vector<16x10xf32>
    %271 = vector.shape_cast %268 : vector<16x10xf32> to vector<16x1x10xf32>
    tpu.vector_store %arg11[%c0_247, %c1_248, %c10_249], %271 {strides = array<i32>} : memref<16x4x40xf32, #tpu.memory_space<vmem>>, vector<16x1x10xf32>,
    %c0_250 = arith.constant 0 : index
    %c154_251 = arith.constant 154 : index
    %272 = vector.load %arg10[%c0_250, %c154_251] : memref<16x429xf32, #tpu.memory_space<vmem>>, vector<16x10xf32>
    %c0_252 = arith.constant 0 : index
    %c1_253 = arith.constant 1 : index
    %c20_254 = arith.constant 20 : index
    %273 = vector.load %arg11[%c0_252, %c1_253, %c20_254] : memref<16x4x40xf32, #tpu.memory_space<vmem>>, vector<16x1x10xf32>
    %274 = vector.shape_cast %273 : vector<16x1x10xf32> to vector<16x10xf32>
    %275 = vector.shape_cast %272 : vector<16x10xf32> to vector<16x1x10xf32>
    tpu.vector_store %arg11[%c0_252, %c1_253, %c20_254], %275 {strides = array<i32>} : memref<16x4x40xf32, #tpu.memory_space<vmem>>, vector<16x1x10xf32>,
    %c0_255 = arith.constant 0 : index
    %c176_256 = arith.constant 176 : index
    %276 = vector.load %arg10[%c0_255, %c176_256] : memref<16x429xf32, #tpu.memory_space<vmem>>, vector<16x10xf32>
    %c0_257 = arith.constant 0 : index
    %c1_258 = arith.constant 1 : index
    %c30_259 = arith.constant 30 : index
    %277 = vector.load %arg11[%c0_257, %c1_258, %c30_259] : memref<16x4x40xf32, #tpu.memory_space<vmem>>, vector<16x1x10xf32>
    %278 = vector.shape_cast %277 : vector<16x1x10xf32> to vector<16x10xf32>
    %279 = vector.shape_cast %276 : vector<16x10xf32> to vector<16x1x10xf32>
    tpu.vector_store %arg11[%c0_257, %c1_258, %c30_259], %279 {strides = array<i32>} : memref<16x4x40xf32, #tpu.memory_space<vmem>>, vector<16x1x10xf32>,
    %c0_260 = arith.constant 0 : index
    %c220_261 = arith.constant 220 : index
    %280 = vector.load %arg10[%c0_260, %c220_261] : memref<16x429xf32, #tpu.memory_space<vmem>>, vector<16x10xf32>
    %c0_262 = arith.constant 0 : index
    %c2_263 = arith.constant 2 : index
    %c0_264 = arith.constant 0 : index
    %281 = vector.load %arg11[%c0_262, %c2_263, %c0_264] : memref<16x4x40xf32, #tpu.memory_space<vmem>>, vector<16x1x10xf32>
    %282 = vector.shape_cast %281 : vector<16x1x10xf32> to vector<16x10xf32>
    %283 = vector.shape_cast %280 : vector<16x10xf32> to vector<16x1x10xf32>
    tpu.vector_store %arg11[%c0_262, %c2_263, %c0_264], %283 {strides = array<i32>} : memref<16x4x40xf32, #tpu.memory_space<vmem>>, vector<16x1x10xf32>,
    %c0_265 = arith.constant 0 : index
    %c242_266 = arith.constant 242 : index
    %284 = vector.load %arg10[%c0_265, %c242_266] : memref<16x429xf32, #tpu.memory_space<vmem>>, vector<16x10xf32>
    %c0_267 = arith.constant 0 : index
    %c2_268 = arith.constant 2 : index
    %c10_269 = arith.constant 10 : index
    %285 = vector.load %arg11[%c0_267, %c2_268, %c10_269] : memref<16x4x40xf32, #tpu.memory_space<vmem>>, vector<16x1x10xf32>
    %286 = vector.shape_cast %285 : vector<16x1x10xf32> to vector<16x10xf32>
    %287 = vector.shape_cast %284 : vector<16x10xf32> to vector<16x1x10xf32>
    tpu.vector_store %arg11[%c0_267, %c2_268, %c10_269], %287 {strides = array<i32>} : memref<16x4x40xf32, #tpu.memory_space<vmem>>, vector<16x1x10xf32>,
    %c0_270 = arith.constant 0 : index
    %c264_271 = arith.constant 264 : index
    %288 = vector.load %arg10[%c0_270, %c264_271] : memref<16x429xf32, #tpu.memory_space<vmem>>, vector<16x10xf32>
    %c0_272 = arith.constant 0 : index
    %c2_273 = arith.constant 2 : index
    %c20_274 = arith.constant 20 : index
    %289 = vector.load %arg11[%c0_272, %c2_273, %c20_274] : memref<16x4x40xf32, #tpu.memory_space<vmem>>, vector<16x1x10xf32>
    %290 = vector.shape_cast %289 : vector<16x1x10xf32> to vector<16x10xf32>
    %291 = vector.shape_cast %288 : vector<16x10xf32> to vector<16x1x10xf32>
    tpu.vector_store %arg11[%c0_272, %c2_273, %c20_274], %291 {strides = array<i32>} : memref<16x4x40xf32, #tpu.memory_space<vmem>>, vector<16x1x10xf32>,
    %c0_275 = arith.constant 0 : index
    %c286_276 = arith.constant 286 : index
    %292 = vector.load %arg10[%c0_275, %c286_276] : memref<16x429xf32, #tpu.memory_space<vmem>>, vector<16x10xf32>
    %c0_277 = arith.constant 0 : index
    %c2_278 = arith.constant 2 : index
    %c30_279 = arith.constant 30 : index
    %293 = vector.load %arg11[%c0_277, %c2_278, %c30_279] : memref<16x4x40xf32, #tpu.memory_space<vmem>>, vector<16x1x10xf32>
    %294 = vector.shape_cast %293 : vector<16x1x10xf32> to vector<16x10xf32>
    %295 = vector.shape_cast %292 : vector<16x10xf32> to vector<16x1x10xf32>
    tpu.vector_store %arg11[%c0_277, %c2_278, %c30_279], %295 {strides = array<i32>} : memref<16x4x40xf32, #tpu.memory_space<vmem>>, vector<16x1x10xf32>,
    %c0_280 = arith.constant 0 : index
    %c330_281 = arith.constant 330 : index
    %296 = vector.load %arg10[%c0_280, %c330_281] : memref<16x429xf32, #tpu.memory_space<vmem>>, vector<16x10xf32>
    %c0_282 = arith.constant 0 : index
    %c3_283 = arith.constant 3 : index
    %c0_284 = arith.constant 0 : index
    %297 = vector.load %arg11[%c0_282, %c3_283, %c0_284] : memref<16x4x40xf32, #tpu.memory_space<vmem>>, vector<16x1x10xf32>
    %298 = vector.shape_cast %297 : vector<16x1x10xf32> to vector<16x10xf32>
    %299 = vector.shape_cast %296 : vector<16x10xf32> to vector<16x1x10xf32>
    tpu.vector_store %arg11[%c0_282, %c3_283, %c0_284], %299 {strides = array<i32>} : memref<16x4x40xf32, #tpu.memory_space<vmem>>, vector<16x1x10xf32>,
    %c0_285 = arith.constant 0 : index
    %c352_286 = arith.constant 352 : index
    %300 = vector.load %arg10[%c0_285, %c352_286] : memref<16x429xf32, #tpu.memory_space<vmem>>, vector<16x10xf32>
    %c0_287 = arith.constant 0 : index
    %c3_288 = arith.constant 3 : index
    %c10_289 = arith.constant 10 : index
    %301 = vector.load %arg11[%c0_287, %c3_288, %c10_289] : memref<16x4x40xf32, #tpu.memory_space<vmem>>, vector<16x1x10xf32>
    %302 = vector.shape_cast %301 : vector<16x1x10xf32> to vector<16x10xf32>
    %303 = vector.shape_cast %300 : vector<16x10xf32> to vector<16x1x10xf32>
    tpu.vector_store %arg11[%c0_287, %c3_288, %c10_289], %303 {strides = array<i32>} : memref<16x4x40xf32, #tpu.memory_space<vmem>>, vector<16x1x10xf32>,
    %c0_290 = arith.constant 0 : index
    %c374 = arith.constant 374 : index
    %304 = vector.load %arg10[%c0_290, %c374] : memref<16x429xf32, #tpu.memory_space<vmem>>, vector<16x10xf32>
    %c0_291 = arith.constant 0 : index
    %c3_292 = arith.constant 3 : index
    %c20_293 = arith.constant 20 : index
    %305 = vector.load %arg11[%c0_291, %c3_292, %c20_293] : memref<16x4x40xf32, #tpu.memory_space<vmem>>, vector<16x1x10xf32>
    %306 = vector.shape_cast %305 : vector<16x1x10xf32> to vector<16x10xf32>
    %307 = vector.shape_cast %304 : vector<16x10xf32> to vector<16x1x10xf32>
    tpu.vector_store %arg11[%c0_291, %c3_292, %c20_293], %307 {strides = array<i32>} : memref<16x4x40xf32, #tpu.memory_space<vmem>>, vector<16x1x10xf32>,
    %c0_294 = arith.constant 0 : index
    %c396_295 = arith.constant 396 : index
    %308 = vector.load %arg10[%c0_294, %c396_295] : memref<16x429xf32, #tpu.memory_space<vmem>>, vector<16x10xf32>
    %c0_296 = arith.constant 0 : index
    %c3_297 = arith.constant 3 : index
    %c30_298 = arith.constant 30 : index
    %309 = vector.load %arg11[%c0_296, %c3_297, %c30_298] : memref<16x4x40xf32, #tpu.memory_space<vmem>>, vector<16x1x10xf32>
    %310 = vector.shape_cast %309 : vector<16x1x10xf32> to vector<16x10xf32>
    %311 = vector.shape_cast %308 : vector<16x10xf32> to vector<16x1x10xf32>
    tpu.vector_store %arg11[%c0_296, %c3_297, %c30_298], %311 {strides = array<i32>} : memref<16x4x40xf32, #tpu.memory_space<vmem>>, vector<16x1x10xf32>,
    %c0_299 = arith.constant 0 : index
    %c0_300 = arith.constant 0 : index
    %c0_301 = arith.constant 0 : index
    %312 = vector.load %arg11[%c0_299, %c0_300, %c0_301] : memref<16x4x40xf32, #tpu.memory_space<vmem>>, vector<1x4x40xf32>
    %313 = vector.shape_cast %312 : vector<1x4x40xf32> to vector<4x40xf32>
    %c0_302 = arith.constant 0 : index
    %c0_303 = arith.constant 0 : index
    %314 = vector.load %arg2[%c0_302, %c0_303] : memref<640x16xf32, #tpu.memory_space<vmem>>, vector<40x16xf32>
    %cst_304 = arith.constant dense<0.000000e+00> : vector<4x16xf32>
    %315 = tpu.matmul %313, %314, %cst_304 {dimension_numbers = #tpu.dot_dimension_numbers<[1], [0], [0], [1], [0, 0, 1, 1], [], []>} : vector<4x40xf32>, vector<40x16xf32>, vector<4x16xf32> -> vector<4x16xf32>
    %c1_305 = arith.constant 1 : index
    %c0_306 = arith.constant 0 : index
    %c0_307 = arith.constant 0 : index
    %316 = vector.load %arg11[%c1_305, %c0_306, %c0_307] : memref<16x4x40xf32, #tpu.memory_space<vmem>>, vector<1x4x40xf32>
    %317 = vector.shape_cast %316 : vector<1x4x40xf32> to vector<4x40xf32>
    %c40_308 = arith.constant 40 : index
    %c0_309 = arith.constant 0 : index
    %318 = vector.load %arg2[%c40_308, %c0_309] : memref<640x16xf32, #tpu.memory_space<vmem>>, vector<40x16xf32>
    %cst_310 = arith.constant dense<0.000000e+00> : vector<4x16xf32>
    %319 = tpu.matmul %317, %318, %cst_310 {dimension_numbers = #tpu.dot_dimension_numbers<[1], [0], [0], [1], [0, 0, 1, 1], [], []>} : vector<4x40xf32>, vector<40x16xf32>, vector<4x16xf32> -> vector<4x16xf32>
    %320 = arith.addf %315, %319 : vector<4x16xf32>
    %c2_311 = arith.constant 2 : index
    %c0_312 = arith.constant 0 : index
    %c0_313 = arith.constant 0 : index
    %321 = vector.load %arg11[%c2_311, %c0_312, %c0_313] : memref<16x4x40xf32, #tpu.memory_space<vmem>>, vector<1x4x40xf32>
    %322 = vector.shape_cast %321 : vector<1x4x40xf32> to vector<4x40xf32>
    %c80_314 = arith.constant 80 : index
    %c0_315 = arith.constant 0 : index
    %323 = vector.load %arg2[%c80_314, %c0_315] : memref<640x16xf32, #tpu.memory_space<vmem>>, vector<40x16xf32>
    %cst_316 = arith.constant dense<0.000000e+00> : vector<4x16xf32>
    %324 = tpu.matmul %322, %323, %cst_316 {dimension_numbers = #tpu.dot_dimension_numbers<[1], [0], [0], [1], [0, 0, 1, 1], [], []>} : vector<4x40xf32>, vector<40x16xf32>, vector<4x16xf32> -> vector<4x16xf32>
    %325 = arith.addf %320, %324 : vector<4x16xf32>
    %c3_317 = arith.constant 3 : index
    %c0_318 = arith.constant 0 : index
    %c0_319 = arith.constant 0 : index
    %326 = vector.load %arg11[%c3_317, %c0_318, %c0_319] : memref<16x4x40xf32, #tpu.memory_space<vmem>>, vector<1x4x40xf32>
    %327 = vector.shape_cast %326 : vector<1x4x40xf32> to vector<4x40xf32>
    %c120_320 = arith.constant 120 : index
    %c0_321 = arith.constant 0 : index
    %328 = vector.load %arg2[%c120_320, %c0_321] : memref<640x16xf32, #tpu.memory_space<vmem>>, vector<40x16xf32>
    %cst_322 = arith.constant dense<0.000000e+00> : vector<4x16xf32>
    %329 = tpu.matmul %327, %328, %cst_322 {dimension_numbers = #tpu.dot_dimension_numbers<[1], [0], [0], [1], [0, 0, 1, 1], [], []>} : vector<4x40xf32>, vector<40x16xf32>, vector<4x16xf32> -> vector<4x16xf32>
    %330 = arith.addf %325, %329 : vector<4x16xf32>
    %c4_323 = arith.constant 4 : index
    %c0_324 = arith.constant 0 : index
    %c0_325 = arith.constant 0 : index
    %331 = vector.load %arg11[%c4_323, %c0_324, %c0_325] : memref<16x4x40xf32, #tpu.memory_space<vmem>>, vector<1x4x40xf32>
    %332 = vector.shape_cast %331 : vector<1x4x40xf32> to vector<4x40xf32>
    %c160_326 = arith.constant 160 : index
    %c0_327 = arith.constant 0 : index
    %333 = vector.load %arg2[%c160_326, %c0_327] : memref<640x16xf32, #tpu.memory_space<vmem>>, vector<40x16xf32>
    %cst_328 = arith.constant dense<0.000000e+00> : vector<4x16xf32>
    %334 = tpu.matmul %332, %333, %cst_328 {dimension_numbers = #tpu.dot_dimension_numbers<[1], [0], [0], [1], [0, 0, 1, 1], [], []>} : vector<4x40xf32>, vector<40x16xf32>, vector<4x16xf32> -> vector<4x16xf32>
    %335 = arith.addf %330, %334 : vector<4x16xf32>
    %c5_329 = arith.constant 5 : index
    %c0_330 = arith.constant 0 : index
    %c0_331 = arith.constant 0 : index
    %336 = vector.load %arg11[%c5_329, %c0_330, %c0_331] : memref<16x4x40xf32, #tpu.memory_space<vmem>>, vector<1x4x40xf32>
    %337 = vector.shape_cast %336 : vector<1x4x40xf32> to vector<4x40xf32>
    %c200_332 = arith.constant 200 : index
    %c0_333 = arith.constant 0 : index
    %338 = vector.load %arg2[%c200_332, %c0_333] : memref<640x16xf32, #tpu.memory_space<vmem>>, vector<40x16xf32>
    %cst_334 = arith.constant dense<0.000000e+00> : vector<4x16xf32>
    %339 = tpu.matmul %337, %338, %cst_334 {dimension_numbers = #tpu.dot_dimension_numbers<[1], [0], [0], [1], [0, 0, 1, 1], [], []>} : vector<4x40xf32>, vector<40x16xf32>, vector<4x16xf32> -> vector<4x16xf32>
    %340 = arith.addf %335, %339 : vector<4x16xf32>
    %c6_335 = arith.constant 6 : index
    %c0_336 = arith.constant 0 : index
    %c0_337 = arith.constant 0 : index
    %341 = vector.load %arg11[%c6_335, %c0_336, %c0_337] : memref<16x4x40xf32, #tpu.memory_space<vmem>>, vector<1x4x40xf32>
    %342 = vector.shape_cast %341 : vector<1x4x40xf32> to vector<4x40xf32>
    %c240 = arith.constant 240 : index
    %c0_338 = arith.constant 0 : index
    %343 = vector.load %arg2[%c240, %c0_338] : memref<640x16xf32, #tpu.memory_space<vmem>>, vector<40x16xf32>
    %cst_339 = arith.constant dense<0.000000e+00> : vector<4x16xf32>
    %344 = tpu.matmul %342, %343, %cst_339 {dimension_numbers = #tpu.dot_dimension_numbers<[1], [0], [0], [1], [0, 0, 1, 1], [], []>} : vector<4x40xf32>, vector<40x16xf32>, vector<4x16xf32> -> vector<4x16xf32>
    %345 = arith.addf %340, %344 : vector<4x16xf32>
    %c7_340 = arith.constant 7 : index
    %c0_341 = arith.constant 0 : index
    %c0_342 = arith.constant 0 : index
    %346 = vector.load %arg11[%c7_340, %c0_341, %c0_342] : memref<16x4x40xf32, #tpu.memory_space<vmem>>, vector<1x4x40xf32>
    %347 = vector.shape_cast %346 : vector<1x4x40xf32> to vector<4x40xf32>
    %c280 = arith.constant 280 : index
    %c0_343 = arith.constant 0 : index
    %348 = vector.load %arg2[%c280, %c0_343] : memref<640x16xf32, #tpu.memory_space<vmem>>, vector<40x16xf32>
    %cst_344 = arith.constant dense<0.000000e+00> : vector<4x16xf32>
    %349 = tpu.matmul %347, %348, %cst_344 {dimension_numbers = #tpu.dot_dimension_numbers<[1], [0], [0], [1], [0, 0, 1, 1], [], []>} : vector<4x40xf32>, vector<40x16xf32>, vector<4x16xf32> -> vector<4x16xf32>
    %350 = arith.addf %345, %349 : vector<4x16xf32>
    %c8_345 = arith.constant 8 : index
    %c0_346 = arith.constant 0 : index
    %c0_347 = arith.constant 0 : index
    %351 = vector.load %arg11[%c8_345, %c0_346, %c0_347] : memref<16x4x40xf32, #tpu.memory_space<vmem>>, vector<1x4x40xf32>
    %352 = vector.shape_cast %351 : vector<1x4x40xf32> to vector<4x40xf32>
    %c320 = arith.constant 320 : index
    %c0_348 = arith.constant 0 : index
    %353 = vector.load %arg2[%c320, %c0_348] : memref<640x16xf32, #tpu.memory_space<vmem>>, vector<40x16xf32>
    %cst_349 = arith.constant dense<0.000000e+00> : vector<4x16xf32>
    %354 = tpu.matmul %352, %353, %cst_349 {dimension_numbers = #tpu.dot_dimension_numbers<[1], [0], [0], [1], [0, 0, 1, 1], [], []>} : vector<4x40xf32>, vector<40x16xf32>, vector<4x16xf32> -> vector<4x16xf32>
    %355 = arith.addf %350, %354 : vector<4x16xf32>
    %c9_350 = arith.constant 9 : index
    %c0_351 = arith.constant 0 : index
    %c0_352 = arith.constant 0 : index
    %356 = vector.load %arg11[%c9_350, %c0_351, %c0_352] : memref<16x4x40xf32, #tpu.memory_space<vmem>>, vector<1x4x40xf32>
    %357 = vector.shape_cast %356 : vector<1x4x40xf32> to vector<4x40xf32>
    %c360 = arith.constant 360 : index
    %c0_353 = arith.constant 0 : index
    %358 = vector.load %arg2[%c360, %c0_353] : memref<640x16xf32, #tpu.memory_space<vmem>>, vector<40x16xf32>
    %cst_354 = arith.constant dense<0.000000e+00> : vector<4x16xf32>
    %359 = tpu.matmul %357, %358, %cst_354 {dimension_numbers = #tpu.dot_dimension_numbers<[1], [0], [0], [1], [0, 0, 1, 1], [], []>} : vector<4x40xf32>, vector<40x16xf32>, vector<4x16xf32> -> vector<4x16xf32>
    %360 = arith.addf %355, %359 : vector<4x16xf32>
    %c10_355 = arith.constant 10 : index
    %c0_356 = arith.constant 0 : index
    %c0_357 = arith.constant 0 : index
    %361 = vector.load %arg11[%c10_355, %c0_356, %c0_357] : memref<16x4x40xf32, #tpu.memory_space<vmem>>, vector<1x4x40xf32>
    %362 = vector.shape_cast %361 : vector<1x4x40xf32> to vector<4x40xf32>
    %c400 = arith.constant 400 : index
    %c0_358 = arith.constant 0 : index
    %363 = vector.load %arg2[%c400, %c0_358] : memref<640x16xf32, #tpu.memory_space<vmem>>, vector<40x16xf32>
    %cst_359 = arith.constant dense<0.000000e+00> : vector<4x16xf32>
    %364 = tpu.matmul %362, %363, %cst_359 {dimension_numbers = #tpu.dot_dimension_numbers<[1], [0], [0], [1], [0, 0, 1, 1], [], []>} : vector<4x40xf32>, vector<40x16xf32>, vector<4x16xf32> -> vector<4x16xf32>
    %365 = arith.addf %360, %364 : vector<4x16xf32>
    %c11_360 = arith.constant 11 : index
    %c0_361 = arith.constant 0 : index
    %c0_362 = arith.constant 0 : index
    %366 = vector.load %arg11[%c11_360, %c0_361, %c0_362] : memref<16x4x40xf32, #tpu.memory_space<vmem>>, vector<1x4x40xf32>
    %367 = vector.shape_cast %366 : vector<1x4x40xf32> to vector<4x40xf32>
    %c440_363 = arith.constant 440 : index
    %c0_364 = arith.constant 0 : index
    %368 = vector.load %arg2[%c440_363, %c0_364] : memref<640x16xf32, #tpu.memory_space<vmem>>, vector<40x16xf32>
    %cst_365 = arith.constant dense<0.000000e+00> : vector<4x16xf32>
    %369 = tpu.matmul %367, %368, %cst_365 {dimension_numbers = #tpu.dot_dimension_numbers<[1], [0], [0], [1], [0, 0, 1, 1], [], []>} : vector<4x40xf32>, vector<40x16xf32>, vector<4x16xf32> -> vector<4x16xf32>
    %370 = arith.addf %365, %369 : vector<4x16xf32>
    %c12_366 = arith.constant 12 : index
    %c0_367 = arith.constant 0 : index
    %c0_368 = arith.constant 0 : index
    %371 = vector.load %arg11[%c12_366, %c0_367, %c0_368] : memref<16x4x40xf32, #tpu.memory_space<vmem>>, vector<1x4x40xf32>
    %372 = vector.shape_cast %371 : vector<1x4x40xf32> to vector<4x40xf32>
    %c480 = arith.constant 480 : index
    %c0_369 = arith.constant 0 : index
    %373 = vector.load %arg2[%c480, %c0_369] : memref<640x16xf32, #tpu.memory_space<vmem>>, vector<40x16xf32>
    %cst_370 = arith.constant dense<0.000000e+00> : vector<4x16xf32>
    %374 = tpu.matmul %372, %373, %cst_370 {dimension_numbers = #tpu.dot_dimension_numbers<[1], [0], [0], [1], [0, 0, 1, 1], [], []>} : vector<4x40xf32>, vector<40x16xf32>, vector<4x16xf32> -> vector<4x16xf32>
    %375 = arith.addf %370, %374 : vector<4x16xf32>
    %c13_371 = arith.constant 13 : index
    %c0_372 = arith.constant 0 : index
    %c0_373 = arith.constant 0 : index
    %376 = vector.load %arg11[%c13_371, %c0_372, %c0_373] : memref<16x4x40xf32, #tpu.memory_space<vmem>>, vector<1x4x40xf32>
    %377 = vector.shape_cast %376 : vector<1x4x40xf32> to vector<4x40xf32>
    %c520 = arith.constant 520 : index
    %c0_374 = arith.constant 0 : index
    %378 = vector.load %arg2[%c520, %c0_374] : memref<640x16xf32, #tpu.memory_space<vmem>>, vector<40x16xf32>
    %cst_375 = arith.constant dense<0.000000e+00> : vector<4x16xf32>
    %379 = tpu.matmul %377, %378, %cst_375 {dimension_numbers = #tpu.dot_dimension_numbers<[1], [0], [0], [1], [0, 0, 1, 1], [], []>} : vector<4x40xf32>, vector<40x16xf32>, vector<4x16xf32> -> vector<4x16xf32>
    %380 = arith.addf %375, %379 : vector<4x16xf32>
    %c14 = arith.constant 14 : index
    %c0_376 = arith.constant 0 : index
    %c0_377 = arith.constant 0 : index
    %381 = vector.load %arg11[%c14, %c0_376, %c0_377] : memref<16x4x40xf32, #tpu.memory_space<vmem>>, vector<1x4x40xf32>
    %382 = vector.shape_cast %381 : vector<1x4x40xf32> to vector<4x40xf32>
    %c560 = arith.constant 560 : index
    %c0_378 = arith.constant 0 : index
    %383 = vector.load %arg2[%c560, %c0_378] : memref<640x16xf32, #tpu.memory_space<vmem>>, vector<40x16xf32>
    %cst_379 = arith.constant dense<0.000000e+00> : vector<4x16xf32>
    %384 = tpu.matmul %382, %383, %cst_379 {dimension_numbers = #tpu.dot_dimension_numbers<[1], [0], [0], [1], [0, 0, 1, 1], [], []>} : vector<4x40xf32>, vector<40x16xf32>, vector<4x16xf32> -> vector<4x16xf32>
    %385 = arith.addf %380, %384 : vector<4x16xf32>
    %c15 = arith.constant 15 : index
    %c0_380 = arith.constant 0 : index
    %c0_381 = arith.constant 0 : index
    %386 = vector.load %arg11[%c15, %c0_380, %c0_381] : memref<16x4x40xf32, #tpu.memory_space<vmem>>, vector<1x4x40xf32>
    %387 = vector.shape_cast %386 : vector<1x4x40xf32> to vector<4x40xf32>
    %c600 = arith.constant 600 : index
    %c0_382 = arith.constant 0 : index
    %388 = vector.load %arg2[%c600, %c0_382] : memref<640x16xf32, #tpu.memory_space<vmem>>, vector<40x16xf32>
    %cst_383 = arith.constant dense<0.000000e+00> : vector<4x16xf32>
    %389 = tpu.matmul %387, %388, %cst_383 {dimension_numbers = #tpu.dot_dimension_numbers<[1], [0], [0], [1], [0, 0, 1, 1], [], []>} : vector<4x40xf32>, vector<40x16xf32>, vector<4x16xf32> -> vector<4x16xf32>
    %390 = arith.addf %385, %389 : vector<4x16xf32>
    %c0_384 = arith.constant 0 : index
    %c256 = arith.constant 256 : index
    %391 = vector.load %arg1[%c0_384, %c256] : memref<16x272xf32, #tpu.memory_space<vmem>>, vector<1x16xf32>
    %392 = vector.broadcast %391 : vector<1x16xf32> to vector<4x16xf32>
    %393 = arith.addf %390, %392 : vector<4x16xf32>
    %cst_385 = arith.constant 0.000000e+00 : f32
    %394 = vector.broadcast %cst_385 : f32 to vector<4x16xf32>
    %395 = arith.maximumf %393, %394 : vector<4x16xf32>
    %c0_386 = arith.constant 0 : index
    %c216 = arith.constant 216 : index
    %396 = vector.load %arg1[%c0_386, %c216] : memref<16x272xf32, #tpu.memory_space<vmem>>, vector<16x4xf32>
    %cst_387 = arith.constant dense<0.000000e+00> : vector<4x4xf32>
    %397 = tpu.matmul %395, %396, %cst_387 {dimension_numbers = #tpu.dot_dimension_numbers<[1], [0], [0], [1], [0, 0, 1, 1], [], []>} : vector<4x16xf32>, vector<16x4xf32>, vector<4x4xf32> -> vector<4x4xf32>
    %c0_388 = arith.constant 0 : index
    %c232_389 = arith.constant 232 : index
    %398 = vector.load %arg1[%c0_388, %c232_389] : memref<16x272xf32, #tpu.memory_space<vmem>>, vector<1x4xf32>
    %399 = vector.broadcast %398 : vector<1x4xf32> to vector<4x4xf32>
    %400 = arith.addf %397, %399 : vector<4x4xf32>
    %cst_390 = arith.constant dense<0xFF800000> : vector<4xf32>
    %401 = vector.multi_reduction <maximumf>, %400, %cst_390 [1] : vector<4x4xf32> to vector<4xf32>
    %402 = vector.shape_cast %401 : vector<4xf32> to vector<4x1xf32>
    %403 = vector.broadcast %402 : vector<4x1xf32> to vector<4x4xf32>
    %404 = arith.subf %400, %403 : vector<4x4xf32>
    %405 = math.exp %404 : vector<4x4xf32>
    %cst_391 = arith.constant dense<0.000000e+00> : vector<4xf32>
    %406 = vector.multi_reduction <add>, %405, %cst_391 [1] : vector<4x4xf32> to vector<4xf32>
    %407 = vector.shape_cast %406 : vector<4xf32> to vector<4x1xf32>
    %408 = math.log %407 : vector<4x1xf32>
    %409 = vector.broadcast %408 : vector<4x1xf32> to vector<4x4xf32>
    %410 = arith.subf %404, %409 : vector<4x4xf32>
    %c0_392 = arith.constant 0 : index
    %c0_393 = arith.constant 0 : index
    %411 = vector.load %arg3[%c0_392, %c0_393] : memref<4x4xf32, #tpu.memory_space<vmem>>, vector<4x4xf32>
    tpu.vector_store %arg3[%c0_392, %c0_393], %410 {strides = array<i32>} : memref<4x4xf32, #tpu.memory_space<vmem>>, vector<4x4xf32>,
    return
  }
}

</mosaic_0001>

<llo_original>
// kernel: cnn_forward.1
$region0: #{cnn_forward.1}
  #allocation0 [shape = 'u32[]', space=smem, size = 0x4, offset = 0x4, fixed_abs, tag = 'smem constant byte address 0x4 - core index']
  #allocation1 [shape = 'u32[72,128]{1,0:T(1,128)}', space=vmem, size = 0x9000, scoped, tag = 'internal scratch']
  #allocation2 [shape = 'f32[8,816]{1,0:T(8,128)}', space=vmem, size = 0x7000, scoped, tag = 'scratch operand']
  #allocation3 [shape = 'f32[8,792]{1,0:T(8,128)}', space=vmem, size = 0x7000, scoped, tag = 'scratch operand']
  #allocation4 [shape = 'f32[8,781]{1,0:T(8,128)}', space=vmem, size = 0x7000, scoped, tag = 'scratch operand']
  #allocation5 [shape = 'f32[8,464]{1,0:T(8,128)}', space=vmem, size = 0x4000, scoped, tag = 'scratch operand']
  #allocation6 [shape = 'f32[8,452]{1,0:T(8,128)}', space=vmem, size = 0x4000, scoped, tag = 'scratch operand']
  #allocation7 [shape = 'f32[16,440]{1,0:T(8,128)}', space=vmem, size = 0x8000, scoped, tag = 'scratch operand']
  #allocation8 [shape = 'f32[16,429]{1,0:T(8,128)}', space=vmem, size = 0x8000, scoped, tag = 'scratch operand']
  #allocation9 [shape = 'f32[16,4,40]{2,1,0:T(4,128)}', space=vmem, size = 0x8000, scoped, tag = 'scratch operand']
  %s0 = inlined_call_operand.vmem [shape: f32[8,816], index: 0, kind: input, shape index: {}]
  %s1 = inlined_call_operand.vmem [shape: f32[16,272], index: 1, kind: input, shape index: {}]
  %s2 = inlined_call_operand.vmem [shape: f32[640,16], index: 2, kind: input, shape index: {}]
  %s3 = inlined_call_operand.hbm [shape: f32[4,4], index: 3, kind: output, shape index: {}]
  %s4 = sld [smem:[#allocation0]]
  $region22: #{cnn_forward.1} parent=0
    _
  %s6 = ssub.s32 1, %s4
  %s7 = scalar_select 0, %s6, %s4
  $region1: #{cnn_forward.1} parent=0
    #allocation10 [shape = 'u8[2048]{0}', space=vmem, size = 0x800, scoped, tag = 'output window, operand 0, single buffered']
    #allocation11 [shape = 's32[1]{0}', space=sflag, size = 0x4, scoped, tag = 'scoped memory for cnn_forward.1']
    %8 = vsyncpa [#allocation11], 0
    // Predicated region
    $region2: #{cnn_forward.1} parent=1 // pred_check
      _
    $region3: #{cnn_forward.1} parent=1 // pred_check_branch
      %10 = sbr.rel (0) target = $region5
    $region4: #{cnn_forward.1} parent=1 // pred_region
      _
    $region5: #{cnn_forward.1} parent=1 // pred_fallthru
      _
    // Predicated region
    $region6: #{cnn_forward.1} parent=1 // pred_check
      _
    $region7: #{cnn_forward.1} parent=1 // pred_check_branch
      %12 = sbr.rel (0) target = $region9
    $region8: #{cnn_forward.1} parent=1 // pred_region
      _
    $region9: #{cnn_forward.1} parent=1 // pred_fallthru
      _
    // Predicated region
    $region10: #{cnn_forward.1} parent=1 // pred_check
      _
    $region11: #{cnn_forward.1} parent=1 // pred_check_branch
      %14 = sbr.rel (0) target = $region13
    $region12: #{cnn_forward.1} parent=1 // pred_region
      _
    $region13: #{cnn_forward.1} parent=1 // pred_fallthru
      _
    %v15 = vld [vmem:[%s1] sm:$0xff]
    %v16 = vld [vmem:[%s0] ss:$8 sm:$0xf]
    %v17 = vld [vmem:[%s0] ss:$8 sm:$0x70]
    %v18 = vor.u32 %v16, %v17
    %20 = vset.pattern.permute.xlu0 0
    %21 = vperm.xlu0 %20, %v15
    %v22 = vpop.permute.xlu0 %21
    %v25 = vperm.slane %v18, 0
    %v26 = vperm.slane %v18, 1
    %v27 = vperm.slane %v18, 2
    %v28 = vperm.slane %v18, 3
    %v29 = vperm.slane %v18, 4
    %v30 = vperm.slane %v18, 5
    %v31 = vperm.slane %v18, 6
    %v39 = vmul.f32 %v22, %v25
    %v40 = vmul.f32 %v22, %v26
    %v41 = vmul.f32 %v22, %v27
    %v42 = vmul.f32 %v22, %v28
    %v43 = vmul.f32 %v22, %v29
    %v44 = vmul.f32 %v22, %v30
    %v45 = vmul.f32 %v22, %v31
    %46 = vset.pattern.permute.xlu0 1
    %47 = vperm.xlu0 %46, %v15
    %v48 = vpop.permute.xlu0 %47
    %v50 = vmul.f32 %v48, %v25
    %v51 = vmul.f32 %v48, %v26
    %v52 = vmul.f32 %v48, %v27
    %v53 = vmul.f32 %v48, %v28
    %v54 = vmul.f32 %v48, %v29
    %v55 = vmul.f32 %v48, %v30
    %v56 = vmul.f32 %v48, %v31
    %64 = vrot.lane.b32.xlu0 %v50, 127
    %v65 = vpop.permute.xlu0 %64
    %66 = vrot.lane.b32.xlu0 %v51, 127
    %v67 = vpop.permute.xlu0 %66
    %68 = vrot.lane.b32.xlu0 %v52, 127
    %v69 = vpop.permute.xlu0 %68
    %70 = vrot.lane.b32.xlu0 %v53, 127
    %v71 = vpop.permute.xlu0 %70
    %72 = vrot.lane.b32.xlu0 %v54, 127
    %v73 = vpop.permute.xlu0 %72
    %74 = vrot.lane.b32.xlu0 %v55, 127
    %v75 = vpop.permute.xlu0 %74
    %76 = vrot.lane.b32.xlu0 %v56, 127
    %v77 = vpop.permute.xlu0 %76
    %vm78 = vcmask 1039360
    %v79 = vsel %vm78, %v65, %v67
    %v80 = vsel %vm78, %v67, %v69
    %v81 = vsel %vm78, %v69, %v71
    %v82 = vsel %vm78, %v71, %v73
    %v83 = vsel %vm78, %v73, %v75
    %v84 = vsel %vm78, %v75, %v77
    %v92 = vadd.f32 %v39, %v79
    %v93 = vadd.f32 %v40, %v80
    %v94 = vadd.f32 %v41, %v81
    %v95 = vadd.f32 %v42, %v82
    %v96 = vadd.f32 %v43, %v83
    %v97 = vadd.f32 %v44, %v84
    %v98 = vadd.f32 %v45, %v77
    %99 = vset.pattern.permute.xlu0 2
    %100 = vperm.xlu0 %99, %v15
    %v101 = vpop.permute.xlu0 %100
    %v103 = vmul.f32 %v101, %v25
    %v104 = vmul.f32 %v101, %v26
    %v105 = vmul.f32 %v101, %v27
    %v106 = vmul.f32 %v101, %v28
    %v107 = vmul.f32 %v101, %v29
    %v108 = vmul.f32 %v101, %v30
    %v109 = vmul.f32 %v101, %v31
    %117 = vrot.lane.b32.xlu0 %v103, 126
    %v118 = vpop.permute.xlu0 %117
    %119 = vrot.lane.b32.xlu0 %v104, 126
    %v120 = vpop.permute.xlu0 %119
    %121 = vrot.lane.b32.xlu0 %v105, 126
    %v122 = vpop.permute.xlu0 %121
    %123 = vrot.lane.b32.xlu0 %v106, 126
    %v124 = vpop.permute.xlu0 %123
    %125 = vrot.lane.b32.xlu0 %v107, 126
    %v126 = vpop.permute.xlu0 %125
    %127 = vrot.lane.b32.xlu0 %v108, 126
    %v128 = vpop.permute.xlu0 %127
    %129 = vrot.lane.b32.xlu0 %v109, 126
    %v130 = vpop.permute.xlu0 %129
    %vm131 = vcmask 1031168
    %v132 = vsel %vm131, %v118, %v120
    %v133 = vsel %vm131, %v120, %v122
    %v134 = vsel %vm131, %v122, %v124
    %v135 = vsel %vm131, %v124, %v126
    %v136 = vsel %vm131, %v126, %v128
    %v137 = vsel %vm131, %v128, %v130
    %v145 = vadd.f32 %v92, %v132
    %v146 = vadd.f32 %v93, %v133
    %v147 = vadd.f32 %v94, %v134
    %v148 = vadd.f32 %v95, %v135
    %v149 = vadd.f32 %v96, %v136
    %v150 = vadd.f32 %v97, %v137
    %v151 = vadd.f32 %v98, %v130
    %152 = vset.pattern.permute.xlu0 3
    %153 = vperm.xlu0 %152, %v15
    %v154 = vpop.permute.xlu0 %153
    %v156 = vmul.f32 %v154, %v25
    %v157 = vmul.f32 %v154, %v26
    %v158 = vmul.f32 %v154, %v27
    %v159 = vmul.f32 %v154, %v28
    %v160 = vmul.f32 %v154, %v29
    %v161 = vmul.f32 %v154, %v30
    %v162 = vmul.f32 %v154, %v31
    %170 = vrot.lane.b32.xlu0 %v156, 117
    %v171 = vpop.permute.xlu0 %170
    %172 = vrot.lane.b32.xlu0 %v157, 117
    %v173 = vpop.permute.xlu0 %172
    %174 = vrot.lane.b32.xlu0 %v158, 117
    %v175 = vpop.permute.xlu0 %174
    %176 = vrot.lane.b32.xlu0 %v159, 117
    %v177 = vpop.permute.xlu0 %176
    %178 = vrot.lane.b32.xlu0 %v160, 117
    %v179 = vpop.permute.xlu0 %178
    %180 = vrot.lane.b32.xlu0 %v161, 117
    %v181 = vpop.permute.xlu0 %180
    %182 = vrot.lane.b32.xlu0 %v162, 117
    %v183 = vpop.permute.xlu0 %182
    %vm184 = vcmask 957440
    %v185 = vsel %vm184, %v171, %v173
    %v186 = vsel %vm184, %v173, %v175
    %v187 = vsel %vm184, %v175, %v177
    %v188 = vsel %vm184, %v177, %v179
    %v189 = vsel %vm184, %v179, %v181
    %v190 = vsel %vm184, %v181, %v183
    %v198 = vadd.f32 %v145, %v185
    %v199 = vadd.f32 %v146, %v186
    %v200 = vadd.f32 %v147, %v187
    %v201 = vadd.f32 %v148, %v188
    %v202 = vadd.f32 %v149, %v189
    %v203 = vadd.f32 %v150, %v190
    %v204 = vadd.f32 %v151, %v183
    %205 = vset.pattern.permute.xlu0 4
    %206 = vperm.xlu0 %205, %v15
    %v207 = vpop.permute.xlu0 %206
    %v209 = vmul.f32 %v207, %v25
    %v210 = vmul.f32 %v207, %v26
    %v211 = vmul.f32 %v207, %v27
    %v212 = vmul.f32 %v207, %v28
    %v213 = vmul.f32 %v207, %v29
    %v214 = vmul.f32 %v207, %v30
    %v215 = vmul.f32 %v207, %v31
    %223 = vrot.lane.b32.xlu0 %v209, 116
    %v224 = vpop.permute.xlu0 %223
    %225 = vrot.lane.b32.xlu0 %v210, 116
    %v226 = vpop.permute.xlu0 %225
    %227 = vrot.lane.b32.xlu0 %v211, 116
    %v228 = vpop.permute.xlu0 %227
    %229 = vrot.lane.b32.xlu0 %v212, 116
    %v230 = vpop.permute.xlu0 %229
    %231 = vrot.lane.b32.xlu0 %v213, 116
    %v232 = vpop.permute.xlu0 %231
    %233 = vrot.lane.b32.xlu0 %v214, 116
    %v234 = vpop.permute.xlu0 %233
    %235 = vrot.lane.b32.xlu0 %v215, 116
    %v236 = vpop.permute.xlu0 %235
    %vm237 = vcmask 949248
    %v238 = vsel %vm237, %v224, %v226
    %v239 = vsel %vm237, %v226, %v228
    %v240 = vsel %vm237, %v228, %v230
    %v241 = vsel %vm237, %v230, %v232
    %v242 = vsel %vm237, %v232, %v234
    %v243 = vsel %vm237, %v234, %v236
    %v251 = vadd.f32 %v198, %v238
    %v252 = vadd.f32 %v199, %v239
    %v253 = vadd.f32 %v200, %v240
    %v254 = vadd.f32 %v201, %v241
    %v255 = vadd.f32 %v202, %v242
    %v256 = vadd.f32 %v203, %v243
    %v257 = vadd.f32 %v204, %v236
    %258 = vset.pattern.permute.xlu0 5
    %259 = vperm.xlu0 %258, %v15
    %v260 = vpop.permute.xlu0 %259
    %v262 = vmul.f32 %v260, %v25
    %v263 = vmul.f32 %v260, %v26
    %v264 = vmul.f32 %v260, %v27
    %v265 = vmul.f32 %v260, %v28
    %v266 = vmul.f32 %v260, %v29
    %v267 = vmul.f32 %v260, %v30
    %v268 = vmul.f32 %v260, %v31
    %276 = vrot.lane.b32.xlu0 %v262, 115
    %v277 = vpop.permute.xlu0 %276
    %278 = vrot.lane.b32.xlu0 %v263, 115
    %v279 = vpop.permute.xlu0 %278
    %280 = vrot.lane.b32.xlu0 %v264, 115
    %v281 = vpop.permute.xlu0 %280
    %282 = vrot.lane.b32.xlu0 %v265, 115
    %v283 = vpop.permute.xlu0 %282
    %284 = vrot.lane.b32.xlu0 %v266, 115
    %v285 = vpop.permute.xlu0 %284
    %286 = vrot.lane.b32.xlu0 %v267, 115
    %v287 = vpop.permute.xlu0 %286
    %288 = vrot.lane.b32.xlu0 %v268, 115
    %v289 = vpop.permute.xlu0 %288
    %vm290 = vcmask 941056
    %v291 = vsel %vm290, %v277, %v279
    %v292 = vsel %vm290, %v279, %v281
    %v293 = vsel %vm290, %v281, %v283
    %v294 = vsel %vm290, %v283, %v285
    %v295 = vsel %vm290, %v285, %v287
    %v296 = vsel %vm290, %v287, %v289
    %v304 = vadd.f32 %v251, %v291
    %v305 = vadd.f32 %v252, %v292
    %v306 = vadd.f32 %v253, %v293
    %v307 = vadd.f32 %v254, %v294
    %v308 = vadd.f32 %v255, %v295
    %v309 = vadd.f32 %v256, %v296
    %v310 = vadd.f32 %v257, %v289
    %311 = vset.pattern.permute.xlu0 6
    %312 = vperm.xlu0 %311, %v15
    %v313 = vpop.permute.xlu0 %312
    %v315 = vmul.f32 %v313, %v25
    %v316 = vmul.f32 %v313, %v26
    %v317 = vmul.f32 %v313, %v27
    %v318 = vmul.f32 %v313, %v28
    %v319 = vmul.f32 %v313, %v29
    %v320 = vmul.f32 %v313, %v30
    %v321 = vmul.f32 %v313, %v31
    %329 = vrot.lane.b32.xlu0 %v315, 106
    %v330 = vpop.permute.xlu0 %329
    %331 = vrot.lane.b32.xlu0 %v316, 106
    %v332 = vpop.permute.xlu0 %331
    %333 = vrot.lane.b32.xlu0 %v317, 106
    %v334 = vpop.permute.xlu0 %333
    %335 = vrot.lane.b32.xlu0 %v318, 106
    %v336 = vpop.permute.xlu0 %335
    %337 = vrot.lane.b32.xlu0 %v319, 106
    %v338 = vpop.permute.xlu0 %337
    %339 = vrot.lane.b32.xlu0 %v320, 106
    %v340 = vpop.permute.xlu0 %339
    %341 = vrot.lane.b32.xlu0 %v321, 106
    %v342 = vpop.permute.xlu0 %341
    %vm343 = vcmask 867328
    %v344 = vsel %vm343, %v330, %v332
    %v345 = vsel %vm343, %v332, %v334
    %v346 = vsel %vm343, %v334, %v336
    %v347 = vsel %vm343, %v336, %v338
    %v348 = vsel %vm343, %v338, %v340
    %v349 = vsel %vm343, %v340, %v342
    %v357 = vadd.f32 %v304, %v344
    %v358 = vadd.f32 %v305, %v345
    %v359 = vadd.f32 %v306, %v346
    %v360 = vadd.f32 %v307, %v347
    %v361 = vadd.f32 %v308, %v348
    %v362 = vadd.f32 %v309, %v349
    %v363 = vadd.f32 %v310, %v342
    %364 = vset.pattern.permute.xlu0 7
    %365 = vperm.xlu0 %364, %v15
    %v366 = vpop.permute.xlu0 %365
    %v368 = vmul.f32 %v366, %v25
    %v369 = vmul.f32 %v366, %v26
    %v370 = vmul.f32 %v366, %v27
    %v371 = vmul.f32 %v366, %v28
    %v372 = vmul.f32 %v366, %v29
    %v373 = vmul.f32 %v366, %v30
    %v374 = vmul.f32 %v366, %v31
    %382 = vrot.lane.b32.xlu0 %v368, 105
    %v383 = vpop.permute.xlu0 %382
    %384 = vrot.lane.b32.xlu0 %v369, 105
    %v385 = vpop.permute.xlu0 %384
    %386 = vrot.lane.b32.xlu0 %v370, 105
    %v387 = vpop.permute.xlu0 %386
    %388 = vrot.lane.b32.xlu0 %v371, 105
    %v389 = vpop.permute.xlu0 %388
    %390 = vrot.lane.b32.xlu0 %v372, 105
    %v391 = vpop.permute.xlu0 %390
    %392 = vrot.lane.b32.xlu0 %v373, 105
    %v393 = vpop.permute.xlu0 %392
    %394 = vrot.lane.b32.xlu0 %v374, 105
    %v395 = vpop.permute.xlu0 %394
    %vm396 = vcmask 859136
    %v397 = vsel %vm396, %v383, %v385
    %v398 = vsel %vm396, %v385, %v387
    %v399 = vsel %vm396, %v387, %v389
    %v400 = vsel %vm396, %v389, %v391
    %v401 = vsel %vm396, %v391, %v393
    %v402 = vsel %vm396, %v393, %v395
    %v410 = vadd.f32 %v357, %v397
    %v411 = vadd.f32 %v358, %v398
    %v412 = vadd.f32 %v359, %v399
    %v413 = vadd.f32 %v360, %v400
    %v414 = vadd.f32 %v361, %v401
    %v415 = vadd.f32 %v362, %v402
    %v416 = vadd.f32 %v363, %v395
    %417 = vset.pattern.permute.xlu0 8
    %418 = vperm.xlu0 %417, %v15
    %v419 = vpop.permute.xlu0 %418
    %v421 = vmul.f32 %v419, %v25
    %v422 = vmul.f32 %v419, %v26
    %v423 = vmul.f32 %v419, %v27
    %v424 = vmul.f32 %v419, %v28
    %v425 = vmul.f32 %v419, %v29
    %v426 = vmul.f32 %v419, %v30
    %v427 = vmul.f32 %v419, %v31
    %435 = vrot.lane.b32.xlu0 %v421, 104
    %v436 = vpop.permute.xlu0 %435
    %437 = vrot.lane.b32.xlu0 %v422, 104
    %v438 = vpop.permute.xlu0 %437
    %439 = vrot.lane.b32.xlu0 %v423, 104
    %v440 = vpop.permute.xlu0 %439
    %441 = vrot.lane.b32.xlu0 %v424, 104
    %v442 = vpop.permute.xlu0 %441
    %443 = vrot.lane.b32.xlu0 %v425, 104
    %v444 = vpop.permute.xlu0 %443
    %445 = vrot.lane.b32.xlu0 %v426, 104
    %v446 = vpop.permute.xlu0 %445
    %447 = vrot.lane.b32.xlu0 %v427, 104
    %v448 = vpop.permute.xlu0 %447
    %vm449 = vcmask 850944
    %v450 = vsel %vm449, %v436, %v438
    %v451 = vsel %vm449, %v438, %v440
    %v452 = vsel %vm449, %v440, %v442
    %v453 = vsel %vm449, %v442, %v444
    %v454 = vsel %vm449, %v444, %v446
    %v455 = vsel %vm449, %v446, %v448
    %v463 = vadd.f32 %v410, %v450
    %v464 = vadd.f32 %v411, %v451
    %v465 = vadd.f32 %v412, %v452
    %v466 = vadd.f32 %v413, %v453
    %v467 = vadd.f32 %v414, %v454
    %v468 = vadd.f32 %v415, %v455
    %v469 = vadd.f32 %v416, %v448
    %470 = vset.pattern.permute.xlu0 9
    %471 = vperm.xlu0 %470, %v15
    %v472 = vpop.permute.xlu0 %471
    %v474 = vadd.f32 %v463, %v472
    %v475 = vadd.f32 %v464, %v472
    %v476 = vadd.f32 %v465, %v472
    %v477 = vadd.f32 %v466, %v472
    %v478 = vadd.f32 %v467, %v472
    %v479 = vadd.f32 %v468, %v472
    %v480 = vadd.f32 %v469, %v472
    %v481 = vmax.f32 %v474, 0.0
    %v482 = vmax.f32 %v475, 0.0
    %v483 = vmax.f32 %v476, 0.0
    %v484 = vmax.f32 %v477, 0.0
    %v485 = vmax.f32 %v478, 0.0
    %v486 = vmax.f32 %v479, 0.0
    %v487 = vmax.f32 %v480, 0.0
    %vm488 = vcmask 97280
    %489 = vst.msk [vmem:[#allocation2] sm:$0xff] %vm488, 0.0
    %vm490 = vcmask 392480
    %491 = vst.msk [vmem:[#allocation2 + $0x30] sm:$0xff] %vm490, 0.0
    %s492 = scalar_lea.vmem %s0, 1
    %v493 = vld [vmem:[%s492] ss:$8 sm:$0xf]
    %v494 = vld [vmem:[%s492] ss:$8 sm:$0x70]
    %v495 = vor.u32 %v493, %v494
    %v497 = vperm.slane %v495, 0
    %v498 = vperm.slane %v495, 1
    %v499 = vperm.slane %v495, 2
    %v500 = vperm.slane %v495, 3
    %v501 = vperm.slane %v495, 4
    %v502 = vperm.slane %v495, 5
    %v503 = vperm.slane %v495, 6
    %v511 = vmul.f32 %v481, %v497
    %v512 = vmul.f32 %v482, %v498
    %v513 = vmul.f32 %v483, %v499
    %v514 = vmul.f32 %v484, %v500
    %v515 = vmul.f32 %v485, %v501
    %v516 = vmul.f32 %v486, %v502
    %v517 = vmul.f32 %v487, %v503
    %525 = vrot.lane.b32.xlu0 %v511, 12
    %v526 = vpop.permute.xlu0 %525
    %527 = vrot.lane.b32.xlu0 %v512, 12
    %v528 = vpop.permute.xlu0 %527
    %529 = vrot.lane.b32.xlu0 %v513, 12
    %v530 = vpop.permute.xlu0 %529
    %531 = vrot.lane.b32.xlu0 %v514, 12
    %v532 = vpop.permute.xlu0 %531
    %533 = vrot.lane.b32.xlu0 %v515, 12
    %v534 = vpop.permute.xlu0 %533
    %535 = vrot.lane.b32.xlu0 %v516, 12
    %v536 = vpop.permute.xlu0 %535
    %537 = vrot.lane.b32.xlu0 %v517, 12
    %v538 = vpop.permute.xlu0 %537
    %v539 = vsel %vm488, %v526, %v528
    %v540 = vsel %vm488, %v528, %v530
    %v541 = vsel %vm488, %v530, %v532
    %v542 = vsel %vm488, %v532, %v534
    %v543 = vsel %vm488, %v534, %v536
    %v544 = vsel %vm488, %v536, %v538
    %vm552 = vcmask 1047648
    %553 = vst.msk [vmem:[#allocation2] sm:$0xff] %vm552, %v526
    %554 = vst [vmem:[#allocation2 + $0x8] sm:$0xff] %v539
    %555 = vst [vmem:[#allocation2 + $0x10] sm:$0xff] %v540
    %556 = vst [vmem:[#allocation2 + $0x18] sm:$0xff] %v541
    %557 = vst [vmem:[#allocation2 + $0x20] sm:$0xff] %v542
    %558 = vst [vmem:[#allocation2 + $0x28] sm:$0xff] %v543
    %vm559 = vcmask 293888
    %560 = vst.msk [vmem:[#allocation2 + $0x30] sm:$0xff] %vm559, %v544
    %v561 = vld [vmem:[%s1] sm:$0xff]
    %v562 = vld [vmem:[#allocation2] sm:$0xff]
    %v563 = vld [vmem:[#allocation2 + $0x8] sm:$0xff]
    %v564 = vld [vmem:[#allocation2 + $0x10] sm:$0xff]
    %v565 = vld [vmem:[#allocation2 + $0x18] sm:$0xff]
    %v566 = vld [vmem:[#allocation2 + $0x20] sm:$0xff]
    %v567 = vld [vmem:[#allocation2 + $0x28] sm:$0xff]
    %v568 = vld [vmem:[#allocation2 + $0x30] sm:$0xff]
    %570 = vrot.lane.b32.xlu0 %v561, 104
    %v571 = vpop.permute.xlu0 %570
    %579 = vrot.lane.b32.xlu0 %v562, 127
    %v580 = vpop.permute.xlu0 %579
    %581 = vrot.lane.b32.xlu0 %v563, 127
    %v582 = vpop.permute.xlu0 %581
    %583 = vrot.lane.b32.xlu0 %v564, 127
    %v584 = vpop.permute.xlu0 %583
    %585 = vrot.lane.b32.xlu0 %v565, 127
    %v586 = vpop.permute.xlu0 %585
    %587 = vrot.lane.b32.xlu0 %v566, 127
    %v588 = vpop.permute.xlu0 %587
    %589 = vrot.lane.b32.xlu0 %v567, 127
    %v590 = vpop.permute.xlu0 %589
    %591 = vrot.lane.b32.xlu0 %v568, 127
    %v592 = vpop.permute.xlu0 %591
    %v593 = vsel %vm78, %v580, %v582
    %v594 = vsel %vm78, %v582, %v584
    %v595 = vsel %vm78, %v584, %v586
    %v596 = vsel %vm78, %v586, %v588
    %v597 = vsel %vm78, %v588, %v590
    %v598 = vsel %vm78, %v590, %v592
    %vm606 = vcmask 64512
    %v607 = vsel %vm606, %v571, 0
    %609 = vmatpush.msra.mxu0 0.0
    %610 = vmatpush.msra.mxu0 0.0
    %611 = vmatpush.msra.mxu0 0.0
    %612 = vmatpush.msra.mxu0 0.0
    %613 = vmatpush.msra.mxu0 0.0
    %614 = vmatpush.msra.mxu0 0.0
    %615 = vmatpush.msra.mxu0 0.0
    %616 = vmatpush.msra.mxu0 0.0
    %617 = vmatpush.msra.mxu0 0.0
    %618 = vmatpush.msra.mxu0 0.0
    %619 = vmatpush.msra.mxu0 0.0
    %620 = vmatpush.msra.mxu0 0.0
    %621 = vmatpush.msra.mxu0 0.0
    %622 = vmatpush.msra.mxu0 0.0
    %623 = vmatpush.msra.mxu0 0.0
    %624 = vmatpush.msra.mxu0 %v593
    %625 = vmatmul.f32.gmra.mxu0 %v607
    %v626 = vpop.f32.mrf.mxu0
    %v627 = vadd.f32 0.0, %v626
    %628 = vdwg.mxu0
    %629 = vmatpush.msra.mxu0 0.0
    %630 = vmatpush.msra.mxu0 0.0
    %631 = vmatpush.msra.mxu0 0.0
    %632 = vmatpush.msra.mxu0 0.0
    %633 = vmatpush.msra.mxu0 0.0
    %634 = vmatpush.msra.mxu0 0.0
    %635 = vmatpush.msra.mxu0 0.0
    %636 = vmatpush.msra.mxu0 0.0
    %637 = vmatpush.msra.mxu0 0.0
    %638 = vmatpush.msra.mxu0 0.0
    %639 = vmatpush.msra.mxu0 0.0
    %640 = vmatpush.msra.mxu0 0.0
    %641 = vmatpush.msra.mxu0 0.0
    %642 = vmatpush.msra.mxu0 0.0
    %643 = vmatpush.msra.mxu0 0.0
    %644 = vmatpush.msra.mxu0 %v594
    %645 = vmatmul.f32.gmra.mxu0 %v607
    %v646 = vpop.f32.mrf.mxu0
    %v647 = vadd.f32 0.0, %v646
    %648 = vdwg.mxu0
    %649 = vmatpush.msra.mxu0 0.0
    %650 = vmatpush.msra.mxu0 0.0
    %651 = vmatpush.msra.mxu0 0.0
    %652 = vmatpush.msra.mxu0 0.0
    %653 = vmatpush.msra.mxu0 0.0
    %654 = vmatpush.msra.mxu0 0.0
    %655 = vmatpush.msra.mxu0 0.0
    %656 = vmatpush.msra.mxu0 0.0
    %657 = vmatpush.msra.mxu0 0.0
    %658 = vmatpush.msra.mxu0 0.0
    %659 = vmatpush.msra.mxu0 0.0
    %660 = vmatpush.msra.mxu0 0.0
    %661 = vmatpush.msra.mxu0 0.0
    %662 = vmatpush.msra.mxu0 0.0
    %663 = vmatpush.msra.mxu0 0.0
    %664 = vmatpush.msra.mxu0 %v595
    %665 = vmatmul.f32.gmra.mxu0 %v607
    %v666 = vpop.f32.mrf.mxu0
    %v667 = vadd.f32 0.0, %v666
    %668 = vdwg.mxu0
    %669 = vmatpush.msra.mxu0 0.0
    %670 = vmatpush.msra.mxu0 0.0
    %671 = vmatpush.msra.mxu0 0.0
    %672 = vmatpush.msra.mxu0 0.0
    %673 = vmatpush.msra.mxu0 0.0
    %674 = vmatpush.msra.mxu0 0.0
    %675 = vmatpush.msra.mxu0 0.0
    %676 = vmatpush.msra.mxu0 0.0
    %677 = vmatpush.msra.mxu0 0.0
    %678 = vmatpush.msra.mxu0 0.0
    %679 = vmatpush.msra.mxu0 0.0
    %680 = vmatpush.msra.mxu0 0.0
    %681 = vmatpush.msra.mxu0 0.0
    %682 = vmatpush.msra.mxu0 0.0
    %683 = vmatpush.msra.mxu0 0.0
    %684 = vmatpush.msra.mxu0 %v596
    %685 = vmatmul.f32.gmra.mxu0 %v607
    %v686 = vpop.f32.mrf.mxu0
    %v687 = vadd.f32 0.0, %v686
    %688 = vdwg.mxu0
    %689 = vmatpush.msra.mxu0 0.0
    %690 = vmatpush.msra.mxu0 0.0
    %691 = vmatpush.msra.mxu0 0.0
    %692 = vmatpush.msra.mxu0 0.0
    %693 = vmatpush.msra.mxu0 0.0
    %694 = vmatpush.msra.mxu0 0.0
    %695 = vmatpush.msra.mxu0 0.0
    %696 = vmatpush.msra.mxu0 0.0
    %697 = vmatpush.msra.mxu0 0.0
    %698 = vmatpush.msra.mxu0 0.0
    %699 = vmatpush.msra.mxu0 0.0
    %700 = vmatpush.msra.mxu0 0.0
    %701 = vmatpush.msra.mxu0 0.0
    %702 = vmatpush.msra.mxu0 0.0
    %703 = vmatpush.msra.mxu0 0.0
    %704 = vmatpush.msra.mxu0 %v597
    %705 = vmatmul.f32.gmra.mxu0 %v607
    %v706 = vpop.f32.mrf.mxu0
    %v707 = vadd.f32 0.0, %v706
    %708 = vdwg.mxu0
    %709 = vmatpush.msra.mxu0 0.0
    %710 = vmatpush.msra.mxu0 0.0
    %711 = vmatpush.msra.mxu0 0.0
    %712 = vmatpush.msra.mxu0 0.0
    %713 = vmatpush.msra.mxu0 0.0
    %714 = vmatpush.msra.mxu0 0.0
    %715 = vmatpush.msra.mxu0 0.0
    %716 = vmatpush.msra.mxu0 0.0
    %717 = vmatpush.msra.mxu0 0.0
    %718 = vmatpush.msra.mxu0 0.0
    %719 = vmatpush.msra.mxu0 0.0
    %720 = vmatpush.msra.mxu0 0.0
    %721 = vmatpush.msra.mxu0 0.0
    %722 = vmatpush.msra.mxu0 0.0
    %723 = vmatpush.msra.mxu0 0.0
    %724 = vmatpush.msra.mxu0 %v598
    %725 = vmatmul.f32.gmra.mxu0 %v607
    %v726 = vpop.f32.mrf.mxu0
    %v727 = vadd.f32 0.0, %v726
    %728 = vdwg.mxu0
    %729 = vmatpush.msra.mxu0 0.0
    %730 = vmatpush.msra.mxu0 0.0
    %731 = vmatpush.msra.mxu0 0.0
    %732 = vmatpush.msra.mxu0 0.0
    %733 = vmatpush.msra.mxu0 0.0
    %734 = vmatpush.msra.mxu0 0.0
    %735 = vmatpush.msra.mxu0 0.0
    %736 = vmatpush.msra.mxu0 0.0
    %737 = vmatpush.msra.mxu0 0.0
    %738 = vmatpush.msra.mxu0 0.0
    %739 = vmatpush.msra.mxu0 0.0
    %740 = vmatpush.msra.mxu0 0.0
    %741 = vmatpush.msra.mxu0 0.0
    %742 = vmatpush.msra.mxu0 0.0
    %743 = vmatpush.msra.mxu0 0.0
    %744 = vmatpush.msra.mxu0 %v592
    %745 = vmatmul.f32.gmra.mxu0 %v607
    %v746 = vpop.f32.mrf.mxu0
    %v747 = vadd.f32 0.0, %v746
    %748 = vdwg.mxu0
    %749 = vrot.lane.b32.xlu0 %v561, 112
    %v750 = vpop.permute.xlu0 %749
    %v751 = vsel %vm606, %v750, 0
    %753 = vmatpush.msra.mxu0 0.0
    %754 = vmatpush.msra.mxu0 0.0
    %755 = vmatpush.msra.mxu0 0.0
    %756 = vmatpush.msra.mxu0 0.0
    %757 = vmatpush.msra.mxu0 0.0
    %758 = vmatpush.msra.mxu0 0.0
    %759 = vmatpush.msra.mxu0 0.0
    %760 = vmatpush.msra.mxu0 0.0
    %761 = vmatpush.msra.mxu0 0.0
    %762 = vmatpush.msra.mxu0 0.0
    %763 = vmatpush.msra.mxu0 0.0
    %764 = vmatpush.msra.mxu0 0.0
    %765 = vmatpush.msra.mxu0 0.0
    %766 = vmatpush.msra.mxu0 0.0
    %767 = vmatpush.msra.mxu0 0.0
    %768 = vmatpush.msra.mxu0 %v562
    %769 = vmatmul.f32.gmra.mxu0 %v751
    %v770 = vpop.f32.mrf.mxu0
    %v771 = vadd.f32 %v627, %v770
    %772 = vdwg.mxu0
    %773 = vmatpush.msra.mxu0 0.0
    %774 = vmatpush.msra.mxu0 0.0
    %775 = vmatpush.msra.mxu0 0.0
    %776 = vmatpush.msra.mxu0 0.0
    %777 = vmatpush.msra.mxu0 0.0
    %778 = vmatpush.msra.mxu0 0.0
    %779 = vmatpush.msra.mxu0 0.0
    %780 = vmatpush.msra.mxu0 0.0
    %781 = vmatpush.msra.mxu0 0.0
    %782 = vmatpush.msra.mxu0 0.0
    %783 = vmatpush.msra.mxu0 0.0
    %784 = vmatpush.msra.mxu0 0.0
    %785 = vmatpush.msra.mxu0 0.0
    %786 = vmatpush.msra.mxu0 0.0
    %787 = vmatpush.msra.mxu0 0.0
    %788 = vmatpush.msra.mxu0 %v563
    %789 = vmatmul.f32.gmra.mxu0 %v751
    %v790 = vpop.f32.mrf.mxu0
    %v791 = vadd.f32 %v647, %v790
    %792 = vdwg.mxu0
    %793 = vmatpush.msra.mxu0 0.0
    %794 = vmatpush.msra.mxu0 0.0
    %795 = vmatpush.msra.mxu0 0.0
    %796 = vmatpush.msra.mxu0 0.0
    %797 = vmatpush.msra.mxu0 0.0
    %798 = vmatpush.msra.mxu0 0.0
    %799 = vmatpush.msra.mxu0 0.0
    %800 = vmatpush.msra.mxu0 0.0
    %801 = vmatpush.msra.mxu0 0.0
    %802 = vmatpush.msra.mxu0 0.0
    %803 = vmatpush.msra.mxu0 0.0
    %804 = vmatpush.msra.mxu0 0.0
    %805 = vmatpush.msra.mxu0 0.0
    %806 = vmatpush.msra.mxu0 0.0
    %807 = vmatpush.msra.mxu0 0.0
    %808 = vmatpush.msra.mxu0 %v564
    %809 = vmatmul.f32.gmra.mxu0 %v751
    %v810 = vpop.f32.mrf.mxu0
    %v811 = vadd.f32 %v667, %v810
    %812 = vdwg.mxu0
    %813 = vmatpush.msra.mxu0 0.0
    %814 = vmatpush.msra.mxu0 0.0
    %815 = vmatpush.msra.mxu0 0.0
    %816 = vmatpush.msra.mxu0 0.0
    %817 = vmatpush.msra.mxu0 0.0
    %818 = vmatpush.msra.mxu0 0.0
    %819 = vmatpush.msra.mxu0 0.0
    %820 = vmatpush.msra.mxu0 0.0
    %821 = vmatpush.msra.mxu0 0.0
    %822 = vmatpush.msra.mxu0 0.0
    %823 = vmatpush.msra.mxu0 0.0
    %824 = vmatpush.msra.mxu0 0.0
    %825 = vmatpush.msra.mxu0 0.0
    %826 = vmatpush.msra.mxu0 0.0
    %827 = vmatpush.msra.mxu0 0.0
    %828 = vmatpush.msra.mxu0 %v565
    %829 = vmatmul.f32.gmra.mxu0 %v751
    %v830 = vpop.f32.mrf.mxu0
    %v831 = vadd.f32 %v687, %v830
    %832 = vdwg.mxu0
    %833 = vmatpush.msra.mxu0 0.0
    %834 = vmatpush.msra.mxu0 0.0
    %835 = vmatpush.msra.mxu0 0.0
    %836 = vmatpush.msra.mxu0 0.0
    %837 = vmatpush.msra.mxu0 0.0
    %838 = vmatpush.msra.mxu0 0.0
    %839 = vmatpush.msra.mxu0 0.0
    %840 = vmatpush.msra.mxu0 0.0
    %841 = vmatpush.msra.mxu0 0.0
    %842 = vmatpush.msra.mxu0 0.0
    %843 = vmatpush.msra.mxu0 0.0
    %844 = vmatpush.msra.mxu0 0.0
    %845 = vmatpush.msra.mxu0 0.0
    %846 = vmatpush.msra.mxu0 0.0
    %847 = vmatpush.msra.mxu0 0.0
    %848 = vmatpush.msra.mxu0 %v566
    %849 = vmatmul.f32.gmra.mxu0 %v751
    %v850 = vpop.f32.mrf.mxu0
    %v851 = vadd.f32 %v707, %v850
    %852 = vdwg.mxu0
    %853 = vmatpush.msra.mxu0 0.0
    %854 = vmatpush.msra.mxu0 0.0
    %855 = vmatpush.msra.mxu0 0.0
    %856 = vmatpush.msra.mxu0 0.0
    %857 = vmatpush.msra.mxu0 0.0
    %858 = vmatpush.msra.mxu0 0.0
    %859 = vmatpush.msra.mxu0 0.0
    %860 = vmatpush.msra.mxu0 0.0
    %861 = vmatpush.msra.mxu0 0.0
    %862 = vmatpush.msra.mxu0 0.0
    %863 = vmatpush.msra.mxu0 0.0
    %864 = vmatpush.msra.mxu0 0.0
    %865 = vmatpush.msra.mxu0 0.0
    %866 = vmatpush.msra.mxu0 0.0
    %867 = vmatpush.msra.mxu0 0.0
    %868 = vmatpush.msra.mxu0 %v567
    %869 = vmatmul.f32.gmra.mxu0 %v751
    %v870 = vpop.f32.mrf.mxu0
    %v871 = vadd.f32 %v727, %v870
    %872 = vdwg.mxu0
    %873 = vmatpush.msra.mxu0 0.0
    %874 = vmatpush.msra.mxu0 0.0
    %875 = vmatpush.msra.mxu0 0.0
    %876 = vmatpush.msra.mxu0 0.0
    %877 = vmatpush.msra.mxu0 0.0
    %878 = vmatpush.msra.mxu0 0.0
    %879 = vmatpush.msra.mxu0 0.0
    %880 = vmatpush.msra.mxu0 0.0
    %881 = vmatpush.msra.mxu0 0.0
    %882 = vmatpush.msra.mxu0 0.0
    %883 = vmatpush.msra.mxu0 0.0
    %884 = vmatpush.msra.mxu0 0.0
    %885 = vmatpush.msra.mxu0 0.0
    %886 = vmatpush.msra.mxu0 0.0
    %887 = vmatpush.msra.mxu0 0.0
    %888 = vmatpush.msra.mxu0 %v568
    %889 = vmatmul.f32.gmra.mxu0 %v751
    %v890 = vpop.f32.mrf.mxu0
    %v891 = vadd.f32 %v747, %v890
    %892 = vdwg.mxu0
    %893 = vrot.lane.b32.xlu0 %v561, 96
    %v894 = vpop.permute.xlu0 %893
    %895 = vrot.lane.b32.xlu0 %v562, 126
    %v896 = vpop.permute.xlu0 %895
    %897 = vrot.lane.b32.xlu0 %v563, 126
    %v898 = vpop.permute.xlu0 %897
    %899 = vrot.lane.b32.xlu0 %v564, 126
    %v900 = vpop.permute.xlu0 %899
    %901 = vrot.lane.b32.xlu0 %v565, 126
    %v902 = vpop.permute.xlu0 %901
    %903 = vrot.lane.b32.xlu0 %v566, 126
    %v904 = vpop.permute.xlu0 %903
    %905 = vrot.lane.b32.xlu0 %v567, 126
    %v906 = vpop.permute.xlu0 %905
    %907 = vrot.lane.b32.xlu0 %v568, 126
    %v908 = vpop.permute.xlu0 %907
    %v909 = vsel %vm131, %v896, %v898
    %v910 = vsel %vm131, %v898, %v900
    %v911 = vsel %vm131, %v900, %v902
    %v912 = vsel %vm131, %v902, %v904
    %v913 = vsel %vm131, %v904, %v906
    %v914 = vsel %vm131, %v906, %v908
    %v922 = vsel %vm606, %v894, 0
    %924 = vmatpush.msra.mxu0 0.0
    %925 = vmatpush.msra.mxu0 0.0
    %926 = vmatpush.msra.mxu0 0.0
    %927 = vmatpush.msra.mxu0 0.0
    %928 = vmatpush.msra.mxu0 0.0
    %929 = vmatpush.msra.mxu0 0.0
    %930 = vmatpush.msra.mxu0 0.0
    %931 = vmatpush.msra.mxu0 0.0
    %932 = vmatpush.msra.mxu0 0.0
    %933 = vmatpush.msra.mxu0 0.0
    %934 = vmatpush.msra.mxu0 0.0
    %935 = vmatpush.msra.mxu0 0.0
    %936 = vmatpush.msra.mxu0 0.0
    %937 = vmatpush.msra.mxu0 0.0
    %938 = vmatpush.msra.mxu0 0.0
    %939 = vmatpush.msra.mxu0 %v909
    %940 = vmatmul.f32.gmra.mxu0 %v922
    %v941 = vpop.f32.mrf.mxu0
    %v942 = vadd.f32 0.0, %v941
    %943 = vdwg.mxu0
    %944 = vmatpush.msra.mxu0 0.0
    %945 = vmatpush.msra.mxu0 0.0
    %946 = vmatpush.msra.mxu0 0.0
    %947 = vmatpush.msra.mxu0 0.0
    %948 = vmatpush.msra.mxu0 0.0
    %949 = vmatpush.msra.mxu0 0.0
    %950 = vmatpush.msra.mxu0 0.0
    %951 = vmatpush.msra.mxu0 0.0
    %952 = vmatpush.msra.mxu0 0.0
    %953 = vmatpush.msra.mxu0 0.0
    %954 = vmatpush.msra.mxu0 0.0
    %955 = vmatpush.msra.mxu0 0.0
    %956 = vmatpush.msra.mxu0 0.0
    %957 = vmatpush.msra.mxu0 0.0
    %958 = vmatpush.msra.mxu0 0.0
    %959 = vmatpush.msra.mxu0 %v910
    %960 = vmatmul.f32.gmra.mxu0 %v922
    %v961 = vpop.f32.mrf.mxu0
    %v962 = vadd.f32 0.0, %v961
    %963 = vdwg.mxu0
    %964 = vmatpush.msra.mxu0 0.0
    %965 = vmatpush.msra.mxu0 0.0
    %966 = vmatpush.msra.mxu0 0.0
    %967 = vmatpush.msra.mxu0 0.0
    %968 = vmatpush.msra.mxu0 0.0
    %969 = vmatpush.msra.mxu0 0.0
    %970 = vmatpush.msra.mxu0 0.0
    %971 = vmatpush.msra.mxu0 0.0
    %972 = vmatpush.msra.mxu0 0.0
    %973 = vmatpush.msra.mxu0 0.0
    %974 = vmatpush.msra.mxu0 0.0
    %975 = vmatpush.msra.mxu0 0.0
    %976 = vmatpush.msra.mxu0 0.0
    %977 = vmatpush.msra.mxu0 0.0
    %978 = vmatpush.msra.mxu0 0.0
    %979 = vmatpush.msra.mxu0 %v911
    %980 = vmatmul.f32.gmra.mxu0 %v922
    %v981 = vpop.f32.mrf.mxu0
    %v982 = vadd.f32 0.0, %v981
    %983 = vdwg.mxu0
    %984 = vmatpush.msra.mxu0 0.0
    %985 = vmatpush.msra.mxu0 0.0
    %986 = vmatpush.msra.mxu0 0.0
    %987 = vmatpush.msra.mxu0 0.0
    %988 = vmatpush.msra.mxu0 0.0
    %989 = vmatpush.msra.mxu0 0.0
    %990 = vmatpush.msra.mxu0 0.0
    %991 = vmatpush.msra.mxu0 0.0
    %992 = vmatpush.msra.mxu0 0.0
    %993 = vmatpush.msra.mxu0 0.0
    %994 = vmatpush.msra.mxu0 0.0
    %995 = vmatpush.msra.mxu0 0.0
    %996 = vmatpush.msra.mxu0 0.0
    %997 = vmatpush.msra.mxu0 0.0
    %998 = vmatpush.msra.mxu0 0.0
    %999 = vmatpush.msra.mxu0 %v912
    %1000 = vmatmul.f32.gmra.mxu0 %v922
    %v1001 = vpop.f32.mrf.mxu0
    %v1002 = vadd.f32 0.0, %v1001
    %1003 = vdwg.mxu0
    %1004 = vmatpush.msra.mxu0 0.0
    %1005 = vmatpush.msra.mxu0 0.0
    %1006 = vmatpush.msra.mxu0 0.0
    %1007 = vmatpush.msra.mxu0 0.0
    %1008 = vmatpush.msra.mxu0 0.0
    %1009 = vmatpush.msra.mxu0 0.0
    %1010 = vmatpush.msra.mxu0 0.0
    %1011 = vmatpush.msra.mxu0 0.0
    %1012 = vmatpush.msra.mxu0 0.0
    %1013 = vmatpush.msra.mxu0 0.0
    %1014 = vmatpush.msra.mxu0 0.0
    %1015 = vmatpush.msra.mxu0 0.0
    %1016 = vmatpush.msra.mxu0 0.0
    %1017 = vmatpush.msra.mxu0 0.0
    %1018 = vmatpush.msra.mxu0 0.0
    %1019 = vmatpush.msra.mxu0 %v913
    %1020 = vmatmul.f32.gmra.mxu0 %v922
    %v1021 = vpop.f32.mrf.mxu0
    %v1022 = vadd.f32 0.0, %v1021
    %1023 = vdwg.mxu0
    %1024 = vmatpush.msra.mxu0 0.0
    %1025 = vmatpush.msra.mxu0 0.0
    %1026 = vmatpush.msra.mxu0 0.0
    %1027 = vmatpush.msra.mxu0 0.0
    %1028 = vmatpush.msra.mxu0 0.0
    %1029 = vmatpush.msra.mxu0 0.0
    %1030 = vmatpush.msra.mxu0 0.0
    %1031 = vmatpush.msra.mxu0 0.0
    %1032 = vmatpush.msra.mxu0 0.0
    %1033 = vmatpush.msra.mxu0 0.0
    %1034 = vmatpush.msra.mxu0 0.0
    %1035 = vmatpush.msra.mxu0 0.0
    %1036 = vmatpush.msra.mxu0 0.0
    %1037 = vmatpush.msra.mxu0 0.0
    %1038 = vmatpush.msra.mxu0 0.0
    %1039 = vmatpush.msra.mxu0 %v914
    %1040 = vmatmul.f32.gmra.mxu0 %v922
    %v1041 = vpop.f32.mrf.mxu0
    %v1042 = vadd.f32 0.0, %v1041
    %1043 = vdwg.mxu0
    %1044 = vmatpush.msra.mxu0 0.0
    %1045 = vmatpush.msra.mxu0 0.0
    %1046 = vmatpush.msra.mxu0 0.0
    %1047 = vmatpush.msra.mxu0 0.0
    %1048 = vmatpush.msra.mxu0 0.0
    %1049 = vmatpush.msra.mxu0 0.0
    %1050 = vmatpush.msra.mxu0 0.0
    %1051 = vmatpush.msra.mxu0 0.0
    %1052 = vmatpush.msra.mxu0 0.0
    %1053 = vmatpush.msra.mxu0 0.0
    %1054 = vmatpush.msra.mxu0 0.0
    %1055 = vmatpush.msra.mxu0 0.0
    %1056 = vmatpush.msra.mxu0 0.0
    %1057 = vmatpush.msra.mxu0 0.0
    %1058 = vmatpush.msra.mxu0 0.0
    %1059 = vmatpush.msra.mxu0 %v908
    %1060 = vmatmul.f32.gmra.mxu0 %v922
    %v1061 = vpop.f32.mrf.mxu0
    %v1062 = vadd.f32 0.0, %v1061
    %1063 = vdwg.mxu0
    %v1064 = vadd.f32 %v771, %v942
    %v1065 = vadd.f32 %v791, %v962
    %v1066 = vadd.f32 %v811, %v982
    %v1067 = vadd.f32 %v831, %v1002
    %v1068 = vadd.f32 %v851, %v1022
    %v1069 = vadd.f32 %v871, %v1042
    %v1070 = vadd.f32 %v891, %v1062
    %1071 = vrot.lane.b32.xlu0 %v561, 88
    %v1072 = vpop.permute.xlu0 %1071
    %1073 = vrot.lane.b32.xlu0 %v562, 117
    %v1074 = vpop.permute.xlu0 %1073
    %1075 = vrot.lane.b32.xlu0 %v563, 117
    %v1076 = vpop.permute.xlu0 %1075
    %1077 = vrot.lane.b32.xlu0 %v564, 117
    %v1078 = vpop.permute.xlu0 %1077
    %1079 = vrot.lane.b32.xlu0 %v565, 117
    %v1080 = vpop.permute.xlu0 %1079
    %1081 = vrot.lane.b32.xlu0 %v566, 117
    %v1082 = vpop.permute.xlu0 %1081
    %1083 = vrot.lane.b32.xlu0 %v567, 117
    %v1084 = vpop.permute.xlu0 %1083
    %1085 = vrot.lane.b32.xlu0 %v568, 117
    %v1086 = vpop.permute.xlu0 %1085
    %v1087 = vsel %vm184, %v1074, %v1076
    %v1088 = vsel %vm184, %v1076, %v1078
    %v1089 = vsel %vm184, %v1078, %v1080
    %v1090 = vsel %vm184, %v1080, %v1082
    %v1091 = vsel %vm184, %v1082, %v1084
    %v1092 = vsel %vm184, %v1084, %v1086
    %v1100 = vsel %vm606, %v1072, 0
    %1102 = vmatpush.msra.mxu0 0.0
    %1103 = vmatpush.msra.mxu0 0.0
    %1104 = vmatpush.msra.mxu0 0.0
    %1105 = vmatpush.msra.mxu0 0.0
    %1106 = vmatpush.msra.mxu0 0.0
    %1107 = vmatpush.msra.mxu0 0.0
    %1108 = vmatpush.msra.mxu0 0.0
    %1109 = vmatpush.msra.mxu0 0.0
    %1110 = vmatpush.msra.mxu0 0.0
    %1111 = vmatpush.msra.mxu0 0.0
    %1112 = vmatpush.msra.mxu0 0.0
    %1113 = vmatpush.msra.mxu0 0.0
    %1114 = vmatpush.msra.mxu0 0.0
    %1115 = vmatpush.msra.mxu0 0.0
    %1116 = vmatpush.msra.mxu0 0.0
    %1117 = vmatpush.msra.mxu0 %v1087
    %1118 = vmatmul.f32.gmra.mxu0 %v1100
    %v1119 = vpop.f32.mrf.mxu0
    %v1120 = vadd.f32 0.0, %v1119
    %1121 = vdwg.mxu0
    %1122 = vmatpush.msra.mxu0 0.0
    %1123 = vmatpush.msra.mxu0 0.0
    %1124 = vmatpush.msra.mxu0 0.0
    %1125 = vmatpush.msra.mxu0 0.0
    %1126 = vmatpush.msra.mxu0 0.0
    %1127 = vmatpush.msra.mxu0 0.0
    %1128 = vmatpush.msra.mxu0 0.0
    %1129 = vmatpush.msra.mxu0 0.0
    %1130 = vmatpush.msra.mxu0 0.0
    %1131 = vmatpush.msra.mxu0 0.0
    %1132 = vmatpush.msra.mxu0 0.0
    %1133 = vmatpush.msra.mxu0 0.0
    %1134 = vmatpush.msra.mxu0 0.0
    %1135 = vmatpush.msra.mxu0 0.0
    %1136 = vmatpush.msra.mxu0 0.0
    %1137 = vmatpush.msra.mxu0 %v1088
    %1138 = vmatmul.f32.gmra.mxu0 %v1100
    %v1139 = vpop.f32.mrf.mxu0
    %v1140 = vadd.f32 0.0, %v1139
    %1141 = vdwg.mxu0
    %1142 = vmatpush.msra.mxu0 0.0
    %1143 = vmatpush.msra.mxu0 0.0
    %1144 = vmatpush.msra.mxu0 0.0
    %1145 = vmatpush.msra.mxu0 0.0
    %1146 = vmatpush.msra.mxu0 0.0
    %1147 = vmatpush.msra.mxu0 0.0
    %1148 = vmatpush.msra.mxu0 0.0
    %1149 = vmatpush.msra.mxu0 0.0
    %1150 = vmatpush.msra.mxu0 0.0
    %1151 = vmatpush.msra.mxu0 0.0
    %1152 = vmatpush.msra.mxu0 0.0
    %1153 = vmatpush.msra.mxu0 0.0
    %1154 = vmatpush.msra.mxu0 0.0
    %1155 = vmatpush.msra.mxu0 0.0
    %1156 = vmatpush.msra.mxu0 0.0
    %1157 = vmatpush.msra.mxu0 %v1089
    %1158 = vmatmul.f32.gmra.mxu0 %v1100
    %v1159 = vpop.f32.mrf.mxu0
    %v1160 = vadd.f32 0.0, %v1159
    %1161 = vdwg.mxu0
    %1162 = vmatpush.msra.mxu0 0.0
    %1163 = vmatpush.msra.mxu0 0.0
    %1164 = vmatpush.msra.mxu0 0.0
    %1165 = vmatpush.msra.mxu0 0.0
    %1166 = vmatpush.msra.mxu0 0.0
    %1167 = vmatpush.msra.mxu0 0.0
    %1168 = vmatpush.msra.mxu0 0.0
    %1169 = vmatpush.msra.mxu0 0.0
    %1170 = vmatpush.msra.mxu0 0.0
    %1171 = vmatpush.msra.mxu0 0.0
    %1172 = vmatpush.msra.mxu0 0.0
    %1173 = vmatpush.msra.mxu0 0.0
    %1174 = vmatpush.msra.mxu0 0.0
    %1175 = vmatpush.msra.mxu0 0.0
    %1176 = vmatpush.msra.mxu0 0.0
    %1177 = vmatpush.msra.mxu0 %v1090
    %1178 = vmatmul.f32.gmra.mxu0 %v1100
    %v1179 = vpop.f32.mrf.mxu0
    %v1180 = vadd.f32 0.0, %v1179
    %1181 = vdwg.mxu0
    %1182 = vmatpush.msra.mxu0 0.0
    %1183 = vmatpush.msra.mxu0 0.0
    %1184 = vmatpush.msra.mxu0 0.0
    %1185 = vmatpush.msra.mxu0 0.0
    %1186 = vmatpush.msra.mxu0 0.0
    %1187 = vmatpush.msra.mxu0 0.0
    %1188 = vmatpush.msra.mxu0 0.0
    %1189 = vmatpush.msra.mxu0 0.0
    %1190 = vmatpush.msra.mxu0 0.0
    %1191 = vmatpush.msra.mxu0 0.0
    %1192 = vmatpush.msra.mxu0 0.0
    %1193 = vmatpush.msra.mxu0 0.0
    %1194 = vmatpush.msra.mxu0 0.0
    %1195 = vmatpush.msra.mxu0 0.0
    %1196 = vmatpush.msra.mxu0 0.0
    %1197 = vmatpush.msra.mxu0 %v1091
    %1198 = vmatmul.f32.gmra.mxu0 %v1100
    %v1199 = vpop.f32.mrf.mxu0
    %v1200 = vadd.f32 0.0, %v1199
    %1201 = vdwg.mxu0
    %1202 = vmatpush.msra.mxu0 0.0
    %1203 = vmatpush.msra.mxu0 0.0
    %1204 = vmatpush.msra.mxu0 0.0
    %1205 = vmatpush.msra.mxu0 0.0
    %1206 = vmatpush.msra.mxu0 0.0
    %1207 = vmatpush.msra.mxu0 0.0
    %1208 = vmatpush.msra.mxu0 0.0
    %1209 = vmatpush.msra.mxu0 0.0
    %1210 = vmatpush.msra.mxu0 0.0
    %1211 = vmatpush.msra.mxu0 0.0
    %1212 = vmatpush.msra.mxu0 0.0
    %1213 = vmatpush.msra.mxu0 0.0
    %1214 = vmatpush.msra.mxu0 0.0
    %1215 = vmatpush.msra.mxu0 0.0
    %1216 = vmatpush.msra.mxu0 0.0
    %1217 = vmatpush.msra.mxu0 %v1092
    %1218 = vmatmul.f32.gmra.mxu0 %v1100
    %v1219 = vpop.f32.mrf.mxu0
    %v1220 = vadd.f32 0.0, %v1219
    %1221 = vdwg.mxu0
    %1222 = vmatpush.msra.mxu0 0.0
    %1223 = vmatpush.msra.mxu0 0.0
    %1224 = vmatpush.msra.mxu0 0.0
    %1225 = vmatpush.msra.mxu0 0.0
    %1226 = vmatpush.msra.mxu0 0.0
    %1227 = vmatpush.msra.mxu0 0.0
    %1228 = vmatpush.msra.mxu0 0.0
    %1229 = vmatpush.msra.mxu0 0.0
    %1230 = vmatpush.msra.mxu0 0.0
    %1231 = vmatpush.msra.mxu0 0.0
    %1232 = vmatpush.msra.mxu0 0.0
    %1233 = vmatpush.msra.mxu0 0.0
    %1234 = vmatpush.msra.mxu0 0.0
    %1235 = vmatpush.msra.mxu0 0.0
    %1236 = vmatpush.msra.mxu0 0.0
    %1237 = vmatpush.msra.mxu0 %v1086
    %1238 = vmatmul.f32.gmra.mxu0 %v1100
    %v1239 = vpop.f32.mrf.mxu0
    %v1240 = vadd.f32 0.0, %v1239
    %1241 = vdwg.mxu0
    %v1242 = vadd.f32 %v1064, %v1120
    %v1243 = vadd.f32 %v1065, %v1140
    %v1244 = vadd.f32 %v1066, %v1160
    %v1245 = vadd.f32 %v1067, %v1180
    %v1246 = vadd.f32 %v1068, %v1200
    %v1247 = vadd.f32 %v1069, %v1220
    %v1248 = vadd.f32 %v1070, %v1240
    %1249 = vrot.lane.b32.xlu0 %v561, 80
    %v1250 = vpop.permute.xlu0 %1249
    %1251 = vrot.lane.b32.xlu0 %v562, 116
    %v1252 = vpop.permute.xlu0 %1251
    %1253 = vrot.lane.b32.xlu0 %v563, 116
    %v1254 = vpop.permute.xlu0 %1253
    %1255 = vrot.lane.b32.xlu0 %v564, 116
    %v1256 = vpop.permute.xlu0 %1255
    %1257 = vrot.lane.b32.xlu0 %v565, 116
    %v1258 = vpop.permute.xlu0 %1257
    %1259 = vrot.lane.b32.xlu0 %v566, 116
    %v1260 = vpop.permute.xlu0 %1259
    %1261 = vrot.lane.b32.xlu0 %v567, 116
    %v1262 = vpop.permute.xlu0 %1261
    %1263 = vrot.lane.b32.xlu0 %v568, 116
    %v1264 = vpop.permute.xlu0 %1263
    %v1265 = vsel %vm237, %v1252, %v1254
    %v1266 = vsel %vm237, %v1254, %v1256
    %v1267 = vsel %vm237, %v1256, %v1258
    %v1268 = vsel %vm237, %v1258, %v1260
    %v1269 = vsel %vm237, %v1260, %v1262
    %v1270 = vsel %vm237, %v1262, %v1264
    %v1278 = vsel %vm606, %v1250, 0
    %1280 = vmatpush.msra.mxu0 0.0
    %1281 = vmatpush.msra.mxu0 0.0
    %1282 = vmatpush.msra.mxu0 0.0
    %1283 = vmatpush.msra.mxu0 0.0
    %1284 = vmatpush.msra.mxu0 0.0
    %1285 = vmatpush.msra.mxu0 0.0
    %1286 = vmatpush.msra.mxu0 0.0
    %1287 = vmatpush.msra.mxu0 0.0
    %1288 = vmatpush.msra.mxu0 0.0
    %1289 = vmatpush.msra.mxu0 0.0
    %1290 = vmatpush.msra.mxu0 0.0
    %1291 = vmatpush.msra.mxu0 0.0
    %1292 = vmatpush.msra.mxu0 0.0
    %1293 = vmatpush.msra.mxu0 0.0
    %1294 = vmatpush.msra.mxu0 0.0
    %1295 = vmatpush.msra.mxu0 %v1265
    %1296 = vmatmul.f32.gmra.mxu0 %v1278
    %v1297 = vpop.f32.mrf.mxu0
    %v1298 = vadd.f32 0.0, %v1297
    %1299 = vdwg.mxu0
    %1300 = vmatpush.msra.mxu0 0.0
    %1301 = vmatpush.msra.mxu0 0.0
    %1302 = vmatpush.msra.mxu0 0.0
    %1303 = vmatpush.msra.mxu0 0.0
    %1304 = vmatpush.msra.mxu0 0.0
    %1305 = vmatpush.msra.mxu0 0.0
    %1306 = vmatpush.msra.mxu0 0.0
    %1307 = vmatpush.msra.mxu0 0.0
    %1308 = vmatpush.msra.mxu0 0.0
    %1309 = vmatpush.msra.mxu0 0.0
    %1310 = vmatpush.msra.mxu0 0.0
    %1311 = vmatpush.msra.mxu0 0.0
    %1312 = vmatpush.msra.mxu0 0.0
    %1313 = vmatpush.msra.mxu0 0.0
    %1314 = vmatpush.msra.mxu0 0.0
    %1315 = vmatpush.msra.mxu0 %v1266
    %1316 = vmatmul.f32.gmra.mxu0 %v1278
    %v1317 = vpop.f32.mrf.mxu0
    %v1318 = vadd.f32 0.0, %v1317
    %1319 = vdwg.mxu0
    %1320 = vmatpush.msra.mxu0 0.0
    %1321 = vmatpush.msra.mxu0 0.0
    %1322 = vmatpush.msra.mxu0 0.0
    %1323 = vmatpush.msra.mxu0 0.0
    %1324 = vmatpush.msra.mxu0 0.0
    %1325 = vmatpush.msra.mxu0 0.0
    %1326 = vmatpush.msra.mxu0 0.0
    %1327 = vmatpush.msra.mxu0 0.0
    %1328 = vmatpush.msra.mxu0 0.0
    %1329 = vmatpush.msra.mxu0 0.0
    %1330 = vmatpush.msra.mxu0 0.0
    %1331 = vmatpush.msra.mxu0 0.0
    %1332 = vmatpush.msra.mxu0 0.0
    %1333 = vmatpush.msra.mxu0 0.0
    %1334 = vmatpush.msra.mxu0 0.0
    %1335 = vmatpush.msra.mxu0 %v1267
    %1336 = vmatmul.f32.gmra.mxu0 %v1278
    %v1337 = vpop.f32.mrf.mxu0
    %v1338 = vadd.f32 0.0, %v1337
    %1339 = vdwg.mxu0
    %1340 = vmatpush.msra.mxu0 0.0
    %1341 = vmatpush.msra.mxu0 0.0
    %1342 = vmatpush.msra.mxu0 0.0
    %1343 = vmatpush.msra.mxu0 0.0
    %1344 = vmatpush.msra.mxu0 0.0
    %1345 = vmatpush.msra.mxu0 0.0
    %1346 = vmatpush.msra.mxu0 0.0
    %1347 = vmatpush.msra.mxu0 0.0
    %1348 = vmatpush.msra.mxu0 0.0
    %1349 = vmatpush.msra.mxu0 0.0
    %1350 = vmatpush.msra.mxu0 0.0
    %1351 = vmatpush.msra.mxu0 0.0
    %1352 = vmatpush.msra.mxu0 0.0
    %1353 = vmatpush.msra.mxu0 0.0
    %1354 = vmatpush.msra.mxu0 0.0
    %1355 = vmatpush.msra.mxu0 %v1268
    %1356 = vmatmul.f32.gmra.mxu0 %v1278
    %v1357 = vpop.f32.mrf.mxu0
    %v1358 = vadd.f32 0.0, %v1357
    %1359 = vdwg.mxu0
    %1360 = vmatpush.msra.mxu0 0.0
    %1361 = vmatpush.msra.mxu0 0.0
    %1362 = vmatpush.msra.mxu0 0.0
    %1363 = vmatpush.msra.mxu0 0.0
    %1364 = vmatpush.msra.mxu0 0.0
    %1365 = vmatpush.msra.mxu0 0.0
    %1366 = vmatpush.msra.mxu0 0.0
    %1367 = vmatpush.msra.mxu0 0.0
    %1368 = vmatpush.msra.mxu0 0.0
    %1369 = vmatpush.msra.mxu0 0.0
    %1370 = vmatpush.msra.mxu0 0.0
    %1371 = vmatpush.msra.mxu0 0.0
    %1372 = vmatpush.msra.mxu0 0.0
    %1373 = vmatpush.msra.mxu0 0.0
    %1374 = vmatpush.msra.mxu0 0.0
    %1375 = vmatpush.msra.mxu0 %v1269
    %1376 = vmatmul.f32.gmra.mxu0 %v1278
    %v1377 = vpop.f32.mrf.mxu0
    %v1378 = vadd.f32 0.0, %v1377
    %1379 = vdwg.mxu0
    %1380 = vmatpush.msra.mxu0 0.0
    %1381 = vmatpush.msra.mxu0 0.0
    %1382 = vmatpush.msra.mxu0 0.0
    %1383 = vmatpush.msra.mxu0 0.0
    %1384 = vmatpush.msra.mxu0 0.0
    %1385 = vmatpush.msra.mxu0 0.0
    %1386 = vmatpush.msra.mxu0 0.0
    %1387 = vmatpush.msra.mxu0 0.0
    %1388 = vmatpush.msra.mxu0 0.0
    %1389 = vmatpush.msra.mxu0 0.0
    %1390 = vmatpush.msra.mxu0 0.0
    %1391 = vmatpush.msra.mxu0 0.0
    %1392 = vmatpush.msra.mxu0 0.0
    %1393 = vmatpush.msra.mxu0 0.0
    %1394 = vmatpush.msra.mxu0 0.0
    %1395 = vmatpush.msra.mxu0 %v1270
    %1396 = vmatmul.f32.gmra.mxu0 %v1278
    %v1397 = vpop.f32.mrf.mxu0
    %v1398 = vadd.f32 0.0, %v1397
    %1399 = vdwg.mxu0
    %1400 = vmatpush.msra.mxu0 0.0
    %1401 = vmatpush.msra.mxu0 0.0
    %1402 = vmatpush.msra.mxu0 0.0
    %1403 = vmatpush.msra.mxu0 0.0
    %1404 = vmatpush.msra.mxu0 0.0
    %1405 = vmatpush.msra.mxu0 0.0
    %1406 = vmatpush.msra.mxu0 0.0
    %1407 = vmatpush.msra.mxu0 0.0
    %1408 = vmatpush.msra.mxu0 0.0
    %1409 = vmatpush.msra.mxu0 0.0
    %1410 = vmatpush.msra.mxu0 0.0
    %1411 = vmatpush.msra.mxu0 0.0
    %1412 = vmatpush.msra.mxu0 0.0
    %1413 = vmatpush.msra.mxu0 0.0
    %1414 = vmatpush.msra.mxu0 0.0
    %1415 = vmatpush.msra.mxu0 %v1264
    %1416 = vmatmul.f32.gmra.mxu0 %v1278
    %v1417 = vpop.f32.mrf.mxu0
    %v1418 = vadd.f32 0.0, %v1417
    %1419 = vdwg.mxu0
    %v1420 = vadd.f32 %v1242, %v1298
    %v1421 = vadd.f32 %v1243, %v1318
    %v1422 = vadd.f32 %v1244, %v1338
    %v1423 = vadd.f32 %v1245, %v1358
    %v1424 = vadd.f32 %v1246, %v1378
    %v1425 = vadd.f32 %v1247, %v1398
    %v1426 = vadd.f32 %v1248, %v1418
    %1427 = vrot.lane.b32.xlu0 %v561, 72
    %v1428 = vpop.permute.xlu0 %1427
    %1429 = vrot.lane.b32.xlu0 %v562, 115
    %v1430 = vpop.permute.xlu0 %1429
    %1431 = vrot.lane.b32.xlu0 %v563, 115
    %v1432 = vpop.permute.xlu0 %1431
    %1433 = vrot.lane.b32.xlu0 %v564, 115
    %v1434 = vpop.permute.xlu0 %1433
    %1435 = vrot.lane.b32.xlu0 %v565, 115
    %v1436 = vpop.permute.xlu0 %1435
    %1437 = vrot.lane.b32.xlu0 %v566, 115
    %v1438 = vpop.permute.xlu0 %1437
    %1439 = vrot.lane.b32.xlu0 %v567, 115
    %v1440 = vpop.permute.xlu0 %1439
    %1441 = vrot.lane.b32.xlu0 %v568, 115
    %v1442 = vpop.permute.xlu0 %1441
    %v1443 = vsel %vm290, %v1430, %v1432
    %v1444 = vsel %vm290, %v1432, %v1434
    %v1445 = vsel %vm290, %v1434, %v1436
    %v1446 = vsel %vm290, %v1436, %v1438
    %v1447 = vsel %vm290, %v1438, %v1440
    %v1448 = vsel %vm290, %v1440, %v1442
    %v1456 = vsel %vm606, %v1428, 0
    %1458 = vmatpush.msra.mxu0 0.0
    %1459 = vmatpush.msra.mxu0 0.0
    %1460 = vmatpush.msra.mxu0 0.0
    %1461 = vmatpush.msra.mxu0 0.0
    %1462 = vmatpush.msra.mxu0 0.0
    %1463 = vmatpush.msra.mxu0 0.0
    %1464 = vmatpush.msra.mxu0 0.0
    %1465 = vmatpush.msra.mxu0 0.0
    %1466 = vmatpush.msra.mxu0 0.0
    %1467 = vmatpush.msra.mxu0 0.0
    %1468 = vmatpush.msra.mxu0 0.0
    %1469 = vmatpush.msra.mxu0 0.0
    %1470 = vmatpush.msra.mxu0 0.0
    %1471 = vmatpush.msra.mxu0 0.0
    %1472 = vmatpush.msra.mxu0 0.0
    %1473 = vmatpush.msra.mxu0 %v1443
    %1474 = vmatmul.f32.gmra.mxu0 %v1456
    %v1475 = vpop.f32.mrf.mxu0
    %v1476 = vadd.f32 0.0, %v1475
    %1477 = vdwg.mxu0
    %1478 = vmatpush.msra.mxu0 0.0
    %1479 = vmatpush.msra.mxu0 0.0
    %1480 = vmatpush.msra.mxu0 0.0
    %1481 = vmatpush.msra.mxu0 0.0
    %1482 = vmatpush.msra.mxu0 0.0
    %1483 = vmatpush.msra.mxu0 0.0
    %1484 = vmatpush.msra.mxu0 0.0
    %1485 = vmatpush.msra.mxu0 0.0
    %1486 = vmatpush.msra.mxu0 0.0
    %1487 = vmatpush.msra.mxu0 0.0
    %1488 = vmatpush.msra.mxu0 0.0
    %1489 = vmatpush.msra.mxu0 0.0
    %1490 = vmatpush.msra.mxu0 0.0
    %1491 = vmatpush.msra.mxu0 0.0
    %1492 = vmatpush.msra.mxu0 0.0
    %1493 = vmatpush.msra.mxu0 %v1444
    %1494 = vmatmul.f32.gmra.mxu0 %v1456
    %v1495 = vpop.f32.mrf.mxu0
    %v1496 = vadd.f32 0.0, %v1495
    %1497 = vdwg.mxu0
    %1498 = vmatpush.msra.mxu0 0.0
    %1499 = vmatpush.msra.mxu0 0.0
    %1500 = vmatpush.msra.mxu0 0.0
    %1501 = vmatpush.msra.mxu0 0.0
    %1502 = vmatpush.msra.mxu0 0.0
    %1503 = vmatpush.msra.mxu0 0.0
    %1504 = vmatpush.msra.mxu0 0.0
    %1505 = vmatpush.msra.mxu0 0.0
    %1506 = vmatpush.msra.mxu0 0.0
    %1507 = vmatpush.msra.mxu0 0.0
    %1508 = vmatpush.msra.mxu0 0.0
    %1509 = vmatpush.msra.mxu0 0.0
    %1510 = vmatpush.msra.mxu0 0.0
    %1511 = vmatpush.msra.mxu0 0.0
    %1512 = vmatpush.msra.mxu0 0.0
    %1513 = vmatpush.msra.mxu0 %v1445
    %1514 = vmatmul.f32.gmra.mxu0 %v1456
    %v1515 = vpop.f32.mrf.mxu0
    %v1516 = vadd.f32 0.0, %v1515
    %1517 = vdwg.mxu0
    %1518 = vmatpush.msra.mxu0 0.0
    %1519 = vmatpush.msra.mxu0 0.0
    %1520 = vmatpush.msra.mxu0 0.0
    %1521 = vmatpush.msra.mxu0 0.0
    %1522 = vmatpush.msra.mxu0 0.0
    %1523 = vmatpush.msra.mxu0 0.0
    %1524 = vmatpush.msra.mxu0 0.0
    %1525 = vmatpush.msra.mxu0 0.0
    %1526 = vmatpush.msra.mxu0 0.0
    %1527 = vmatpush.msra.mxu0 0.0
    %1528 = vmatpush.msra.mxu0 0.0
    %1529 = vmatpush.msra.mxu0 0.0
    %1530 = vmatpush.msra.mxu0 0.0
    %1531 = vmatpush.msra.mxu0 0.0
    %1532 = vmatpush.msra.mxu0 0.0
    %1533 = vmatpush.msra.mxu0 %v1446
    %1534 = vmatmul.f32.gmra.mxu0 %v1456
    %v1535 = vpop.f32.mrf.mxu0
    %v1536 = vadd.f32 0.0, %v1535
    %1537 = vdwg.mxu0
    %1538 = vmatpush.msra.mxu0 0.0
    %1539 = vmatpush.msra.mxu0 0.0
    %1540 = vmatpush.msra.mxu0 0.0
    %1541 = vmatpush.msra.mxu0 0.0
    %1542 = vmatpush.msra.mxu0 0.0
    %1543 = vmatpush.msra.mxu0 0.0
    %1544 = vmatpush.msra.mxu0 0.0
    %1545 = vmatpush.msra.mxu0 0.0
    %1546 = vmatpush.msra.mxu0 0.0
    %1547 = vmatpush.msra.mxu0 0.0
    %1548 = vmatpush.msra.mxu0 0.0
    %1549 = vmatpush.msra.mxu0 0.0
    %1550 = vmatpush.msra.mxu0 0.0
    %1551 = vmatpush.msra.mxu0 0.0
    %1552 = vmatpush.msra.mxu0 0.0
    %1553 = vmatpush.msra.mxu0 %v1447
    %1554 = vmatmul.f32.gmra.mxu0 %v1456
    %v1555 = vpop.f32.mrf.mxu0
    %v1556 = vadd.f32 0.0, %v1555
    %1557 = vdwg.mxu0
    %1558 = vmatpush.msra.mxu0 0.0
    %1559 = vmatpush.msra.mxu0 0.0
    %1560 = vmatpush.msra.mxu0 0.0
    %1561 = vmatpush.msra.mxu0 0.0
    %1562 = vmatpush.msra.mxu0 0.0
    %1563 = vmatpush.msra.mxu0 0.0
    %1564 = vmatpush.msra.mxu0 0.0
    %1565 = vmatpush.msra.mxu0 0.0
    %1566 = vmatpush.msra.mxu0 0.0
    %1567 = vmatpush.msra.mxu0 0.0
    %1568 = vmatpush.msra.mxu0 0.0
    %1569 = vmatpush.msra.mxu0 0.0
    %1570 = vmatpush.msra.mxu0 0.0
    %1571 = vmatpush.msra.mxu0 0.0
    %1572 = vmatpush.msra.mxu0 0.0
    %1573 = vmatpush.msra.mxu0 %v1448
    %1574 = vmatmul.f32.gmra.mxu0 %v1456
    %v1575 = vpop.f32.mrf.mxu0
    %v1576 = vadd.f32 0.0, %v1575
    %1577 = vdwg.mxu0
    %1578 = vmatpush.msra.mxu0 0.0
    %1579 = vmatpush.msra.mxu0 0.0
    %1580 = vmatpush.msra.mxu0 0.0
    %1581 = vmatpush.msra.mxu0 0.0
    %1582 = vmatpush.msra.mxu0 0.0
    %1583 = vmatpush.msra.mxu0 0.0
    %1584 = vmatpush.msra.mxu0 0.0
    %1585 = vmatpush.msra.mxu0 0.0
    %1586 = vmatpush.msra.mxu0 0.0
    %1587 = vmatpush.msra.mxu0 0.0
    %1588 = vmatpush.msra.mxu0 0.0
    %1589 = vmatpush.msra.mxu0 0.0
    %1590 = vmatpush.msra.mxu0 0.0
    %1591 = vmatpush.msra.mxu0 0.0
    %1592 = vmatpush.msra.mxu0 0.0
    %1593 = vmatpush.msra.mxu0 %v1442
    %1594 = vmatmul.f32.gmra.mxu0 %v1456
    %v1595 = vpop.f32.mrf.mxu0
    %v1596 = vadd.f32 0.0, %v1595
    %1597 = vdwg.mxu0
    %v1598 = vadd.f32 %v1420, %v1476
    %v1599 = vadd.f32 %v1421, %v1496
    %v1600 = vadd.f32 %v1422, %v1516
    %v1601 = vadd.f32 %v1423, %v1536
    %v1602 = vadd.f32 %v1424, %v1556
    %v1603 = vadd.f32 %v1425, %v1576
    %v1604 = vadd.f32 %v1426, %v1596
    %1605 = vrot.lane.b32.xlu0 %v561, 64
    %v1606 = vpop.permute.xlu0 %1605
    %1607 = vrot.lane.b32.xlu0 %v562, 106
    %v1608 = vpop.permute.xlu0 %1607
    %1609 = vrot.lane.b32.xlu0 %v563, 106
    %v1610 = vpop.permute.xlu0 %1609
    %1611 = vrot.lane.b32.xlu0 %v564, 106
    %v1612 = vpop.permute.xlu0 %1611
    %1613 = vrot.lane.b32.xlu0 %v565, 106
    %v1614 = vpop.permute.xlu0 %1613
    %1615 = vrot.lane.b32.xlu0 %v566, 106
    %v1616 = vpop.permute.xlu0 %1615
    %1617 = vrot.lane.b32.xlu0 %v567, 106
    %v1618 = vpop.permute.xlu0 %1617
    %1619 = vrot.lane.b32.xlu0 %v568, 106
    %v1620 = vpop.permute.xlu0 %1619
    %v1621 = vsel %vm343, %v1608, %v1610
    %v1622 = vsel %vm343, %v1610, %v1612
    %v1623 = vsel %vm343, %v1612, %v1614
    %v1624 = vsel %vm343, %v1614, %v1616
    %v1625 = vsel %vm343, %v1616, %v1618
    %v1626 = vsel %vm343, %v1618, %v1620
    %v1634 = vsel %vm606, %v1606, 0
    %1636 = vmatpush.msra.mxu0 0.0
    %1637 = vmatpush.msra.mxu0 0.0
    %1638 = vmatpush.msra.mxu0 0.0
    %1639 = vmatpush.msra.mxu0 0.0
    %1640 = vmatpush.msra.mxu0 0.0
    %1641 = vmatpush.msra.mxu0 0.0
    %1642 = vmatpush.msra.mxu0 0.0
    %1643 = vmatpush.msra.mxu0 0.0
    %1644 = vmatpush.msra.mxu0 0.0
    %1645 = vmatpush.msra.mxu0 0.0
    %1646 = vmatpush.msra.mxu0 0.0
    %1647 = vmatpush.msra.mxu0 0.0
    %1648 = vmatpush.msra.mxu0 0.0
    %1649 = vmatpush.msra.mxu0 0.0
    %1650 = vmatpush.msra.mxu0 0.0
    %1651 = vmatpush.msra.mxu0 %v1621
    %1652 = vmatmul.f32.gmra.mxu0 %v1634
    %v1653 = vpop.f32.mrf.mxu0
    %v1654 = vadd.f32 0.0, %v1653
    %1655 = vdwg.mxu0
    %1656 = vmatpush.msra.mxu0 0.0
    %1657 = vmatpush.msra.mxu0 0.0
    %1658 = vmatpush.msra.mxu0 0.0
    %1659 = vmatpush.msra.mxu0 0.0
    %1660 = vmatpush.msra.mxu0 0.0
    %1661 = vmatpush.msra.mxu0 0.0
    %1662 = vmatpush.msra.mxu0 0.0
    %1663 = vmatpush.msra.mxu0 0.0
    %1664 = vmatpush.msra.mxu0 0.0
    %1665 = vmatpush.msra.mxu0 0.0
    %1666 = vmatpush.msra.mxu0 0.0
    %1667 = vmatpush.msra.mxu0 0.0
    %1668 = vmatpush.msra.mxu0 0.0
    %1669 = vmatpush.msra.mxu0 0.0
    %1670 = vmatpush.msra.mxu0 0.0
    %1671 = vmatpush.msra.mxu0 %v1622
    %1672 = vmatmul.f32.gmra.mxu0 %v1634
    %v1673 = vpop.f32.mrf.mxu0
    %v1674 = vadd.f32 0.0, %v1673
    %1675 = vdwg.mxu0
    %1676 = vmatpush.msra.mxu0 0.0
    %1677 = vmatpush.msra.mxu0 0.0
    %1678 = vmatpush.msra.mxu0 0.0
    %1679 = vmatpush.msra.mxu0 0.0
    %1680 = vmatpush.msra.mxu0 0.0
    %1681 = vmatpush.msra.mxu0 0.0
    %1682 = vmatpush.msra.mxu0 0.0
    %1683 = vmatpush.msra.mxu0 0.0
    %1684 = vmatpush.msra.mxu0 0.0
    %1685 = vmatpush.msra.mxu0 0.0
    %1686 = vmatpush.msra.mxu0 0.0
    %1687 = vmatpush.msra.mxu0 0.0
    %1688 = vmatpush.msra.mxu0 0.0
    %1689 = vmatpush.msra.mxu0 0.0
    %1690 = vmatpush.msra.mxu0 0.0
    %1691 = vmatpush.msra.mxu0 %v1623
    %1692 = vmatmul.f32.gmra.mxu0 %v1634
    %v1693 = vpop.f32.mrf.mxu0
    %v1694 = vadd.f32 0.0, %v1693
    %1695 = vdwg.mxu0
    %1696 = vmatpush.msra.mxu0 0.0
    %1697 = vmatpush.msra.mxu0 0.0
    %1698 = vmatpush.msra.mxu0 0.0
    %1699 = vmatpush.msra.mxu0 0.0
    %1700 = vmatpush.msra.mxu0 0.0
    %1701 = vmatpush.msra.mxu0 0.0
    %1702 = vmatpush.msra.mxu0 0.0
    %1703 = vmatpush.msra.mxu0 0.0
    %1704 = vmatpush.msra.mxu0 0.0
    %1705 = vmatpush.msra.mxu0 0.0
    %1706 = vmatpush.msra.mxu0 0.0
    %1707 = vmatpush.msra.mxu0 0.0
    %1708 = vmatpush.msra.mxu0 0.0
    %1709 = vmatpush.msra.mxu0 0.0
    %1710 = vmatpush.msra.mxu0 0.0
    %1711 = vmatpush.msra.mxu0 %v1624
    %1712 = vmatmul.f32.gmra.mxu0 %v1634
    %v1713 = vpop.f32.mrf.mxu0
    %v1714 = vadd.f32 0.0, %v1713
    %1715 = vdwg.mxu0
    %1716 = vmatpush.msra.mxu0 0.0
    %1717 = vmatpush.msra.mxu0 0.0
    %1718 = vmatpush.msra.mxu0 0.0
    %1719 = vmatpush.msra.mxu0 0.0
    %1720 = vmatpush.msra.mxu0 0.0
    %1721 = vmatpush.msra.mxu0 0.0
    %1722 = vmatpush.msra.mxu0 0.0
    %1723 = vmatpush.msra.mxu0 0.0
    %1724 = vmatpush.msra.mxu0 0.0
    %1725 = vmatpush.msra.mxu0 0.0
    %1726 = vmatpush.msra.mxu0 0.0
    %1727 = vmatpush.msra.mxu0 0.0
    %1728 = vmatpush.msra.mxu0 0.0
    %1729 = vmatpush.msra.mxu0 0.0
    %1730 = vmatpush.msra.mxu0 0.0
    %1731 = vmatpush.msra.mxu0 %v1625
    %1732 = vmatmul.f32.gmra.mxu0 %v1634
    %v1733 = vpop.f32.mrf.mxu0
    %v1734 = vadd.f32 0.0, %v1733
    %1735 = vdwg.mxu0
    %1736 = vmatpush.msra.mxu0 0.0
    %1737 = vmatpush.msra.mxu0 0.0
    %1738 = vmatpush.msra.mxu0 0.0
    %1739 = vmatpush.msra.mxu0 0.0
    %1740 = vmatpush.msra.mxu0 0.0
    %1741 = vmatpush.msra.mxu0 0.0
    %1742 = vmatpush.msra.mxu0 0.0
    %1743 = vmatpush.msra.mxu0 0.0
    %1744 = vmatpush.msra.mxu0 0.0
    %1745 = vmatpush.msra.mxu0 0.0
    %1746 = vmatpush.msra.mxu0 0.0
    %1747 = vmatpush.msra.mxu0 0.0
    %1748 = vmatpush.msra.mxu0 0.0
    %1749 = vmatpush.msra.mxu0 0.0
    %1750 = vmatpush.msra.mxu0 0.0
    %1751 = vmatpush.msra.mxu0 %v1626
    %1752 = vmatmul.f32.gmra.mxu0 %v1634
    %v1753 = vpop.f32.mrf.mxu0
    %v1754 = vadd.f32 0.0, %v1753
    %1755 = vdwg.mxu0
    %1756 = vmatpush.msra.mxu0 0.0
    %1757 = vmatpush.msra.mxu0 0.0
    %1758 = vmatpush.msra.mxu0 0.0
    %1759 = vmatpush.msra.mxu0 0.0
    %1760 = vmatpush.msra.mxu0 0.0
    %1761 = vmatpush.msra.mxu0 0.0
    %1762 = vmatpush.msra.mxu0 0.0
    %1763 = vmatpush.msra.mxu0 0.0
    %1764 = vmatpush.msra.mxu0 0.0
    %1765 = vmatpush.msra.mxu0 0.0
    %1766 = vmatpush.msra.mxu0 0.0
    %1767 = vmatpush.msra.mxu0 0.0
    %1768 = vmatpush.msra.mxu0 0.0
    %1769 = vmatpush.msra.mxu0 0.0
    %1770 = vmatpush.msra.mxu0 0.0
    %1771 = vmatpush.msra.mxu0 %v1620
    %1772 = vmatmul.f32.gmra.mxu0 %v1634
    %v1773 = vpop.f32.mrf.mxu0
    %v1774 = vadd.f32 0.0, %v1773
    %1775 = vdwg.mxu0
    %v1776 = vadd.f32 %v1598, %v1654
    %v1777 = vadd.f32 %v1599, %v1674
    %v1778 = vadd.f32 %v1600, %v1694
    %v1779 = vadd.f32 %v1601, %v1714
    %v1780 = vadd.f32 %v1602, %v1734
    %v1781 = vadd.f32 %v1603, %v1754
    %v1782 = vadd.f32 %v1604, %v1774
    %1783 = vrot.lane.b32.xlu0 %v561, 56
    %v1784 = vpop.permute.xlu0 %1783
    %1785 = vrot.lane.b32.xlu0 %v562, 105
    %v1786 = vpop.permute.xlu0 %1785
    %1787 = vrot.lane.b32.xlu0 %v563, 105
    %v1788 = vpop.permute.xlu0 %1787
    %1789 = vrot.lane.b32.xlu0 %v564, 105
    %v1790 = vpop.permute.xlu0 %1789
    %1791 = vrot.lane.b32.xlu0 %v565, 105
    %v1792 = vpop.permute.xlu0 %1791
    %1793 = vrot.lane.b32.xlu0 %v566, 105
    %v1794 = vpop.permute.xlu0 %1793
    %1795 = vrot.lane.b32.xlu0 %v567, 105
    %v1796 = vpop.permute.xlu0 %1795
    %1797 = vrot.lane.b32.xlu0 %v568, 105
    %v1798 = vpop.permute.xlu0 %1797
    %v1799 = vsel %vm396, %v1786, %v1788
    %v1800 = vsel %vm396, %v1788, %v1790
    %v1801 = vsel %vm396, %v1790, %v1792
    %v1802 = vsel %vm396, %v1792, %v1794
    %v1803 = vsel %vm396, %v1794, %v1796
    %v1804 = vsel %vm396, %v1796, %v1798
    %v1812 = vsel %vm606, %v1784, 0
    %1814 = vmatpush.msra.mxu0 0.0
    %1815 = vmatpush.msra.mxu0 0.0
    %1816 = vmatpush.msra.mxu0 0.0
    %1817 = vmatpush.msra.mxu0 0.0
    %1818 = vmatpush.msra.mxu0 0.0
    %1819 = vmatpush.msra.mxu0 0.0
    %1820 = vmatpush.msra.mxu0 0.0
    %1821 = vmatpush.msra.mxu0 0.0
    %1822 = vmatpush.msra.mxu0 0.0
    %1823 = vmatpush.msra.mxu0 0.0
    %1824 = vmatpush.msra.mxu0 0.0
    %1825 = vmatpush.msra.mxu0 0.0
    %1826 = vmatpush.msra.mxu0 0.0
    %1827 = vmatpush.msra.mxu0 0.0
    %1828 = vmatpush.msra.mxu0 0.0
    %1829 = vmatpush.msra.mxu0 %v1799
    %1830 = vmatmul.f32.gmra.mxu0 %v1812
    %v1831 = vpop.f32.mrf.mxu0
    %v1832 = vadd.f32 0.0, %v1831
    %1833 = vdwg.mxu0
    %1834 = vmatpush.msra.mxu0 0.0
    %1835 = vmatpush.msra.mxu0 0.0
    %1836 = vmatpush.msra.mxu0 0.0
    %1837 = vmatpush.msra.mxu0 0.0
    %1838 = vmatpush.msra.mxu0 0.0
    %1839 = vmatpush.msra.mxu0 0.0
    %1840 = vmatpush.msra.mxu0 0.0
    %1841 = vmatpush.msra.mxu0 0.0
    %1842 = vmatpush.msra.mxu0 0.0
    %1843 = vmatpush.msra.mxu0 0.0
    %1844 = vmatpush.msra.mxu0 0.0
    %1845 = vmatpush.msra.mxu0 0.0
    %1846 = vmatpush.msra.mxu0 0.0
    %1847 = vmatpush.msra.mxu0 0.0
    %1848 = vmatpush.msra.mxu0 0.0
    %1849 = vmatpush.msra.mxu0 %v1800
    %1850 = vmatmul.f32.gmra.mxu0 %v1812
    %v1851 = vpop.f32.mrf.mxu0
    %v1852 = vadd.f32 0.0, %v1851
    %1853 = vdwg.mxu0
    %1854 = vmatpush.msra.mxu0 0.0
    %1855 = vmatpush.msra.mxu0 0.0
    %1856 = vmatpush.msra.mxu0 0.0
    %1857 = vmatpush.msra.mxu0 0.0
    %1858 = vmatpush.msra.mxu0 0.0
    %1859 = vmatpush.msra.mxu0 0.0
    %1860 = vmatpush.msra.mxu0 0.0
    %1861 = vmatpush.msra.mxu0 0.0
    %1862 = vmatpush.msra.mxu0 0.0
    %1863 = vmatpush.msra.mxu0 0.0
    %1864 = vmatpush.msra.mxu0 0.0
    %1865 = vmatpush.msra.mxu0 0.0
    %1866 = vmatpush.msra.mxu0 0.0
    %1867 = vmatpush.msra.mxu0 0.0
    %1868 = vmatpush.msra.mxu0 0.0
    %1869 = vmatpush.msra.mxu0 %v1801
    %1870 = vmatmul.f32.gmra.mxu0 %v1812
    %v1871 = vpop.f32.mrf.mxu0
    %v1872 = vadd.f32 0.0, %v1871
    %1873 = vdwg.mxu0
    %1874 = vmatpush.msra.mxu0 0.0
    %1875 = vmatpush.msra.mxu0 0.0
    %1876 = vmatpush.msra.mxu0 0.0
    %1877 = vmatpush.msra.mxu0 0.0
    %1878 = vmatpush.msra.mxu0 0.0
    %1879 = vmatpush.msra.mxu0 0.0
    %1880 = vmatpush.msra.mxu0 0.0
    %1881 = vmatpush.msra.mxu0 0.0
    %1882 = vmatpush.msra.mxu0 0.0
    %1883 = vmatpush.msra.mxu0 0.0
    %1884 = vmatpush.msra.mxu0 0.0
    %1885 = vmatpush.msra.mxu0 0.0
    %1886 = vmatpush.msra.mxu0 0.0
    %1887 = vmatpush.msra.mxu0 0.0
    %1888 = vmatpush.msra.mxu0 0.0
    %1889 = vmatpush.msra.mxu0 %v1802
    %1890 = vmatmul.f32.gmra.mxu0 %v1812
    %v1891 = vpop.f32.mrf.mxu0
    %v1892 = vadd.f32 0.0, %v1891
    %1893 = vdwg.mxu0
    %1894 = vmatpush.msra.mxu0 0.0
    %1895 = vmatpush.msra.mxu0 0.0
    %1896 = vmatpush.msra.mxu0 0.0
    %1897 = vmatpush.msra.mxu0 0.0
    %1898 = vmatpush.msra.mxu0 0.0
    %1899 = vmatpush.msra.mxu0 0.0
    %1900 = vmatpush.msra.mxu0 0.0
    %1901 = vmatpush.msra.mxu0 0.0
    %1902 = vmatpush.msra.mxu0 0.0
    %1903 = vmatpush.msra.mxu0 0.0
    %1904 = vmatpush.msra.mxu0 0.0
    %1905 = vmatpush.msra.mxu0 0.0
    %1906 = vmatpush.msra.mxu0 0.0
    %1907 = vmatpush.msra.mxu0 0.0
    %1908 = vmatpush.msra.mxu0 0.0
    %1909 = vmatpush.msra.mxu0 %v1803
    %1910 = vmatmul.f32.gmra.mxu0 %v1812
    %v1911 = vpop.f32.mrf.mxu0
    %v1912 = vadd.f32 0.0, %v1911
    %1913 = vdwg.mxu0
    %1914 = vmatpush.msra.mxu0 0.0
    %1915 = vmatpush.msra.mxu0 0.0
    %1916 = vmatpush.msra.mxu0 0.0
    %1917 = vmatpush.msra.mxu0 0.0
    %1918 = vmatpush.msra.mxu0 0.0
    %1919 = vmatpush.msra.mxu0 0.0
    %1920 = vmatpush.msra.mxu0 0.0
    %1921 = vmatpush.msra.mxu0 0.0
    %1922 = vmatpush.msra.mxu0 0.0
    %1923 = vmatpush.msra.mxu0 0.0
    %1924 = vmatpush.msra.mxu0 0.0
    %1925 = vmatpush.msra.mxu0 0.0
    %1926 = vmatpush.msra.mxu0 0.0
    %1927 = vmatpush.msra.mxu0 0.0
    %1928 = vmatpush.msra.mxu0 0.0
    %1929 = vmatpush.msra.mxu0 %v1804
    %1930 = vmatmul.f32.gmra.mxu0 %v1812
    %v1931 = vpop.f32.mrf.mxu0
    %v1932 = vadd.f32 0.0, %v1931
    %1933 = vdwg.mxu0
    %1934 = vmatpush.msra.mxu0 0.0
    %1935 = vmatpush.msra.mxu0 0.0
    %1936 = vmatpush.msra.mxu0 0.0
    %1937 = vmatpush.msra.mxu0 0.0
    %1938 = vmatpush.msra.mxu0 0.0
    %1939 = vmatpush.msra.mxu0 0.0
    %1940 = vmatpush.msra.mxu0 0.0
    %1941 = vmatpush.msra.mxu0 0.0
    %1942 = vmatpush.msra.mxu0 0.0
    %1943 = vmatpush.msra.mxu0 0.0
    %1944 = vmatpush.msra.mxu0 0.0
    %1945 = vmatpush.msra.mxu0 0.0
    %1946 = vmatpush.msra.mxu0 0.0
    %1947 = vmatpush.msra.mxu0 0.0
    %1948 = vmatpush.msra.mxu0 0.0
    %1949 = vmatpush.msra.mxu0 %v1798
    %1950 = vmatmul.f32.gmra.mxu0 %v1812
    %v1951 = vpop.f32.mrf.mxu0
    %v1952 = vadd.f32 0.0, %v1951
    %1953 = vdwg.mxu0
    %v1954 = vadd.f32 %v1776, %v1832
    %v1955 = vadd.f32 %v1777, %v1852
    %v1956 = vadd.f32 %v1778, %v1872
    %v1957 = vadd.f32 %v1779, %v1892
    %v1958 = vadd.f32 %v1780, %v1912
    %v1959 = vadd.f32 %v1781, %v1932
    %v1960 = vadd.f32 %v1782, %v1952
    %1961 = vrot.lane.b32.xlu0 %v561, 48
    %v1962 = vpop.permute.xlu0 %1961
    %1963 = vrot.lane.b32.xlu0 %v562, 104
    %v1964 = vpop.permute.xlu0 %1963
    %1965 = vrot.lane.b32.xlu0 %v563, 104
    %v1966 = vpop.permute.xlu0 %1965
    %1967 = vrot.lane.b32.xlu0 %v564, 104
    %v1968 = vpop.permute.xlu0 %1967
    %1969 = vrot.lane.b32.xlu0 %v565, 104
    %v1970 = vpop.permute.xlu0 %1969
    %1971 = vrot.lane.b32.xlu0 %v566, 104
    %v1972 = vpop.permute.xlu0 %1971
    %1973 = vrot.lane.b32.xlu0 %v567, 104
    %v1974 = vpop.permute.xlu0 %1973
    %1975 = vrot.lane.b32.xlu0 %v568, 104
    %v1976 = vpop.permute.xlu0 %1975
    %v1977 = vsel %vm449, %v1964, %v1966
    %v1978 = vsel %vm449, %v1966, %v1968
    %v1979 = vsel %vm449, %v1968, %v1970
    %v1980 = vsel %vm449, %v1970, %v1972
    %v1981 = vsel %vm449, %v1972, %v1974
    %v1982 = vsel %vm449, %v1974, %v1976
    %v1990 = vsel %vm606, %v1962, 0
    %1992 = vmatpush.msra.mxu0 0.0
    %1993 = vmatpush.msra.mxu0 0.0
    %1994 = vmatpush.msra.mxu0 0.0
    %1995 = vmatpush.msra.mxu0 0.0
    %1996 = vmatpush.msra.mxu0 0.0
    %1997 = vmatpush.msra.mxu0 0.0
    %1998 = vmatpush.msra.mxu0 0.0
    %1999 = vmatpush.msra.mxu0 0.0
    %2000 = vmatpush.msra.mxu0 0.0
    %2001 = vmatpush.msra.mxu0 0.0
    %2002 = vmatpush.msra.mxu0 0.0
    %2003 = vmatpush.msra.mxu0 0.0
    %2004 = vmatpush.msra.mxu0 0.0
    %2005 = vmatpush.msra.mxu0 0.0
    %2006 = vmatpush.msra.mxu0 0.0
    %2007 = vmatpush.msra.mxu0 %v1977
    %2008 = vmatmul.f32.gmra.mxu0 %v1990
    %v2009 = vpop.f32.mrf.mxu0
    %v2010 = vadd.f32 0.0, %v2009
    %2011 = vdwg.mxu0
    %2012 = vmatpush.msra.mxu0 0.0
    %2013 = vmatpush.msra.mxu0 0.0
    %2014 = vmatpush.msra.mxu0 0.0
    %2015 = vmatpush.msra.mxu0 0.0
    %2016 = vmatpush.msra.mxu0 0.0
    %2017 = vmatpush.msra.mxu0 0.0
    %2018 = vmatpush.msra.mxu0 0.0
    %2019 = vmatpush.msra.mxu0 0.0
    %2020 = vmatpush.msra.mxu0 0.0
    %2021 = vmatpush.msra.mxu0 0.0
    %2022 = vmatpush.msra.mxu0 0.0
    %2023 = vmatpush.msra.mxu0 0.0
    %2024 = vmatpush.msra.mxu0 0.0
    %2025 = vmatpush.msra.mxu0 0.0
    %2026 = vmatpush.msra.mxu0 0.0
    %2027 = vmatpush.msra.mxu0 %v1978
    %2028 = vmatmul.f32.gmra.mxu0 %v1990
    %v2029 = vpop.f32.mrf.mxu0
    %v2030 = vadd.f32 0.0, %v2029
    %2031 = vdwg.mxu0
    %2032 = vmatpush.msra.mxu0 0.0
    %2033 = vmatpush.msra.mxu0 0.0
    %2034 = vmatpush.msra.mxu0 0.0
    %2035 = vmatpush.msra.mxu0 0.0
    %2036 = vmatpush.msra.mxu0 0.0
    %2037 = vmatpush.msra.mxu0 0.0
    %2038 = vmatpush.msra.mxu0 0.0
    %2039 = vmatpush.msra.mxu0 0.0
    %2040 = vmatpush.msra.mxu0 0.0
    %2041 = vmatpush.msra.mxu0 0.0
    %2042 = vmatpush.msra.mxu0 0.0
    %2043 = vmatpush.msra.mxu0 0.0
    %2044 = vmatpush.msra.mxu0 0.0
    %2045 = vmatpush.msra.mxu0 0.0
    %2046 = vmatpush.msra.mxu0 0.0
    %2047 = vmatpush.msra.mxu0 %v1979
    %2048 = vmatmul.f32.gmra.mxu0 %v1990
    %v2049 = vpop.f32.mrf.mxu0
    %v2050 = vadd.f32 0.0, %v2049
    %2051 = vdwg.mxu0
    %2052 = vmatpush.msra.mxu0 0.0
    %2053 = vmatpush.msra.mxu0 0.0
    %2054 = vmatpush.msra.mxu0 0.0
    %2055 = vmatpush.msra.mxu0 0.0
    %2056 = vmatpush.msra.mxu0 0.0
    %2057 = vmatpush.msra.mxu0 0.0
    %2058 = vmatpush.msra.mxu0 0.0
    %2059 = vmatpush.msra.mxu0 0.0
    %2060 = vmatpush.msra.mxu0 0.0
    %2061 = vmatpush.msra.mxu0 0.0
    %2062 = vmatpush.msra.mxu0 0.0
    %2063 = vmatpush.msra.mxu0 0.0
    %2064 = vmatpush.msra.mxu0 0.0
    %2065 = vmatpush.msra.mxu0 0.0
    %2066 = vmatpush.msra.mxu0 0.0
    %2067 = vmatpush.msra.mxu0 %v1980
    %2068 = vmatmul.f32.gmra.mxu0 %v1990
    %v2069 = vpop.f32.mrf.mxu0
    %v2070 = vadd.f32 0.0, %v2069
    %2071 = vdwg.mxu0
    %2072 = vmatpush.msra.mxu0 0.0
    %2073 = vmatpush.msra.mxu0 0.0
    %2074 = vmatpush.msra.mxu0 0.0
    %2075 = vmatpush.msra.mxu0 0.0
    %2076 = vmatpush.msra.mxu0 0.0
    %2077 = vmatpush.msra.mxu0 0.0
    %2078 = vmatpush.msra.mxu0 0.0
    %2079 = vmatpush.msra.mxu0 0.0
    %2080 = vmatpush.msra.mxu0 0.0
    %2081 = vmatpush.msra.mxu0 0.0
    %2082 = vmatpush.msra.mxu0 0.0
    %2083 = vmatpush.msra.mxu0 0.0
    %2084 = vmatpush.msra.mxu0 0.0
    %2085 = vmatpush.msra.mxu0 0.0
    %2086 = vmatpush.msra.mxu0 0.0
    %2087 = vmatpush.msra.mxu0 %v1981
    %2088 = vmatmul.f32.gmra.mxu0 %v1990
    %v2089 = vpop.f32.mrf.mxu0
    %v2090 = vadd.f32 0.0, %v2089
    %2091 = vdwg.mxu0
    %2092 = vmatpush.msra.mxu0 0.0
    %2093 = vmatpush.msra.mxu0 0.0
    %2094 = vmatpush.msra.mxu0 0.0
    %2095 = vmatpush.msra.mxu0 0.0
    %2096 = vmatpush.msra.mxu0 0.0
    %2097 = vmatpush.msra.mxu0 0.0
    %2098 = vmatpush.msra.mxu0 0.0
    %2099 = vmatpush.msra.mxu0 0.0
    %2100 = vmatpush.msra.mxu0 0.0
    %2101 = vmatpush.msra.mxu0 0.0
    %2102 = vmatpush.msra.mxu0 0.0
    %2103 = vmatpush.msra.mxu0 0.0
    %2104 = vmatpush.msra.mxu0 0.0
    %2105 = vmatpush.msra.mxu0 0.0
    %2106 = vmatpush.msra.mxu0 0.0
    %2107 = vmatpush.msra.mxu0 %v1982
    %2108 = vmatmul.f32.gmra.mxu0 %v1990
    %v2109 = vpop.f32.mrf.mxu0
    %v2110 = vadd.f32 0.0, %v2109
    %2111 = vdwg.mxu0
    %2112 = vmatpush.msra.mxu0 0.0
    %2113 = vmatpush.msra.mxu0 0.0
    %2114 = vmatpush.msra.mxu0 0.0
    %2115 = vmatpush.msra.mxu0 0.0
    %2116 = vmatpush.msra.mxu0 0.0
    %2117 = vmatpush.msra.mxu0 0.0
    %2118 = vmatpush.msra.mxu0 0.0
    %2119 = vmatpush.msra.mxu0 0.0
    %2120 = vmatpush.msra.mxu0 0.0
    %2121 = vmatpush.msra.mxu0 0.0
    %2122 = vmatpush.msra.mxu0 0.0
    %2123 = vmatpush.msra.mxu0 0.0
    %2124 = vmatpush.msra.mxu0 0.0
    %2125 = vmatpush.msra.mxu0 0.0
    %2126 = vmatpush.msra.mxu0 0.0
    %2127 = vmatpush.msra.mxu0 %v1976
    %2128 = vmatmul.f32.gmra.mxu0 %v1990
    %v2129 = vpop.f32.mrf.mxu0
    %v2130 = vadd.f32 0.0, %v2129
    %2131 = vdwg.mxu0
    %v2132 = vadd.f32 %v1954, %v2010
    %v2133 = vadd.f32 %v1955, %v2030
    %v2134 = vadd.f32 %v1956, %v2050
    %v2135 = vadd.f32 %v1957, %v2070
    %v2136 = vadd.f32 %v1958, %v2090
    %v2137 = vadd.f32 %v1959, %v2110
    %v2138 = vadd.f32 %v1960, %v2130
    %2139 = vset.pattern.permute.xlu0 88
    %2140 = vperm.xlu0 %2139, %v561
    %v2141 = vpop.permute.xlu0 %2140
    %v2143 = vadd.f32 %v2132, %v2141
    %v2144 = vadd.f32 %v2133, %v2141
    %v2145 = vadd.f32 %v2134, %v2141
    %v2146 = vadd.f32 %v2135, %v2141
    %v2147 = vadd.f32 %v2136, %v2141
    %v2148 = vadd.f32 %v2137, %v2141
    %v2149 = vadd.f32 %v2138, %v2141
    %v2150 = vmax.f32 %v2143, 0.0
    %v2151 = vmax.f32 %v2144, 0.0
    %v2152 = vmax.f32 %v2145, 0.0
    %v2153 = vmax.f32 %v2146, 0.0
    %v2154 = vmax.f32 %v2147, 0.0
    %v2155 = vmax.f32 %v2148, 0.0
    %v2156 = vmax.f32 %v2149, 0.0
    %2157 = vst [vmem:[#allocation3] sm:$0xff] %v2150
    %2158 = vst [vmem:[#allocation3 + $0x8] sm:$0xff] %v2151
    %2159 = vst [vmem:[#allocation3 + $0x10] sm:$0xff] %v2152
    %2160 = vst [vmem:[#allocation3 + $0x18] sm:$0xff] %v2153
    %2161 = vst [vmem:[#allocation3 + $0x20] sm:$0xff] %v2154
    %2162 = vst [vmem:[#allocation3 + $0x28] sm:$0xff] %v2155
    %vm2163 = vcmask 195584
    %2164 = vst.msk [vmem:[#allocation3 + $0x30] sm:$0xff] %vm2163, %v2156
    %v2165 = vld [vmem:[#allocation3] sm:$0xff]
    %v2166 = vld [vmem:[#allocation3 + $0x8] sm:$0xff]
    %v2167 = vld [vmem:[#allocation3 + $0x10] sm:$0xff]
    %v2168 = vld [vmem:[#allocation3 + $0x18] sm:$0xff]
    %v2169 = vld [vmem:[#allocation3 + $0x20] sm:$0xff]
    %v2170 = vld [vmem:[#allocation3 + $0x28] sm:$0xff]
    %v2171 = vld [vmem:[#allocation3 + $0x30] sm:$0xff]
    %2179 = vrot.lane.b32.xlu0 %v2165, 117
    %v2180 = vpop.permute.xlu0 %2179
    %2181 = vrot.lane.b32.xlu0 %v2166, 117
    %v2182 = vpop.permute.xlu0 %2181
    %2183 = vrot.lane.b32.xlu0 %v2167, 117
    %v2184 = vpop.permute.xlu0 %2183
    %2185 = vrot.lane.b32.xlu0 %v2168, 117
    %v2186 = vpop.permute.xlu0 %2185
    %2187 = vrot.lane.b32.xlu0 %v2169, 117
    %v2188 = vpop.permute.xlu0 %2187
    %2189 = vrot.lane.b32.xlu0 %v2170, 117
    %v2190 = vpop.permute.xlu0 %2189
    %2191 = vrot.lane.b32.xlu0 %v2171, 117
    %v2192 = vpop.permute.xlu0 %2191
    %v2193 = vsel %vm184, %v2180, %v2182
    %v2194 = vsel %vm184, %v2182, %v2184
    %v2195 = vsel %vm184, %v2184, %v2186
    %v2196 = vsel %vm184, %v2186, %v2188
    %v2197 = vsel %vm184, %v2188, %v2190
    %v2198 = vsel %vm184, %v2190, %v2192
    %v2206 = vmax.f32 %v2165, %v2193
    %v2207 = vmax.f32 %v2166, %v2194
    %v2208 = vmax.f32 %v2167, %v2195
    %v2209 = vmax.f32 %v2168, %v2196
    %v2210 = vmax.f32 %v2169, %v2197
    %v2211 = vmax.f32 %v2170, %v2198
    %v2212 = vmax.f32 %v2171, %v2192
    %2213 = vst [vmem:[#allocation4] sm:$0xff] %v2206
    %2214 = vst [vmem:[#allocation4 + $0x8] sm:$0xff] %v2207
    %2215 = vst [vmem:[#allocation4 + $0x10] sm:$0xff] %v2208
    %2216 = vst [vmem:[#allocation4 + $0x18] sm:$0xff] %v2209
    %2217 = vst [vmem:[#allocation4 + $0x20] sm:$0xff] %v2210
    %2218 = vst [vmem:[#allocation4 + $0x28] sm:$0xff] %v2211
    %vm2219 = vcmask 105472
    %2220 = vst.msk [vmem:[#allocation4 + $0x30] sm:$0xff] %vm2219, %v2212
    %2221 = vst [vmem:[#allocation5] sm:$0xff] 0.0
    %2222 = vst [vmem:[#allocation5 + $0x8] sm:$0xff] 0.0
    %2223 = vst [vmem:[#allocation5 + $0x10] sm:$0xff] 0.0
    %vm2224 = vcmask 654336
    %2225 = vst.msk [vmem:[#allocation5 + $0x18] sm:$0xff] %vm2224, 0.0
    %v2226 = vld [vmem:[#allocation4] sm:$0xff]
    %2228 = vrot.lane.b32.xlu0 %v2226, 12
    %v2229 = vpop.permute.xlu0 %2228
    %vm2231 = vcmask 171104
    %2232 = vst.msk [vmem:[#allocation5] sm:$0xff] %vm2231, %v2229
    %v2233 = vld [vmem:[#allocation4] sm:$0xff]
    %2235 = vrot.lane.b32.xlu0 %v2233, 1
    %v2236 = vpop.permute.xlu0 %2235
    %vm2238 = vcmask 261304
    %2239 = vst.msk [vmem:[#allocation5] sm:$0xff] %vm2238, %v2236
    %v2240 = vld [vmem:[#allocation4] sm:$0xff]
    %2242 = vrot.lane.b32.xlu0 %v2240, 118
    %v2243 = vpop.permute.xlu0 %2242
    %vm2245 = vcmask 351504
    %2246 = vst.msk [vmem:[#allocation5] sm:$0xff] %vm2245, %v2243
    %v2247 = vld [vmem:[#allocation4] sm:$0xff]
    %2249 = vrot.lane.b32.xlu0 %v2247, 107
    %v2250 = vpop.permute.xlu0 %2249
    %vm2252 = vcmask 441704
    %2253 = vst.msk [vmem:[#allocation5] sm:$0xff] %vm2252, %v2250
    %v2254 = vld [vmem:[#allocation4] sm:$0xff]
    %2256 = vrot.lane.b32.xlu0 %v2254, 96
    %v2257 = vpop.permute.xlu0 %2256
    %vm2259 = vcmask 531904
    %2260 = vst.msk [vmem:[#allocation5] sm:$0xff] %vm2259, %v2257
    %v2261 = vld [vmem:[#allocation4] sm:$0xff]
    %2263 = vrot.lane.b32.xlu0 %v2261, 85
    %v2264 = vpop.permute.xlu0 %2263
    %vm2266 = vcmask 622104
    %2267 = vst.msk [vmem:[#allocation5] sm:$0xff] %vm2266, %v2264
    %v2268 = vld [vmem:[#allocation4 + $0x8] sm:$0xff]
    %2270 = vrot.lane.b32.xlu0 %v2268, 74
    %v2271 = vpop.permute.xlu0 %2270
    %vm2273 = vcmask 712304
    %2274 = vst.msk [vmem:[#allocation5] sm:$0xff] %vm2273, %v2271
    %v2275 = vld [vmem:[#allocation4 + $0x8] sm:$0xff]
    %2277 = vrot.lane.b32.xlu0 %v2275, 63
    %v2278 = vpop.permute.xlu0 %2277
    %vm2280 = vcmask 802504
    %2281 = vst.msk [vmem:[#allocation5] sm:$0xff] %vm2280, %v2278
    %v2282 = vld [vmem:[#allocation4 + $0x8] sm:$0xff]
    %2284 = vrot.lane.b32.xlu0 %v2282, 52
    %v2285 = vpop.permute.xlu0 %2284
    %vm2287 = vcmask 1048528
    %2288 = vst.msk [vmem:[#allocation5] sm:$0xff] %vm2287, %v2285
    %vm2289 = vcmask 23552
    %2290 = vst.msk [vmem:[#allocation5 + $0x8] sm:$0xff] %vm2289, %v2285
    %v2291 = vld [vmem:[#allocation4 + $0x8] sm:$0xff]
    %2293 = vrot.lane.b32.xlu0 %v2291, 41
    %v2294 = vpop.permute.xlu0 %2293
    %vm2296 = vcmask 113704
    %2297 = vst.msk [vmem:[#allocation5 + $0x8] sm:$0xff] %vm2296, %v2294
    %v2298 = vld [vmem:[#allocation4 + $0x8] sm:$0xff]
    %2300 = vrot.lane.b32.xlu0 %v2298, 30
    %v2301 = vpop.permute.xlu0 %2300
    %vm2303 = vcmask 203904
    %2304 = vst.msk [vmem:[#allocation5 + $0x8] sm:$0xff] %vm2303, %v2301
    %v2305 = vld [vmem:[#allocation4 + $0x10] sm:$0xff]
    %2307 = vrot.lane.b32.xlu0 %v2305, 19
    %v2308 = vpop.permute.xlu0 %2307
    %vm2310 = vcmask 294104
    %2311 = vst.msk [vmem:[#allocation5 + $0x8] sm:$0xff] %vm2310, %v2308
    %v2312 = vld [vmem:[#allocation4 + $0x10] sm:$0xff]
    %2314 = vrot.lane.b32.xlu0 %v2312, 8
    %v2315 = vpop.permute.xlu0 %2314
    %vm2317 = vcmask 384304
    %2318 = vst.msk [vmem:[#allocation5 + $0x8] sm:$0xff] %vm2317, %v2315
    %v2319 = vld [vmem:[#allocation4 + $0x10] sm:$0xff]
    %2321 = vrot.lane.b32.xlu0 %v2319, 125
    %v2322 = vpop.permute.xlu0 %2321
    %vm2324 = vcmask 474504
    %2325 = vst.msk [vmem:[#allocation5 + $0x8] sm:$0xff] %vm2324, %v2322
    %v2326 = vld [vmem:[#allocation4 + $0x10] sm:$0xff]
    %2328 = vrot.lane.b32.xlu0 %v2326, 114
    %v2329 = vpop.permute.xlu0 %2328
    %vm2331 = vcmask 564704
    %2332 = vst.msk [vmem:[#allocation5 + $0x8] sm:$0xff] %vm2331, %v2329
    %v2333 = vld [vmem:[#allocation4 + $0x10] sm:$0xff]
    %2335 = vrot.lane.b32.xlu0 %v2333, 103
    %v2336 = vpop.permute.xlu0 %2335
    %vm2338 = vcmask 654904
    %2339 = vst.msk [vmem:[#allocation5 + $0x8] sm:$0xff] %vm2338, %v2336
    %v2340 = vld [vmem:[#allocation4 + $0x18] sm:$0xff]
    %2342 = vrot.lane.b32.xlu0 %v2340, 92
    %v2343 = vpop.permute.xlu0 %2342
    %vm2345 = vcmask 925504
    %2346 = vst.msk [vmem:[#allocation5 + $0x8] sm:$0xff] %vm2345, %v2343
    %v2347 = vld [vmem:[#allocation4 + $0x18] sm:$0xff]
    %2349 = vrot.lane.b32.xlu0 %v2347, 81
    %v2350 = vpop.permute.xlu0 %2349
    %vm2352 = vcmask 1015704
    %2353 = vst.msk [vmem:[#allocation5 + $0x8] sm:$0xff] %vm2352, %v2350
    %v2354 = vld [vmem:[#allocation4 + $0x18] sm:$0xff]
    %2356 = vrot.lane.b32.xlu0 %v2354, 70
    %v2357 = vpop.permute.xlu0 %2356
    %vm2359 = vcmask 1048560
    %2360 = vst.msk [vmem:[#allocation5 + $0x8] sm:$0xff] %vm2359, %v2357
    %vm2361 = vcmask 56320
    %2362 = vst.msk [vmem:[#allocation5 + $0x10] sm:$0xff] %vm2361, %v2357
    %v2363 = vld [vmem:[#allocation4 + $0x18] sm:$0xff]
    %2365 = vrot.lane.b32.xlu0 %v2363, 59
    %v2366 = vpop.permute.xlu0 %2365
    %vm2368 = vcmask 146504
    %2369 = vst.msk [vmem:[#allocation5 + $0x10] sm:$0xff] %vm2368, %v2366
    %v2370 = vld [vmem:[#allocation4 + $0x18] sm:$0xff]
    %2372 = vrot.lane.b32.xlu0 %v2370, 48
    %v2373 = vpop.permute.xlu0 %2372
    %vm2375 = vcmask 236704
    %2376 = vst.msk [vmem:[#allocation5 + $0x10] sm:$0xff] %vm2375, %v2373
    %v2377 = vld [vmem:[#allocation4 + $0x18] sm:$0xff]
    %v2378 = vld [vmem:[#allocation4 + $0x20] sm:$0xff]
    %2381 = vrot.lane.b32.xlu0 %v2377, 37
    %v2382 = vpop.permute.xlu0 %2381
    %2383 = vrot.lane.b32.xlu0 %v2378, 37
    %v2384 = vpop.permute.xlu0 %2383
    %vm2385 = vcmask 302080
    %v2386 = vsel %vm2385, %v2382, %v2384
    %vm2388 = vcmask 326904
    %2389 = vst.msk [vmem:[#allocation5 + $0x10] sm:$0xff] %vm2388, %v2386
    %v2390 = vld [vmem:[#allocation4 + $0x20] sm:$0xff]
    %2392 = vrot.lane.b32.xlu0 %v2390, 26
    %v2393 = vpop.permute.xlu0 %2392
    %vm2395 = vcmask 417104
    %2396 = vst.msk [vmem:[#allocation5 + $0x10] sm:$0xff] %vm2395, %v2393
    %v2397 = vld [vmem:[#allocation4 + $0x20] sm:$0xff]
    %2399 = vrot.lane.b32.xlu0 %v2397, 15
    %v2400 = vpop.permute.xlu0 %2399
    %vm2402 = vcmask 507304
    %2403 = vst.msk [vmem:[#allocation5 + $0x10] sm:$0xff] %vm2402, %v2400
    %v2404 = vld [vmem:[#allocation4 + $0x20] sm:$0xff]
    %2406 = vrot.lane.b32.xlu0 %v2404, 4
    %v2407 = vpop.permute.xlu0 %2406
    %vm2409 = vcmask 777904
    %2410 = vst.msk [vmem:[#allocation5 + $0x10] sm:$0xff] %vm2409, %v2407
    %v2411 = vld [vmem:[#allocation4 + $0x20] sm:$0xff]
    %2413 = vrot.lane.b32.xlu0 %v2411, 121
    %v2414 = vpop.permute.xlu0 %2413
    %vm2416 = vcmask 868104
    %2417 = vst.msk [vmem:[#allocation5 + $0x10] sm:$0xff] %vm2416, %v2414
    %v2418 = vld [vmem:[#allocation4 + $0x20] sm:$0xff]
    %v2419 = vld [vmem:[#allocation4 + $0x28] sm:$0xff]
    %2422 = vrot.lane.b32.xlu0 %v2418, 110
    %v2423 = vpop.permute.xlu0 %2422
    %2424 = vrot.lane.b32.xlu0 %v2419, 110
    %v2425 = vpop.permute.xlu0 %2424
    %vm2426 = vcmask 900096
    %v2427 = vsel %vm2426, %v2423, %v2425
    %vm2429 = vcmask 958304
    %2430 = vst.msk [vmem:[#allocation5 + $0x10] sm:$0xff] %vm2429, %v2427
    %v2431 = vld [vmem:[#allocation4 + $0x28] sm:$0xff]
    %2433 = vrot.lane.b32.xlu0 %v2431, 99
    %v2434 = vpop.permute.xlu0 %2433
    %vm2436 = vcmask 1048504
    %2437 = vst.msk [vmem:[#allocation5 + $0x10] sm:$0xff] %vm2436, %v2434
    %v2438 = vld [vmem:[#allocation4 + $0x28] sm:$0xff]
    %2440 = vrot.lane.b32.xlu0 %v2438, 88
    %v2441 = vpop.permute.xlu0 %2440
    %vm2443 = vcmask 89104
    %2444 = vst.msk [vmem:[#allocation5 + $0x18] sm:$0xff] %vm2443, %v2441
    %v2445 = vld [vmem:[#allocation4 + $0x28] sm:$0xff]
    %2447 = vrot.lane.b32.xlu0 %v2445, 77
    %v2448 = vpop.permute.xlu0 %2447
    %vm2450 = vcmask 179304
    %2451 = vst.msk [vmem:[#allocation5 + $0x18] sm:$0xff] %vm2450, %v2448
    %v2452 = vld [vmem:[#allocation4 + $0x28] sm:$0xff]
    %2454 = vrot.lane.b32.xlu0 %v2452, 66
    %v2455 = vpop.permute.xlu0 %2454
    %vm2457 = vcmask 269504
    %2458 = vst.msk [vmem:[#allocation5 + $0x18] sm:$0xff] %vm2457, %v2455
    %v2459 = vld [vmem:[#allocation4 + $0x28] sm:$0xff]
    %2461 = vrot.lane.b32.xlu0 %v2459, 55
    %v2462 = vpop.permute.xlu0 %2461
    %vm2464 = vcmask 359704
    %2465 = vst.msk [vmem:[#allocation5 + $0x18] sm:$0xff] %vm2464, %v2462
    %v2466 = vld [vmem:[%s1] sm:$0xff]
    %v2467 = vld [vmem:[#allocation5] sm:$0xff]
    %v2468 = vld [vmem:[#allocation5 + $0x8] sm:$0xff]
    %v2469 = vld [vmem:[#allocation5 + $0x10] sm:$0xff]
    %v2470 = vld [vmem:[#allocation5 + $0x18] sm:$0xff]
    %2472 = vrot.lane.b32.xlu0 %v2466, 24
    %v2473 = vpop.permute.xlu0 %2472
    %2478 = vrot.lane.b32.xlu0 %v2467, 127
    %v2479 = vpop.permute.xlu0 %2478
    %2480 = vrot.lane.b32.xlu0 %v2468, 127
    %v2481 = vpop.permute.xlu0 %2480
    %2482 = vrot.lane.b32.xlu0 %v2469, 127
    %v2483 = vpop.permute.xlu0 %2482
    %2484 = vrot.lane.b32.xlu0 %v2470, 127
    %v2485 = vpop.permute.xlu0 %2484
    %v2486 = vsel %vm78, %v2479, %v2481
    %v2487 = vsel %vm78, %v2481, %v2483
    %v2488 = vsel %vm78, %v2483, %v2485
    %v2493 = vsel %vm606, %v2473, 0
    %2495 = vmatpush.msra.mxu0 0.0
    %2496 = vmatpush.msra.mxu0 0.0
    %2497 = vmatpush.msra.mxu0 0.0
    %2498 = vmatpush.msra.mxu0 0.0
    %2499 = vmatpush.msra.mxu0 0.0
    %2500 = vmatpush.msra.mxu0 0.0
    %2501 = vmatpush.msra.mxu0 0.0
    %2502 = vmatpush.msra.mxu0 0.0
    %2503 = vmatpush.msra.mxu0 0.0
    %2504 = vmatpush.msra.mxu0 0.0
    %2505 = vmatpush.msra.mxu0 0.0
    %2506 = vmatpush.msra.mxu0 0.0
    %2507 = vmatpush.msra.mxu0 0.0
    %2508 = vmatpush.msra.mxu0 0.0
    %2509 = vmatpush.msra.mxu0 0.0
    %2510 = vmatpush.msra.mxu0 %v2486
    %2511 = vmatmul.f32.gmra.mxu0 %v2493
    %v2512 = vpop.f32.mrf.mxu0
    %v2513 = vadd.f32 0.0, %v2512
    %2514 = vdwg.mxu0
    %2515 = vmatpush.msra.mxu0 0.0
    %2516 = vmatpush.msra.mxu0 0.0
    %2517 = vmatpush.msra.mxu0 0.0
    %2518 = vmatpush.msra.mxu0 0.0
    %2519 = vmatpush.msra.mxu0 0.0
    %2520 = vmatpush.msra.mxu0 0.0
    %2521 = vmatpush.msra.mxu0 0.0
    %2522 = vmatpush.msra.mxu0 0.0
    %2523 = vmatpush.msra.mxu0 0.0
    %2524 = vmatpush.msra.mxu0 0.0
    %2525 = vmatpush.msra.mxu0 0.0
    %2526 = vmatpush.msra.mxu0 0.0
    %2527 = vmatpush.msra.mxu0 0.0
    %2528 = vmatpush.msra.mxu0 0.0
    %2529 = vmatpush.msra.mxu0 0.0
    %2530 = vmatpush.msra.mxu0 %v2487
    %2531 = vmatmul.f32.gmra.mxu0 %v2493
    %v2532 = vpop.f32.mrf.mxu0
    %v2533 = vadd.f32 0.0, %v2532
    %2534 = vdwg.mxu0
    %2535 = vmatpush.msra.mxu0 0.0
    %2536 = vmatpush.msra.mxu0 0.0
    %2537 = vmatpush.msra.mxu0 0.0
    %2538 = vmatpush.msra.mxu0 0.0
    %2539 = vmatpush.msra.mxu0 0.0
    %2540 = vmatpush.msra.mxu0 0.0
    %2541 = vmatpush.msra.mxu0 0.0
    %2542 = vmatpush.msra.mxu0 0.0
    %2543 = vmatpush.msra.mxu0 0.0
    %2544 = vmatpush.msra.mxu0 0.0
    %2545 = vmatpush.msra.mxu0 0.0
    %2546 = vmatpush.msra.mxu0 0.0
    %2547 = vmatpush.msra.mxu0 0.0
    %2548 = vmatpush.msra.mxu0 0.0
    %2549 = vmatpush.msra.mxu0 0.0
    %2550 = vmatpush.msra.mxu0 %v2488
    %2551 = vmatmul.f32.gmra.mxu0 %v2493
    %v2552 = vpop.f32.mrf.mxu0
    %v2553 = vadd.f32 0.0, %v2552
    %2554 = vdwg.mxu0
    %2555 = vmatpush.msra.mxu0 0.0
    %2556 = vmatpush.msra.mxu0 0.0
    %2557 = vmatpush.msra.mxu0 0.0
    %2558 = vmatpush.msra.mxu0 0.0
    %2559 = vmatpush.msra.mxu0 0.0
    %2560 = vmatpush.msra.mxu0 0.0
    %2561 = vmatpush.msra.mxu0 0.0
    %2562 = vmatpush.msra.mxu0 0.0
    %2563 = vmatpush.msra.mxu0 0.0
    %2564 = vmatpush.msra.mxu0 0.0
    %2565 = vmatpush.msra.mxu0 0.0
    %2566 = vmatpush.msra.mxu0 0.0
    %2567 = vmatpush.msra.mxu0 0.0
    %2568 = vmatpush.msra.mxu0 0.0
    %2569 = vmatpush.msra.mxu0 0.0
    %2570 = vmatpush.msra.mxu0 %v2485
    %2571 = vmatmul.f32.gmra.mxu0 %v2493
    %v2572 = vpop.f32.mrf.mxu0
    %v2573 = vadd.f32 0.0, %v2572
    %2574 = vdwg.mxu0
    %2575 = vrot.lane.b32.xlu0 %v2466, 32
    %v2576 = vpop.permute.xlu0 %2575
    %v2577 = vsel %vm606, %v2576, 0
    %2579 = vmatpush.msra.mxu0 0.0
    %2580 = vmatpush.msra.mxu0 0.0
    %2581 = vmatpush.msra.mxu0 0.0
    %2582 = vmatpush.msra.mxu0 0.0
    %2583 = vmatpush.msra.mxu0 0.0
    %2584 = vmatpush.msra.mxu0 0.0
    %2585 = vmatpush.msra.mxu0 0.0
    %2586 = vmatpush.msra.mxu0 0.0
    %2587 = vmatpush.msra.mxu0 0.0
    %2588 = vmatpush.msra.mxu0 0.0
    %2589 = vmatpush.msra.mxu0 0.0
    %2590 = vmatpush.msra.mxu0 0.0
    %2591 = vmatpush.msra.mxu0 0.0
    %2592 = vmatpush.msra.mxu0 0.0
    %2593 = vmatpush.msra.mxu0 0.0
    %2594 = vmatpush.msra.mxu0 %v2467
    %2595 = vmatmul.f32.gmra.mxu0 %v2577
    %v2596 = vpop.f32.mrf.mxu0
    %v2597 = vadd.f32 %v2513, %v2596
    %2598 = vdwg.mxu0
    %2599 = vmatpush.msra.mxu0 0.0
    %2600 = vmatpush.msra.mxu0 0.0
    %2601 = vmatpush.msra.mxu0 0.0
    %2602 = vmatpush.msra.mxu0 0.0
    %2603 = vmatpush.msra.mxu0 0.0
    %2604 = vmatpush.msra.mxu0 0.0
    %2605 = vmatpush.msra.mxu0 0.0
    %2606 = vmatpush.msra.mxu0 0.0
    %2607 = vmatpush.msra.mxu0 0.0
    %2608 = vmatpush.msra.mxu0 0.0
    %2609 = vmatpush.msra.mxu0 0.0
    %2610 = vmatpush.msra.mxu0 0.0
    %2611 = vmatpush.msra.mxu0 0.0
    %2612 = vmatpush.msra.mxu0 0.0
    %2613 = vmatpush.msra.mxu0 0.0
    %2614 = vmatpush.msra.mxu0 %v2468
    %2615 = vmatmul.f32.gmra.mxu0 %v2577
    %v2616 = vpop.f32.mrf.mxu0
    %v2617 = vadd.f32 %v2533, %v2616
    %2618 = vdwg.mxu0
    %2619 = vmatpush.msra.mxu0 0.0
    %2620 = vmatpush.msra.mxu0 0.0
    %2621 = vmatpush.msra.mxu0 0.0
    %2622 = vmatpush.msra.mxu0 0.0
    %2623 = vmatpush.msra.mxu0 0.0
    %2624 = vmatpush.msra.mxu0 0.0
    %2625 = vmatpush.msra.mxu0 0.0
    %2626 = vmatpush.msra.mxu0 0.0
    %2627 = vmatpush.msra.mxu0 0.0
    %2628 = vmatpush.msra.mxu0 0.0
    %2629 = vmatpush.msra.mxu0 0.0
    %2630 = vmatpush.msra.mxu0 0.0
    %2631 = vmatpush.msra.mxu0 0.0
    %2632 = vmatpush.msra.mxu0 0.0
    %2633 = vmatpush.msra.mxu0 0.0
    %2634 = vmatpush.msra.mxu0 %v2469
    %2635 = vmatmul.f32.gmra.mxu0 %v2577
    %v2636 = vpop.f32.mrf.mxu0
    %v2637 = vadd.f32 %v2553, %v2636
    %2638 = vdwg.mxu0
    %2639 = vmatpush.msra.mxu0 0.0
    %2640 = vmatpush.msra.mxu0 0.0
    %2641 = vmatpush.msra.mxu0 0.0
    %2642 = vmatpush.msra.mxu0 0.0
    %2643 = vmatpush.msra.mxu0 0.0
    %2644 = vmatpush.msra.mxu0 0.0
    %2645 = vmatpush.msra.mxu0 0.0
    %2646 = vmatpush.msra.mxu0 0.0
    %2647 = vmatpush.msra.mxu0 0.0
    %2648 = vmatpush.msra.mxu0 0.0
    %2649 = vmatpush.msra.mxu0 0.0
    %2650 = vmatpush.msra.mxu0 0.0
    %2651 = vmatpush.msra.mxu0 0.0
    %2652 = vmatpush.msra.mxu0 0.0
    %2653 = vmatpush.msra.mxu0 0.0
    %2654 = vmatpush.msra.mxu0 %v2470
    %2655 = vmatmul.f32.gmra.mxu0 %v2577
    %v2656 = vpop.f32.mrf.mxu0
    %v2657 = vadd.f32 %v2573, %v2656
    %2658 = vdwg.mxu0
    %2659 = vrot.lane.b32.xlu0 %v2466, 16
    %v2660 = vpop.permute.xlu0 %2659
    %2661 = vrot.lane.b32.xlu0 %v2467, 126
    %v2662 = vpop.permute.xlu0 %2661
    %2663 = vrot.lane.b32.xlu0 %v2468, 126
    %v2664 = vpop.permute.xlu0 %2663
    %2665 = vrot.lane.b32.xlu0 %v2469, 126
    %v2666 = vpop.permute.xlu0 %2665
    %2667 = vrot.lane.b32.xlu0 %v2470, 126
    %v2668 = vpop.permute.xlu0 %2667
    %v2669 = vsel %vm131, %v2662, %v2664
    %v2670 = vsel %vm131, %v2664, %v2666
    %v2671 = vsel %vm131, %v2666, %v2668
    %v2676 = vsel %vm606, %v2660, 0
    %2678 = vmatpush.msra.mxu0 0.0
    %2679 = vmatpush.msra.mxu0 0.0
    %2680 = vmatpush.msra.mxu0 0.0
    %2681 = vmatpush.msra.mxu0 0.0
    %2682 = vmatpush.msra.mxu0 0.0
    %2683 = vmatpush.msra.mxu0 0.0
    %2684 = vmatpush.msra.mxu0 0.0
    %2685 = vmatpush.msra.mxu0 0.0
    %2686 = vmatpush.msra.mxu0 0.0
    %2687 = vmatpush.msra.mxu0 0.0
    %2688 = vmatpush.msra.mxu0 0.0
    %2689 = vmatpush.msra.mxu0 0.0
    %2690 = vmatpush.msra.mxu0 0.0
    %2691 = vmatpush.msra.mxu0 0.0
    %2692 = vmatpush.msra.mxu0 0.0
    %2693 = vmatpush.msra.mxu0 %v2669
    %2694 = vmatmul.f32.gmra.mxu0 %v2676
    %v2695 = vpop.f32.mrf.mxu0
    %v2696 = vadd.f32 0.0, %v2695
    %2697 = vdwg.mxu0
    %2698 = vmatpush.msra.mxu0 0.0
    %2699 = vmatpush.msra.mxu0 0.0
    %2700 = vmatpush.msra.mxu0 0.0
    %2701 = vmatpush.msra.mxu0 0.0
    %2702 = vmatpush.msra.mxu0 0.0
    %2703 = vmatpush.msra.mxu0 0.0
    %2704 = vmatpush.msra.mxu0 0.0
    %2705 = vmatpush.msra.mxu0 0.0
    %2706 = vmatpush.msra.mxu0 0.0
    %2707 = vmatpush.msra.mxu0 0.0
    %2708 = vmatpush.msra.mxu0 0.0
    %2709 = vmatpush.msra.mxu0 0.0
    %2710 = vmatpush.msra.mxu0 0.0
    %2711 = vmatpush.msra.mxu0 0.0
    %2712 = vmatpush.msra.mxu0 0.0
    %2713 = vmatpush.msra.mxu0 %v2670
    %2714 = vmatmul.f32.gmra.mxu0 %v2676
    %v2715 = vpop.f32.mrf.mxu0
    %v2716 = vadd.f32 0.0, %v2715
    %2717 = vdwg.mxu0
    %2718 = vmatpush.msra.mxu0 0.0
    %2719 = vmatpush.msra.mxu0 0.0
    %2720 = vmatpush.msra.mxu0 0.0
    %2721 = vmatpush.msra.mxu0 0.0
    %2722 = vmatpush.msra.mxu0 0.0
    %2723 = vmatpush.msra.mxu0 0.0
    %2724 = vmatpush.msra.mxu0 0.0
    %2725 = vmatpush.msra.mxu0 0.0
    %2726 = vmatpush.msra.mxu0 0.0
    %2727 = vmatpush.msra.mxu0 0.0
    %2728 = vmatpush.msra.mxu0 0.0
    %2729 = vmatpush.msra.mxu0 0.0
    %2730 = vmatpush.msra.mxu0 0.0
    %2731 = vmatpush.msra.mxu0 0.0
    %2732 = vmatpush.msra.mxu0 0.0
    %2733 = vmatpush.msra.mxu0 %v2671
    %2734 = vmatmul.f32.gmra.mxu0 %v2676
    %v2735 = vpop.f32.mrf.mxu0
    %v2736 = vadd.f32 0.0, %v2735
    %2737 = vdwg.mxu0
    %2738 = vmatpush.msra.mxu0 0.0
    %2739 = vmatpush.msra.mxu0 0.0
    %2740 = vmatpush.msra.mxu0 0.0
    %2741 = vmatpush.msra.mxu0 0.0
    %2742 = vmatpush.msra.mxu0 0.0
    %2743 = vmatpush.msra.mxu0 0.0
    %2744 = vmatpush.msra.mxu0 0.0
    %2745 = vmatpush.msra.mxu0 0.0
    %2746 = vmatpush.msra.mxu0 0.0
    %2747 = vmatpush.msra.mxu0 0.0
    %2748 = vmatpush.msra.mxu0 0.0
    %2749 = vmatpush.msra.mxu0 0.0
    %2750 = vmatpush.msra.mxu0 0.0
    %2751 = vmatpush.msra.mxu0 0.0
    %2752 = vmatpush.msra.mxu0 0.0
    %2753 = vmatpush.msra.mxu0 %v2668
    %2754 = vmatmul.f32.gmra.mxu0 %v2676
    %v2755 = vpop.f32.mrf.mxu0
    %v2756 = vadd.f32 0.0, %v2755
    %2757 = vdwg.mxu0
    %v2758 = vadd.f32 %v2597, %v2696
    %v2759 = vadd.f32 %v2617, %v2716
    %v2760 = vadd.f32 %v2637, %v2736
    %v2761 = vadd.f32 %v2657, %v2756
    %2762 = vrot.lane.b32.xlu0 %v2466, 8
    %v2763 = vpop.permute.xlu0 %2762
    %2764 = vrot.lane.b32.xlu0 %v2467, 117
    %v2765 = vpop.permute.xlu0 %2764
    %2766 = vrot.lane.b32.xlu0 %v2468, 117
    %v2767 = vpop.permute.xlu0 %2766
    %2768 = vrot.lane.b32.xlu0 %v2469, 117
    %v2769 = vpop.permute.xlu0 %2768
    %2770 = vrot.lane.b32.xlu0 %v2470, 117
    %v2771 = vpop.permute.xlu0 %2770
    %v2772 = vsel %vm184, %v2765, %v2767
    %v2773 = vsel %vm184, %v2767, %v2769
    %v2774 = vsel %vm184, %v2769, %v2771
    %v2779 = vsel %vm606, %v2763, 0
    %2781 = vmatpush.msra.mxu0 0.0
    %2782 = vmatpush.msra.mxu0 0.0
    %2783 = vmatpush.msra.mxu0 0.0
    %2784 = vmatpush.msra.mxu0 0.0
    %2785 = vmatpush.msra.mxu0 0.0
    %2786 = vmatpush.msra.mxu0 0.0
    %2787 = vmatpush.msra.mxu0 0.0
    %2788 = vmatpush.msra.mxu0 0.0
    %2789 = vmatpush.msra.mxu0 0.0
    %2790 = vmatpush.msra.mxu0 0.0
    %2791 = vmatpush.msra.mxu0 0.0
    %2792 = vmatpush.msra.mxu0 0.0
    %2793 = vmatpush.msra.mxu0 0.0
    %2794 = vmatpush.msra.mxu0 0.0
    %2795 = vmatpush.msra.mxu0 0.0
    %2796 = vmatpush.msra.mxu0 %v2772
    %2797 = vmatmul.f32.gmra.mxu0 %v2779
    %v2798 = vpop.f32.mrf.mxu0
    %v2799 = vadd.f32 0.0, %v2798
    %2800 = vdwg.mxu0
    %2801 = vmatpush.msra.mxu0 0.0
    %2802 = vmatpush.msra.mxu0 0.0
    %2803 = vmatpush.msra.mxu0 0.0
    %2804 = vmatpush.msra.mxu0 0.0
    %2805 = vmatpush.msra.mxu0 0.0
    %2806 = vmatpush.msra.mxu0 0.0
    %2807 = vmatpush.msra.mxu0 0.0
    %2808 = vmatpush.msra.mxu0 0.0
    %2809 = vmatpush.msra.mxu0 0.0
    %2810 = vmatpush.msra.mxu0 0.0
    %2811 = vmatpush.msra.mxu0 0.0
    %2812 = vmatpush.msra.mxu0 0.0
    %2813 = vmatpush.msra.mxu0 0.0
    %2814 = vmatpush.msra.mxu0 0.0
    %2815 = vmatpush.msra.mxu0 0.0
    %2816 = vmatpush.msra.mxu0 %v2773
    %2817 = vmatmul.f32.gmra.mxu0 %v2779
    %v2818 = vpop.f32.mrf.mxu0
    %v2819 = vadd.f32 0.0, %v2818
    %2820 = vdwg.mxu0
    %2821 = vmatpush.msra.mxu0 0.0
    %2822 = vmatpush.msra.mxu0 0.0
    %2823 = vmatpush.msra.mxu0 0.0
    %2824 = vmatpush.msra.mxu0 0.0
    %2825 = vmatpush.msra.mxu0 0.0
    %2826 = vmatpush.msra.mxu0 0.0
    %2827 = vmatpush.msra.mxu0 0.0
    %2828 = vmatpush.msra.mxu0 0.0
    %2829 = vmatpush.msra.mxu0 0.0
    %2830 = vmatpush.msra.mxu0 0.0
    %2831 = vmatpush.msra.mxu0 0.0
    %2832 = vmatpush.msra.mxu0 0.0
    %2833 = vmatpush.msra.mxu0 0.0
    %2834 = vmatpush.msra.mxu0 0.0
    %2835 = vmatpush.msra.mxu0 0.0
    %2836 = vmatpush.msra.mxu0 %v2774
    %2837 = vmatmul.f32.gmra.mxu0 %v2779
    %v2838 = vpop.f32.mrf.mxu0
    %v2839 = vadd.f32 0.0, %v2838
    %2840 = vdwg.mxu0
    %2841 = vmatpush.msra.mxu0 0.0
    %2842 = vmatpush.msra.mxu0 0.0
    %2843 = vmatpush.msra.mxu0 0.0
    %2844 = vmatpush.msra.mxu0 0.0
    %2845 = vmatpush.msra.mxu0 0.0
    %2846 = vmatpush.msra.mxu0 0.0
    %2847 = vmatpush.msra.mxu0 0.0
    %2848 = vmatpush.msra.mxu0 0.0
    %2849 = vmatpush.msra.mxu0 0.0
    %2850 = vmatpush.msra.mxu0 0.0
    %2851 = vmatpush.msra.mxu0 0.0
    %2852 = vmatpush.msra.mxu0 0.0
    %2853 = vmatpush.msra.mxu0 0.0
    %2854 = vmatpush.msra.mxu0 0.0
    %2855 = vmatpush.msra.mxu0 0.0
    %2856 = vmatpush.msra.mxu0 %v2771
    %2857 = vmatmul.f32.gmra.mxu0 %v2779
    %v2858 = vpop.f32.mrf.mxu0
    %v2859 = vadd.f32 0.0, %v2858
    %2860 = vdwg.mxu0
    %v2861 = vadd.f32 %v2758, %v2799
    %v2862 = vadd.f32 %v2759, %v2819
    %v2863 = vadd.f32 %v2760, %v2839
    %v2864 = vadd.f32 %v2761, %v2859
    %v2865 = vld [vmem:[%s1 + $0x8] sm:$0xff]
    %2866 = vrot.lane.b32.xlu0 %v2467, 116
    %v2867 = vpop.permute.xlu0 %2866
    %2868 = vrot.lane.b32.xlu0 %v2468, 116
    %v2869 = vpop.permute.xlu0 %2868
    %2870 = vrot.lane.b32.xlu0 %v2469, 116
    %v2871 = vpop.permute.xlu0 %2870
    %2872 = vrot.lane.b32.xlu0 %v2470, 116
    %v2873 = vpop.permute.xlu0 %2872
    %v2874 = vsel %vm237, %v2867, %v2869
    %v2875 = vsel %vm237, %v2869, %v2871
    %v2876 = vsel %vm237, %v2871, %v2873
    %v2882 = vsel %vm606, %v2865, 0
    %2884 = vmatpush.msra.mxu0 0.0
    %2885 = vmatpush.msra.mxu0 0.0
    %2886 = vmatpush.msra.mxu0 0.0
    %2887 = vmatpush.msra.mxu0 0.0
    %2888 = vmatpush.msra.mxu0 0.0
    %2889 = vmatpush.msra.mxu0 0.0
    %2890 = vmatpush.msra.mxu0 0.0
    %2891 = vmatpush.msra.mxu0 0.0
    %2892 = vmatpush.msra.mxu0 0.0
    %2893 = vmatpush.msra.mxu0 0.0
    %2894 = vmatpush.msra.mxu0 0.0
    %2895 = vmatpush.msra.mxu0 0.0
    %2896 = vmatpush.msra.mxu0 0.0
    %2897 = vmatpush.msra.mxu0 0.0
    %2898 = vmatpush.msra.mxu0 0.0
    %2899 = vmatpush.msra.mxu0 %v2874
    %2900 = vmatmul.f32.gmra.mxu0 %v2882
    %v2901 = vpop.f32.mrf.mxu0
    %v2902 = vadd.f32 0.0, %v2901
    %2903 = vdwg.mxu0
    %2904 = vmatpush.msra.mxu0 0.0
    %2905 = vmatpush.msra.mxu0 0.0
    %2906 = vmatpush.msra.mxu0 0.0
    %2907 = vmatpush.msra.mxu0 0.0
    %2908 = vmatpush.msra.mxu0 0.0
    %2909 = vmatpush.msra.mxu0 0.0
    %2910 = vmatpush.msra.mxu0 0.0
    %2911 = vmatpush.msra.mxu0 0.0
    %2912 = vmatpush.msra.mxu0 0.0
    %2913 = vmatpush.msra.mxu0 0.0
    %2914 = vmatpush.msra.mxu0 0.0
    %2915 = vmatpush.msra.mxu0 0.0
    %2916 = vmatpush.msra.mxu0 0.0
    %2917 = vmatpush.msra.mxu0 0.0
    %2918 = vmatpush.msra.mxu0 0.0
    %2919 = vmatpush.msra.mxu0 %v2875
    %2920 = vmatmul.f32.gmra.mxu0 %v2882
    %v2921 = vpop.f32.mrf.mxu0
    %v2922 = vadd.f32 0.0, %v2921
    %2923 = vdwg.mxu0
    %2924 = vmatpush.msra.mxu0 0.0
    %2925 = vmatpush.msra.mxu0 0.0
    %2926 = vmatpush.msra.mxu0 0.0
    %2927 = vmatpush.msra.mxu0 0.0
    %2928 = vmatpush.msra.mxu0 0.0
    %2929 = vmatpush.msra.mxu0 0.0
    %2930 = vmatpush.msra.mxu0 0.0
    %2931 = vmatpush.msra.mxu0 0.0
    %2932 = vmatpush.msra.mxu0 0.0
    %2933 = vmatpush.msra.mxu0 0.0
    %2934 = vmatpush.msra.mxu0 0.0
    %2935 = vmatpush.msra.mxu0 0.0
    %2936 = vmatpush.msra.mxu0 0.0
    %2937 = vmatpush.msra.mxu0 0.0
    %2938 = vmatpush.msra.mxu0 0.0
    %2939 = vmatpush.msra.mxu0 %v2876
    %2940 = vmatmul.f32.gmra.mxu0 %v2882
    %v2941 = vpop.f32.mrf.mxu0
    %v2942 = vadd.f32 0.0, %v2941
    %2943 = vdwg.mxu0
    %2944 = vmatpush.msra.mxu0 0.0
    %2945 = vmatpush.msra.mxu0 0.0
    %2946 = vmatpush.msra.mxu0 0.0
    %2947 = vmatpush.msra.mxu0 0.0
    %2948 = vmatpush.msra.mxu0 0.0
    %2949 = vmatpush.msra.mxu0 0.0
    %2950 = vmatpush.msra.mxu0 0.0
    %2951 = vmatpush.msra.mxu0 0.0
    %2952 = vmatpush.msra.mxu0 0.0
    %2953 = vmatpush.msra.mxu0 0.0
    %2954 = vmatpush.msra.mxu0 0.0
    %2955 = vmatpush.msra.mxu0 0.0
    %2956 = vmatpush.msra.mxu0 0.0
    %2957 = vmatpush.msra.mxu0 0.0
    %2958 = vmatpush.msra.mxu0 0.0
    %2959 = vmatpush.msra.mxu0 %v2873
    %2960 = vmatmul.f32.gmra.mxu0 %v2882
    %v2961 = vpop.f32.mrf.mxu0
    %v2962 = vadd.f32 0.0, %v2961
    %2963 = vdwg.mxu0
    %v2964 = vadd.f32 %v2861, %v2902
    %v2965 = vadd.f32 %v2862, %v2922
    %v2966 = vadd.f32 %v2863, %v2942
    %v2967 = vadd.f32 %v2864, %v2962
    %2968 = vrot.lane.b32.xlu0 %v2865, 120
    %v2969 = vpop.permute.xlu0 %2968
    %2970 = vrot.lane.b32.xlu0 %v2467, 115
    %v2971 = vpop.permute.xlu0 %2970
    %2972 = vrot.lane.b32.xlu0 %v2468, 115
    %v2973 = vpop.permute.xlu0 %2972
    %2974 = vrot.lane.b32.xlu0 %v2469, 115
    %v2975 = vpop.permute.xlu0 %2974
    %2976 = vrot.lane.b32.xlu0 %v2470, 115
    %v2977 = vpop.permute.xlu0 %2976
    %v2978 = vsel %vm290, %v2971, %v2973
    %v2979 = vsel %vm290, %v2973, %v2975
    %v2980 = vsel %vm290, %v2975, %v2977
    %v2985 = vsel %vm606, %v2969, 0
    %2987 = vmatpush.msra.mxu0 0.0
    %2988 = vmatpush.msra.mxu0 0.0
    %2989 = vmatpush.msra.mxu0 0.0
    %2990 = vmatpush.msra.mxu0 0.0
    %2991 = vmatpush.msra.mxu0 0.0
    %2992 = vmatpush.msra.mxu0 0.0
    %2993 = vmatpush.msra.mxu0 0.0
    %2994 = vmatpush.msra.mxu0 0.0
    %2995 = vmatpush.msra.mxu0 0.0
    %2996 = vmatpush.msra.mxu0 0.0
    %2997 = vmatpush.msra.mxu0 0.0
    %2998 = vmatpush.msra.mxu0 0.0
    %2999 = vmatpush.msra.mxu0 0.0
    %3000 = vmatpush.msra.mxu0 0.0
    %3001 = vmatpush.msra.mxu0 0.0
    %3002 = vmatpush.msra.mxu0 %v2978
    %3003 = vmatmul.f32.gmra.mxu0 %v2985
    %v3004 = vpop.f32.mrf.mxu0
    %v3005 = vadd.f32 0.0, %v3004
    %3006 = vdwg.mxu0
    %3007 = vmatpush.msra.mxu0 0.0
    %3008 = vmatpush.msra.mxu0 0.0
    %3009 = vmatpush.msra.mxu0 0.0
    %3010 = vmatpush.msra.mxu0 0.0
    %3011 = vmatpush.msra.mxu0 0.0
    %3012 = vmatpush.msra.mxu0 0.0
    %3013 = vmatpush.msra.mxu0 0.0
    %3014 = vmatpush.msra.mxu0 0.0
    %3015 = vmatpush.msra.mxu0 0.0
    %3016 = vmatpush.msra.mxu0 0.0
    %3017 = vmatpush.msra.mxu0 0.0
    %3018 = vmatpush.msra.mxu0 0.0
    %3019 = vmatpush.msra.mxu0 0.0
    %3020 = vmatpush.msra.mxu0 0.0
    %3021 = vmatpush.msra.mxu0 0.0
    %3022 = vmatpush.msra.mxu0 %v2979
    %3023 = vmatmul.f32.gmra.mxu0 %v2985
    %v3024 = vpop.f32.mrf.mxu0
    %v3025 = vadd.f32 0.0, %v3024
    %3026 = vdwg.mxu0
    %3027 = vmatpush.msra.mxu0 0.0
    %3028 = vmatpush.msra.mxu0 0.0
    %3029 = vmatpush.msra.mxu0 0.0
    %3030 = vmatpush.msra.mxu0 0.0
    %3031 = vmatpush.msra.mxu0 0.0
    %3032 = vmatpush.msra.mxu0 0.0
    %3033 = vmatpush.msra.mxu0 0.0
    %3034 = vmatpush.msra.mxu0 0.0
    %3035 = vmatpush.msra.mxu0 0.0
    %3036 = vmatpush.msra.mxu0 0.0
    %3037 = vmatpush.msra.mxu0 0.0
    %3038 = vmatpush.msra.mxu0 0.0
    %3039 = vmatpush.msra.mxu0 0.0
    %3040 = vmatpush.msra.mxu0 0.0
    %3041 = vmatpush.msra.mxu0 0.0
    %3042 = vmatpush.msra.mxu0 %v2980
    %3043 = vmatmul.f32.gmra.mxu0 %v2985
    %v3044 = vpop.f32.mrf.mxu0
    %v3045 = vadd.f32 0.0, %v3044
    %3046 = vdwg.mxu0
    %3047 = vmatpush.msra.mxu0 0.0
    %3048 = vmatpush.msra.mxu0 0.0
    %3049 = vmatpush.msra.mxu0 0.0
    %3050 = vmatpush.msra.mxu0 0.0
    %3051 = vmatpush.msra.mxu0 0.0
    %3052 = vmatpush.msra.mxu0 0.0
    %3053 = vmatpush.msra.mxu0 0.0
    %3054 = vmatpush.msra.mxu0 0.0
    %3055 = vmatpush.msra.mxu0 0.0
    %3056 = vmatpush.msra.mxu0 0.0
    %3057 = vmatpush.msra.mxu0 0.0
    %3058 = vmatpush.msra.mxu0 0.0
    %3059 = vmatpush.msra.mxu0 0.0
    %3060 = vmatpush.msra.mxu0 0.0
    %3061 = vmatpush.msra.mxu0 0.0
    %3062 = vmatpush.msra.mxu0 %v2977
    %3063 = vmatmul.f32.gmra.mxu0 %v2985
    %v3064 = vpop.f32.mrf.mxu0
    %v3065 = vadd.f32 0.0, %v3064
    %3066 = vdwg.mxu0
    %v3067 = vadd.f32 %v2964, %v3005
    %v3068 = vadd.f32 %v2965, %v3025
    %v3069 = vadd.f32 %v2966, %v3045
    %v3070 = vadd.f32 %v2967, %v3065
    %3071 = vrot.lane.b32.xlu0 %v2865, 112
    %v3072 = vpop.permute.xlu0 %3071
    %3073 = vrot.lane.b32.xlu0 %v2467, 106
    %v3074 = vpop.permute.xlu0 %3073
    %3075 = vrot.lane.b32.xlu0 %v2468, 106
    %v3076 = vpop.permute.xlu0 %3075
    %3077 = vrot.lane.b32.xlu0 %v2469, 106
    %v3078 = vpop.permute.xlu0 %3077
    %3079 = vrot.lane.b32.xlu0 %v2470, 106
    %v3080 = vpop.permute.xlu0 %3079
    %v3081 = vsel %vm343, %v3074, %v3076
    %v3082 = vsel %vm343, %v3076, %v3078
    %v3083 = vsel %vm343, %v3078, %v3080
    %v3088 = vsel %vm606, %v3072, 0
    %3090 = vmatpush.msra.mxu0 0.0
    %3091 = vmatpush.msra.mxu0 0.0
    %3092 = vmatpush.msra.mxu0 0.0
    %3093 = vmatpush.msra.mxu0 0.0
    %3094 = vmatpush.msra.mxu0 0.0
    %3095 = vmatpush.msra.mxu0 0.0
    %3096 = vmatpush.msra.mxu0 0.0
    %3097 = vmatpush.msra.mxu0 0.0
    %3098 = vmatpush.msra.mxu0 0.0
    %3099 = vmatpush.msra.mxu0 0.0
    %3100 = vmatpush.msra.mxu0 0.0
    %3101 = vmatpush.msra.mxu0 0.0
    %3102 = vmatpush.msra.mxu0 0.0
    %3103 = vmatpush.msra.mxu0 0.0
    %3104 = vmatpush.msra.mxu0 0.0
    %3105 = vmatpush.msra.mxu0 %v3081
    %3106 = vmatmul.f32.gmra.mxu0 %v3088
    %v3107 = vpop.f32.mrf.mxu0
    %v3108 = vadd.f32 0.0, %v3107
    %3109 = vdwg.mxu0
    %3110 = vmatpush.msra.mxu0 0.0
    %3111 = vmatpush.msra.mxu0 0.0
    %3112 = vmatpush.msra.mxu0 0.0
    %3113 = vmatpush.msra.mxu0 0.0
    %3114 = vmatpush.msra.mxu0 0.0
    %3115 = vmatpush.msra.mxu0 0.0
    %3116 = vmatpush.msra.mxu0 0.0
    %3117 = vmatpush.msra.mxu0 0.0
    %3118 = vmatpush.msra.mxu0 0.0
    %3119 = vmatpush.msra.mxu0 0.0
    %3120 = vmatpush.msra.mxu0 0.0
    %3121 = vmatpush.msra.mxu0 0.0
    %3122 = vmatpush.msra.mxu0 0.0
    %3123 = vmatpush.msra.mxu0 0.0
    %3124 = vmatpush.msra.mxu0 0.0
    %3125 = vmatpush.msra.mxu0 %v3082
    %3126 = vmatmul.f32.gmra.mxu0 %v3088
    %v3127 = vpop.f32.mrf.mxu0
    %v3128 = vadd.f32 0.0, %v3127
    %3129 = vdwg.mxu0
    %3130 = vmatpush.msra.mxu0 0.0
    %3131 = vmatpush.msra.mxu0 0.0
    %3132 = vmatpush.msra.mxu0 0.0
    %3133 = vmatpush.msra.mxu0 0.0
    %3134 = vmatpush.msra.mxu0 0.0
    %3135 = vmatpush.msra.mxu0 0.0
    %3136 = vmatpush.msra.mxu0 0.0
    %3137 = vmatpush.msra.mxu0 0.0
    %3138 = vmatpush.msra.mxu0 0.0
    %3139 = vmatpush.msra.mxu0 0.0
    %3140 = vmatpush.msra.mxu0 0.0
    %3141 = vmatpush.msra.mxu0 0.0
    %3142 = vmatpush.msra.mxu0 0.0
    %3143 = vmatpush.msra.mxu0 0.0
    %3144 = vmatpush.msra.mxu0 0.0
    %3145 = vmatpush.msra.mxu0 %v3083
    %3146 = vmatmul.f32.gmra.mxu0 %v3088
    %v3147 = vpop.f32.mrf.mxu0
    %v3148 = vadd.f32 0.0, %v3147
    %3149 = vdwg.mxu0
    %3150 = vmatpush.msra.mxu0 0.0
    %3151 = vmatpush.msra.mxu0 0.0
    %3152 = vmatpush.msra.mxu0 0.0
    %3153 = vmatpush.msra.mxu0 0.0
    %3154 = vmatpush.msra.mxu0 0.0
    %3155 = vmatpush.msra.mxu0 0.0
    %3156 = vmatpush.msra.mxu0 0.0
    %3157 = vmatpush.msra.mxu0 0.0
    %3158 = vmatpush.msra.mxu0 0.0
    %3159 = vmatpush.msra.mxu0 0.0
    %3160 = vmatpush.msra.mxu0 0.0
    %3161 = vmatpush.msra.mxu0 0.0
    %3162 = vmatpush.msra.mxu0 0.0
    %3163 = vmatpush.msra.mxu0 0.0
    %3164 = vmatpush.msra.mxu0 0.0
    %3165 = vmatpush.msra.mxu0 %v3080
    %3166 = vmatmul.f32.gmra.mxu0 %v3088
    %v3167 = vpop.f32.mrf.mxu0
    %v3168 = vadd.f32 0.0, %v3167
    %3169 = vdwg.mxu0
    %v3170 = vadd.f32 %v3067, %v3108
    %v3171 = vadd.f32 %v3068, %v3128
    %v3172 = vadd.f32 %v3069, %v3148
    %v3173 = vadd.f32 %v3070, %v3168
    %3174 = vrot.lane.b32.xlu0 %v2865, 104
    %v3175 = vpop.permute.xlu0 %3174
    %3176 = vrot.lane.b32.xlu0 %v2467, 105
    %v3177 = vpop.permute.xlu0 %3176
    %3178 = vrot.lane.b32.xlu0 %v2468, 105
    %v3179 = vpop.permute.xlu0 %3178
    %3180 = vrot.lane.b32.xlu0 %v2469, 105
    %v3181 = vpop.permute.xlu0 %3180
    %3182 = vrot.lane.b32.xlu0 %v2470, 105
    %v3183 = vpop.permute.xlu0 %3182
    %v3184 = vsel %vm396, %v3177, %v3179
    %v3185 = vsel %vm396, %v3179, %v3181
    %v3186 = vsel %vm396, %v3181, %v3183
    %v3191 = vsel %vm606, %v3175, 0
    %3193 = vmatpush.msra.mxu0 0.0
    %3194 = vmatpush.msra.mxu0 0.0
    %3195 = vmatpush.msra.mxu0 0.0
    %3196 = vmatpush.msra.mxu0 0.0
    %3197 = vmatpush.msra.mxu0 0.0
    %3198 = vmatpush.msra.mxu0 0.0
    %3199 = vmatpush.msra.mxu0 0.0
    %3200 = vmatpush.msra.mxu0 0.0
    %3201 = vmatpush.msra.mxu0 0.0
    %3202 = vmatpush.msra.mxu0 0.0
    %3203 = vmatpush.msra.mxu0 0.0
    %3204 = vmatpush.msra.mxu0 0.0
    %3205 = vmatpush.msra.mxu0 0.0
    %3206 = vmatpush.msra.mxu0 0.0
    %3207 = vmatpush.msra.mxu0 0.0
    %3208 = vmatpush.msra.mxu0 %v3184
    %3209 = vmatmul.f32.gmra.mxu0 %v3191
    %v3210 = vpop.f32.mrf.mxu0
    %v3211 = vadd.f32 0.0, %v3210
    %3212 = vdwg.mxu0
    %3213 = vmatpush.msra.mxu0 0.0
    %3214 = vmatpush.msra.mxu0 0.0
    %3215 = vmatpush.msra.mxu0 0.0
    %3216 = vmatpush.msra.mxu0 0.0
    %3217 = vmatpush.msra.mxu0 0.0
    %3218 = vmatpush.msra.mxu0 0.0
    %3219 = vmatpush.msra.mxu0 0.0
    %3220 = vmatpush.msra.mxu0 0.0
    %3221 = vmatpush.msra.mxu0 0.0
    %3222 = vmatpush.msra.mxu0 0.0
    %3223 = vmatpush.msra.mxu0 0.0
    %3224 = vmatpush.msra.mxu0 0.0
    %3225 = vmatpush.msra.mxu0 0.0
    %3226 = vmatpush.msra.mxu0 0.0
    %3227 = vmatpush.msra.mxu0 0.0
    %3228 = vmatpush.msra.mxu0 %v3185
    %3229 = vmatmul.f32.gmra.mxu0 %v3191
    %v3230 = vpop.f32.mrf.mxu0
    %v3231 = vadd.f32 0.0, %v3230
    %3232 = vdwg.mxu0
    %3233 = vmatpush.msra.mxu0 0.0
    %3234 = vmatpush.msra.mxu0 0.0
    %3235 = vmatpush.msra.mxu0 0.0
    %3236 = vmatpush.msra.mxu0 0.0
    %3237 = vmatpush.msra.mxu0 0.0
    %3238 = vmatpush.msra.mxu0 0.0
    %3239 = vmatpush.msra.mxu0 0.0
    %3240 = vmatpush.msra.mxu0 0.0
    %3241 = vmatpush.msra.mxu0 0.0
    %3242 = vmatpush.msra.mxu0 0.0
    %3243 = vmatpush.msra.mxu0 0.0
    %3244 = vmatpush.msra.mxu0 0.0
    %3245 = vmatpush.msra.mxu0 0.0
    %3246 = vmatpush.msra.mxu0 0.0
    %3247 = vmatpush.msra.mxu0 0.0
    %3248 = vmatpush.msra.mxu0 %v3186
    %3249 = vmatmul.f32.gmra.mxu0 %v3191
    %v3250 = vpop.f32.mrf.mxu0
    %v3251 = vadd.f32 0.0, %v3250
    %3252 = vdwg.mxu0
    %3253 = vmatpush.msra.mxu0 0.0
    %3254 = vmatpush.msra.mxu0 0.0
    %3255 = vmatpush.msra.mxu0 0.0
    %3256 = vmatpush.msra.mxu0 0.0
    %3257 = vmatpush.msra.mxu0 0.0
    %3258 = vmatpush.msra.mxu0 0.0
    %3259 = vmatpush.msra.mxu0 0.0
    %3260 = vmatpush.msra.mxu0 0.0
    %3261 = vmatpush.msra.mxu0 0.0
    %3262 = vmatpush.msra.mxu0 0.0
    %3263 = vmatpush.msra.mxu0 0.0
    %3264 = vmatpush.msra.mxu0 0.0
    %3265 = vmatpush.msra.mxu0 0.0
    %3266 = vmatpush.msra.mxu0 0.0
    %3267 = vmatpush.msra.mxu0 0.0
    %3268 = vmatpush.msra.mxu0 %v3183
    %3269 = vmatmul.f32.gmra.mxu0 %v3191
    %v3270 = vpop.f32.mrf.mxu0
    %v3271 = vadd.f32 0.0, %v3270
    %3272 = vdwg.mxu0
    %v3273 = vadd.f32 %v3170, %v3211
    %v3274 = vadd.f32 %v3171, %v3231
    %v3275 = vadd.f32 %v3172, %v3251
    %v3276 = vadd.f32 %v3173, %v3271
    %3277 = vrot.lane.b32.xlu0 %v2865, 96
    %v3278 = vpop.permute.xlu0 %3277
    %3279 = vrot.lane.b32.xlu0 %v2467, 104
    %v3280 = vpop.permute.xlu0 %3279
    %3281 = vrot.lane.b32.xlu0 %v2468, 104
    %v3282 = vpop.permute.xlu0 %3281
    %3283 = vrot.lane.b32.xlu0 %v2469, 104
    %v3284 = vpop.permute.xlu0 %3283
    %3285 = vrot.lane.b32.xlu0 %v2470, 104
    %v3286 = vpop.permute.xlu0 %3285
    %v3287 = vsel %vm449, %v3280, %v3282
    %v3288 = vsel %vm449, %v3282, %v3284
    %v3289 = vsel %vm449, %v3284, %v3286
    %v3294 = vsel %vm606, %v3278, 0
    %3296 = vmatpush.msra.mxu0 0.0
    %3297 = vmatpush.msra.mxu0 0.0
    %3298 = vmatpush.msra.mxu0 0.0
    %3299 = vmatpush.msra.mxu0 0.0
    %3300 = vmatpush.msra.mxu0 0.0
    %3301 = vmatpush.msra.mxu0 0.0
    %3302 = vmatpush.msra.mxu0 0.0
    %3303 = vmatpush.msra.mxu0 0.0
    %3304 = vmatpush.msra.mxu0 0.0
    %3305 = vmatpush.msra.mxu0 0.0
    %3306 = vmatpush.msra.mxu0 0.0
    %3307 = vmatpush.msra.mxu0 0.0
    %3308 = vmatpush.msra.mxu0 0.0
    %3309 = vmatpush.msra.mxu0 0.0
    %3310 = vmatpush.msra.mxu0 0.0
    %3311 = vmatpush.msra.mxu0 %v3287
    %3312 = vmatmul.f32.gmra.mxu0 %v3294
    %v3313 = vpop.f32.mrf.mxu0
    %v3314 = vadd.f32 0.0, %v3313
    %3315 = vdwg.mxu0
    %3316 = vmatpush.msra.mxu0 0.0
    %3317 = vmatpush.msra.mxu0 0.0
    %3318 = vmatpush.msra.mxu0 0.0
    %3319 = vmatpush.msra.mxu0 0.0
    %3320 = vmatpush.msra.mxu0 0.0
    %3321 = vmatpush.msra.mxu0 0.0
    %3322 = vmatpush.msra.mxu0 0.0
    %3323 = vmatpush.msra.mxu0 0.0
    %3324 = vmatpush.msra.mxu0 0.0
    %3325 = vmatpush.msra.mxu0 0.0
    %3326 = vmatpush.msra.mxu0 0.0
    %3327 = vmatpush.msra.mxu0 0.0
    %3328 = vmatpush.msra.mxu0 0.0
    %3329 = vmatpush.msra.mxu0 0.0
    %3330 = vmatpush.msra.mxu0 0.0
    %3331 = vmatpush.msra.mxu0 %v3288
    %3332 = vmatmul.f32.gmra.mxu0 %v3294
    %v3333 = vpop.f32.mrf.mxu0
    %v3334 = vadd.f32 0.0, %v3333
    %3335 = vdwg.mxu0
    %3336 = vmatpush.msra.mxu0 0.0
    %3337 = vmatpush.msra.mxu0 0.0
    %3338 = vmatpush.msra.mxu0 0.0
    %3339 = vmatpush.msra.mxu0 0.0
    %3340 = vmatpush.msra.mxu0 0.0
    %3341 = vmatpush.msra.mxu0 0.0
    %3342 = vmatpush.msra.mxu0 0.0
    %3343 = vmatpush.msra.mxu0 0.0
    %3344 = vmatpush.msra.mxu0 0.0
    %3345 = vmatpush.msra.mxu0 0.0
    %3346 = vmatpush.msra.mxu0 0.0
    %3347 = vmatpush.msra.mxu0 0.0
    %3348 = vmatpush.msra.mxu0 0.0
    %3349 = vmatpush.msra.mxu0 0.0
    %3350 = vmatpush.msra.mxu0 0.0
    %3351 = vmatpush.msra.mxu0 %v3289
    %3352 = vmatmul.f32.gmra.mxu0 %v3294
    %v3353 = vpop.f32.mrf.mxu0
    %v3354 = vadd.f32 0.0, %v3353
    %3355 = vdwg.mxu0
    %3356 = vmatpush.msra.mxu0 0.0
    %3357 = vmatpush.msra.mxu0 0.0
    %3358 = vmatpush.msra.mxu0 0.0
    %3359 = vmatpush.msra.mxu0 0.0
    %3360 = vmatpush.msra.mxu0 0.0
    %3361 = vmatpush.msra.mxu0 0.0
    %3362 = vmatpush.msra.mxu0 0.0
    %3363 = vmatpush.msra.mxu0 0.0
    %3364 = vmatpush.msra.mxu0 0.0
    %3365 = vmatpush.msra.mxu0 0.0
    %3366 = vmatpush.msra.mxu0 0.0
    %3367 = vmatpush.msra.mxu0 0.0
    %3368 = vmatpush.msra.mxu0 0.0
    %3369 = vmatpush.msra.mxu0 0.0
    %3370 = vmatpush.msra.mxu0 0.0
    %3371 = vmatpush.msra.mxu0 %v3286
    %3372 = vmatmul.f32.gmra.mxu0 %v3294
    %v3373 = vpop.f32.mrf.mxu0
    %v3374 = vadd.f32 0.0, %v3373
    %3375 = vdwg.mxu0
    %v3376 = vadd.f32 %v3273, %v3314
    %v3377 = vadd.f32 %v3274, %v3334
    %v3378 = vadd.f32 %v3275, %v3354
    %v3379 = vadd.f32 %v3276, %v3374
    %3380 = vset.pattern.permute.xlu0 40
    %3381 = vperm.xlu0 %3380, %v2865
    %v3382 = vpop.permute.xlu0 %3381
    %v3384 = vadd.f32 %v3376, %v3382
    %v3385 = vadd.f32 %v3377, %v3382
    %v3386 = vadd.f32 %v3378, %v3382
    %v3387 = vadd.f32 %v3379, %v3382
    %v3388 = vmax.f32 %v3384, 0.0
    %v3389 = vmax.f32 %v3385, 0.0
    %v3390 = vmax.f32 %v3386, 0.0
    %v3391 = vmax.f32 %v3387, 0.0
    %3392 = vst.msk [vmem:[#allocation6] sm:$0xff] %vm488, 0.0
    %s3393 = scalar_lea.vmem %s0, 2
    %v3394 = vld [vmem:[%s3393] ss:$8 sm:$0xf]
    %v3396 = vperm.slane %v3394, 0
    %v3397 = vperm.slane %v3394, 1
    %v3398 = vperm.slane %v3394, 2
    %v3399 = vperm.slane %v3394, 3
    %v3404 = vmul.f32 %v3388, %v3396
    %v3405 = vmul.f32 %v3389, %v3397
    %v3406 = vmul.f32 %v3390, %v3398
    %v3407 = vmul.f32 %v3391, %v3399
    %3412 = vrot.lane.b32.xlu0 %v3404, 12
    %v3413 = vpop.permute.xlu0 %3412
    %3414 = vrot.lane.b32.xlu0 %v3405, 12
    %v3415 = vpop.permute.xlu0 %3414
    %3416 = vrot.lane.b32.xlu0 %v3406, 12
    %v3417 = vpop.permute.xlu0 %3416
    %3418 = vrot.lane.b32.xlu0 %v3407, 12
    %v3419 = vpop.permute.xlu0 %3418
    %v3420 = vsel %vm488, %v3413, %v3415
    %v3421 = vsel %vm488, %v3415, %v3417
    %v3422 = vsel %vm488, %v3417, %v3419
    %3427 = vst.msk [vmem:[#allocation6] sm:$0xff] %vm552, %v3413
    %3428 = vst [vmem:[#allocation6 + $0x8] sm:$0xff] %v3420
    %3429 = vst [vmem:[#allocation6 + $0x10] sm:$0xff] %v3421
    %vm3430 = vcmask 556032
    %3431 = vst.msk [vmem:[#allocation6 + $0x18] sm:$0xff] %vm3430, %v3422
    %v3432 = vld [vmem:[%s1 + $0x8] sm:$0xff]
    %v3433 = vld [vmem:[%s1 + $0x20] sm:$0xff]
    %v3434 = vld [vmem:[#allocation6] sm:$0xff]
    %v3435 = vld [vmem:[#allocation6 + $0x8] sm:$0xff]
    %v3436 = vld [vmem:[#allocation6 + $0x10] sm:$0xff]
    %v3437 = vld [vmem:[#allocation6 + $0x18] sm:$0xff]
    %3440 = vrot.lane.b32.xlu0 %v3432, 72
    %v3441 = vpop.permute.xlu0 %3440
    %3442 = vrot.lane.b32.xlu0 %v3433, 72
    %v3443 = vpop.permute.xlu0 %3442
    %3448 = vrot.lane.b32.xlu0 %v3434, 127
    %v3449 = vpop.permute.xlu0 %3448
    %3450 = vrot.lane.b32.xlu0 %v3435, 127
    %v3451 = vpop.permute.xlu0 %3450
    %3452 = vrot.lane.b32.xlu0 %v3436, 127
    %v3453 = vpop.permute.xlu0 %3452
    %3454 = vrot.lane.b32.xlu0 %v3437, 127
    %v3455 = vpop.permute.xlu0 %3454
    %v3456 = vsel %vm78, %v3449, %v3451
    %v3457 = vsel %vm78, %v3451, %v3453
    %v3458 = vsel %vm78, %v3453, %v3455
    %v3463 = vsel %vm606, %v3441, 0
    %v3465 = vsel %vm606, %v3443, 0
    %3467 = vmatpush.msra.mxu0 0.0
    %3468 = vmatpush.msra.mxu0 0.0
    %3469 = vmatpush.msra.mxu0 0.0
    %3470 = vmatpush.msra.mxu0 0.0
    %3471 = vmatpush.msra.mxu0 0.0
    %3472 = vmatpush.msra.mxu0 0.0
    %3473 = vmatpush.msra.mxu0 0.0
    %3474 = vmatpush.msra.mxu0 0.0
    %3475 = vmatpush.msra.mxu0 0.0
    %3476 = vmatpush.msra.mxu0 0.0
    %3477 = vmatpush.msra.mxu0 0.0
    %3478 = vmatpush.msra.mxu0 0.0
    %3479 = vmatpush.msra.mxu0 0.0
    %3480 = vmatpush.msra.mxu0 0.0
    %3481 = vmatpush.msra.mxu0 0.0
    %3482 = vmatpush.msra.mxu0 %v3456
    %3483 = vmatmul.f32.gmra.mxu0 %v3463
    %v3484 = vpop.f32.mrf.mxu0
    %v3485 = vadd.f32 0.0, %v3484
    %3486 = vmatmul.f32.gmra.mxu0 %v3465
    %v3487 = vpop.f32.mrf.mxu0
    %v3488 = vadd.f32 0.0, %v3487
    %3489 = vdwg.mxu0
    %3490 = vmatpush.msra.mxu0 0.0
    %3491 = vmatpush.msra.mxu0 0.0
    %3492 = vmatpush.msra.mxu0 0.0
    %3493 = vmatpush.msra.mxu0 0.0
    %3494 = vmatpush.msra.mxu0 0.0
    %3495 = vmatpush.msra.mxu0 0.0
    %3496 = vmatpush.msra.mxu0 0.0
    %3497 = vmatpush.msra.mxu0 0.0
    %3498 = vmatpush.msra.mxu0 0.0
    %3499 = vmatpush.msra.mxu0 0.0
    %3500 = vmatpush.msra.mxu0 0.0
    %3501 = vmatpush.msra.mxu0 0.0
    %3502 = vmatpush.msra.mxu0 0.0
    %3503 = vmatpush.msra.mxu0 0.0
    %3504 = vmatpush.msra.mxu0 0.0
    %3505 = vmatpush.msra.mxu0 %v3457
    %3506 = vmatmul.f32.gmra.mxu0 %v3463
    %v3507 = vpop.f32.mrf.mxu0
    %v3508 = vadd.f32 0.0, %v3507
    %3509 = vmatmul.f32.gmra.mxu0 %v3465
    %v3510 = vpop.f32.mrf.mxu0
    %v3511 = vadd.f32 0.0, %v3510
    %3512 = vdwg.mxu0
    %3513 = vmatpush.msra.mxu0 0.0
    %3514 = vmatpush.msra.mxu0 0.0
    %3515 = vmatpush.msra.mxu0 0.0
    %3516 = vmatpush.msra.mxu0 0.0
    %3517 = vmatpush.msra.mxu0 0.0
    %3518 = vmatpush.msra.mxu0 0.0
    %3519 = vmatpush.msra.mxu0 0.0
    %3520 = vmatpush.msra.mxu0 0.0
    %3521 = vmatpush.msra.mxu0 0.0
    %3522 = vmatpush.msra.mxu0 0.0
    %3523 = vmatpush.msra.mxu0 0.0
    %3524 = vmatpush.msra.mxu0 0.0
    %3525 = vmatpush.msra.mxu0 0.0
    %3526 = vmatpush.msra.mxu0 0.0
    %3527 = vmatpush.msra.mxu0 0.0
    %3528 = vmatpush.msra.mxu0 %v3458
    %3529 = vmatmul.f32.gmra.mxu0 %v3463
    %v3530 = vpop.f32.mrf.mxu0
    %v3531 = vadd.f32 0.0, %v3530
    %3532 = vmatmul.f32.gmra.mxu0 %v3465
    %v3533 = vpop.f32.mrf.mxu0
    %v3534 = vadd.f32 0.0, %v3533
    %3535 = vdwg.mxu0
    %3536 = vmatpush.msra.mxu0 0.0
    %3537 = vmatpush.msra.mxu0 0.0
    %3538 = vmatpush.msra.mxu0 0.0
    %3539 = vmatpush.msra.mxu0 0.0
    %3540 = vmatpush.msra.mxu0 0.0
    %3541 = vmatpush.msra.mxu0 0.0
    %3542 = vmatpush.msra.mxu0 0.0
    %3543 = vmatpush.msra.mxu0 0.0
    %3544 = vmatpush.msra.mxu0 0.0
    %3545 = vmatpush.msra.mxu0 0.0
    %3546 = vmatpush.msra.mxu0 0.0
    %3547 = vmatpush.msra.mxu0 0.0
    %3548 = vmatpush.msra.mxu0 0.0
    %3549 = vmatpush.msra.mxu0 0.0
    %3550 = vmatpush.msra.mxu0 0.0
    %3551 = vmatpush.msra.mxu0 %v3455
    %3552 = vmatmul.f32.gmra.mxu0 %v3463
    %v3553 = vpop.f32.mrf.mxu0
    %v3554 = vadd.f32 0.0, %v3553
    %3555 = vmatmul.f32.gmra.mxu0 %v3465
    %v3556 = vpop.f32.mrf.mxu0
    %v3557 = vadd.f32 0.0, %v3556
    %3558 = vdwg.mxu0
    %3559 = vrot.lane.b32.xlu0 %v3432, 80
    %v3560 = vpop.permute.xlu0 %3559
    %3561 = vrot.lane.b32.xlu0 %v3433, 80
    %v3562 = vpop.permute.xlu0 %3561
    %v3563 = vsel %vm606, %v3560, 0
    %v3565 = vsel %vm606, %v3562, 0
    %3567 = vmatpush.msra.mxu0 0.0
    %3568 = vmatpush.msra.mxu0 0.0
    %3569 = vmatpush.msra.mxu0 0.0
    %3570 = vmatpush.msra.mxu0 0.0
    %3571 = vmatpush.msra.mxu0 0.0
    %3572 = vmatpush.msra.mxu0 0.0
    %3573 = vmatpush.msra.mxu0 0.0
    %3574 = vmatpush.msra.mxu0 0.0
    %3575 = vmatpush.msra.mxu0 0.0
    %3576 = vmatpush.msra.mxu0 0.0
    %3577 = vmatpush.msra.mxu0 0.0
    %3578 = vmatpush.msra.mxu0 0.0
    %3579 = vmatpush.msra.mxu0 0.0
    %3580 = vmatpush.msra.mxu0 0.0
    %3581 = vmatpush.msra.mxu0 0.0
    %3582 = vmatpush.msra.mxu0 %v3434
    %3583 = vmatmul.f32.gmra.mxu0 %v3563
    %v3584 = vpop.f32.mrf.mxu0
    %v3585 = vadd.f32 %v3485, %v3584
    %3586 = vmatmul.f32.gmra.mxu0 %v3565
    %v3587 = vpop.f32.mrf.mxu0
    %v3588 = vadd.f32 %v3488, %v3587
    %3589 = vdwg.mxu0
    %3590 = vmatpush.msra.mxu0 0.0
    %3591 = vmatpush.msra.mxu0 0.0
    %3592 = vmatpush.msra.mxu0 0.0
    %3593 = vmatpush.msra.mxu0 0.0
    %3594 = vmatpush.msra.mxu0 0.0
    %3595 = vmatpush.msra.mxu0 0.0
    %3596 = vmatpush.msra.mxu0 0.0
    %3597 = vmatpush.msra.mxu0 0.0
    %3598 = vmatpush.msra.mxu0 0.0
    %3599 = vmatpush.msra.mxu0 0.0
    %3600 = vmatpush.msra.mxu0 0.0
    %3601 = vmatpush.msra.mxu0 0.0
    %3602 = vmatpush.msra.mxu0 0.0
    %3603 = vmatpush.msra.mxu0 0.0
    %3604 = vmatpush.msra.mxu0 0.0
    %3605 = vmatpush.msra.mxu0 %v3435
    %3606 = vmatmul.f32.gmra.mxu0 %v3563
    %v3607 = vpop.f32.mrf.mxu0
    %v3608 = vadd.f32 %v3508, %v3607
    %3609 = vmatmul.f32.gmra.mxu0 %v3565
    %v3610 = vpop.f32.mrf.mxu0
    %v3611 = vadd.f32 %v3511, %v3610
    %3612 = vdwg.mxu0
    %3613 = vmatpush.msra.mxu0 0.0
    %3614 = vmatpush.msra.mxu0 0.0
    %3615 = vmatpush.msra.mxu0 0.0
    %3616 = vmatpush.msra.mxu0 0.0
    %3617 = vmatpush.msra.mxu0 0.0
    %3618 = vmatpush.msra.mxu0 0.0
    %3619 = vmatpush.msra.mxu0 0.0
    %3620 = vmatpush.msra.mxu0 0.0
    %3621 = vmatpush.msra.mxu0 0.0
    %3622 = vmatpush.msra.mxu0 0.0
    %3623 = vmatpush.msra.mxu0 0.0
    %3624 = vmatpush.msra.mxu0 0.0
    %3625 = vmatpush.msra.mxu0 0.0
    %3626 = vmatpush.msra.mxu0 0.0
    %3627 = vmatpush.msra.mxu0 0.0
    %3628 = vmatpush.msra.mxu0 %v3436
    %3629 = vmatmul.f32.gmra.mxu0 %v3563
    %v3630 = vpop.f32.mrf.mxu0
    %v3631 = vadd.f32 %v3531, %v3630
    %3632 = vmatmul.f32.gmra.mxu0 %v3565
    %v3633 = vpop.f32.mrf.mxu0
    %v3634 = vadd.f32 %v3534, %v3633
    %3635 = vdwg.mxu0
    %3636 = vmatpush.msra.mxu0 0.0
    %3637 = vmatpush.msra.mxu0 0.0
    %3638 = vmatpush.msra.mxu0 0.0
    %3639 = vmatpush.msra.mxu0 0.0
    %3640 = vmatpush.msra.mxu0 0.0
    %3641 = vmatpush.msra.mxu0 0.0
    %3642 = vmatpush.msra.mxu0 0.0
    %3643 = vmatpush.msra.mxu0 0.0
    %3644 = vmatpush.msra.mxu0 0.0
    %3645 = vmatpush.msra.mxu0 0.0
    %3646 = vmatpush.msra.mxu0 0.0
    %3647 = vmatpush.msra.mxu0 0.0
    %3648 = vmatpush.msra.mxu0 0.0
    %3649 = vmatpush.msra.mxu0 0.0
    %3650 = vmatpush.msra.mxu0 0.0
    %3651 = vmatpush.msra.mxu0 %v3437
    %3652 = vmatmul.f32.gmra.mxu0 %v3563
    %v3653 = vpop.f32.mrf.mxu0
    %v3654 = vadd.f32 %v3554, %v3653
    %3655 = vmatmul.f32.gmra.mxu0 %v3565
    %v3656 = vpop.f32.mrf.mxu0
    %v3657 = vadd.f32 %v3557, %v3656
    %3658 = vdwg.mxu0
    %3659 = vrot.lane.b32.xlu0 %v3432, 64
    %v3660 = vpop.permute.xlu0 %3659
    %3661 = vrot.lane.b32.xlu0 %v3433, 64
    %v3662 = vpop.permute.xlu0 %3661
    %3663 = vrot.lane.b32.xlu0 %v3434, 117
    %v3664 = vpop.permute.xlu0 %3663
    %3665 = vrot.lane.b32.xlu0 %v3435, 117
    %v3666 = vpop.permute.xlu0 %3665
    %3667 = vrot.lane.b32.xlu0 %v3436, 117
    %v3668 = vpop.permute.xlu0 %3667
    %3669 = vrot.lane.b32.xlu0 %v3437, 117
    %v3670 = vpop.permute.xlu0 %3669
    %v3671 = vsel %vm184, %v3664, %v3666
    %v3672 = vsel %vm184, %v3666, %v3668
    %v3673 = vsel %vm184, %v3668, %v3670
    %v3678 = vsel %vm606, %v3660, 0
    %v3680 = vsel %vm606, %v3662, 0
    %3682 = vmatpush.msra.mxu0 0.0
    %3683 = vmatpush.msra.mxu0 0.0
    %3684 = vmatpush.msra.mxu0 0.0
    %3685 = vmatpush.msra.mxu0 0.0
    %3686 = vmatpush.msra.mxu0 0.0
    %3687 = vmatpush.msra.mxu0 0.0
    %3688 = vmatpush.msra.mxu0 0.0
    %3689 = vmatpush.msra.mxu0 0.0
    %3690 = vmatpush.msra.mxu0 0.0
    %3691 = vmatpush.msra.mxu0 0.0
    %3692 = vmatpush.msra.mxu0 0.0
    %3693 = vmatpush.msra.mxu0 0.0
    %3694 = vmatpush.msra.mxu0 0.0
    %3695 = vmatpush.msra.mxu0 0.0
    %3696 = vmatpush.msra.mxu0 0.0
    %3697 = vmatpush.msra.mxu0 %v3671
    %3698 = vmatmul.f32.gmra.mxu0 %v3678
    %v3699 = vpop.f32.mrf.mxu0
    %v3700 = vadd.f32 0.0, %v3699
    %3701 = vmatmul.f32.gmra.mxu0 %v3680
    %v3702 = vpop.f32.mrf.mxu0
    %v3703 = vadd.f32 0.0, %v3702
    %3704 = vdwg.mxu0
    %3705 = vmatpush.msra.mxu0 0.0
    %3706 = vmatpush.msra.mxu0 0.0
    %3707 = vmatpush.msra.mxu0 0.0
    %3708 = vmatpush.msra.mxu0 0.0
    %3709 = vmatpush.msra.mxu0 0.0
    %3710 = vmatpush.msra.mxu0 0.0
    %3711 = vmatpush.msra.mxu0 0.0
    %3712 = vmatpush.msra.mxu0 0.0
    %3713 = vmatpush.msra.mxu0 0.0
    %3714 = vmatpush.msra.mxu0 0.0
    %3715 = vmatpush.msra.mxu0 0.0
    %3716 = vmatpush.msra.mxu0 0.0
    %3717 = vmatpush.msra.mxu0 0.0
    %3718 = vmatpush.msra.mxu0 0.0
    %3719 = vmatpush.msra.mxu0 0.0
    %3720 = vmatpush.msra.mxu0 %v3672
    %3721 = vmatmul.f32.gmra.mxu0 %v3678
    %v3722 = vpop.f32.mrf.mxu0
    %v3723 = vadd.f32 0.0, %v3722
    %3724 = vmatmul.f32.gmra.mxu0 %v3680
    %v3725 = vpop.f32.mrf.mxu0
    %v3726 = vadd.f32 0.0, %v3725
    %3727 = vdwg.mxu0
    %3728 = vmatpush.msra.mxu0 0.0
    %3729 = vmatpush.msra.mxu0 0.0
    %3730 = vmatpush.msra.mxu0 0.0
    %3731 = vmatpush.msra.mxu0 0.0
    %3732 = vmatpush.msra.mxu0 0.0
    %3733 = vmatpush.msra.mxu0 0.0
    %3734 = vmatpush.msra.mxu0 0.0
    %3735 = vmatpush.msra.mxu0 0.0
    %3736 = vmatpush.msra.mxu0 0.0
    %3737 = vmatpush.msra.mxu0 0.0
    %3738 = vmatpush.msra.mxu0 0.0
    %3739 = vmatpush.msra.mxu0 0.0
    %3740 = vmatpush.msra.mxu0 0.0
    %3741 = vmatpush.msra.mxu0 0.0
    %3742 = vmatpush.msra.mxu0 0.0
    %3743 = vmatpush.msra.mxu0 %v3673
    %3744 = vmatmul.f32.gmra.mxu0 %v3678
    %v3745 = vpop.f32.mrf.mxu0
    %v3746 = vadd.f32 0.0, %v3745
    %3747 = vmatmul.f32.gmra.mxu0 %v3680
    %v3748 = vpop.f32.mrf.mxu0
    %v3749 = vadd.f32 0.0, %v3748
    %3750 = vdwg.mxu0
    %3751 = vmatpush.msra.mxu0 0.0
    %3752 = vmatpush.msra.mxu0 0.0
    %3753 = vmatpush.msra.mxu0 0.0
    %3754 = vmatpush.msra.mxu0 0.0
    %3755 = vmatpush.msra.mxu0 0.0
    %3756 = vmatpush.msra.mxu0 0.0
    %3757 = vmatpush.msra.mxu0 0.0
    %3758 = vmatpush.msra.mxu0 0.0
    %3759 = vmatpush.msra.mxu0 0.0
    %3760 = vmatpush.msra.mxu0 0.0
    %3761 = vmatpush.msra.mxu0 0.0
    %3762 = vmatpush.msra.mxu0 0.0
    %3763 = vmatpush.msra.mxu0 0.0
    %3764 = vmatpush.msra.mxu0 0.0
    %3765 = vmatpush.msra.mxu0 0.0
    %3766 = vmatpush.msra.mxu0 %v3670
    %3767 = vmatmul.f32.gmra.mxu0 %v3678
    %v3768 = vpop.f32.mrf.mxu0
    %v3769 = vadd.f32 0.0, %v3768
    %3770 = vmatmul.f32.gmra.mxu0 %v3680
    %v3771 = vpop.f32.mrf.mxu0
    %v3772 = vadd.f32 0.0, %v3771
    %3773 = vdwg.mxu0
    %v3774 = vadd.f32 %v3585, %v3700
    %v3775 = vadd.f32 %v3608, %v3723
    %v3776 = vadd.f32 %v3631, %v3746
    %v3777 = vadd.f32 %v3654, %v3769
    %v3778 = vadd.f32 %v3588, %v3703
    %v3779 = vadd.f32 %v3611, %v3726
    %v3780 = vadd.f32 %v3634, %v3749
    %v3781 = vadd.f32 %v3657, %v3772
    %3782 = vrot.lane.b32.xlu0 %v3432, 56
    %v3783 = vpop.permute.xlu0 %3782
    %3784 = vrot.lane.b32.xlu0 %v3433, 56
    %v3785 = vpop.permute.xlu0 %3784
    %3786 = vrot.lane.b32.xlu0 %v3434, 116
    %v3787 = vpop.permute.xlu0 %3786
    %3788 = vrot.lane.b32.xlu0 %v3435, 116
    %v3789 = vpop.permute.xlu0 %3788
    %3790 = vrot.lane.b32.xlu0 %v3436, 116
    %v3791 = vpop.permute.xlu0 %3790
    %3792 = vrot.lane.b32.xlu0 %v3437, 116
    %v3793 = vpop.permute.xlu0 %3792
    %v3794 = vsel %vm237, %v3787, %v3789
    %v3795 = vsel %vm237, %v3789, %v3791
    %v3796 = vsel %vm237, %v3791, %v3793
    %v3801 = vsel %vm606, %v3783, 0
    %v3803 = vsel %vm606, %v3785, 0
    %3805 = vmatpush.msra.mxu0 0.0
    %3806 = vmatpush.msra.mxu0 0.0
    %3807 = vmatpush.msra.mxu0 0.0
    %3808 = vmatpush.msra.mxu0 0.0
    %3809 = vmatpush.msra.mxu0 0.0
    %3810 = vmatpush.msra.mxu0 0.0
    %3811 = vmatpush.msra.mxu0 0.0
    %3812 = vmatpush.msra.mxu0 0.0
    %3813 = vmatpush.msra.mxu0 0.0
    %3814 = vmatpush.msra.mxu0 0.0
    %3815 = vmatpush.msra.mxu0 0.0
    %3816 = vmatpush.msra.mxu0 0.0
    %3817 = vmatpush.msra.mxu0 0.0
    %3818 = vmatpush.msra.mxu0 0.0
    %3819 = vmatpush.msra.mxu0 0.0
    %3820 = vmatpush.msra.mxu0 %v3794
    %3821 = vmatmul.f32.gmra.mxu0 %v3801
    %v3822 = vpop.f32.mrf.mxu0
    %v3823 = vadd.f32 0.0, %v3822
    %3824 = vmatmul.f32.gmra.mxu0 %v3803
    %v3825 = vpop.f32.mrf.mxu0
    %v3826 = vadd.f32 0.0, %v3825
    %3827 = vdwg.mxu0
    %3828 = vmatpush.msra.mxu0 0.0
    %3829 = vmatpush.msra.mxu0 0.0
    %3830 = vmatpush.msra.mxu0 0.0
    %3831 = vmatpush.msra.mxu0 0.0
    %3832 = vmatpush.msra.mxu0 0.0
    %3833 = vmatpush.msra.mxu0 0.0
    %3834 = vmatpush.msra.mxu0 0.0
    %3835 = vmatpush.msra.mxu0 0.0
    %3836 = vmatpush.msra.mxu0 0.0
    %3837 = vmatpush.msra.mxu0 0.0
    %3838 = vmatpush.msra.mxu0 0.0
    %3839 = vmatpush.msra.mxu0 0.0
    %3840 = vmatpush.msra.mxu0 0.0
    %3841 = vmatpush.msra.mxu0 0.0
    %3842 = vmatpush.msra.mxu0 0.0
    %3843 = vmatpush.msra.mxu0 %v3795
    %3844 = vmatmul.f32.gmra.mxu0 %v3801
    %v3845 = vpop.f32.mrf.mxu0
    %v3846 = vadd.f32 0.0, %v3845
    %3847 = vmatmul.f32.gmra.mxu0 %v3803
    %v3848 = vpop.f32.mrf.mxu0
    %v3849 = vadd.f32 0.0, %v3848
    %3850 = vdwg.mxu0
    %3851 = vmatpush.msra.mxu0 0.0
    %3852 = vmatpush.msra.mxu0 0.0
    %3853 = vmatpush.msra.mxu0 0.0
    %3854 = vmatpush.msra.mxu0 0.0
    %3855 = vmatpush.msra.mxu0 0.0
    %3856 = vmatpush.msra.mxu0 0.0
    %3857 = vmatpush.msra.mxu0 0.0
    %3858 = vmatpush.msra.mxu0 0.0
    %3859 = vmatpush.msra.mxu0 0.0
    %3860 = vmatpush.msra.mxu0 0.0
    %3861 = vmatpush.msra.mxu0 0.0
    %3862 = vmatpush.msra.mxu0 0.0
    %3863 = vmatpush.msra.mxu0 0.0
    %3864 = vmatpush.msra.mxu0 0.0
    %3865 = vmatpush.msra.mxu0 0.0
    %3866 = vmatpush.msra.mxu0 %v3796
    %3867 = vmatmul.f32.gmra.mxu0 %v3801
    %v3868 = vpop.f32.mrf.mxu0
    %v3869 = vadd.f32 0.0, %v3868
    %3870 = vmatmul.f32.gmra.mxu0 %v3803
    %v3871 = vpop.f32.mrf.mxu0
    %v3872 = vadd.f32 0.0, %v3871
    %3873 = vdwg.mxu0
    %3874 = vmatpush.msra.mxu0 0.0
    %3875 = vmatpush.msra.mxu0 0.0
    %3876 = vmatpush.msra.mxu0 0.0
    %3877 = vmatpush.msra.mxu0 0.0
    %3878 = vmatpush.msra.mxu0 0.0
    %3879 = vmatpush.msra.mxu0 0.0
    %3880 = vmatpush.msra.mxu0 0.0
    %3881 = vmatpush.msra.mxu0 0.0
    %3882 = vmatpush.msra.mxu0 0.0
    %3883 = vmatpush.msra.mxu0 0.0
    %3884 = vmatpush.msra.mxu0 0.0
    %3885 = vmatpush.msra.mxu0 0.0
    %3886 = vmatpush.msra.mxu0 0.0
    %3887 = vmatpush.msra.mxu0 0.0
    %3888 = vmatpush.msra.mxu0 0.0
    %3889 = vmatpush.msra.mxu0 %v3793
    %3890 = vmatmul.f32.gmra.mxu0 %v3801
    %v3891 = vpop.f32.mrf.mxu0
    %v3892 = vadd.f32 0.0, %v3891
    %3893 = vmatmul.f32.gmra.mxu0 %v3803
    %v3894 = vpop.f32.mrf.mxu0
    %v3895 = vadd.f32 0.0, %v3894
    %3896 = vdwg.mxu0
    %v3897 = vadd.f32 %v3774, %v3823
    %v3898 = vadd.f32 %v3775, %v3846
    %v3899 = vadd.f32 %v3776, %v3869
    %v3900 = vadd.f32 %v3777, %v3892
    %v3901 = vadd.f32 %v3778, %v3826
    %v3902 = vadd.f32 %v3779, %v3849
    %v3903 = vadd.f32 %v3780, %v3872
    %v3904 = vadd.f32 %v3781, %v3895
    %3905 = vset.pattern.permute.xlu0 80
    %3906 = vperm.xlu0 %3905, %v3432
    %v3907 = vpop.permute.xlu0 %3906
    %3909 = vset.pattern.permute.xlu0 80
    %3910 = vperm.xlu0 %3909, %v3433
    %v3911 = vpop.permute.xlu0 %3910
    %v3913 = vadd.f32 %v3897, %v3907
    %v3914 = vadd.f32 %v3898, %v3907
    %v3915 = vadd.f32 %v3899, %v3907
    %v3916 = vadd.f32 %v3900, %v3907
    %v3917 = vadd.f32 %v3901, %v3911
    %v3918 = vadd.f32 %v3902, %v3911
    %v3919 = vadd.f32 %v3903, %v3911
    %v3920 = vadd.f32 %v3904, %v3911
    %v3921 = vmax.f32 %v3913, 0.0
    %v3922 = vmax.f32 %v3914, 0.0
    %v3923 = vmax.f32 %v3915, 0.0
    %v3924 = vmax.f32 %v3916, 0.0
    %v3925 = vmax.f32 %v3917, 0.0
    %v3926 = vmax.f32 %v3918, 0.0
    %v3927 = vmax.f32 %v3919, 0.0
    %v3928 = vmax.f32 %v3920, 0.0
    %3929 = vst [vmem:[#allocation7] sm:$0xff] %v3921
    %3930 = vst [vmem:[#allocation7 + $0x8] sm:$0xff] %v3922
    %3931 = vst [vmem:[#allocation7 + $0x10] sm:$0xff] %v3923
    %vm3932 = vcmask 457728
    %3933 = vst.msk [vmem:[#allocation7 + $0x18] sm:$0xff] %vm3932, %v3924
    %3934 = vst [vmem:[#allocation7 + $0x20] sm:$0xff] %v3925
    %3935 = vst [vmem:[#allocation7 + $0x28] sm:$0xff] %v3926
    %3936 = vst [vmem:[#allocation7 + $0x30] sm:$0xff] %v3927
    %3937 = vst.msk [vmem:[#allocation7 + $0x38] sm:$0xff] %vm3932, %v3928
    %v3938 = vld [vmem:[#allocation7] sm:$0xff]
    %v3939 = vld [vmem:[#allocation7 + $0x8] sm:$0xff]
    %v3940 = vld [vmem:[#allocation7 + $0x10] sm:$0xff]
    %v3941 = vld [vmem:[#allocation7 + $0x18] sm:$0xff]
    %v3942 = vld [vmem:[#allocation7 + $0x20] sm:$0xff]
    %v3943 = vld [vmem:[#allocation7 + $0x28] sm:$0xff]
    %v3944 = vld [vmem:[#allocation7 + $0x30] sm:$0xff]
    %v3945 = vld [vmem:[#allocation7 + $0x38] sm:$0xff]
    %3954 = vrot.lane.b32.xlu0 %v3938, 117
    %v3955 = vpop.permute.xlu0 %3954
    %3956 = vrot.lane.b32.xlu0 %v3939, 117
    %v3957 = vpop.permute.xlu0 %3956
    %3958 = vrot.lane.b32.xlu0 %v3940, 117
    %v3959 = vpop.permute.xlu0 %3958
    %3960 = vrot.lane.b32.xlu0 %v3941, 117
    %v3961 = vpop.permute.xlu0 %3960
    %3962 = vrot.lane.b32.xlu0 %v3942, 117
    %v3963 = vpop.permute.xlu0 %3962
    %3964 = vrot.lane.b32.xlu0 %v3943, 117
    %v3965 = vpop.permute.xlu0 %3964
    %3966 = vrot.lane.b32.xlu0 %v3944, 117
    %v3967 = vpop.permute.xlu0 %3966
    %3968 = vrot.lane.b32.xlu0 %v3945, 117
    %v3969 = vpop.permute.xlu0 %3968
    %v3970 = vsel %vm184, %v3955, %v3957
    %v3971 = vsel %vm184, %v3957, %v3959
    %v3972 = vsel %vm184, %v3959, %v3961
    %v3973 = vsel %vm184, %v3963, %v3965
    %v3974 = vsel %vm184, %v3965, %v3967
    %v3975 = vsel %vm184, %v3967, %v3969
    %v3984 = vmax.f32 %v3938, %v3970
    %v3985 = vmax.f32 %v3939, %v3971
    %v3986 = vmax.f32 %v3940, %v3972
    %v3987 = vmax.f32 %v3941, %v3961
    %v3988 = vmax.f32 %v3942, %v3973
    %v3989 = vmax.f32 %v3943, %v3974
    %v3990 = vmax.f32 %v3944, %v3975
    %v3991 = vmax.f32 %v3945, %v3969
    %3992 = vst [vmem:[#allocation8] sm:$0xff] %v3984
    %3993 = vst [vmem:[#allocation8 + $0x8] sm:$0xff] %v3985
    %3994 = vst [vmem:[#allocation8 + $0x10] sm:$0xff] %v3986
    %vm3995 = vcmask 367616
    %3996 = vst.msk [vmem:[#allocation8 + $0x18] sm:$0xff] %vm3995, %v3987
    %3997 = vst [vmem:[#allocation8 + $0x20] sm:$0xff] %v3988
    %3998 = vst [vmem:[#allocation8 + $0x28] sm:$0xff] %v3989
    %3999 = vst [vmem:[#allocation8 + $0x30] sm:$0xff] %v3990
    %4000 = vst.msk [vmem:[#allocation8 + $0x38] sm:$0xff] %vm3995, %v3991
    %v4001 = vld [vmem:[#allocation8] sm:$0xff]
    %v4002 = vld [vmem:[#allocation8 + $0x20] sm:$0xff]
    %v4005 = vrot.slane %v4001, 1
    %v4006 = vrot.slane %v4001, 2
    %v4007 = vrot.slane %v4001, 3
    %v4008 = vrot.slane %v4001, 4
    %v4009 = vrot.slane %v4001, 5
    %v4010 = vrot.slane %v4001, 6
    %v4011 = vrot.slane %v4001, 7
    %v4012 = vrot.slane %v4002, 1
    %v4013 = vrot.slane %v4002, 2
    %v4014 = vrot.slane %v4002, 3
    %v4015 = vrot.slane %v4002, 4
    %v4016 = vrot.slane %v4002, 5
    %v4017 = vrot.slane %v4002, 6
    %v4018 = vrot.slane %v4002, 7
    %vm4033 = vcmask 73728
    %4034 = vst.msk [vmem:[#allocation9] sm:$0x1] %vm4033, %v4001
    %4035 = vst.msk [vmem:[#allocation9 + $0x4] sm:$0x1] %vm4033, %v4005
    %4036 = vst.msk [vmem:[#allocation9 + $0x8] sm:$0x1] %vm4033, %v4006
    %4037 = vst.msk [vmem:[#allocation9 + $0xc] sm:$0x1] %vm4033, %v4007
    %4038 = vst.msk [vmem:[#allocation9 + $0x10] sm:$0x1] %vm4033, %v4008
    %4039 = vst.msk [vmem:[#allocation9 + $0x14] sm:$0x1] %vm4033, %v4009
    %4040 = vst.msk [vmem:[#allocation9 + $0x18] sm:$0x1] %vm4033, %v4010
    %4041 = vst.msk [vmem:[#allocation9 + $0x1c] sm:$0x1] %vm4033, %v4011
    %4042 = vst.msk [vmem:[#allocation9 + $0x20] sm:$0x1] %vm4033, %v4002
    %4043 = vst.msk [vmem:[#allocation9 + $0x24] sm:$0x1] %vm4033, %v4012
    %4044 = vst.msk [vmem:[#allocation9 + $0x28] sm:$0x1] %vm4033, %v4013
    %4045 = vst.msk [vmem:[#allocation9 + $0x2c] sm:$0x1] %vm4033, %v4014
    %4046 = vst.msk [vmem:[#allocation9 + $0x30] sm:$0x1] %vm4033, %v4015
    %4047 = vst.msk [vmem:[#allocation9 + $0x34] sm:$0x1] %vm4033, %v4016
    %4048 = vst.msk [vmem:[#allocation9 + $0x38] sm:$0x1] %vm4033, %v4017
    %4049 = vst.msk [vmem:[#allocation9 + $0x3c] sm:$0x1] %vm4033, %v4018
    %v4050 = vld [vmem:[#allocation8] sm:$0xff]
    %v4051 = vld [vmem:[#allocation8 + $0x20] sm:$0xff]
    %v4054 = vrot.slane %v4050, 1
    %v4055 = vrot.slane %v4050, 2
    %v4056 = vrot.slane %v4050, 3
    %v4057 = vrot.slane %v4050, 4
    %v4058 = vrot.slane %v4050, 5
    %v4059 = vrot.slane %v4050, 6
    %v4060 = vrot.slane %v4050, 7
    %v4061 = vrot.slane %v4051, 1
    %v4062 = vrot.slane %v4051, 2
    %v4063 = vrot.slane %v4051, 3
    %v4064 = vrot.slane %v4051, 4
    %v4065 = vrot.slane %v4051, 5
    %v4066 = vrot.slane %v4051, 6
    %v4067 = vrot.slane %v4051, 7
    %v4068 = vperm.slane %v4050, 0
    %v4069 = vperm.slane %v4054, 0
    %v4070 = vperm.slane %v4055, 0
    %v4071 = vperm.slane %v4056, 0
    %v4072 = vperm.slane %v4057, 0
    %v4073 = vperm.slane %v4058, 0
    %v4074 = vperm.slane %v4059, 0
    %v4075 = vperm.slane %v4060, 0
    %v4076 = vperm.slane %v4051, 0
    %v4077 = vperm.slane %v4061, 0
    %v4078 = vperm.slane %v4062, 0
    %v4079 = vperm.slane %v4063, 0
    %v4080 = vperm.slane %v4064, 0
    %v4081 = vperm.slane %v4065, 0
    %v4082 = vperm.slane %v4066, 0
    %v4083 = vperm.slane %v4067, 0
    %4084 = vrot.lane.b32.xlu0 %v4068, 116
    %v4085 = vpop.permute.xlu0 %4084
    %4086 = vrot.lane.b32.xlu0 %v4069, 116
    %v4087 = vpop.permute.xlu0 %4086
    %4088 = vrot.lane.b32.xlu0 %v4070, 116
    %v4089 = vpop.permute.xlu0 %4088
    %4090 = vrot.lane.b32.xlu0 %v4071, 116
    %v4091 = vpop.permute.xlu0 %4090
    %4092 = vrot.lane.b32.xlu0 %v4072, 116
    %v4093 = vpop.permute.xlu0 %4092
    %4094 = vrot.lane.b32.xlu0 %v4073, 116
    %v4095 = vpop.permute.xlu0 %4094
    %4096 = vrot.lane.b32.xlu0 %v4074, 116
    %v4097 = vpop.permute.xlu0 %4096
    %4098 = vrot.lane.b32.xlu0 %v4075, 116
    %v4099 = vpop.permute.xlu0 %4098
    %4100 = vrot.lane.b32.xlu0 %v4076, 116
    %v4101 = vpop.permute.xlu0 %4100
    %4102 = vrot.lane.b32.xlu0 %v4077, 116
    %v4103 = vpop.permute.xlu0 %4102
    %4104 = vrot.lane.b32.xlu0 %v4078, 116
    %v4105 = vpop.permute.xlu0 %4104
    %4106 = vrot.lane.b32.xlu0 %v4079, 116
    %v4107 = vpop.permute.xlu0 %4106
    %4108 = vrot.lane.b32.xlu0 %v4080, 116
    %v4109 = vpop.permute.xlu0 %4108
    %4110 = vrot.lane.b32.xlu0 %v4081, 116
    %v4111 = vpop.permute.xlu0 %4110
    %4112 = vrot.lane.b32.xlu0 %v4082, 116
    %v4113 = vpop.permute.xlu0 %4112
    %4114 = vrot.lane.b32.xlu0 %v4083, 116
    %v4115 = vpop.permute.xlu0 %4114
    %vm4132 = vcmask 155728
    %4133 = vst.msk [vmem:[#allocation9] sm:$0x1] %vm4132, %v4085
    %4134 = vst.msk [vmem:[#allocation9 + $0x4] sm:$0x1] %vm4132, %v4087
    %4135 = vst.msk [vmem:[#allocation9 + $0x8] sm:$0x1] %vm4132, %v4089
    %4136 = vst.msk [vmem:[#allocation9 + $0xc] sm:$0x1] %vm4132, %v4091
    %4137 = vst.msk [vmem:[#allocation9 + $0x10] sm:$0x1] %vm4132, %v4093
    %4138 = vst.msk [vmem:[#allocation9 + $0x14] sm:$0x1] %vm4132, %v4095
    %4139 = vst.msk [vmem:[#allocation9 + $0x18] sm:$0x1] %vm4132, %v4097
    %4140 = vst.msk [vmem:[#allocation9 + $0x1c] sm:$0x1] %vm4132, %v4099
    %4141 = vst.msk [vmem:[#allocation9 + $0x20] sm:$0x1] %vm4132, %v4101
    %4142 = vst.msk [vmem:[#allocation9 + $0x24] sm:$0x1] %vm4132, %v4103
    %4143 = vst.msk [vmem:[#allocation9 + $0x28] sm:$0x1] %vm4132, %v4105
    %4144 = vst.msk [vmem:[#allocation9 + $0x2c] sm:$0x1] %vm4132, %v4107
    %4145 = vst.msk [vmem:[#allocation9 + $0x30] sm:$0x1] %vm4132, %v4109
    %4146 = vst.msk [vmem:[#allocation9 + $0x34] sm:$0x1] %vm4132, %v4111
    %4147 = vst.msk [vmem:[#allocation9 + $0x38] sm:$0x1] %vm4132, %v4113
    %4148 = vst.msk [vmem:[#allocation9 + $0x3c] sm:$0x1] %vm4132, %v4115
    %v4149 = vld [vmem:[#allocation8] sm:$0xff]
    %v4150 = vld [vmem:[#allocation8 + $0x20] sm:$0xff]
    %v4153 = vrot.slane %v4149, 1
    %v4154 = vrot.slane %v4149, 2
    %v4155 = vrot.slane %v4149, 3
    %v4156 = vrot.slane %v4149, 4
    %v4157 = vrot.slane %v4149, 5
    %v4158 = vrot.slane %v4149, 6
    %v4159 = vrot.slane %v4149, 7
    %v4160 = vrot.slane %v4150, 1
    %v4161 = vrot.slane %v4150, 2
    %v4162 = vrot.slane %v4150, 3
    %v4163 = vrot.slane %v4150, 4
    %v4164 = vrot.slane %v4150, 5
    %v4165 = vrot.slane %v4150, 6
    %v4166 = vrot.slane %v4150, 7
    %v4167 = vperm.slane %v4149, 0
    %v4168 = vperm.slane %v4153, 0
    %v4169 = vperm.slane %v4154, 0
    %v4170 = vperm.slane %v4155, 0
    %v4171 = vperm.slane %v4156, 0
    %v4172 = vperm.slane %v4157, 0
    %v4173 = vperm.slane %v4158, 0
    %v4174 = vperm.slane %v4159, 0
    %v4175 = vperm.slane %v4150, 0
    %v4176 = vperm.slane %v4160, 0
    %v4177 = vperm.slane %v4161, 0
    %v4178 = vperm.slane %v4162, 0
    %v4179 = vperm.slane %v4163, 0
    %v4180 = vperm.slane %v4164, 0
    %v4181 = vperm.slane %v4165, 0
    %v4182 = vperm.slane %v4166, 0
    %4183 = vrot.lane.b32.xlu0 %v4167, 104
    %v4184 = vpop.permute.xlu0 %4183
    %4185 = vrot.lane.b32.xlu0 %v4168, 104
    %v4186 = vpop.permute.xlu0 %4185
    %4187 = vrot.lane.b32.xlu0 %v4169, 104
    %v4188 = vpop.permute.xlu0 %4187
    %4189 = vrot.lane.b32.xlu0 %v4170, 104
    %v4190 = vpop.permute.xlu0 %4189
    %4191 = vrot.lane.b32.xlu0 %v4171, 104
    %v4192 = vpop.permute.xlu0 %4191
    %4193 = vrot.lane.b32.xlu0 %v4172, 104
    %v4194 = vpop.permute.xlu0 %4193
    %4195 = vrot.lane.b32.xlu0 %v4173, 104
    %v4196 = vpop.permute.xlu0 %4195
    %4197 = vrot.lane.b32.xlu0 %v4174, 104
    %v4198 = vpop.permute.xlu0 %4197
    %4199 = vrot.lane.b32.xlu0 %v4175, 104
    %v4200 = vpop.permute.xlu0 %4199
    %4201 = vrot.lane.b32.xlu0 %v4176, 104
    %v4202 = vpop.permute.xlu0 %4201
    %4203 = vrot.lane.b32.xlu0 %v4177, 104
    %v4204 = vpop.permute.xlu0 %4203
    %4205 = vrot.lane.b32.xlu0 %v4178, 104
    %v4206 = vpop.permute.xlu0 %4205
    %4207 = vrot.lane.b32.xlu0 %v4179, 104
    %v4208 = vpop.permute.xlu0 %4207
    %4209 = vrot.lane.b32.xlu0 %v4180, 104
    %v4210 = vpop.permute.xlu0 %4209
    %4211 = vrot.lane.b32.xlu0 %v4181, 104
    %v4212 = vpop.permute.xlu0 %4211
    %4213 = vrot.lane.b32.xlu0 %v4182, 104
    %v4214 = vpop.permute.xlu0 %4213
    %vm4231 = vcmask 237728
    %4232 = vst.msk [vmem:[#allocation9] sm:$0x1] %vm4231, %v4184
    %4233 = vst.msk [vmem:[#allocation9 + $0x4] sm:$0x1] %vm4231, %v4186
    %4234 = vst.msk [vmem:[#allocation9 + $0x8] sm:$0x1] %vm4231, %v4188
    %4235 = vst.msk [vmem:[#allocation9 + $0xc] sm:$0x1] %vm4231, %v4190
    %4236 = vst.msk [vmem:[#allocation9 + $0x10] sm:$0x1] %vm4231, %v4192
    %4237 = vst.msk [vmem:[#allocation9 + $0x14] sm:$0x1] %vm4231, %v4194
    %4238 = vst.msk [vmem:[#allocation9 + $0x18] sm:$0x1] %vm4231, %v4196
    %4239 = vst.msk [vmem:[#allocation9 + $0x1c] sm:$0x1] %vm4231, %v4198
    %4240 = vst.msk [vmem:[#allocation9 + $0x20] sm:$0x1] %vm4231, %v4200
    %4241 = vst.msk [vmem:[#allocation9 + $0x24] sm:$0x1] %vm4231, %v4202
    %4242 = vst.msk [vmem:[#allocation9 + $0x28] sm:$0x1] %vm4231, %v4204
    %4243 = vst.msk [vmem:[#allocation9 + $0x2c] sm:$0x1] %vm4231, %v4206
    %4244 = vst.msk [vmem:[#allocation9 + $0x30] sm:$0x1] %vm4231, %v4208
    %4245 = vst.msk [vmem:[#allocation9 + $0x34] sm:$0x1] %vm4231, %v4210
    %4246 = vst.msk [vmem:[#allocation9 + $0x38] sm:$0x1] %vm4231, %v4212
    %4247 = vst.msk [vmem:[#allocation9 + $0x3c] sm:$0x1] %vm4231, %v4214
    %v4248 = vld [vmem:[#allocation8] sm:$0xff]
    %v4249 = vld [vmem:[#allocation8 + $0x20] sm:$0xff]
    %v4252 = vrot.slane %v4248, 1
    %v4253 = vrot.slane %v4248, 2
    %v4254 = vrot.slane %v4248, 3
    %v4255 = vrot.slane %v4248, 4
    %v4256 = vrot.slane %v4248, 5
    %v4257 = vrot.slane %v4248, 6
    %v4258 = vrot.slane %v4248, 7
    %v4259 = vrot.slane %v4249, 1
    %v4260 = vrot.slane %v4249, 2
    %v4261 = vrot.slane %v4249, 3
    %v4262 = vrot.slane %v4249, 4
    %v4263 = vrot.slane %v4249, 5
    %v4264 = vrot.slane %v4249, 6
    %v4265 = vrot.slane %v4249, 7
    %v4266 = vperm.slane %v4248, 0
    %v4267 = vperm.slane %v4252, 0
    %v4268 = vperm.slane %v4253, 0
    %v4269 = vperm.slane %v4254, 0
    %v4270 = vperm.slane %v4255, 0
    %v4271 = vperm.slane %v4256, 0
    %v4272 = vperm.slane %v4257, 0
    %v4273 = vperm.slane %v4258, 0
    %v4274 = vperm.slane %v4249, 0
    %v4275 = vperm.slane %v4259, 0
    %v4276 = vperm.slane %v4260, 0
    %v4277 = vperm.slane %v4261, 0
    %v4278 = vperm.slane %v4262, 0
    %v4279 = vperm.slane %v4263, 0
    %v4280 = vperm.slane %v4264, 0
    %v4281 = vperm.slane %v4265, 0
    %4282 = vrot.lane.b32.xlu0 %v4266, 92
    %v4283 = vpop.permute.xlu0 %4282
    %4284 = vrot.lane.b32.xlu0 %v4267, 92
    %v4285 = vpop.permute.xlu0 %4284
    %4286 = vrot.lane.b32.xlu0 %v4268, 92
    %v4287 = vpop.permute.xlu0 %4286
    %4288 = vrot.lane.b32.xlu0 %v4269, 92
    %v4289 = vpop.permute.xlu0 %4288
    %4290 = vrot.lane.b32.xlu0 %v4270, 92
    %v4291 = vpop.permute.xlu0 %4290
    %4292 = vrot.lane.b32.xlu0 %v4271, 92
    %v4293 = vpop.permute.xlu0 %4292
    %4294 = vrot.lane.b32.xlu0 %v4272, 92
    %v4295 = vpop.permute.xlu0 %4294
    %4296 = vrot.lane.b32.xlu0 %v4273, 92
    %v4297 = vpop.permute.xlu0 %4296
    %4298 = vrot.lane.b32.xlu0 %v4274, 92
    %v4299 = vpop.permute.xlu0 %4298
    %4300 = vrot.lane.b32.xlu0 %v4275, 92
    %v4301 = vpop.permute.xlu0 %4300
    %4302 = vrot.lane.b32.xlu0 %v4276, 92
    %v4303 = vpop.permute.xlu0 %4302
    %4304 = vrot.lane.b32.xlu0 %v4277, 92
    %v4305 = vpop.permute.xlu0 %4304
    %4306 = vrot.lane.b32.xlu0 %v4278, 92
    %v4307 = vpop.permute.xlu0 %4306
    %4308 = vrot.lane.b32.xlu0 %v4279, 92
    %v4309 = vpop.permute.xlu0 %4308
    %4310 = vrot.lane.b32.xlu0 %v4280, 92
    %v4311 = vpop.permute.xlu0 %4310
    %4312 = vrot.lane.b32.xlu0 %v4281, 92
    %v4313 = vpop.permute.xlu0 %4312
    %vm4330 = vcmask 319728
    %4331 = vst.msk [vmem:[#allocation9] sm:$0x1] %vm4330, %v4283
    %4332 = vst.msk [vmem:[#allocation9 + $0x4] sm:$0x1] %vm4330, %v4285
    %4333 = vst.msk [vmem:[#allocation9 + $0x8] sm:$0x1] %vm4330, %v4287
    %4334 = vst.msk [vmem:[#allocation9 + $0xc] sm:$0x1] %vm4330, %v4289
    %4335 = vst.msk [vmem:[#allocation9 + $0x10] sm:$0x1] %vm4330, %v4291
    %4336 = vst.msk [vmem:[#allocation9 + $0x14] sm:$0x1] %vm4330, %v4293
    %4337 = vst.msk [vmem:[#allocation9 + $0x18] sm:$0x1] %vm4330, %v4295
    %4338 = vst.msk [vmem:[#allocation9 + $0x1c] sm:$0x1] %vm4330, %v4297
    %4339 = vst.msk [vmem:[#allocation9 + $0x20] sm:$0x1] %vm4330, %v4299
    %4340 = vst.msk [vmem:[#allocation9 + $0x24] sm:$0x1] %vm4330, %v4301
    %4341 = vst.msk [vmem:[#allocation9 + $0x28] sm:$0x1] %vm4330, %v4303
    %4342 = vst.msk [vmem:[#allocation9 + $0x2c] sm:$0x1] %vm4330, %v4305
    %4343 = vst.msk [vmem:[#allocation9 + $0x30] sm:$0x1] %vm4330, %v4307
    %4344 = vst.msk [vmem:[#allocation9 + $0x34] sm:$0x1] %vm4330, %v4309
    %4345 = vst.msk [vmem:[#allocation9 + $0x38] sm:$0x1] %vm4330, %v4311
    %4346 = vst.msk [vmem:[#allocation9 + $0x3c] sm:$0x1] %vm4330, %v4313
    %v4347 = vld [vmem:[#allocation8] sm:$0xff]
    %v4348 = vld [vmem:[#allocation8 + $0x20] sm:$0xff]
    %v4351 = vrot.slane %v4347, 1
    %v4352 = vrot.slane %v4347, 2
    %v4353 = vrot.slane %v4347, 3
    %v4354 = vrot.slane %v4347, 4
    %v4355 = vrot.slane %v4347, 5
    %v4356 = vrot.slane %v4347, 6
    %v4357 = vrot.slane %v4347, 7
    %v4358 = vrot.slane %v4348, 1
    %v4359 = vrot.slane %v4348, 2
    %v4360 = vrot.slane %v4348, 3
    %v4361 = vrot.slane %v4348, 4
    %v4362 = vrot.slane %v4348, 5
    %v4363 = vrot.slane %v4348, 6
    %v4364 = vrot.slane %v4348, 7
    %v4365 = vperm.slane %v4347, 0
    %v4366 = vperm.slane %v4351, 0
    %v4367 = vperm.slane %v4352, 0
    %v4368 = vperm.slane %v4353, 0
    %v4369 = vperm.slane %v4354, 0
    %v4370 = vperm.slane %v4355, 0
    %v4371 = vperm.slane %v4356, 0
    %v4372 = vperm.slane %v4357, 0
    %v4373 = vperm.slane %v4348, 0
    %v4374 = vperm.slane %v4358, 0
    %v4375 = vperm.slane %v4359, 0
    %v4376 = vperm.slane %v4360, 0
    %v4377 = vperm.slane %v4361, 0
    %v4378 = vperm.slane %v4362, 0
    %v4379 = vperm.slane %v4363, 0
    %v4380 = vperm.slane %v4364, 0
    %4381 = vrot.lane.b32.xlu0 %v4365, 18
    %v4382 = vpop.permute.xlu0 %4381
    %4383 = vrot.lane.b32.xlu0 %v4366, 18
    %v4384 = vpop.permute.xlu0 %4383
    %4385 = vrot.lane.b32.xlu0 %v4367, 18
    %v4386 = vpop.permute.xlu0 %4385
    %4387 = vrot.lane.b32.xlu0 %v4368, 18
    %v4388 = vpop.permute.xlu0 %4387
    %4389 = vrot.lane.b32.xlu0 %v4369, 18
    %v4390 = vpop.permute.xlu0 %4389
    %4391 = vrot.lane.b32.xlu0 %v4370, 18
    %v4392 = vpop.permute.xlu0 %4391
    %4393 = vrot.lane.b32.xlu0 %v4371, 18
    %v4394 = vpop.permute.xlu0 %4393
    %4395 = vrot.lane.b32.xlu0 %v4372, 18
    %v4396 = vpop.permute.xlu0 %4395
    %4397 = vrot.lane.b32.xlu0 %v4373, 18
    %v4398 = vpop.permute.xlu0 %4397
    %4399 = vrot.lane.b32.xlu0 %v4374, 18
    %v4400 = vpop.permute.xlu0 %4399
    %4401 = vrot.lane.b32.xlu0 %v4375, 18
    %v4402 = vpop.permute.xlu0 %4401
    %4403 = vrot.lane.b32.xlu0 %v4376, 18
    %v4404 = vpop.permute.xlu0 %4403
    %4405 = vrot.lane.b32.xlu0 %v4377, 18
    %v4406 = vpop.permute.xlu0 %4405
    %4407 = vrot.lane.b32.xlu0 %v4378, 18
    %v4408 = vpop.permute.xlu0 %4407
    %4409 = vrot.lane.b32.xlu0 %v4379, 18
    %v4410 = vpop.permute.xlu0 %4409
    %4411 = vrot.lane.b32.xlu0 %v4380, 18
    %v4412 = vpop.permute.xlu0 %4411
    %4429 = vst.msk [vmem:[#allocation9 + $0x1] sm:$0x1] %vm4033, %v4382
    %4430 = vst.msk [vmem:[#allocation9 + $0x5] sm:$0x1] %vm4033, %v4384
    %4431 = vst.msk [vmem:[#allocation9 + $0x9] sm:$0x1] %vm4033, %v4386
    %4432 = vst.msk [vmem:[#allocation9 + $0xd] sm:$0x1] %vm4033, %v4388
    %4433 = vst.msk [vmem:[#allocation9 + $0x11] sm:$0x1] %vm4033, %v4390
    %4434 = vst.msk [vmem:[#allocation9 + $0x15] sm:$0x1] %vm4033, %v4392
    %4435 = vst.msk [vmem:[#allocation9 + $0x19] sm:$0x1] %vm4033, %v4394
    %4436 = vst.msk [vmem:[#allocation9 + $0x1d] sm:$0x1] %vm4033, %v4396
    %4437 = vst.msk [vmem:[#allocation9 + $0x21] sm:$0x1] %vm4033, %v4398
    %4438 = vst.msk [vmem:[#allocation9 + $0x25] sm:$0x1] %vm4033, %v4400
    %4439 = vst.msk [vmem:[#allocation9 + $0x29] sm:$0x1] %vm4033, %v4402
    %4440 = vst.msk [vmem:[#allocation9 + $0x2d] sm:$0x1] %vm4033, %v4404
    %4441 = vst.msk [vmem:[#allocation9 + $0x31] sm:$0x1] %vm4033, %v4406
    %4442 = vst.msk [vmem:[#allocation9 + $0x35] sm:$0x1] %vm4033, %v4408
    %4443 = vst.msk [vmem:[#allocation9 + $0x39] sm:$0x1] %vm4033, %v4410
    %4444 = vst.msk [vmem:[#allocation9 + $0x3d] sm:$0x1] %vm4033, %v4412
    %v4445 = vld [vmem:[#allocation8 + $0x8] sm:$0xff]
    %v4446 = vld [vmem:[#allocation8 + $0x28] sm:$0xff]
    %v4449 = vrot.slane %v4445, 1
    %v4450 = vrot.slane %v4445, 2
    %v4451 = vrot.slane %v4445, 3
    %v4452 = vrot.slane %v4445, 4
    %v4453 = vrot.slane %v4445, 5
    %v4454 = vrot.slane %v4445, 6
    %v4455 = vrot.slane %v4445, 7
    %v4456 = vrot.slane %v4446, 1
    %v4457 = vrot.slane %v4446, 2
    %v4458 = vrot.slane %v4446, 3
    %v4459 = vrot.slane %v4446, 4
    %v4460 = vrot.slane %v4446, 5
    %v4461 = vrot.slane %v4446, 6
    %v4462 = vrot.slane %v4446, 7
    %v4463 = vperm.slane %v4445, 0
    %v4464 = vperm.slane %v4449, 0
    %v4465 = vperm.slane %v4450, 0
    %v4466 = vperm.slane %v4451, 0
    %v4467 = vperm.slane %v4452, 0
    %v4468 = vperm.slane %v4453, 0
    %v4469 = vperm.slane %v4454, 0
    %v4470 = vperm.slane %v4455, 0
    %v4471 = vperm.slane %v4446, 0
    %v4472 = vperm.slane %v4456, 0
    %v4473 = vperm.slane %v4457, 0
    %v4474 = vperm.slane %v4458, 0
    %v4475 = vperm.slane %v4459, 0
    %v4476 = vperm.slane %v4460, 0
    %v4477 = vperm.slane %v4461, 0
    %v4478 = vperm.slane %v4462, 0
    %4479 = vrot.lane.b32.xlu0 %v4463, 6
    %v4480 = vpop.permute.xlu0 %4479
    %4481 = vrot.lane.b32.xlu0 %v4464, 6
    %v4482 = vpop.permute.xlu0 %4481
    %4483 = vrot.lane.b32.xlu0 %v4465, 6
    %v4484 = vpop.permute.xlu0 %4483
    %4485 = vrot.lane.b32.xlu0 %v4466, 6
    %v4486 = vpop.permute.xlu0 %4485
    %4487 = vrot.lane.b32.xlu0 %v4467, 6
    %v4488 = vpop.permute.xlu0 %4487
    %4489 = vrot.lane.b32.xlu0 %v4468, 6
    %v4490 = vpop.permute.xlu0 %4489
    %4491 = vrot.lane.b32.xlu0 %v4469, 6
    %v4492 = vpop.permute.xlu0 %4491
    %4493 = vrot.lane.b32.xlu0 %v4470, 6
    %v4494 = vpop.permute.xlu0 %4493
    %4495 = vrot.lane.b32.xlu0 %v4471, 6
    %v4496 = vpop.permute.xlu0 %4495
    %4497 = vrot.lane.b32.xlu0 %v4472, 6
    %v4498 = vpop.permute.xlu0 %4497
    %4499 = vrot.lane.b32.xlu0 %v4473, 6
    %v4500 = vpop.permute.xlu0 %4499
    %4501 = vrot.lane.b32.xlu0 %v4474, 6
    %v4502 = vpop.permute.xlu0 %4501
    %4503 = vrot.lane.b32.xlu0 %v4475, 6
    %v4504 = vpop.permute.xlu0 %4503
    %4505 = vrot.lane.b32.xlu0 %v4476, 6
    %v4506 = vpop.permute.xlu0 %4505
    %4507 = vrot.lane.b32.xlu0 %v4477, 6
    %v4508 = vpop.permute.xlu0 %4507
    %4509 = vrot.lane.b32.xlu0 %v4478, 6
    %v4510 = vpop.permute.xlu0 %4509
    %4527 = vst.msk [vmem:[#allocation9 + $0x1] sm:$0x1] %vm4132, %v4480
    %4528 = vst.msk [vmem:[#allocation9 + $0x5] sm:$0x1] %vm4132, %v4482
    %4529 = vst.msk [vmem:[#allocation9 + $0x9] sm:$0x1] %vm4132, %v4484
    %4530 = vst.msk [vmem:[#allocation9 + $0xd] sm:$0x1] %vm4132, %v4486
    %4531 = vst.msk [vmem:[#allocation9 + $0x11] sm:$0x1] %vm4132, %v4488
    %4532 = vst.msk [vmem:[#allocation9 + $0x15] sm:$0x1] %vm4132, %v4490
    %4533 = vst.msk [vmem:[#allocation9 + $0x19] sm:$0x1] %vm4132, %v4492
    %4534 = vst.msk [vmem:[#allocation9 + $0x1d] sm:$0x1] %vm4132, %v4494
    %4535 = vst.msk [vmem:[#allocation9 + $0x21] sm:$0x1] %vm4132, %v4496
    %4536 = vst.msk [vmem:[#allocation9 + $0x25] sm:$0x1] %vm4132, %v4498
    %4537 = vst.msk [vmem:[#allocation9 + $0x29] sm:$0x1] %vm4132, %v4500
    %4538 = vst.msk [vmem:[#allocation9 + $0x2d] sm:$0x1] %vm4132, %v4502
    %4539 = vst.msk [vmem:[#allocation9 + $0x31] sm:$0x1] %vm4132, %v4504
    %4540 = vst.msk [vmem:[#allocation9 + $0x35] sm:$0x1] %vm4132, %v4506
    %4541 = vst.msk [vmem:[#allocation9 + $0x39] sm:$0x1] %vm4132, %v4508
    %4542 = vst.msk [vmem:[#allocation9 + $0x3d] sm:$0x1] %vm4132, %v4510
    %v4543 = vld [vmem:[#allocation8 + $0x8] sm:$0xff]
    %v4544 = vld [vmem:[#allocation8 + $0x28] sm:$0xff]
    %v4547 = vrot.slane %v4543, 1
    %v4548 = vrot.slane %v4543, 2
    %v4549 = vrot.slane %v4543, 3
    %v4550 = vrot.slane %v4543, 4
    %v4551 = vrot.slane %v4543, 5
    %v4552 = vrot.slane %v4543, 6
    %v4553 = vrot.slane %v4543, 7
    %v4554 = vrot.slane %v4544, 1
    %v4555 = vrot.slane %v4544, 2
    %v4556 = vrot.slane %v4544, 3
    %v4557 = vrot.slane %v4544, 4
    %v4558 = vrot.slane %v4544, 5
    %v4559 = vrot.slane %v4544, 6
    %v4560 = vrot.slane %v4544, 7
    %v4561 = vperm.slane %v4543, 0
    %v4562 = vperm.slane %v4547, 0
    %v4563 = vperm.slane %v4548, 0
    %v4564 = vperm.slane %v4549, 0
    %v4565 = vperm.slane %v4550, 0
    %v4566 = vperm.slane %v4551, 0
    %v4567 = vperm.slane %v4552, 0
    %v4568 = vperm.slane %v4553, 0
    %v4569 = vperm.slane %v4544, 0
    %v4570 = vperm.slane %v4554, 0
    %v4571 = vperm.slane %v4555, 0
    %v4572 = vperm.slane %v4556, 0
    %v4573 = vperm.slane %v4557, 0
    %v4574 = vperm.slane %v4558, 0
    %v4575 = vperm.slane %v4559, 0
    %v4576 = vperm.slane %v4560, 0
    %4577 = vrot.lane.b32.xlu0 %v4561, 122
    %v4578 = vpop.permute.xlu0 %4577
    %4579 = vrot.lane.b32.xlu0 %v4562, 122
    %v4580 = vpop.permute.xlu0 %4579
    %4581 = vrot.lane.b32.xlu0 %v4563, 122
    %v4582 = vpop.permute.xlu0 %4581
    %4583 = vrot.lane.b32.xlu0 %v4564, 122
    %v4584 = vpop.permute.xlu0 %4583
    %4585 = vrot.lane.b32.xlu0 %v4565, 122
    %v4586 = vpop.permute.xlu0 %4585
    %4587 = vrot.lane.b32.xlu0 %v4566, 122
    %v4588 = vpop.permute.xlu0 %4587
    %4589 = vrot.lane.b32.xlu0 %v4567, 122
    %v4590 = vpop.permute.xlu0 %4589
    %4591 = vrot.lane.b32.xlu0 %v4568, 122
    %v4592 = vpop.permute.xlu0 %4591
    %4593 = vrot.lane.b32.xlu0 %v4569, 122
    %v4594 = vpop.permute.xlu0 %4593
    %4595 = vrot.lane.b32.xlu0 %v4570, 122
    %v4596 = vpop.permute.xlu0 %4595
    %4597 = vrot.lane.b32.xlu0 %v4571, 122
    %v4598 = vpop.permute.xlu0 %4597
    %4599 = vrot.lane.b32.xlu0 %v4572, 122
    %v4600 = vpop.permute.xlu0 %4599
    %4601 = vrot.lane.b32.xlu0 %v4573, 122
    %v4602 = vpop.permute.xlu0 %4601
    %4603 = vrot.lane.b32.xlu0 %v4574, 122
    %v4604 = vpop.permute.xlu0 %4603
    %4605 = vrot.lane.b32.xlu0 %v4575, 122
    %v4606 = vpop.permute.xlu0 %4605
    %4607 = vrot.lane.b32.xlu0 %v4576, 122
    %v4608 = vpop.permute.xlu0 %4607
    %4625 = vst.msk [vmem:[#allocation9 + $0x1] sm:$0x1] %vm4231, %v4578
    %4626 = vst.msk [vmem:[#allocation9 + $0x5] sm:$0x1] %vm4231, %v4580
    %4627 = vst.msk [vmem:[#allocation9 + $0x9] sm:$0x1] %vm4231, %v4582
    %4628 = vst.msk [vmem:[#allocation9 + $0xd] sm:$0x1] %vm4231, %v4584
    %4629 = vst.msk [vmem:[#allocation9 + $0x11] sm:$0x1] %vm4231, %v4586
    %4630 = vst.msk [vmem:[#allocation9 + $0x15] sm:$0x1] %vm4231, %v4588
    %4631 = vst.msk [vmem:[#allocation9 + $0x19] sm:$0x1] %vm4231, %v4590
    %4632 = vst.msk [vmem:[#allocation9 + $0x1d] sm:$0x1] %vm4231, %v4592
    %4633 = vst.msk [vmem:[#allocation9 + $0x21] sm:$0x1] %vm4231, %v4594
    %4634 = vst.msk [vmem:[#allocation9 + $0x25] sm:$0x1] %vm4231, %v4596
    %4635 = vst.msk [vmem:[#allocation9 + $0x29] sm:$0x1] %vm4231, %v4598
    %4636 = vst.msk [vmem:[#allocation9 + $0x2d] sm:$0x1] %vm4231, %v4600
    %4637 = vst.msk [vmem:[#allocation9 + $0x31] sm:$0x1] %vm4231, %v4602
    %4638 = vst.msk [vmem:[#allocation9 + $0x35] sm:$0x1] %vm4231, %v4604
    %4639 = vst.msk [vmem:[#allocation9 + $0x39] sm:$0x1] %vm4231, %v4606
    %4640 = vst.msk [vmem:[#allocation9 + $0x3d] sm:$0x1] %vm4231, %v4608
    %v4641 = vld [vmem:[#allocation8 + $0x8] sm:$0xff]
    %v4642 = vld [vmem:[#allocation8 + $0x28] sm:$0xff]
    %v4645 = vrot.slane %v4641, 1
    %v4646 = vrot.slane %v4641, 2
    %v4647 = vrot.slane %v4641, 3
    %v4648 = vrot.slane %v4641, 4
    %v4649 = vrot.slane %v4641, 5
    %v4650 = vrot.slane %v4641, 6
    %v4651 = vrot.slane %v4641, 7
    %v4652 = vrot.slane %v4642, 1
    %v4653 = vrot.slane %v4642, 2
    %v4654 = vrot.slane %v4642, 3
    %v4655 = vrot.slane %v4642, 4
    %v4656 = vrot.slane %v4642, 5
    %v4657 = vrot.slane %v4642, 6
    %v4658 = vrot.slane %v4642, 7
    %v4659 = vperm.slane %v4641, 0
    %v4660 = vperm.slane %v4645, 0
    %v4661 = vperm.slane %v4646, 0
    %v4662 = vperm.slane %v4647, 0
    %v4663 = vperm.slane %v4648, 0
    %v4664 = vperm.slane %v4649, 0
    %v4665 = vperm.slane %v4650, 0
    %v4666 = vperm.slane %v4651, 0
    %v4667 = vperm.slane %v4642, 0
    %v4668 = vperm.slane %v4652, 0
    %v4669 = vperm.slane %v4653, 0
    %v4670 = vperm.slane %v4654, 0
    %v4671 = vperm.slane %v4655, 0
    %v4672 = vperm.slane %v4656, 0
    %v4673 = vperm.slane %v4657, 0
    %v4674 = vperm.slane %v4658, 0
    %4675 = vrot.lane.b32.xlu0 %v4659, 110
    %v4676 = vpop.permute.xlu0 %4675
    %4677 = vrot.lane.b32.xlu0 %v4660, 110
    %v4678 = vpop.permute.xlu0 %4677
    %4679 = vrot.lane.b32.xlu0 %v4661, 110
    %v4680 = vpop.permute.xlu0 %4679
    %4681 = vrot.lane.b32.xlu0 %v4662, 110
    %v4682 = vpop.permute.xlu0 %4681
    %4683 = vrot.lane.b32.xlu0 %v4663, 110
    %v4684 = vpop.permute.xlu0 %4683
    %4685 = vrot.lane.b32.xlu0 %v4664, 110
    %v4686 = vpop.permute.xlu0 %4685
    %4687 = vrot.lane.b32.xlu0 %v4665, 110
    %v4688 = vpop.permute.xlu0 %4687
    %4689 = vrot.lane.b32.xlu0 %v4666, 110
    %v4690 = vpop.permute.xlu0 %4689
    %4691 = vrot.lane.b32.xlu0 %v4667, 110
    %v4692 = vpop.permute.xlu0 %4691
    %4693 = vrot.lane.b32.xlu0 %v4668, 110
    %v4694 = vpop.permute.xlu0 %4693
    %4695 = vrot.lane.b32.xlu0 %v4669, 110
    %v4696 = vpop.permute.xlu0 %4695
    %4697 = vrot.lane.b32.xlu0 %v4670, 110
    %v4698 = vpop.permute.xlu0 %4697
    %4699 = vrot.lane.b32.xlu0 %v4671, 110
    %v4700 = vpop.permute.xlu0 %4699
    %4701 = vrot.lane.b32.xlu0 %v4672, 110
    %v4702 = vpop.permute.xlu0 %4701
    %4703 = vrot.lane.b32.xlu0 %v4673, 110
    %v4704 = vpop.permute.xlu0 %4703
    %4705 = vrot.lane.b32.xlu0 %v4674, 110
    %v4706 = vpop.permute.xlu0 %4705
    %4723 = vst.msk [vmem:[#allocation9 + $0x1] sm:$0x1] %vm4330, %v4676
    %4724 = vst.msk [vmem:[#allocation9 + $0x5] sm:$0x1] %vm4330, %v4678
    %4725 = vst.msk [vmem:[#allocation9 + $0x9] sm:$0x1] %vm4330, %v4680
    %4726 = vst.msk [vmem:[#allocation9 + $0xd] sm:$0x1] %vm4330, %v4682
    %4727 = vst.msk [vmem:[#allocation9 + $0x11] sm:$0x1] %vm4330, %v4684
    %4728 = vst.msk [vmem:[#allocation9 + $0x15] sm:$0x1] %vm4330, %v4686
    %4729 = vst.msk [vmem:[#allocation9 + $0x19] sm:$0x1] %vm4330, %v4688
    %4730 = vst.msk [vmem:[#allocation9 + $0x1d] sm:$0x1] %vm4330, %v4690
    %4731 = vst.msk [vmem:[#allocation9 + $0x21] sm:$0x1] %vm4330, %v4692
    %4732 = vst.msk [vmem:[#allocation9 + $0x25] sm:$0x1] %vm4330, %v4694
    %4733 = vst.msk [vmem:[#allocation9 + $0x29] sm:$0x1] %vm4330, %v4696
    %4734 = vst.msk [vmem:[#allocation9 + $0x2d] sm:$0x1] %vm4330, %v4698
    %4735 = vst.msk [vmem:[#allocation9 + $0x31] sm:$0x1] %vm4330, %v4700
    %4736 = vst.msk [vmem:[#allocation9 + $0x35] sm:$0x1] %vm4330, %v4702
    %4737 = vst.msk [vmem:[#allocation9 + $0x39] sm:$0x1] %vm4330, %v4704
    %4738 = vst.msk [vmem:[#allocation9 + $0x3d] sm:$0x1] %vm4330, %v4706
    %v4739 = vld [vmem:[#allocation8 + $0x8] sm:$0xff]
    %v4740 = vld [vmem:[#allocation8 + $0x28] sm:$0xff]
    %v4743 = vrot.slane %v4739, 1
    %v4744 = vrot.slane %v4739, 2
    %v4745 = vrot.slane %v4739, 3
    %v4746 = vrot.slane %v4739, 4
    %v4747 = vrot.slane %v4739, 5
    %v4748 = vrot.slane %v4739, 6
    %v4749 = vrot.slane %v4739, 7
    %v4750 = vrot.slane %v4740, 1
    %v4751 = vrot.slane %v4740, 2
    %v4752 = vrot.slane %v4740, 3
    %v4753 = vrot.slane %v4740, 4
    %v4754 = vrot.slane %v4740, 5
    %v4755 = vrot.slane %v4740, 6
    %v4756 = vrot.slane %v4740, 7
    %v4757 = vperm.slane %v4739, 0
    %v4758 = vperm.slane %v4743, 0
    %v4759 = vperm.slane %v4744, 0
    %v4760 = vperm.slane %v4745, 0
    %v4761 = vperm.slane %v4746, 0
    %v4762 = vperm.slane %v4747, 0
    %v4763 = vperm.slane %v4748, 0
    %v4764 = vperm.slane %v4749, 0
    %v4765 = vperm.slane %v4740, 0
    %v4766 = vperm.slane %v4750, 0
    %v4767 = vperm.slane %v4751, 0
    %v4768 = vperm.slane %v4752, 0
    %v4769 = vperm.slane %v4753, 0
    %v4770 = vperm.slane %v4754, 0
    %v4771 = vperm.slane %v4755, 0
    %v4772 = vperm.slane %v4756, 0
    %4773 = vrot.lane.b32.xlu0 %v4757, 36
    %v4774 = vpop.permute.xlu0 %4773
    %4775 = vrot.lane.b32.xlu0 %v4758, 36
    %v4776 = vpop.permute.xlu0 %4775
    %4777 = vrot.lane.b32.xlu0 %v4759, 36
    %v4778 = vpop.permute.xlu0 %4777
    %4779 = vrot.lane.b32.xlu0 %v4760, 36
    %v4780 = vpop.permute.xlu0 %4779
    %4781 = vrot.lane.b32.xlu0 %v4761, 36
    %v4782 = vpop.permute.xlu0 %4781
    %4783 = vrot.lane.b32.xlu0 %v4762, 36
    %v4784 = vpop.permute.xlu0 %4783
    %4785 = vrot.lane.b32.xlu0 %v4763, 36
    %v4786 = vpop.permute.xlu0 %4785
    %4787 = vrot.lane.b32.xlu0 %v4764, 36
    %v4788 = vpop.permute.xlu0 %4787
    %4789 = vrot.lane.b32.xlu0 %v4765, 36
    %v4790 = vpop.permute.xlu0 %4789
    %4791 = vrot.lane.b32.xlu0 %v4766, 36
    %v4792 = vpop.permute.xlu0 %4791
    %4793 = vrot.lane.b32.xlu0 %v4767, 36
    %v4794 = vpop.permute.xlu0 %4793
    %4795 = vrot.lane.b32.xlu0 %v4768, 36
    %v4796 = vpop.permute.xlu0 %4795
    %4797 = vrot.lane.b32.xlu0 %v4769, 36
    %v4798 = vpop.permute.xlu0 %4797
    %4799 = vrot.lane.b32.xlu0 %v4770, 36
    %v4800 = vpop.permute.xlu0 %4799
    %4801 = vrot.lane.b32.xlu0 %v4771, 36
    %v4802 = vpop.permute.xlu0 %4801
    %4803 = vrot.lane.b32.xlu0 %v4772, 36
    %v4804 = vpop.permute.xlu0 %4803
    %4821 = vst.msk [vmem:[#allocation9 + $0x2] sm:$0x1] %vm4033, %v4774
    %4822 = vst.msk [vmem:[#allocation9 + $0x6] sm:$0x1] %vm4033, %v4776
    %4823 = vst.msk [vmem:[#allocation9 + $0xa] sm:$0x1] %vm4033, %v4778
    %4824 = vst.msk [vmem:[#allocation9 + $0xe] sm:$0x1] %vm4033, %v4780
    %4825 = vst.msk [vmem:[#allocation9 + $0x12] sm:$0x1] %vm4033, %v4782
    %4826 = vst.msk [vmem:[#allocation9 + $0x16] sm:$0x1] %vm4033, %v4784
    %4827 = vst.msk [vmem:[#allocation9 + $0x1a] sm:$0x1] %vm4033, %v4786
    %4828 = vst.msk [vmem:[#allocation9 + $0x1e] sm:$0x1] %vm4033, %v4788
    %4829 = vst.msk [vmem:[#allocation9 + $0x22] sm:$0x1] %vm4033, %v4790
    %4830 = vst.msk [vmem:[#allocation9 + $0x26] sm:$0x1] %vm4033, %v4792
    %4831 = vst.msk [vmem:[#allocation9 + $0x2a] sm:$0x1] %vm4033, %v4794
    %4832 = vst.msk [vmem:[#allocation9 + $0x2e] sm:$0x1] %vm4033, %v4796
    %4833 = vst.msk [vmem:[#allocation9 + $0x32] sm:$0x1] %vm4033, %v4798
    %4834 = vst.msk [vmem:[#allocation9 + $0x36] sm:$0x1] %vm4033, %v4800
    %4835 = vst.msk [vmem:[#allocation9 + $0x3a] sm:$0x1] %vm4033, %v4802
    %4836 = vst.msk [vmem:[#allocation9 + $0x3e] sm:$0x1] %vm4033, %v4804
    %v4837 = vld [vmem:[#allocation8 + $0x8] sm:$0xff]
    %v4838 = vld [vmem:[#allocation8 + $0x28] sm:$0xff]
    %v4841 = vrot.slane %v4837, 1
    %v4842 = vrot.slane %v4837, 2
    %v4843 = vrot.slane %v4837, 3
    %v4844 = vrot.slane %v4837, 4
    %v4845 = vrot.slane %v4837, 5
    %v4846 = vrot.slane %v4837, 6
    %v4847 = vrot.slane %v4837, 7
    %v4848 = vrot.slane %v4838, 1
    %v4849 = vrot.slane %v4838, 2
    %v4850 = vrot.slane %v4838, 3
    %v4851 = vrot.slane %v4838, 4
    %v4852 = vrot.slane %v4838, 5
    %v4853 = vrot.slane %v4838, 6
    %v4854 = vrot.slane %v4838, 7
    %v4855 = vperm.slane %v4837, 0
    %v4856 = vperm.slane %v4841, 0
    %v4857 = vperm.slane %v4842, 0
    %v4858 = vperm.slane %v4843, 0
    %v4859 = vperm.slane %v4844, 0
    %v4860 = vperm.slane %v4845, 0
    %v4861 = vperm.slane %v4846, 0
    %v4862 = vperm.slane %v4847, 0
    %v4863 = vperm.slane %v4838, 0
    %v4864 = vperm.slane %v4848, 0
    %v4865 = vperm.slane %v4849, 0
    %v4866 = vperm.slane %v4850, 0
    %v4867 = vperm.slane %v4851, 0
    %v4868 = vperm.slane %v4852, 0
    %v4869 = vperm.slane %v4853, 0
    %v4870 = vperm.slane %v4854, 0
    %4871 = vrot.lane.b32.xlu0 %v4855, 24
    %v4872 = vpop.permute.xlu0 %4871
    %4873 = vrot.lane.b32.xlu0 %v4856, 24
    %v4874 = vpop.permute.xlu0 %4873
    %4875 = vrot.lane.b32.xlu0 %v4857, 24
    %v4876 = vpop.permute.xlu0 %4875
    %4877 = vrot.lane.b32.xlu0 %v4858, 24
    %v4878 = vpop.permute.xlu0 %4877
    %4879 = vrot.lane.b32.xlu0 %v4859, 24
    %v4880 = vpop.permute.xlu0 %4879
    %4881 = vrot.lane.b32.xlu0 %v4860, 24
    %v4882 = vpop.permute.xlu0 %4881
    %4883 = vrot.lane.b32.xlu0 %v4861, 24
    %v4884 = vpop.permute.xlu0 %4883
    %4885 = vrot.lane.b32.xlu0 %v4862, 24
    %v4886 = vpop.permute.xlu0 %4885
    %4887 = vrot.lane.b32.xlu0 %v4863, 24
    %v4888 = vpop.permute.xlu0 %4887
    %4889 = vrot.lane.b32.xlu0 %v4864, 24
    %v4890 = vpop.permute.xlu0 %4889
    %4891 = vrot.lane.b32.xlu0 %v4865, 24
    %v4892 = vpop.permute.xlu0 %4891
    %4893 = vrot.lane.b32.xlu0 %v4866, 24
    %v4894 = vpop.permute.xlu0 %4893
    %4895 = vrot.lane.b32.xlu0 %v4867, 24
    %v4896 = vpop.permute.xlu0 %4895
    %4897 = vrot.lane.b32.xlu0 %v4868, 24
    %v4898 = vpop.permute.xlu0 %4897
    %4899 = vrot.lane.b32.xlu0 %v4869, 24
    %v4900 = vpop.permute.xlu0 %4899
    %4901 = vrot.lane.b32.xlu0 %v4870, 24
    %v4902 = vpop.permute.xlu0 %4901
    %4919 = vst.msk [vmem:[#allocation9 + $0x2] sm:$0x1] %vm4132, %v4872
    %4920 = vst.msk [vmem:[#allocation9 + $0x6] sm:$0x1] %vm4132, %v4874
    %4921 = vst.msk [vmem:[#allocation9 + $0xa] sm:$0x1] %vm4132, %v4876
    %4922 = vst.msk [vmem:[#allocation9 + $0xe] sm:$0x1] %vm4132, %v4878
    %4923 = vst.msk [vmem:[#allocation9 + $0x12] sm:$0x1] %vm4132, %v4880
    %4924 = vst.msk [vmem:[#allocation9 + $0x16] sm:$0x1] %vm4132, %v4882
    %4925 = vst.msk [vmem:[#allocation9 + $0x1a] sm:$0x1] %vm4132, %v4884
    %4926 = vst.msk [vmem:[#allocation9 + $0x1e] sm:$0x1] %vm4132, %v4886
    %4927 = vst.msk [vmem:[#allocation9 + $0x22] sm:$0x1] %vm4132, %v4888
    %4928 = vst.msk [vmem:[#allocation9 + $0x26] sm:$0x1] %vm4132, %v4890
    %4929 = vst.msk [vmem:[#allocation9 + $0x2a] sm:$0x1] %vm4132, %v4892
    %4930 = vst.msk [vmem:[#allocation9 + $0x2e] sm:$0x1] %vm4132, %v4894
    %4931 = vst.msk [vmem:[#allocation9 + $0x32] sm:$0x1] %vm4132, %v4896
    %4932 = vst.msk [vmem:[#allocation9 + $0x36] sm:$0x1] %vm4132, %v4898
    %4933 = vst.msk [vmem:[#allocation9 + $0x3a] sm:$0x1] %vm4132, %v4900
    %4934 = vst.msk [vmem:[#allocation9 + $0x3e] sm:$0x1] %vm4132, %v4902
    %v4935 = vld [vmem:[#allocation8 + $0x10] sm:$0xff]
    %v4936 = vld [vmem:[#allocation8 + $0x30] sm:$0xff]
    %v4939 = vrot.slane %v4935, 1
    %v4940 = vrot.slane %v4935, 2
    %v4941 = vrot.slane %v4935, 3
    %v4942 = vrot.slane %v4935, 4
    %v4943 = vrot.slane %v4935, 5
    %v4944 = vrot.slane %v4935, 6
    %v4945 = vrot.slane %v4935, 7
    %v4946 = vrot.slane %v4936, 1
    %v4947 = vrot.slane %v4936, 2
    %v4948 = vrot.slane %v4936, 3
    %v4949 = vrot.slane %v4936, 4
    %v4950 = vrot.slane %v4936, 5
    %v4951 = vrot.slane %v4936, 6
    %v4952 = vrot.slane %v4936, 7
    %v4953 = vperm.slane %v4935, 0
    %v4954 = vperm.slane %v4939, 0
    %v4955 = vperm.slane %v4940, 0
    %v4956 = vperm.slane %v4941, 0
    %v4957 = vperm.slane %v4942, 0
    %v4958 = vperm.slane %v4943, 0
    %v4959 = vperm.slane %v4944, 0
    %v4960 = vperm.slane %v4945, 0
    %v4961 = vperm.slane %v4936, 0
    %v4962 = vperm.slane %v4946, 0
    %v4963 = vperm.slane %v4947, 0
    %v4964 = vperm.slane %v4948, 0
    %v4965 = vperm.slane %v4949, 0
    %v4966 = vperm.slane %v4950, 0
    %v4967 = vperm.slane %v4951, 0
    %v4968 = vperm.slane %v4952, 0
    %4969 = vrot.lane.b32.xlu0 %v4953, 12
    %v4970 = vpop.permute.xlu0 %4969
    %4971 = vrot.lane.b32.xlu0 %v4954, 12
    %v4972 = vpop.permute.xlu0 %4971
    %4973 = vrot.lane.b32.xlu0 %v4955, 12
    %v4974 = vpop.permute.xlu0 %4973
    %4975 = vrot.lane.b32.xlu0 %v4956, 12
    %v4976 = vpop.permute.xlu0 %4975
    %4977 = vrot.lane.b32.xlu0 %v4957, 12
    %v4978 = vpop.permute.xlu0 %4977
    %4979 = vrot.lane.b32.xlu0 %v4958, 12
    %v4980 = vpop.permute.xlu0 %4979
    %4981 = vrot.lane.b32.xlu0 %v4959, 12
    %v4982 = vpop.permute.xlu0 %4981
    %4983 = vrot.lane.b32.xlu0 %v4960, 12
    %v4984 = vpop.permute.xlu0 %4983
    %4985 = vrot.lane.b32.xlu0 %v4961, 12
    %v4986 = vpop.permute.xlu0 %4985
    %4987 = vrot.lane.b32.xlu0 %v4962, 12
    %v4988 = vpop.permute.xlu0 %4987
    %4989 = vrot.lane.b32.xlu0 %v4963, 12
    %v4990 = vpop.permute.xlu0 %4989
    %4991 = vrot.lane.b32.xlu0 %v4964, 12
    %v4992 = vpop.permute.xlu0 %4991
    %4993 = vrot.lane.b32.xlu0 %v4965, 12
    %v4994 = vpop.permute.xlu0 %4993
    %4995 = vrot.lane.b32.xlu0 %v4966, 12
    %v4996 = vpop.permute.xlu0 %4995
    %4997 = vrot.lane.b32.xlu0 %v4967, 12
    %v4998 = vpop.permute.xlu0 %4997
    %4999 = vrot.lane.b32.xlu0 %v4968, 12
    %v5000 = vpop.permute.xlu0 %4999
    %5017 = vst.msk [vmem:[#allocation9 + $0x2] sm:$0x1] %vm4231, %v4970
    %5018 = vst.msk [vmem:[#allocation9 + $0x6] sm:$0x1] %vm4231, %v4972
    %5019 = vst.msk [vmem:[#allocation9 + $0xa] sm:$0x1] %vm4231, %v4974
    %5020 = vst.msk [vmem:[#allocation9 + $0xe] sm:$0x1] %vm4231, %v4976
    %5021 = vst.msk [vmem:[#allocation9 + $0x12] sm:$0x1] %vm4231, %v4978
    %5022 = vst.msk [vmem:[#allocation9 + $0x16] sm:$0x1] %vm4231, %v4980
    %5023 = vst.msk [vmem:[#allocation9 + $0x1a] sm:$0x1] %vm4231, %v4982
    %5024 = vst.msk [vmem:[#allocation9 + $0x1e] sm:$0x1] %vm4231, %v4984
    %5025 = vst.msk [vmem:[#allocation9 + $0x22] sm:$0x1] %vm4231, %v4986
    %5026 = vst.msk [vmem:[#allocation9 + $0x26] sm:$0x1] %vm4231, %v4988
    %5027 = vst.msk [vmem:[#allocation9 + $0x2a] sm:$0x1] %vm4231, %v4990
    %5028 = vst.msk [vmem:[#allocation9 + $0x2e] sm:$0x1] %vm4231, %v4992
    %5029 = vst.msk [vmem:[#allocation9 + $0x32] sm:$0x1] %vm4231, %v4994
    %5030 = vst.msk [vmem:[#allocation9 + $0x36] sm:$0x1] %vm4231, %v4996
    %5031 = vst.msk [vmem:[#allocation9 + $0x3a] sm:$0x1] %vm4231, %v4998
    %5032 = vst.msk [vmem:[#allocation9 + $0x3e] sm:$0x1] %vm4231, %v5000
    %v5033 = vld [vmem:[#allocation8 + $0x10] sm:$0xff]
    %v5034 = vld [vmem:[#allocation8 + $0x30] sm:$0xff]
    %v5037 = vrot.slane %v5033, 1
    %v5038 = vrot.slane %v5033, 2
    %v5039 = vrot.slane %v5033, 3
    %v5040 = vrot.slane %v5033, 4
    %v5041 = vrot.slane %v5033, 5
    %v5042 = vrot.slane %v5033, 6
    %v5043 = vrot.slane %v5033, 7
    %v5044 = vrot.slane %v5034, 1
    %v5045 = vrot.slane %v5034, 2
    %v5046 = vrot.slane %v5034, 3
    %v5047 = vrot.slane %v5034, 4
    %v5048 = vrot.slane %v5034, 5
    %v5049 = vrot.slane %v5034, 6
    %v5050 = vrot.slane %v5034, 7
    %5065 = vst.msk [vmem:[#allocation9 + $0x2] sm:$0x1] %vm4330, %v5033
    %5066 = vst.msk [vmem:[#allocation9 + $0x6] sm:$0x1] %vm4330, %v5037
    %5067 = vst.msk [vmem:[#allocation9 + $0xa] sm:$0x1] %vm4330, %v5038
    %5068 = vst.msk [vmem:[#allocation9 + $0xe] sm:$0x1] %vm4330, %v5039
    %5069 = vst.msk [vmem:[#allocation9 + $0x12] sm:$0x1] %vm4330, %v5040
    %5070 = vst.msk [vmem:[#allocation9 + $0x16] sm:$0x1] %vm4330, %v5041
    %5071 = vst.msk [vmem:[#allocation9 + $0x1a] sm:$0x1] %vm4330, %v5042
    %5072 = vst.msk [vmem:[#allocation9 + $0x1e] sm:$0x1] %vm4330, %v5043
    %5073 = vst.msk [vmem:[#allocation9 + $0x22] sm:$0x1] %vm4330, %v5034
    %5074 = vst.msk [vmem:[#allocation9 + $0x26] sm:$0x1] %vm4330, %v5044
    %5075 = vst.msk [vmem:[#allocation9 + $0x2a] sm:$0x1] %vm4330, %v5045
    %5076 = vst.msk [vmem:[#allocation9 + $0x2e] sm:$0x1] %vm4330, %v5046
    %5077 = vst.msk [vmem:[#allocation9 + $0x32] sm:$0x1] %vm4330, %v5047
    %5078 = vst.msk [vmem:[#allocation9 + $0x36] sm:$0x1] %vm4330, %v5048
    %5079 = vst.msk [vmem:[#allocation9 + $0x3a] sm:$0x1] %vm4330, %v5049
    %5080 = vst.msk [vmem:[#allocation9 + $0x3e] sm:$0x1] %vm4330, %v5050
    %v5081 = vld [vmem:[#allocation8 + $0x10] sm:$0xff]
    %v5082 = vld [vmem:[#allocation8 + $0x30] sm:$0xff]
    %v5085 = vrot.slane %v5081, 1
    %v5086 = vrot.slane %v5081, 2
    %v5087 = vrot.slane %v5081, 3
    %v5088 = vrot.slane %v5081, 4
    %v5089 = vrot.slane %v5081, 5
    %v5090 = vrot.slane %v5081, 6
    %v5091 = vrot.slane %v5081, 7
    %v5092 = vrot.slane %v5082, 1
    %v5093 = vrot.slane %v5082, 2
    %v5094 = vrot.slane %v5082, 3
    %v5095 = vrot.slane %v5082, 4
    %v5096 = vrot.slane %v5082, 5
    %v5097 = vrot.slane %v5082, 6
    %v5098 = vrot.slane %v5082, 7
    %v5099 = vperm.slane %v5081, 0
    %v5100 = vperm.slane %v5085, 0
    %v5101 = vperm.slane %v5086, 0
    %v5102 = vperm.slane %v5087, 0
    %v5103 = vperm.slane %v5088, 0
    %v5104 = vperm.slane %v5089, 0
    %v5105 = vperm.slane %v5090, 0
    %v5106 = vperm.slane %v5091, 0
    %v5107 = vperm.slane %v5082, 0
    %v5108 = vperm.slane %v5092, 0
    %v5109 = vperm.slane %v5093, 0
    %v5110 = vperm.slane %v5094, 0
    %v5111 = vperm.slane %v5095, 0
    %v5112 = vperm.slane %v5096, 0
    %v5113 = vperm.slane %v5097, 0
    %v5114 = vperm.slane %v5098, 0
    %5115 = vrot.lane.b32.xlu0 %v5099, 54
    %v5116 = vpop.permute.xlu0 %5115
    %5117 = vrot.lane.b32.xlu0 %v5100, 54
    %v5118 = vpop.permute.xlu0 %5117
    %5119 = vrot.lane.b32.xlu0 %v5101, 54
    %v5120 = vpop.permute.xlu0 %5119
    %5121 = vrot.lane.b32.xlu0 %v5102, 54
    %v5122 = vpop.permute.xlu0 %5121
    %5123 = vrot.lane.b32.xlu0 %v5103, 54
    %v5124 = vpop.permute.xlu0 %5123
    %5125 = vrot.lane.b32.xlu0 %v5104, 54
    %v5126 = vpop.permute.xlu0 %5125
    %5127 = vrot.lane.b32.xlu0 %v5105, 54
    %v5128 = vpop.permute.xlu0 %5127
    %5129 = vrot.lane.b32.xlu0 %v5106, 54
    %v5130 = vpop.permute.xlu0 %5129
    %5131 = vrot.lane.b32.xlu0 %v5107, 54
    %v5132 = vpop.permute.xlu0 %5131
    %5133 = vrot.lane.b32.xlu0 %v5108, 54
    %v5134 = vpop.permute.xlu0 %5133
    %5135 = vrot.lane.b32.xlu0 %v5109, 54
    %v5136 = vpop.permute.xlu0 %5135
    %5137 = vrot.lane.b32.xlu0 %v5110, 54
    %v5138 = vpop.permute.xlu0 %5137
    %5139 = vrot.lane.b32.xlu0 %v5111, 54
    %v5140 = vpop.permute.xlu0 %5139
    %5141 = vrot.lane.b32.xlu0 %v5112, 54
    %v5142 = vpop.permute.xlu0 %5141
    %5143 = vrot.lane.b32.xlu0 %v5113, 54
    %v5144 = vpop.permute.xlu0 %5143
    %5145 = vrot.lane.b32.xlu0 %v5114, 54
    %v5146 = vpop.permute.xlu0 %5145
    %5163 = vst.msk [vmem:[#allocation9 + $0x3] sm:$0x1] %vm4033, %v5116
    %5164 = vst.msk [vmem:[#allocation9 + $0x7] sm:$0x1] %vm4033, %v5118
    %5165 = vst.msk [vmem:[#allocation9 + $0xb] sm:$0x1] %vm4033, %v5120
    %5166 = vst.msk [vmem:[#allocation9 + $0xf] sm:$0x1] %vm4033, %v5122
    %5167 = vst.msk [vmem:[#allocation9 + $0x13] sm:$0x1] %vm4033, %v5124
    %5168 = vst.msk [vmem:[#allocation9 + $0x17] sm:$0x1] %vm4033, %v5126
    %5169 = vst.msk [vmem:[#allocation9 + $0x1b] sm:$0x1] %vm4033, %v5128
    %5170 = vst.msk [vmem:[#allocation9 + $0x1f] sm:$0x1] %vm4033, %v5130
    %5171 = vst.msk [vmem:[#allocation9 + $0x23] sm:$0x1] %vm4033, %v5132
    %5172 = vst.msk [vmem:[#allocation9 + $0x27] sm:$0x1] %vm4033, %v5134
    %5173 = vst.msk [vmem:[#allocation9 + $0x2b] sm:$0x1] %vm4033, %v5136
    %5174 = vst.msk [vmem:[#allocation9 + $0x2f] sm:$0x1] %vm4033, %v5138
    %5175 = vst.msk [vmem:[#allocation9 + $0x33] sm:$0x1] %vm4033, %v5140
    %5176 = vst.msk [vmem:[#allocation9 + $0x37] sm:$0x1] %vm4033, %v5142
    %5177 = vst.msk [vmem:[#allocation9 + $0x3b] sm:$0x1] %vm4033, %v5144
    %5178 = vst.msk [vmem:[#allocation9 + $0x3f] sm:$0x1] %vm4033, %v5146
    %v5179 = vld [vmem:[#allocation8 + $0x10] sm:$0xff]
    %v5180 = vld [vmem:[#allocation8 + $0x30] sm:$0xff]
    %v5183 = vrot.slane %v5179, 1
    %v5184 = vrot.slane %v5179, 2
    %v5185 = vrot.slane %v5179, 3
    %v5186 = vrot.slane %v5179, 4
    %v5187 = vrot.slane %v5179, 5
    %v5188 = vrot.slane %v5179, 6
    %v5189 = vrot.slane %v5179, 7
    %v5190 = vrot.slane %v5180, 1
    %v5191 = vrot.slane %v5180, 2
    %v5192 = vrot.slane %v5180, 3
    %v5193 = vrot.slane %v5180, 4
    %v5194 = vrot.slane %v5180, 5
    %v5195 = vrot.slane %v5180, 6
    %v5196 = vrot.slane %v5180, 7
    %v5197 = vperm.slane %v5179, 0
    %v5198 = vperm.slane %v5183, 0
    %v5199 = vperm.slane %v5184, 0
    %v5200 = vperm.slane %v5185, 0
    %v5201 = vperm.slane %v5186, 0
    %v5202 = vperm.slane %v5187, 0
    %v5203 = vperm.slane %v5188, 0
    %v5204 = vperm.slane %v5189, 0
    %v5205 = vperm.slane %v5180, 0
    %v5206 = vperm.slane %v5190, 0
    %v5207 = vperm.slane %v5191, 0
    %v5208 = vperm.slane %v5192, 0
    %v5209 = vperm.slane %v5193, 0
    %v5210 = vperm.slane %v5194, 0
    %v5211 = vperm.slane %v5195, 0
    %v5212 = vperm.slane %v5196, 0
    %5213 = vrot.lane.b32.xlu0 %v5197, 42
    %v5214 = vpop.permute.xlu0 %5213
    %5215 = vrot.lane.b32.xlu0 %v5198, 42
    %v5216 = vpop.permute.xlu0 %5215
    %5217 = vrot.lane.b32.xlu0 %v5199, 42
    %v5218 = vpop.permute.xlu0 %5217
    %5219 = vrot.lane.b32.xlu0 %v5200, 42
    %v5220 = vpop.permute.xlu0 %5219
    %5221 = vrot.lane.b32.xlu0 %v5201, 42
    %v5222 = vpop.permute.xlu0 %5221
    %5223 = vrot.lane.b32.xlu0 %v5202, 42
    %v5224 = vpop.permute.xlu0 %5223
    %5225 = vrot.lane.b32.xlu0 %v5203, 42
    %v5226 = vpop.permute.xlu0 %5225
    %5227 = vrot.lane.b32.xlu0 %v5204, 42
    %v5228 = vpop.permute.xlu0 %5227
    %5229 = vrot.lane.b32.xlu0 %v5205, 42
    %v5230 = vpop.permute.xlu0 %5229
    %5231 = vrot.lane.b32.xlu0 %v5206, 42
    %v5232 = vpop.permute.xlu0 %5231
    %5233 = vrot.lane.b32.xlu0 %v5207, 42
    %v5234 = vpop.permute.xlu0 %5233
    %5235 = vrot.lane.b32.xlu0 %v5208, 42
    %v5236 = vpop.permute.xlu0 %5235
    %5237 = vrot.lane.b32.xlu0 %v5209, 42
    %v5238 = vpop.permute.xlu0 %5237
    %5239 = vrot.lane.b32.xlu0 %v5210, 42
    %v5240 = vpop.permute.xlu0 %5239
    %5241 = vrot.lane.b32.xlu0 %v5211, 42
    %v5242 = vpop.permute.xlu0 %5241
    %5243 = vrot.lane.b32.xlu0 %v5212, 42
    %v5244 = vpop.permute.xlu0 %5243
    %5261 = vst.msk [vmem:[#allocation9 + $0x3] sm:$0x1] %vm4132, %v5214
    %5262 = vst.msk [vmem:[#allocation9 + $0x7] sm:$0x1] %vm4132, %v5216
    %5263 = vst.msk [vmem:[#allocation9 + $0xb] sm:$0x1] %vm4132, %v5218
    %5264 = vst.msk [vmem:[#allocation9 + $0xf] sm:$0x1] %vm4132, %v5220
    %5265 = vst.msk [vmem:[#allocation9 + $0x13] sm:$0x1] %vm4132, %v5222
    %5266 = vst.msk [vmem:[#allocation9 + $0x17] sm:$0x1] %vm4132, %v5224
    %5267 = vst.msk [vmem:[#allocation9 + $0x1b] sm:$0x1] %vm4132, %v5226
    %5268 = vst.msk [vmem:[#allocation9 + $0x1f] sm:$0x1] %vm4132, %v5228
    %5269 = vst.msk [vmem:[#allocation9 + $0x23] sm:$0x1] %vm4132, %v5230
    %5270 = vst.msk [vmem:[#allocation9 + $0x27] sm:$0x1] %vm4132, %v5232
    %5271 = vst.msk [vmem:[#allocation9 + $0x2b] sm:$0x1] %vm4132, %v5234
    %5272 = vst.msk [vmem:[#allocation9 + $0x2f] sm:$0x1] %vm4132, %v5236
    %5273 = vst.msk [vmem:[#allocation9 + $0x33] sm:$0x1] %vm4132, %v5238
    %5274 = vst.msk [vmem:[#allocation9 + $0x37] sm:$0x1] %vm4132, %v5240
    %5275 = vst.msk [vmem:[#allocation9 + $0x3b] sm:$0x1] %vm4132, %v5242
    %5276 = vst.msk [vmem:[#allocation9 + $0x3f] sm:$0x1] %vm4132, %v5244
    %v5277 = vld [vmem:[#allocation8 + $0x10] sm:$0xff]
    %v5278 = vld [vmem:[#allocation8 + $0x30] sm:$0xff]
    %v5281 = vrot.slane %v5277, 1
    %v5282 = vrot.slane %v5277, 2
    %v5283 = vrot.slane %v5277, 3
    %v5284 = vrot.slane %v5277, 4
    %v5285 = vrot.slane %v5277, 5
    %v5286 = vrot.slane %v5277, 6
    %v5287 = vrot.slane %v5277, 7
    %v5288 = vrot.slane %v5278, 1
    %v5289 = vrot.slane %v5278, 2
    %v5290 = vrot.slane %v5278, 3
    %v5291 = vrot.slane %v5278, 4
    %v5292 = vrot.slane %v5278, 5
    %v5293 = vrot.slane %v5278, 6
    %v5294 = vrot.slane %v5278, 7
    %v5295 = vperm.slane %v5277, 0
    %v5296 = vperm.slane %v5281, 0
    %v5297 = vperm.slane %v5282, 0
    %v5298 = vperm.slane %v5283, 0
    %v5299 = vperm.slane %v5284, 0
    %v5300 = vperm.slane %v5285, 0
    %v5301 = vperm.slane %v5286, 0
    %v5302 = vperm.slane %v5287, 0
    %v5303 = vperm.slane %v5278, 0
    %v5304 = vperm.slane %v5288, 0
    %v5305 = vperm.slane %v5289, 0
    %v5306 = vperm.slane %v5290, 0
    %v5307 = vperm.slane %v5291, 0
    %v5308 = vperm.slane %v5292, 0
    %v5309 = vperm.slane %v5293, 0
    %v5310 = vperm.slane %v5294, 0
    %5311 = vrot.lane.b32.xlu0 %v5295, 30
    %v5312 = vpop.permute.xlu0 %5311
    %5313 = vrot.lane.b32.xlu0 %v5296, 30
    %v5314 = vpop.permute.xlu0 %5313
    %5315 = vrot.lane.b32.xlu0 %v5297, 30
    %v5316 = vpop.permute.xlu0 %5315
    %5317 = vrot.lane.b32.xlu0 %v5298, 30
    %v5318 = vpop.permute.xlu0 %5317
    %5319 = vrot.lane.b32.xlu0 %v5299, 30
    %v5320 = vpop.permute.xlu0 %5319
    %5321 = vrot.lane.b32.xlu0 %v5300, 30
    %v5322 = vpop.permute.xlu0 %5321
    %5323 = vrot.lane.b32.xlu0 %v5301, 30
    %v5324 = vpop.permute.xlu0 %5323
    %5325 = vrot.lane.b32.xlu0 %v5302, 30
    %v5326 = vpop.permute.xlu0 %5325
    %5327 = vrot.lane.b32.xlu0 %v5303, 30
    %v5328 = vpop.permute.xlu0 %5327
    %5329 = vrot.lane.b32.xlu0 %v5304, 30
    %v5330 = vpop.permute.xlu0 %5329
    %5331 = vrot.lane.b32.xlu0 %v5305, 30
    %v5332 = vpop.permute.xlu0 %5331
    %5333 = vrot.lane.b32.xlu0 %v5306, 30
    %v5334 = vpop.permute.xlu0 %5333
    %5335 = vrot.lane.b32.xlu0 %v5307, 30
    %v5336 = vpop.permute.xlu0 %5335
    %5337 = vrot.lane.b32.xlu0 %v5308, 30
    %v5338 = vpop.permute.xlu0 %5337
    %5339 = vrot.lane.b32.xlu0 %v5309, 30
    %v5340 = vpop.permute.xlu0 %5339
    %5341 = vrot.lane.b32.xlu0 %v5310, 30
    %v5342 = vpop.permute.xlu0 %5341
    %5359 = vst.msk [vmem:[#allocation9 + $0x3] sm:$0x1] %vm4231, %v5312
    %5360 = vst.msk [vmem:[#allocation9 + $0x7] sm:$0x1] %vm4231, %v5314
    %5361 = vst.msk [vmem:[#allocation9 + $0xb] sm:$0x1] %vm4231, %v5316
    %5362 = vst.msk [vmem:[#allocation9 + $0xf] sm:$0x1] %vm4231, %v5318
    %5363 = vst.msk [vmem:[#allocation9 + $0x13] sm:$0x1] %vm4231, %v5320
    %5364 = vst.msk [vmem:[#allocation9 + $0x17] sm:$0x1] %vm4231, %v5322
    %5365 = vst.msk [vmem:[#allocation9 + $0x1b] sm:$0x1] %vm4231, %v5324
    %5366 = vst.msk [vmem:[#allocation9 + $0x1f] sm:$0x1] %vm4231, %v5326
    %5367 = vst.msk [vmem:[#allocation9 + $0x23] sm:$0x1] %vm4231, %v5328
    %5368 = vst.msk [vmem:[#allocation9 + $0x27] sm:$0x1] %vm4231, %v5330
    %5369 = vst.msk [vmem:[#allocation9 + $0x2b] sm:$0x1] %vm4231, %v5332
    %5370 = vst.msk [vmem:[#allocation9 + $0x2f] sm:$0x1] %vm4231, %v5334
    %5371 = vst.msk [vmem:[#allocation9 + $0x33] sm:$0x1] %vm4231, %v5336
    %5372 = vst.msk [vmem:[#allocation9 + $0x37] sm:$0x1] %vm4231, %v5338
    %5373 = vst.msk [vmem:[#allocation9 + $0x3b] sm:$0x1] %vm4231, %v5340
    %5374 = vst.msk [vmem:[#allocation9 + $0x3f] sm:$0x1] %vm4231, %v5342
    %v5375 = vld [vmem:[#allocation8 + $0x18] sm:$0xff]
    %v5376 = vld [vmem:[#allocation8 + $0x38] sm:$0xff]
    %v5379 = vrot.slane %v5375, 1
    %v5380 = vrot.slane %v5375, 2
    %v5381 = vrot.slane %v5375, 3
    %v5382 = vrot.slane %v5375, 4
    %v5383 = vrot.slane %v5375, 5
    %v5384 = vrot.slane %v5375, 6
    %v5385 = vrot.slane %v5375, 7
    %v5386 = vrot.slane %v5376, 1
    %v5387 = vrot.slane %v5376, 2
    %v5388 = vrot.slane %v5376, 3
    %v5389 = vrot.slane %v5376, 4
    %v5390 = vrot.slane %v5376, 5
    %v5391 = vrot.slane %v5376, 6
    %v5392 = vrot.slane %v5376, 7
    %v5393 = vperm.slane %v5375, 0
    %v5394 = vperm.slane %v5379, 0
    %v5395 = vperm.slane %v5380, 0
    %v5396 = vperm.slane %v5381, 0
    %v5397 = vperm.slane %v5382, 0
    %v5398 = vperm.slane %v5383, 0
    %v5399 = vperm.slane %v5384, 0
    %v5400 = vperm.slane %v5385, 0
    %v5401 = vperm.slane %v5376, 0
    %v5402 = vperm.slane %v5386, 0
    %v5403 = vperm.slane %v5387, 0
    %v5404 = vperm.slane %v5388, 0
    %v5405 = vperm.slane %v5389, 0
    %v5406 = vperm.slane %v5390, 0
    %v5407 = vperm.slane %v5391, 0
    %v5408 = vperm.slane %v5392, 0
    %5409 = vrot.lane.b32.xlu0 %v5393, 18
    %v5410 = vpop.permute.xlu0 %5409
    %5411 = vrot.lane.b32.xlu0 %v5394, 18
    %v5412 = vpop.permute.xlu0 %5411
    %5413 = vrot.lane.b32.xlu0 %v5395, 18
    %v5414 = vpop.permute.xlu0 %5413
    %5415 = vrot.lane.b32.xlu0 %v5396, 18
    %v5416 = vpop.permute.xlu0 %5415
    %5417 = vrot.lane.b32.xlu0 %v5397, 18
    %v5418 = vpop.permute.xlu0 %5417
    %5419 = vrot.lane.b32.xlu0 %v5398, 18
    %v5420 = vpop.permute.xlu0 %5419
    %5421 = vrot.lane.b32.xlu0 %v5399, 18
    %v5422 = vpop.permute.xlu0 %5421
    %5423 = vrot.lane.b32.xlu0 %v5400, 18
    %v5424 = vpop.permute.xlu0 %5423
    %5425 = vrot.lane.b32.xlu0 %v5401, 18
    %v5426 = vpop.permute.xlu0 %5425
    %5427 = vrot.lane.b32.xlu0 %v5402, 18
    %v5428 = vpop.permute.xlu0 %5427
    %5429 = vrot.lane.b32.xlu0 %v5403, 18
    %v5430 = vpop.permute.xlu0 %5429
    %5431 = vrot.lane.b32.xlu0 %v5404, 18
    %v5432 = vpop.permute.xlu0 %5431
    %5433 = vrot.lane.b32.xlu0 %v5405, 18
    %v5434 = vpop.permute.xlu0 %5433
    %5435 = vrot.lane.b32.xlu0 %v5406, 18
    %v5436 = vpop.permute.xlu0 %5435
    %5437 = vrot.lane.b32.xlu0 %v5407, 18
    %v5438 = vpop.permute.xlu0 %5437
    %5439 = vrot.lane.b32.xlu0 %v5408, 18
    %v5440 = vpop.permute.xlu0 %5439
    %5457 = vst.msk [vmem:[#allocation9 + $0x3] sm:$0x1] %vm4330, %v5410
    %5458 = vst.msk [vmem:[#allocation9 + $0x7] sm:$0x1] %vm4330, %v5412
    %5459 = vst.msk [vmem:[#allocation9 + $0xb] sm:$0x1] %vm4330, %v5414
    %5460 = vst.msk [vmem:[#allocation9 + $0xf] sm:$0x1] %vm4330, %v5416
    %5461 = vst.msk [vmem:[#allocation9 + $0x13] sm:$0x1] %vm4330, %v5418
    %5462 = vst.msk [vmem:[#allocation9 + $0x17] sm:$0x1] %vm4330, %v5420
    %5463 = vst.msk [vmem:[#allocation9 + $0x1b] sm:$0x1] %vm4330, %v5422
    %5464 = vst.msk [vmem:[#allocation9 + $0x1f] sm:$0x1] %vm4330, %v5424
    %5465 = vst.msk [vmem:[#allocation9 + $0x23] sm:$0x1] %vm4330, %v5426
    %5466 = vst.msk [vmem:[#allocation9 + $0x27] sm:$0x1] %vm4330, %v5428
    %5467 = vst.msk [vmem:[#allocation9 + $0x2b] sm:$0x1] %vm4330, %v5430
    %5468 = vst.msk [vmem:[#allocation9 + $0x2f] sm:$0x1] %vm4330, %v5432
    %5469 = vst.msk [vmem:[#allocation9 + $0x33] sm:$0x1] %vm4330, %v5434
    %5470 = vst.msk [vmem:[#allocation9 + $0x37] sm:$0x1] %vm4330, %v5436
    %5471 = vst.msk [vmem:[#allocation9 + $0x3b] sm:$0x1] %vm4330, %v5438
    %5472 = vst.msk [vmem:[#allocation9 + $0x3f] sm:$0x1] %vm4330, %v5440
    %v5473 = vld [vmem:[#allocation9] sm:$0xf]
    %v5474 = vld [vmem:[%s2] sm:$0xff]
    %v5475 = vld [vmem:[%s2 + $0x8] sm:$0xff]
    %v5476 = vld [vmem:[%s2 + $0x10] sm:$0xff]
    %v5477 = vld [vmem:[%s2 + $0x18] sm:$0xff]
    %v5478 = vld [vmem:[%s2 + $0x20] sm:$0xff]
    %s5479 = scalar_lea.vmem [#allocation9], 4
    %v5480 = vld [vmem:[%s5479] sm:$0xf]
    %v5481 = vld [vmem:[%s2 + $0x28] sm:$0xff]
    %v5482 = vld [vmem:[%s2 + $0x30] sm:$0xff]
    %v5483 = vld [vmem:[%s2 + $0x38] sm:$0xff]
    %v5484 = vld [vmem:[%s2 + $0x40] sm:$0xff]
    %v5485 = vld [vmem:[%s2 + $0x48] sm:$0xff]
    %vm5486 = vcmask 326656
    %v5488 = vsel %vm5486, %v5480, 0
    %5490 = vmatpush.msra.mxu0 0.0
    %5491 = vmatpush.msra.mxu0 0.0
    %5492 = vmatpush.msra.mxu0 0.0
    %5493 = vmatpush.msra.mxu0 0.0
    %5494 = vmatpush.msra.mxu0 0.0
    %5495 = vmatpush.msra.mxu0 0.0
    %5496 = vmatpush.msra.mxu0 0.0
    %5497 = vmatpush.msra.mxu0 0.0
    %5498 = vmatpush.msra.mxu0 0.0
    %5499 = vmatpush.msra.mxu0 0.0
    %5500 = vmatpush.msra.mxu0 0.0
    %5501 = vmatpush.msra.mxu0 %v5485
    %5502 = vmatpush.msra.mxu0 %v5484
    %5503 = vmatpush.msra.mxu0 %v5483
    %5504 = vmatpush.msra.mxu0 %v5482
    %5505 = vmatpush.msra.mxu0 %v5481
    %5506 = vmatmul.f32.gmra.mxu0 %v5488
    %v5507 = vpop.f32.mrf.mxu0
    %v5508 = vadd.f32 0.0, %v5507
    %5509 = vdwg.mxu0
    %v5511 = vsel %vm5486, %v5473, 0
    %5513 = vmatpush.msra.mxu0 0.0
    %5514 = vmatpush.msra.mxu0 0.0
    %5515 = vmatpush.msra.mxu0 0.0
    %5516 = vmatpush.msra.mxu0 0.0
    %5517 = vmatpush.msra.mxu0 0.0
    %5518 = vmatpush.msra.mxu0 0.0
    %5519 = vmatpush.msra.mxu0 0.0
    %5520 = vmatpush.msra.mxu0 0.0
    %5521 = vmatpush.msra.mxu0 0.0
    %5522 = vmatpush.msra.mxu0 0.0
    %5523 = vmatpush.msra.mxu0 0.0
    %5524 = vmatpush.msra.mxu0 %v5478
    %5525 = vmatpush.msra.mxu0 %v5477
    %5526 = vmatpush.msra.mxu0 %v5476
    %5527 = vmatpush.msra.mxu0 %v5475
    %5528 = vmatpush.msra.mxu0 %v5474
    %5529 = vmatmul.f32.gmra.mxu0 %v5511
    %v5530 = vpop.f32.mrf.mxu0
    %v5531 = vadd.f32 %v5508, %v5530
    %5532 = vdwg.mxu0
    %s5533 = scalar_lea.vmem [#allocation9], 8
    %v5534 = vld [vmem:[%s5533] sm:$0xf]
    %v5535 = vld [vmem:[%s2 + $0x50] sm:$0xff]
    %v5536 = vld [vmem:[%s2 + $0x58] sm:$0xff]
    %v5537 = vld [vmem:[%s2 + $0x60] sm:$0xff]
    %v5538 = vld [vmem:[%s2 + $0x68] sm:$0xff]
    %v5539 = vld [vmem:[%s2 + $0x70] sm:$0xff]
    %v5541 = vsel %vm5486, %v5534, 0
    %5543 = vmatpush.msra.mxu0 0.0
    %5544 = vmatpush.msra.mxu0 0.0
    %5545 = vmatpush.msra.mxu0 0.0
    %5546 = vmatpush.msra.mxu0 0.0
    %5547 = vmatpush.msra.mxu0 0.0
    %5548 = vmatpush.msra.mxu0 0.0
    %5549 = vmatpush.msra.mxu0 0.0
    %5550 = vmatpush.msra.mxu0 0.0
    %5551 = vmatpush.msra.mxu0 0.0
    %5552 = vmatpush.msra.mxu0 0.0
    %5553 = vmatpush.msra.mxu0 0.0
    %5554 = vmatpush.msra.mxu0 %v5539
    %5555 = vmatpush.msra.mxu0 %v5538
    %5556 = vmatpush.msra.mxu0 %v5537
    %5557 = vmatpush.msra.mxu0 %v5536
    %5558 = vmatpush.msra.mxu0 %v5535
    %5559 = vmatmul.f32.gmra.mxu0 %v5541
    %v5560 = vpop.f32.mrf.mxu0
    %v5561 = vadd.f32 0.0, %v5560
    %5562 = vdwg.mxu0
    %v5563 = vadd.f32 %v5531, %v5561
    %s5564 = scalar_lea.vmem [#allocation9], 12
    %v5565 = vld [vmem:[%s5564] sm:$0xf]
    %v5566 = vld [vmem:[%s2 + $0x78] sm:$0xff]
    %v5567 = vld [vmem:[%s2 + $0x80] sm:$0xff]
    %v5568 = vld [vmem:[%s2 + $0x88] sm:$0xff]
    %v5569 = vld [vmem:[%s2 + $0x90] sm:$0xff]
    %v5570 = vld [vmem:[%s2 + $0x98] sm:$0xff]
    %v5572 = vsel %vm5486, %v5565, 0
    %5574 = vmatpush.msra.mxu0 0.0
    %5575 = vmatpush.msra.mxu0 0.0
    %5576 = vmatpush.msra.mxu0 0.0
    %5577 = vmatpush.msra.mxu0 0.0
    %5578 = vmatpush.msra.mxu0 0.0
    %5579 = vmatpush.msra.mxu0 0.0
    %5580 = vmatpush.msra.mxu0 0.0
    %5581 = vmatpush.msra.mxu0 0.0
    %5582 = vmatpush.msra.mxu0 0.0
    %5583 = vmatpush.msra.mxu0 0.0
    %5584 = vmatpush.msra.mxu0 0.0
    %5585 = vmatpush.msra.mxu0 %v5570
    %5586 = vmatpush.msra.mxu0 %v5569
    %5587 = vmatpush.msra.mxu0 %v5568
    %5588 = vmatpush.msra.mxu0 %v5567
    %5589 = vmatpush.msra.mxu0 %v5566
    %5590 = vmatmul.f32.gmra.mxu0 %v5572
    %v5591 = vpop.f32.mrf.mxu0
    %v5592 = vadd.f32 0.0, %v5591
    %5593 = vdwg.mxu0
    %v5594 = vadd.f32 %v5563, %v5592
    %s5595 = scalar_lea.vmem [#allocation9], 16
    %v5596 = vld [vmem:[%s5595] sm:$0xf]
    %v5597 = vld [vmem:[%s2 + $0xa0] sm:$0xff]
    %v5598 = vld [vmem:[%s2 + $0xa8] sm:$0xff]
    %v5599 = vld [vmem:[%s2 + $0xb0] sm:$0xff]
    %v5600 = vld [vmem:[%s2 + $0xb8] sm:$0xff]
    %v5601 = vld [vmem:[%s2 + $0xc0] sm:$0xff]
    %v5603 = vsel %vm5486, %v5596, 0
    %5605 = vmatpush.msra.mxu0 0.0
    %5606 = vmatpush.msra.mxu0 0.0
    %5607 = vmatpush.msra.mxu0 0.0
    %5608 = vmatpush.msra.mxu0 0.0
    %5609 = vmatpush.msra.mxu0 0.0
    %5610 = vmatpush.msra.mxu0 0.0
    %5611 = vmatpush.msra.mxu0 0.0
    %5612 = vmatpush.msra.mxu0 0.0
    %5613 = vmatpush.msra.mxu0 0.0
    %5614 = vmatpush.msra.mxu0 0.0
    %5615 = vmatpush.msra.mxu0 0.0
    %5616 = vmatpush.msra.mxu0 %v5601
    %5617 = vmatpush.msra.mxu0 %v5600
    %5618 = vmatpush.msra.mxu0 %v5599
    %5619 = vmatpush.msra.mxu0 %v5598
    %5620 = vmatpush.msra.mxu0 %v5597
    %5621 = vmatmul.f32.gmra.mxu0 %v5603
    %v5622 = vpop.f32.mrf.mxu0
    %v5623 = vadd.f32 0.0, %v5622
    %5624 = vdwg.mxu0
    %v5625 = vadd.f32 %v5594, %v5623
    %s5626 = scalar_lea.vmem [#allocation9], 20
    %v5627 = vld [vmem:[%s5626] sm:$0xf]
    %v5628 = vld [vmem:[%s2 + $0xc8] sm:$0xff]
    %v5629 = vld [vmem:[%s2 + $0xd0] sm:$0xff]
    %v5630 = vld [vmem:[%s2 + $0xd8] sm:$0xff]
    %v5631 = vld [vmem:[%s2 + $0xe0] sm:$0xff]
    %v5632 = vld [vmem:[%s2 + $0xe8] sm:$0xff]
    %v5634 = vsel %vm5486, %v5627, 0
    %5636 = vmatpush.msra.mxu0 0.0
    %5637 = vmatpush.msra.mxu0 0.0
    %5638 = vmatpush.msra.mxu0 0.0
    %5639 = vmatpush.msra.mxu0 0.0
    %5640 = vmatpush.msra.mxu0 0.0
    %5641 = vmatpush.msra.mxu0 0.0
    %5642 = vmatpush.msra.mxu0 0.0
    %5643 = vmatpush.msra.mxu0 0.0
    %5644 = vmatpush.msra.mxu0 0.0
    %5645 = vmatpush.msra.mxu0 0.0
    %5646 = vmatpush.msra.mxu0 0.0
    %5647 = vmatpush.msra.mxu0 %v5632
    %5648 = vmatpush.msra.mxu0 %v5631
    %5649 = vmatpush.msra.mxu0 %v5630
    %5650 = vmatpush.msra.mxu0 %v5629
    %5651 = vmatpush.msra.mxu0 %v5628
    %5652 = vmatmul.f32.gmra.mxu0 %v5634
    %v5653 = vpop.f32.mrf.mxu0
    %v5654 = vadd.f32 0.0, %v5653
    %5655 = vdwg.mxu0
    %v5656 = vadd.f32 %v5625, %v5654
    %s5657 = scalar_lea.vmem [#allocation9], 24
    %v5658 = vld [vmem:[%s5657] sm:$0xf]
    %v5659 = vld [vmem:[%s2 + $0xf0] sm:$0xff]
    %v5660 = vld [vmem:[%s2 + $0xf8] sm:$0xff]
    %v5661 = vld [vmem:[%s2 + $0x100] sm:$0xff]
    %v5662 = vld [vmem:[%s2 + $0x108] sm:$0xff]
    %v5663 = vld [vmem:[%s2 + $0x110] sm:$0xff]
    %v5665 = vsel %vm5486, %v5658, 0
    %5667 = vmatpush.msra.mxu0 0.0
    %5668 = vmatpush.msra.mxu0 0.0
    %5669 = vmatpush.msra.mxu0 0.0
    %5670 = vmatpush.msra.mxu0 0.0
    %5671 = vmatpush.msra.mxu0 0.0
    %5672 = vmatpush.msra.mxu0 0.0
    %5673 = vmatpush.msra.mxu0 0.0
    %5674 = vmatpush.msra.mxu0 0.0
    %5675 = vmatpush.msra.mxu0 0.0
    %5676 = vmatpush.msra.mxu0 0.0
    %5677 = vmatpush.msra.mxu0 0.0
    %5678 = vmatpush.msra.mxu0 %v5663
    %5679 = vmatpush.msra.mxu0 %v5662
    %5680 = vmatpush.msra.mxu0 %v5661
    %5681 = vmatpush.msra.mxu0 %v5660
    %5682 = vmatpush.msra.mxu0 %v5659
    %5683 = vmatmul.f32.gmra.mxu0 %v5665
    %v5684 = vpop.f32.mrf.mxu0
    %v5685 = vadd.f32 0.0, %v5684
    %5686 = vdwg.mxu0
    %v5687 = vadd.f32 %v5656, %v5685
    %s5688 = scalar_lea.vmem [#allocation9], 28
    %v5689 = vld [vmem:[%s5688] sm:$0xf]
    %v5690 = vld [vmem:[%s2 + $0x118] sm:$0xff]
    %v5691 = vld [vmem:[%s2 + $0x120] sm:$0xff]
    %v5692 = vld [vmem:[%s2 + $0x128] sm:$0xff]
    %v5693 = vld [vmem:[%s2 + $0x130] sm:$0xff]
    %v5694 = vld [vmem:[%s2 + $0x138] sm:$0xff]
    %v5696 = vsel %vm5486, %v5689, 0
    %5698 = vmatpush.msra.mxu0 0.0
    %5699 = vmatpush.msra.mxu0 0.0
    %5700 = vmatpush.msra.mxu0 0.0
    %5701 = vmatpush.msra.mxu0 0.0
    %5702 = vmatpush.msra.mxu0 0.0
    %5703 = vmatpush.msra.mxu0 0.0
    %5704 = vmatpush.msra.mxu0 0.0
    %5705 = vmatpush.msra.mxu0 0.0
    %5706 = vmatpush.msra.mxu0 0.0
    %5707 = vmatpush.msra.mxu0 0.0
    %5708 = vmatpush.msra.mxu0 0.0
    %5709 = vmatpush.msra.mxu0 %v5694
    %5710 = vmatpush.msra.mxu0 %v5693
    %5711 = vmatpush.msra.mxu0 %v5692
    %5712 = vmatpush.msra.mxu0 %v5691
    %5713 = vmatpush.msra.mxu0 %v5690
    %5714 = vmatmul.f32.gmra.mxu0 %v5696
    %v5715 = vpop.f32.mrf.mxu0
    %v5716 = vadd.f32 0.0, %v5715
    %5717 = vdwg.mxu0
    %v5718 = vadd.f32 %v5687, %v5716
    %s5719 = scalar_lea.vmem [#allocation9], 32
    %v5720 = vld [vmem:[%s5719] sm:$0xf]
    %v5721 = vld [vmem:[%s2 + $0x140] sm:$0xff]
    %v5722 = vld [vmem:[%s2 + $0x148] sm:$0xff]
    %v5723 = vld [vmem:[%s2 + $0x150] sm:$0xff]
    %v5724 = vld [vmem:[%s2 + $0x158] sm:$0xff]
    %v5725 = vld [vmem:[%s2 + $0x160] sm:$0xff]
    %v5727 = vsel %vm5486, %v5720, 0
    %5729 = vmatpush.msra.mxu0 0.0
    %5730 = vmatpush.msra.mxu0 0.0
    %5731 = vmatpush.msra.mxu0 0.0
    %5732 = vmatpush.msra.mxu0 0.0
    %5733 = vmatpush.msra.mxu0 0.0
    %5734 = vmatpush.msra.mxu0 0.0
    %5735 = vmatpush.msra.mxu0 0.0
    %5736 = vmatpush.msra.mxu0 0.0
    %5737 = vmatpush.msra.mxu0 0.0
    %5738 = vmatpush.msra.mxu0 0.0
    %5739 = vmatpush.msra.mxu0 0.0
    %5740 = vmatpush.msra.mxu0 %v5725
    %5741 = vmatpush.msra.mxu0 %v5724
    %5742 = vmatpush.msra.mxu0 %v5723
    %5743 = vmatpush.msra.mxu0 %v5722
    %5744 = vmatpush.msra.mxu0 %v5721
    %5745 = vmatmul.f32.gmra.mxu0 %v5727
    %v5746 = vpop.f32.mrf.mxu0
    %v5747 = vadd.f32 0.0, %v5746
    %5748 = vdwg.mxu0
    %v5749 = vadd.f32 %v5718, %v5747
    %s5750 = scalar_lea.vmem [#allocation9], 36
    %v5751 = vld [vmem:[%s5750] sm:$0xf]
    %v5752 = vld [vmem:[%s2 + $0x168] sm:$0xff]
    %v5753 = vld [vmem:[%s2 + $0x170] sm:$0xff]
    %v5754 = vld [vmem:[%s2 + $0x178] sm:$0xff]
    %v5755 = vld [vmem:[%s2 + $0x180] sm:$0xff]
    %v5756 = vld [vmem:[%s2 + $0x188] sm:$0xff]
    %v5758 = vsel %vm5486, %v5751, 0
    %5760 = vmatpush.msra.mxu0 0.0
    %5761 = vmatpush.msra.mxu0 0.0
    %5762 = vmatpush.msra.mxu0 0.0
    %5763 = vmatpush.msra.mxu0 0.0
    %5764 = vmatpush.msra.mxu0 0.0
    %5765 = vmatpush.msra.mxu0 0.0
    %5766 = vmatpush.msra.mxu0 0.0
    %5767 = vmatpush.msra.mxu0 0.0
    %5768 = vmatpush.msra.mxu0 0.0
    %5769 = vmatpush.msra.mxu0 0.0
    %5770 = vmatpush.msra.mxu0 0.0
    %5771 = vmatpush.msra.mxu0 %v5756
    %5772 = vmatpush.msra.mxu0 %v5755
    %5773 = vmatpush.msra.mxu0 %v5754
    %5774 = vmatpush.msra.mxu0 %v5753
    %5775 = vmatpush.msra.mxu0 %v5752
    %5776 = vmatmul.f32.gmra.mxu0 %v5758
    %v5777 = vpop.f32.mrf.mxu0
    %v5778 = vadd.f32 0.0, %v5777
    %5779 = vdwg.mxu0
    %v5780 = vadd.f32 %v5749, %v5778
    %s5781 = scalar_lea.vmem [#allocation9], 40
    %v5782 = vld [vmem:[%s5781] sm:$0xf]
    %v5783 = vld [vmem:[%s2 + $0x190] sm:$0xff]
    %v5784 = vld [vmem:[%s2 + $0x198] sm:$0xff]
    %v5785 = vld [vmem:[%s2 + $0x1a0] sm:$0xff]
    %v5786 = vld [vmem:[%s2 + $0x1a8] sm:$0xff]
    %v5787 = vld [vmem:[%s2 + $0x1b0] sm:$0xff]
    %v5789 = vsel %vm5486, %v5782, 0
    %5791 = vmatpush.msra.mxu0 0.0
    %5792 = vmatpush.msra.mxu0 0.0
    %5793 = vmatpush.msra.mxu0 0.0
    %5794 = vmatpush.msra.mxu0 0.0
    %5795 = vmatpush.msra.mxu0 0.0
    %5796 = vmatpush.msra.mxu0 0.0
    %5797 = vmatpush.msra.mxu0 0.0
    %5798 = vmatpush.msra.mxu0 0.0
    %5799 = vmatpush.msra.mxu0 0.0
    %5800 = vmatpush.msra.mxu0 0.0
    %5801 = vmatpush.msra.mxu0 0.0
    %5802 = vmatpush.msra.mxu0 %v5787
    %5803 = vmatpush.msra.mxu0 %v5786
    %5804 = vmatpush.msra.mxu0 %v5785
    %5805 = vmatpush.msra.mxu0 %v5784
    %5806 = vmatpush.msra.mxu0 %v5783
    %5807 = vmatmul.f32.gmra.mxu0 %v5789
    %v5808 = vpop.f32.mrf.mxu0
    %v5809 = vadd.f32 0.0, %v5808
    %5810 = vdwg.mxu0
    %v5811 = vadd.f32 %v5780, %v5809
    %s5812 = scalar_lea.vmem [#allocation9], 44
    %v5813 = vld [vmem:[%s5812] sm:$0xf]
    %v5814 = vld [vmem:[%s2 + $0x1b8] sm:$0xff]
    %v5815 = vld [vmem:[%s2 + $0x1c0] sm:$0xff]
    %v5816 = vld [vmem:[%s2 + $0x1c8] sm:$0xff]
    %v5817 = vld [vmem:[%s2 + $0x1d0] sm:$0xff]
    %v5818 = vld [vmem:[%s2 + $0x1d8] sm:$0xff]
    %v5820 = vsel %vm5486, %v5813, 0
    %5822 = vmatpush.msra.mxu0 0.0
    %5823 = vmatpush.msra.mxu0 0.0
    %5824 = vmatpush.msra.mxu0 0.0
    %5825 = vmatpush.msra.mxu0 0.0
    %5826 = vmatpush.msra.mxu0 0.0
    %5827 = vmatpush.msra.mxu0 0.0
    %5828 = vmatpush.msra.mxu0 0.0
    %5829 = vmatpush.msra.mxu0 0.0
    %5830 = vmatpush.msra.mxu0 0.0
    %5831 = vmatpush.msra.mxu0 0.0
    %5832 = vmatpush.msra.mxu0 0.0
    %5833 = vmatpush.msra.mxu0 %v5818
    %5834 = vmatpush.msra.mxu0 %v5817
    %5835 = vmatpush.msra.mxu0 %v5816
    %5836 = vmatpush.msra.mxu0 %v5815
    %5837 = vmatpush.msra.mxu0 %v5814
    %5838 = vmatmul.f32.gmra.mxu0 %v5820
    %v5839 = vpop.f32.mrf.mxu0
    %v5840 = vadd.f32 0.0, %v5839
    %5841 = vdwg.mxu0
    %v5842 = vadd.f32 %v5811, %v5840
    %s5843 = scalar_lea.vmem [#allocation9], 48
    %v5844 = vld [vmem:[%s5843] sm:$0xf]
    %v5845 = vld [vmem:[%s2 + $0x1e0] sm:$0xff]
    %v5846 = vld [vmem:[%s2 + $0x1e8] sm:$0xff]
    %v5847 = vld [vmem:[%s2 + $0x1f0] sm:$0xff]
    %v5848 = vld [vmem:[%s2 + $0x1f8] sm:$0xff]
    %v5849 = vld [vmem:[%s2 + $0x200] sm:$0xff]
    %v5851 = vsel %vm5486, %v5844, 0
    %5853 = vmatpush.msra.mxu0 0.0
    %5854 = vmatpush.msra.mxu0 0.0
    %5855 = vmatpush.msra.mxu0 0.0
    %5856 = vmatpush.msra.mxu0 0.0
    %5857 = vmatpush.msra.mxu0 0.0
    %5858 = vmatpush.msra.mxu0 0.0
    %5859 = vmatpush.msra.mxu0 0.0
    %5860 = vmatpush.msra.mxu0 0.0
    %5861 = vmatpush.msra.mxu0 0.0
    %5862 = vmatpush.msra.mxu0 0.0
    %5863 = vmatpush.msra.mxu0 0.0
    %5864 = vmatpush.msra.mxu0 %v5849
    %5865 = vmatpush.msra.mxu0 %v5848
    %5866 = vmatpush.msra.mxu0 %v5847
    %5867 = vmatpush.msra.mxu0 %v5846
    %5868 = vmatpush.msra.mxu0 %v5845
    %5869 = vmatmul.f32.gmra.mxu0 %v5851
    %v5870 = vpop.f32.mrf.mxu0
    %v5871 = vadd.f32 0.0, %v5870
    %5872 = vdwg.mxu0
    %v5873 = vadd.f32 %v5842, %v5871
    %s5874 = scalar_lea.vmem [#allocation9], 52
    %v5875 = vld [vmem:[%s5874] sm:$0xf]
    %v5876 = vld [vmem:[%s2 + $0x208] sm:$0xff]
    %v5877 = vld [vmem:[%s2 + $0x210] sm:$0xff]
    %v5878 = vld [vmem:[%s2 + $0x218] sm:$0xff]
    %v5879 = vld [vmem:[%s2 + $0x220] sm:$0xff]
    %v5880 = vld [vmem:[%s2 + $0x228] sm:$0xff]
    %v5882 = vsel %vm5486, %v5875, 0
    %5884 = vmatpush.msra.mxu0 0.0
    %5885 = vmatpush.msra.mxu0 0.0
    %5886 = vmatpush.msra.mxu0 0.0
    %5887 = vmatpush.msra.mxu0 0.0
    %5888 = vmatpush.msra.mxu0 0.0
    %5889 = vmatpush.msra.mxu0 0.0
    %5890 = vmatpush.msra.mxu0 0.0
    %5891 = vmatpush.msra.mxu0 0.0
    %5892 = vmatpush.msra.mxu0 0.0
    %5893 = vmatpush.msra.mxu0 0.0
    %5894 = vmatpush.msra.mxu0 0.0
    %5895 = vmatpush.msra.mxu0 %v5880
    %5896 = vmatpush.msra.mxu0 %v5879
    %5897 = vmatpush.msra.mxu0 %v5878
    %5898 = vmatpush.msra.mxu0 %v5877
    %5899 = vmatpush.msra.mxu0 %v5876
    %5900 = vmatmul.f32.gmra.mxu0 %v5882
    %v5901 = vpop.f32.mrf.mxu0
    %v5902 = vadd.f32 0.0, %v5901
    %5903 = vdwg.mxu0
    %v5904 = vadd.f32 %v5873, %v5902
    %s5905 = scalar_lea.vmem [#allocation9], 56
    %v5906 = vld [vmem:[%s5905] sm:$0xf]
    %v5907 = vld [vmem:[%s2 + $0x230] sm:$0xff]
    %v5908 = vld [vmem:[%s2 + $0x238] sm:$0xff]
    %v5909 = vld [vmem:[%s2 + $0x240] sm:$0xff]
    %v5910 = vld [vmem:[%s2 + $0x248] sm:$0xff]
    %v5911 = vld [vmem:[%s2 + $0x250] sm:$0xff]
    %v5913 = vsel %vm5486, %v5906, 0
    %5915 = vmatpush.msra.mxu0 0.0
    %5916 = vmatpush.msra.mxu0 0.0
    %5917 = vmatpush.msra.mxu0 0.0
    %5918 = vmatpush.msra.mxu0 0.0
    %5919 = vmatpush.msra.mxu0 0.0
    %5920 = vmatpush.msra.mxu0 0.0
    %5921 = vmatpush.msra.mxu0 0.0
    %5922 = vmatpush.msra.mxu0 0.0
    %5923 = vmatpush.msra.mxu0 0.0
    %5924 = vmatpush.msra.mxu0 0.0
    %5925 = vmatpush.msra.mxu0 0.0
    %5926 = vmatpush.msra.mxu0 %v5911
    %5927 = vmatpush.msra.mxu0 %v5910
    %5928 = vmatpush.msra.mxu0 %v5909
    %5929 = vmatpush.msra.mxu0 %v5908
    %5930 = vmatpush.msra.mxu0 %v5907
    %5931 = vmatmul.f32.gmra.mxu0 %v5913
    %v5932 = vpop.f32.mrf.mxu0
    %v5933 = vadd.f32 0.0, %v5932
    %5934 = vdwg.mxu0
    %v5935 = vadd.f32 %v5904, %v5933
    %s5936 = scalar_lea.vmem [#allocation9], 60
    %v5937 = vld [vmem:[%s5936] sm:$0xf]
    %v5938 = vld [vmem:[%s2 + $0x258] sm:$0xff]
    %v5939 = vld [vmem:[%s2 + $0x260] sm:$0xff]
    %v5940 = vld [vmem:[%s2 + $0x268] sm:$0xff]
    %v5941 = vld [vmem:[%s2 + $0x270] sm:$0xff]
    %v5942 = vld [vmem:[%s2 + $0x278] sm:$0xff]
    %v5944 = vsel %vm5486, %v5937, 0
    %5946 = vmatpush.msra.mxu0 0.0
    %5947 = vmatpush.msra.mxu0 0.0
    %5948 = vmatpush.msra.mxu0 0.0
    %5949 = vmatpush.msra.mxu0 0.0
    %5950 = vmatpush.msra.mxu0 0.0
    %5951 = vmatpush.msra.mxu0 0.0
    %5952 = vmatpush.msra.mxu0 0.0
    %5953 = vmatpush.msra.mxu0 0.0
    %5954 = vmatpush.msra.mxu0 0.0
    %5955 = vmatpush.msra.mxu0 0.0
    %5956 = vmatpush.msra.mxu0 0.0
    %5957 = vmatpush.msra.mxu0 %v5942
    %5958 = vmatpush.msra.mxu0 %v5941
    %5959 = vmatpush.msra.mxu0 %v5940
    %5960 = vmatpush.msra.mxu0 %v5939
    %5961 = vmatpush.msra.mxu0 %v5938
    %5962 = vmatmul.f32.gmra.mxu0 %v5944
    %v5963 = vpop.f32.mrf.mxu0
    %v5964 = vadd.f32 0.0, %v5963
    %5965 = vdwg.mxu0
    %v5966 = vadd.f32 %v5935, %v5964
    %v5967 = vld [vmem:[%s1 + $0x10] ss:$0 sm:$0xff]
    %v5968 = vadd.f32 %v5966, %v5967
    %v5969 = vmax.f32 %v5968, 0.0
    %v5970 = vld [vmem:[%s1 + $0x8] sm:$0xff]
    %v5971 = vld [vmem:[%s1 + $0x20] sm:$0xff]
    %v5972 = vld [vmem:[%s1 + $0x8] ss:$0 sm:$0xff]
    %5975 = vrot.lane.b32.xlu0 %v5970, 40
    %v5976 = vpop.permute.xlu0 %5975
    %5977 = vrot.lane.b32.xlu0 %v5971, 40
    %v5978 = vpop.permute.xlu0 %5977
    %5982 = vrot.lane.b32.xlu0 %v5972, 24
    %v5983 = vpop.permute.xlu0 %5982
    %vm5985 = vcmask 130048
    %v5987 = vsel %vm5985, %v5969, 0
    %5989 = vmatpush.msra.mxu0 0.0
    %5990 = vmatpush.msra.mxu0 0.0
    %5991 = vmatpush.msra.mxu0 0.0
    %5992 = vmatpush.msra.mxu0 0.0
    %5993 = vmatpush.msra.mxu0 0.0
    %5994 = vmatpush.msra.mxu0 0.0
    %5995 = vmatpush.msra.mxu0 0.0
    %5996 = vmatpush.msra.mxu0 0.0
    %5997 = vmatpush.msra.mxu0 0.0
    %5998 = vmatpush.msra.mxu0 0.0
    %5999 = vmatpush.msra.mxu0 0.0
    %6000 = vmatpush.msra.mxu0 0.0
    %6001 = vmatpush.msra.mxu0 0.0
    %6002 = vmatpush.msra.mxu0 0.0
    %6003 = vmatpush.msra.mxu0 %v5978
    %6004 = vmatpush.msra.mxu0 %v5976
    %6005 = vmatmul.f32.gmra.mxu0 %v5987
    %v6006 = vpop.f32.mrf.mxu0
    %v6007 = vadd.f32 %v5983, %v6006
    %6008 = vdwg.mxu0
    %vm6009 = vcmask 27648
    %v6010 = vsel %vm6009, %v6007, -inf
    %6011 = vmax.xlane.f32.xlu0 %v6010
    %v6012 = vpop.xlane.xlu0 %6011
    %v6013 = vsub.f32 %v6007, %v6012
    %v6014 = vmul.f32 %v6013, 1.442695
    %v6015 = vpow.pop %v6014
    %v6016 = vsel %vm6009, %v6015, 0.0
    %6017 = vadd.xlane.f32.xlu0 %v6016
    %v6018 = vpop.xlane.xlu0 %6017
    %v6019 = vlog2.pop %v6018
    %v6020 = vmul.f32 %v6019, 0.6931472
    %v6021 = vsub.f32 %v6013, %v6020
    %6022 = vst.msk [vmem:[#allocation10] sm:$0xf] %vm6009, %v6021
    // Predicated region
    $region14: #{cnn_forward.1} parent=1 // pred_check
      _
    $region15: #{cnn_forward.1} parent=1 // pred_check_branch
      %6024 = sbr.rel (0) target = $region17
    $region16: #{cnn_forward.1} parent=1 // pred_region
      %6026 = vsyncadd [#allocation11], 0
      %s6028 = sshll.u32 [#allocation10], 4
      %s6029 = int_to_ptr.vmem [resolvable:$true] %s6028
      %s6030 = sshll.u32 %s3, 4
      %s6031 = int_to_ptr.hbm [resolvable:$true] %s6030
      %6033 = dma.vmem_to_hbm [thread:$0]  %s6029, 64, %s6031, [#allocation11]
    $region17: #{cnn_forward.1} parent=1 // pred_fallthru
      _
    // Predicated region
    $region18: #{cnn_forward.1} parent=1 // pred_check
      _
    $region19: #{cnn_forward.1} parent=1 // pred_check_branch
      %6035 = sbr.rel (0) target = $region21
    $region20: #{cnn_forward.1} parent=1 // pred_region
      %6037 = dma.done [#allocation11], 64
    $region21: #{cnn_forward.1} parent=1 // pred_fallthru
      _
    %6038 = vsyncpa [#allocation11], 1

</llo_original>
